<compile_context>
chip_gen: v7x
topology: tpu7x:2x2x1
jax: 0.10.0
libtpu: 0.0.40
codegen_flags: <defaults>
</compile_context>

<pallas_src>
import functools
import math

import numpy as np
import jax
import jax.numpy as jnp
from jax import lax
from jax.experimental import pallas as pl
from jax.experimental.pallas import tpu as pltpu


# ----------------------------------------------------------------------------
# Host-side constant builders
# ----------------------------------------------------------------------------
def _bilinear_up1d(n):
    """(2n, n) matrix of the exact PyTorch 2x bilinear weights (align_corners=False)."""
    m = np.zeros((2 * n, n), np.float32)
    for k in range(n):
        m[2 * k, max(k - 1, 0)] += 0.25
        m[2 * k, k] += 0.75
        m[2 * k + 1, k] += 0.75
        m[2 * k + 1, min(k + 1, n - 1)] += 0.25
    return m


def _upsample_pad_matrix(h, w, w_stride):
    """Constant matrix U mapping flat (h*w_stride, C) activations (valid columns
    j < w per row; columns j >= w map to all-zero U columns) to the flat
    zero-padded 2x-upsampled image of shape ((2h+2)*(2w+2) + 2, C).  The two
    trailing rows are zero slack so the in-kernel shifted z-slices stay in bounds.
    All nonzero entries are products of 0.25/0.75 -> exact in bf16."""
    ah = _bilinear_up1d(h)                        # (2h, h)
    aw = _bilinear_up1d(w)                        # (2w, w)
    ahp = np.zeros((2 * h + 2, h), np.float32)
    ahp[1:-1] = ah
    awp = np.zeros((2 * w + 2, w), np.float32)
    awp[1:-1] = aw
    u = np.kron(ahp, awp)                         # ((2h+2)*(2w+2), h*w)
    if w_stride != w:                             # zero cols for the "wide" layout
        u = u.reshape(-1, h, w)
        u = np.concatenate(
            [u, np.zeros((u.shape[0], h, w_stride - w), np.float32)], axis=-1)
        u = u.reshape(-1, h * w_stride)
    u = np.concatenate([u, np.zeros((2, u.shape[1]), np.float32)], axis=0)
    return u


def _pack_conv1_taps(w_hwio, scale):
    """(3,3,Cin,C1) HWIO with the BN scale folded in -> (3, Cin, 3*C1) bf16
    (dx tap slabs packed into the matmul N dimension)."""
    kh, kw, cin, cout = w_hwio.shape
    w = w_hwio * scale.reshape(1, 1, 1, cout)
    w = jnp.transpose(w, (0, 2, 1, 3)).reshape(kh, cin, kw * cout)
    return w.astype(jnp.bfloat16)


def _pack_conv2_taps(w_hwio, tap_off, lanes=128):
    """(3,3,Cin,Cout) -> (3, Cin, lanes) bf16: the dx tap of one dy lives at lane
    offset dx*tap_off inside a single 128-lane block (N per matmul = 128)."""
    kh, kw, cin, cout = w_hwio.shape
    assert (kw - 1) * tap_off + cout <= lanes
    w = jnp.zeros((kh, cin, lanes), w_hwio.dtype)
    for dx in range(kw):
        w = w.at[:, :, dx * tap_off: dx * tap_off + cout].set(w_hwio[:, dx])
    return w.astype(jnp.bfloat16)


# ----------------------------------------------------------------------------
# Fused Pallas kernel: upsample -> conv1(+BN scale folded)+shift+ReLU
#                      -> upsample -> conv2
# ----------------------------------------------------------------------------
def _lane_roll_down(v, k):
    """out[..., i] = v[..., (i + k) % L] — lane rotation expressed as
    slice+concat (unambiguous semantics; lowers to an XLU lane shift)."""
    return jnp.concatenate([v[:, k:], v[:, :k]], axis=1)


def _conv_head_kernel(x_ref, u1_ref, u2_ref, w1_ref, t1_ref, w2_ref, b2_ref,
                      o_ref, *, h1, w1, h2, w2, tap_off):
    wp1, wp2 = w1 + 2, w2 + 2
    m1, m2 = h1 * wp1, h2 * wp2
    c1 = t1_ref.shape[-1]
    lanes = b2_ref.shape[-1]

    # ---- stage 1: 2x bilinear upsample + zero pad == one bf16 MXU matmul ----
    x_b = x_ref[0].astype(jnp.bfloat16)                          # (h0*w0, c0)
    p1 = jnp.dot(u1_ref[...], x_b, preferred_element_type=jnp.float32)
    p1b = p1.astype(jnp.bfloat16)                                # ((h1+2)*wp1+2, c0)

    # ---- conv1 (BN scale pre-folded into the weights) -----------------------
    # Per-dy matmul over the FULL padded slab (dx taps packed into N); the
    # dy/dx shifts land on the f32 z outputs inside ONE fused 9-term sum, so no
    # bf16 operand re-layout copies and no accumulator RMW passes.
    z1 = [jnp.dot(p1b, w1_ref[dy], preferred_element_type=jnp.float32)
          for dy in range(3)]                                    # 3 x (Np1, 3*c1)
    conv1 = t1_ref[...]                                          # BN shift (broadcasts)
    for dy in range(3):
        for dx in range(3):
            off = dy * wp1 + dx
            conv1 = conv1 + z1[dy][off: off + m1, dx * c1:(dx + 1) * c1]
    # columns x >= w1 of a1b are junk ("wrapped" conv reads); they are
    # neutralized because U2 has all-zero columns there (asserted on the host).
    a1b = jnp.maximum(conv1, 0.0).astype(jnp.bfloat16)           # (m1, c1)

    # ---- stage 2: 2x bilinear upsample + zero pad (bf16 MXU) ----------------
    p2 = jnp.dot(u2_ref[...], a1b, preferred_element_type=jnp.float32)
    p2b = p2.astype(jnp.bfloat16)                                # ((h2+2)*wp2+2, c1)

    # ---- conv2: the 3 dx taps live at lane offsets 0/tap_off/2*tap_off of a
    # single 128-lane block -> per-dy matmul N = 128 instead of 3*128.
    z2 = [jnp.dot(p2b, w2_ref[dy], preferred_element_type=jnp.float32)
          for dy in range(3)]                                    # 3 x (Np2, 128)
    q = []
    for dx in range(3):                                          # sum over dy first
        q.append(z2[0][dx: dx + m2, :]
                 + z2[1][wp2 + dx: wp2 + dx + m2, :]
                 + z2[2][2 * wp2 + dx: 2 * wp2 + dx + m2, :])
    # re-align the dx lane offsets with two lane rolls; lanes >= num_classes and
    # columns x >= w2 are junk and sliced off in the (tiny) JAX epilogue.
    y = (q[0]
         + _lane_roll_down(q[1], tap_off)
         + _lane_roll_down(q[2], 2 * tap_off)
         + b2_ref[...])
    o_ref[...] = y.reshape(1, m2, lanes).astype(o_ref.dtype)


# ----------------------------------------------------------------------------
# ConvHead forward (patch_size=4 -> 2 upsampling stages), NCHW in / NCHW out
# ----------------------------------------------------------------------------
def conv_head_forward(x_nchw, params, eps=1e-5):
    n, c0, h0, w0 = x_nchw.shape
    c1 = params["w1"].shape[-1]                   # 128 (initial_filters)
    c2 = params["w2"].shape[-1]                   # num_classes
    lanes = 128
    tap_off = ((c2 + 7) // 8) * 8                 # lane stride between dx taps
    if 2 * tap_off + c2 > lanes:
        # TODO(synk): fall back to one 128-lane slab per tap for very large num_classes.
        raise NotImplementedError("num_classes too large for packed-lane conv2 path")
    h1, w1 = 2 * h0, 2 * w0
    h2, w2 = 2 * h1, 2 * w1
    wp1, wp2 = w1 + 2, w2 + 2

    # constant upsample+pad matrices (bf16: bilinear taps are exact in bf16)
    u1_np = _upsample_pad_matrix(h0, w0, w0)      # ((h1+2)*wp1 + 2, h0*w0)
    u2_np = _upsample_pad_matrix(h1, w1, wp1)     # ((h2+2)*wp2 + 2, h1*wp1)
    # Invariant keeping the fused layout correct: the junk columns of a1 (x>=w1)
    # MUST hit all-zero columns of U2, and the epilogue MUST slice [:, :, :w2, :c2].
    junk_cols = np.arange(h1 * wp1).reshape(h1, wp1)[:, w1:].ravel()
    assert not u2_np[:, junk_cols].any(), "U2 zero-column invariant violated"
    u1 = jnp.asarray(u1_np).astype(jnp.bfloat16)
    u2 = jnp.asarray(u2_np).astype(jnp.bfloat16)

    # BatchNorm (eval mode): fold scale into the conv1 weights, keep f32 shift
    scale1 = params["gamma"] / jnp.sqrt(params["rvar"] + eps)
    shift1 = (params["b1"] - params["rmean"]) * scale1 + params["beta"]
    w1p = _pack_conv1_taps(params["w1"], scale1)                 # (3, c0, 3*c1) bf16
    t1 = shift1.reshape(1, c1).astype(jnp.float32)
    w2p = _pack_conv2_taps(params["w2"], tap_off, lanes)         # (3, c1, 128) bf16
    b2p = jnp.zeros((1, lanes), jnp.float32).at[0, :c2].set(params["b2"])

    # NCHW -> flattened (row-major HW rows, channels in lanes)
    x2d = jnp.transpose(x_nchw, (0, 2, 3, 1)).reshape(n, h0 * w0, c0)

    np1, np2 = u1.shape[0], u2.shape[0]
    flops = 2 * n * (np1 * (h0 * w0) * c0
                     + 3 * np1 * c0 * (3 * c1)
                     + np2 * (h1 * wp1) * c1
                     + 3 * np2 * c1 * lanes)
    bytes_accessed = (x2d.size * 4 + u1.size * 2 + u2.size * 2
                      + w1p.size * 2 + w2p.size * 2 + t1.size * 4 + b2p.size * 4
                      + n * h2 * wp2 * lanes * 4)

    out2d = pl.pallas_call(
        functools.partial(_conv_head_kernel, h1=h1, w1=w1, h2=h2, w2=w2,
                          tap_off=tap_off),
        out_shape=jax.ShapeDtypeStruct((n, h2 * wp2, lanes), jnp.float32),
        grid_spec=pltpu.PrefetchScalarGridSpec(
            num_scalar_prefetch=0,
            grid=(n,),
            in_specs=[
                pl.BlockSpec((1, h0 * w0, c0), lambda b: (b, 0, 0)),
                pl.BlockSpec(u1.shape, lambda b: (0, 0)),
                pl.BlockSpec(u2.shape, lambda b: (0, 0)),
                pl.BlockSpec(w1p.shape, lambda b: (0, 0, 0)),
                pl.BlockSpec(t1.shape, lambda b: (0, 0)),
                pl.BlockSpec(w2p.shape, lambda b: (0, 0, 0)),
                pl.BlockSpec(b2p.shape, lambda b: (0, 0)),
            ],
            out_specs=pl.BlockSpec((1, h2 * wp2, lanes), lambda b: (b, 0, 0)),
        ),
        compiler_params=pltpu.CompilerParams(
            dimension_semantics=("parallel",),
            # computed peak (pipeline buffers + in-kernel intermediates) is
            # ~8-14 MiB at these shapes; leave headroom for Mosaic temporaries.
            vmem_limit_bytes=24 * 1024 * 1024),
        cost_estimate=pl.CostEstimate(
            flops=flops, transcendentals=0, bytes_accessed=bytes_accessed),
    )(x2d, u1, u2, w1p, t1, w2p, b2p)

    # drop the 2 junk pad columns per row and the padded channels, back to NCHW
    out = out2d.reshape(n, h2, wp2, lanes)[:, :, :w2, :c2]
    return jnp.transpose(out, (0, 3, 1, 2))


# ----------------------------------------------------------------------------
# Pure-JAX reference (sanity check of the fused kernel)
# ----------------------------------------------------------------------------
def _up2x_axis(x, axis):
    pad = [(0, 0)] * x.ndim
    pad[axis] = (1, 1)
    xe = jnp.pad(x, pad, mode="edge")
    s = x.shape[axis]
    a = lax.slice_in_dim(xe, 0, s, axis=axis)
    b = lax.slice_in_dim(xe, 1, s + 1, axis=axis)
    c = lax.slice_in_dim(xe, 2, s + 2, axis=axis)
    even = 0.25 * a + 0.75 * b
    odd = 0.75 * b + 0.25 * c
    stacked = jnp.stack([even, odd], axis=axis + 1)
    new_shape = list(x.shape)
    new_shape[axis] = 2 * s
    return stacked.reshape(new_shape)


def _reference_forward(x_nchw, params, eps=1e-5):
    x = jnp.transpose(x_nchw, (0, 2, 3, 1))

    def up2(v):
        return _up2x_axis(_up2x_axis(v, 1), 2)

    def conv(v, w, b):
        return lax.conv_general_dilated(
            v, w, (1, 1), "SAME",
            dimension_numbers=("NHWC", "HWIO", "NHWC"),
            precision=lax.Precision.HIGHEST) + b

    x = up2(x)
    x = conv(x, params["w1"], params["b1"])
    scale = params["gamma"] / jnp.sqrt(params["rvar"] + eps)
    x = (x - params["rmean"]) * scale + params["beta"]
    x = jnp.maximum(x, 0.0)
    x = up2(x)
    x = conv(x, params["w2"], params["b2"])
    return jnp.transpose(x, (0, 3, 1, 2))


# ----------------------------------------------------------------------------
# main
# ----------------------------------------------------------------------------
if __name__ == "__main__":
    # Small shapes consistent with the module: embedding_size=32, patch_size=4,
    # num_classes=5, initial_filters=128, batch=2, 8x8 patch grid -> 32x32 out.
    embedding_size = 32
    num_classes = 5
    c_mid = 128
    N, H, W = 2, 8, 8

    key = jax.random.PRNGKey(0)
    ks = jax.random.split(key, 9)

    x_nchw = jax.random.normal(ks[0], (N, embedding_size, H, W), jnp.float32)

    params = {
        # conv1: Cin=embedding_size, Cout=128 (HWIO layout)
        "w1": jax.random.normal(ks[1], (3, 3, embedding_size, c_mid), jnp.float32)
              * (1.0 / math.sqrt(9 * embedding_size)),
        "b1": 0.01 * jax.random.normal(ks[2], (c_mid,), jnp.float32),
        # BatchNorm2d(128) parameters + running stats
        "gamma": 1.0 + 0.1 * jax.random.normal(ks[3], (c_mid,), jnp.float32),
        "beta": 0.1 * jax.random.normal(ks[4], (c_mid,), jnp.float32),
        "rmean": 0.1 * jax.random.normal(ks[5], (c_mid,), jnp.float32),
        "rvar": 1.0 + 0.1 * jnp.abs(jax.random.normal(ks[6], (c_mid,), jnp.float32)),
        # conv2: Cin=128, Cout=num_classes
        "w2": jax.random.normal(ks[7], (3, 3, c_mid, num_classes), jnp.float32)
              * (1.0 / math.sqrt(9 * c_mid)),
        "b2": 0.01 * jax.random.normal(ks[8], (num_classes,), jnp.float32),
    }

    out = conv_head_forward(x_nchw, params)
    out = jax.block_until_ready(out)

    assert out.shape == (N, num_classes, 4 * H, 4 * W), out.shape
    assert out.dtype == jnp.float32

    # numerical sanity check against the pure-JAX f32 reference (kernel uses
    # bf16 MXU operands with f32 accumulation)
    ref = jax.block_until_ready(_reference_forward(x_nchw, params))
    np.testing.assert_allclose(np.asarray(out), np.asarray(ref),
                               atol=5e-2, rtol=5e-2)

    print("KERNEL_OK")
</pallas_src>

<mosaic_0001>
module attributes {stable_mosaic.version = 11 : i64} {
  func.func @_conv_head_kernel(%arg0: i32, %arg1: memref<1x64x32xf32, #tpu.memory_space<vmem>>, %arg2: memref<326x64xbf16, #tpu.memory_space<vmem>>, %arg3: memref<1158x288xbf16, #tpu.memory_space<vmem>>, %arg4: memref<3x32x384xbf16, #tpu.memory_space<vmem>>, %arg5: memref<1x128xf32, #tpu.memory_space<vmem>>, %arg6: memref<3x128x128xbf16, #tpu.memory_space<vmem>>, %arg7: memref<1x128xf32, #tpu.memory_space<vmem>>, %arg8: memref<1x1088x128xf32, #tpu.memory_space<vmem>>) attributes {dimension_semantics = [#tpu.dimension_semantics<parallel>], iteration_bounds = array<i64: 2>, scalar_prefetch = 0 : i64, scratch_operands = 0 : i64, tpu.core_type = #tpu.core_type<tc>, window_params = [{transform_indices = @transform_0, window_bounds = array<i64: 1, 64, 32>}, {pipeline_mode = #tpu.pipeline_mode<synchronous>, transform_indices = @transform_1, window_bounds = array<i64: 326, 64>}, {pipeline_mode = #tpu.pipeline_mode<synchronous>, transform_indices = @transform_2, window_bounds = array<i64: 1158, 288>}, {pipeline_mode = #tpu.pipeline_mode<synchronous>, transform_indices = @transform_3, window_bounds = array<i64: 3, 32, 384>}, {pipeline_mode = #tpu.pipeline_mode<synchronous>, transform_indices = @transform_4, window_bounds = array<i64: 1, 128>}, {pipeline_mode = #tpu.pipeline_mode<synchronous>, transform_indices = @transform_5, window_bounds = array<i64: 3, 128, 128>}, {pipeline_mode = #tpu.pipeline_mode<synchronous>, transform_indices = @transform_6, window_bounds = array<i64: 1, 128>}, {transform_indices = @transform_7, window_bounds = array<i64: 1, 1088, 128>}]} {
    %c0 = arith.constant 0 : index
    %c0_0 = arith.constant 0 : index
    %c0_1 = arith.constant 0 : index
    %0 = vector.load %arg1[%c0, %c0_0, %c0_1] : memref<1x64x32xf32, #tpu.memory_space<vmem>>, vector<1x64x32xf32>
    %1 = vector.shape_cast %0 : vector<1x64x32xf32> to vector<64x32xf32>
    %2 = arith.truncf %1 : vector<64x32xf32> to vector<64x32xbf16>
    %c0_2 = arith.constant 0 : index
    %c0_3 = arith.constant 0 : index
    %3 = vector.load %arg2[%c0_2, %c0_3] : memref<326x64xbf16, #tpu.memory_space<vmem>>, vector<326x64xbf16>
    %cst = arith.constant dense<0.000000e+00> : vector<326x32xf32>
    %4 = tpu.matmul %3, %2, %cst {dimension_numbers = #tpu.dot_dimension_numbers<[1], [0], [0], [1], [0, 0, 1, 1], [], []>} : vector<326x64xbf16>, vector<64x32xbf16>, vector<326x32xf32> -> vector<326x32xf32>
    %5 = arith.truncf %4 : vector<326x32xf32> to vector<326x32xbf16>
    %c0_4 = arith.constant 0 : index
    %c0_5 = arith.constant 0 : index
    %c0_6 = arith.constant 0 : index
    %6 = vector.load %arg4[%c0_4, %c0_5, %c0_6] : memref<3x32x384xbf16, #tpu.memory_space<vmem>>, vector<1x32x384xbf16>
    %7 = vector.shape_cast %6 : vector<1x32x384xbf16> to vector<32x384xbf16>
    %cst_7 = arith.constant dense<0.000000e+00> : vector<326x384xf32>
    %8 = tpu.matmul %5, %7, %cst_7 {dimension_numbers = #tpu.dot_dimension_numbers<[1], [0], [0], [1], [0, 0, 1, 1], [], []>} : vector<326x32xbf16>, vector<32x384xbf16>, vector<326x384xf32> -> vector<326x384xf32>
    %c1 = arith.constant 1 : index
    %c0_8 = arith.constant 0 : index
    %c0_9 = arith.constant 0 : index
    %9 = vector.load %arg4[%c1, %c0_8, %c0_9] : memref<3x32x384xbf16, #tpu.memory_space<vmem>>, vector<1x32x384xbf16>
    %10 = vector.shape_cast %9 : vector<1x32x384xbf16> to vector<32x384xbf16>
    %cst_10 = arith.constant dense<0.000000e+00> : vector<326x384xf32>
    %11 = tpu.matmul %5, %10, %cst_10 {dimension_numbers = #tpu.dot_dimension_numbers<[1], [0], [0], [1], [0, 0, 1, 1], [], []>} : vector<326x32xbf16>, vector<32x384xbf16>, vector<326x384xf32> -> vector<326x384xf32>
    %c2 = arith.constant 2 : index
    %c0_11 = arith.constant 0 : index
    %c0_12 = arith.constant 0 : index
    %12 = vector.load %arg4[%c2, %c0_11, %c0_12] : memref<3x32x384xbf16, #tpu.memory_space<vmem>>, vector<1x32x384xbf16>
    %13 = vector.shape_cast %12 : vector<1x32x384xbf16> to vector<32x384xbf16>
    %cst_13 = arith.constant dense<0.000000e+00> : vector<326x384xf32>
    %14 = tpu.matmul %5, %13, %cst_13 {dimension_numbers = #tpu.dot_dimension_numbers<[1], [0], [0], [1], [0, 0, 1, 1], [], []>} : vector<326x32xbf16>, vector<32x384xbf16>, vector<326x384xf32> -> vector<326x384xf32>
    %c0_14 = arith.constant 0 : index
    %c0_15 = arith.constant 0 : index
    %15 = vector.load %arg5[%c0_14, %c0_15] : memref<1x128xf32, #tpu.memory_space<vmem>>, vector<1x128xf32>
    %16 = vector.extract_strided_slice %8 {offsets = [0, 0], sizes = [288, 128], strides = [1, 1]} : vector<326x384xf32> to vector<288x128xf32>
    %17 = vector.broadcast %15 : vector<1x128xf32> to vector<288x128xf32>
    %18 = arith.addf %17, %16 : vector<288x128xf32>
    %19 = vector.extract_strided_slice %8 {offsets = [1, 128], sizes = [288, 128], strides = [1, 1]} : vector<326x384xf32> to vector<288x128xf32>
    %20 = arith.addf %18, %19 : vector<288x128xf32>
    %21 = vector.extract_strided_slice %8 {offsets = [2, 256], sizes = [288, 128], strides = [1, 1]} : vector<326x384xf32> to vector<288x128xf32>
    %22 = arith.addf %20, %21 : vector<288x128xf32>
    %23 = vector.extract_strided_slice %11 {offsets = [18, 0], sizes = [288, 128], strides = [1, 1]} : vector<326x384xf32> to vector<288x128xf32>
    %24 = arith.addf %22, %23 : vector<288x128xf32>
    %25 = vector.extract_strided_slice %11 {offsets = [19, 128], sizes = [288, 128], strides = [1, 1]} : vector<326x384xf32> to vector<288x128xf32>
    %26 = arith.addf %24, %25 : vector<288x128xf32>
    %27 = vector.extract_strided_slice %11 {offsets = [20, 256], sizes = [288, 128], strides = [1, 1]} : vector<326x384xf32> to vector<288x128xf32>
    %28 = arith.addf %26, %27 : vector<288x128xf32>
    %29 = vector.extract_strided_slice %14 {offsets = [36, 0], sizes = [288, 128], strides = [1, 1]} : vector<326x384xf32> to vector<288x128xf32>
    %30 = arith.addf %28, %29 : vector<288x128xf32>
    %31 = vector.extract_strided_slice %14 {offsets = [37, 128], sizes = [288, 128], strides = [1, 1]} : vector<326x384xf32> to vector<288x128xf32>
    %32 = arith.addf %30, %31 : vector<288x128xf32>
    %33 = vector.extract_strided_slice %14 {offsets = [38, 256], sizes = [288, 128], strides = [1, 1]} : vector<326x384xf32> to vector<288x128xf32>
    %34 = arith.addf %32, %33 : vector<288x128xf32>
    %cst_16 = arith.constant 0.000000e+00 : f32
    %35 = vector.broadcast %cst_16 : f32 to vector<288x128xf32>
    %36 = arith.maximumf %34, %35 : vector<288x128xf32>
    %37 = arith.truncf %36 : vector<288x128xf32> to vector<288x128xbf16>
    %c0_17 = arith.constant 0 : index
    %c0_18 = arith.constant 0 : index
    %38 = vector.load %arg3[%c0_17, %c0_18] : memref<1158x288xbf16, #tpu.memory_space<vmem>>, vector<1158x288xbf16>
    %cst_19 = arith.constant dense<0.000000e+00> : vector<1158x128xf32>
    %39 = tpu.matmul %38, %37, %cst_19 {dimension_numbers = #tpu.dot_dimension_numbers<[1], [0], [0], [1], [0, 0, 1, 1], [], []>} : vector<1158x288xbf16>, vector<288x128xbf16>, vector<1158x128xf32> -> vector<1158x128xf32>
    %40 = arith.truncf %39 : vector<1158x128xf32> to vector<1158x128xbf16>
    %c0_20 = arith.constant 0 : index
    %c0_21 = arith.constant 0 : index
    %c0_22 = arith.constant 0 : index
    %41 = vector.load %arg6[%c0_20, %c0_21, %c0_22] : memref<3x128x128xbf16, #tpu.memory_space<vmem>>, vector<1x128x128xbf16>
    %42 = vector.shape_cast %41 : vector<1x128x128xbf16> to vector<128x128xbf16>
    %cst_23 = arith.constant dense<0.000000e+00> : vector<1158x128xf32>
    %43 = tpu.matmul %40, %42, %cst_23 {dimension_numbers = #tpu.dot_dimension_numbers<[1], [0], [0], [1], [0, 0, 1, 1], [], []>} : vector<1158x128xbf16>, vector<128x128xbf16>, vector<1158x128xf32> -> vector<1158x128xf32>
    %c1_24 = arith.constant 1 : index
    %c0_25 = arith.constant 0 : index
    %c0_26 = arith.constant 0 : index
    %44 = vector.load %arg6[%c1_24, %c0_25, %c0_26] : memref<3x128x128xbf16, #tpu.memory_space<vmem>>, vector<1x128x128xbf16>
    %45 = vector.shape_cast %44 : vector<1x128x128xbf16> to vector<128x128xbf16>
    %cst_27 = arith.constant dense<0.000000e+00> : vector<1158x128xf32>
    %46 = tpu.matmul %40, %45, %cst_27 {dimension_numbers = #tpu.dot_dimension_numbers<[1], [0], [0], [1], [0, 0, 1, 1], [], []>} : vector<1158x128xbf16>, vector<128x128xbf16>, vector<1158x128xf32> -> vector<1158x128xf32>
    %c2_28 = arith.constant 2 : index
    %c0_29 = arith.constant 0 : index
    %c0_30 = arith.constant 0 : index
    %47 = vector.load %arg6[%c2_28, %c0_29, %c0_30] : memref<3x128x128xbf16, #tpu.memory_space<vmem>>, vector<1x128x128xbf16>
    %48 = vector.shape_cast %47 : vector<1x128x128xbf16> to vector<128x128xbf16>
    %cst_31 = arith.constant dense<0.000000e+00> : vector<1158x128xf32>
    %49 = tpu.matmul %40, %48, %cst_31 {dimension_numbers = #tpu.dot_dimension_numbers<[1], [0], [0], [1], [0, 0, 1, 1], [], []>} : vector<1158x128xbf16>, vector<128x128xbf16>, vector<1158x128xf32> -> vector<1158x128xf32>
    %50 = vector.extract_strided_slice %43 {offsets = [0, 0], sizes = [1088, 128], strides = [1, 1]} : vector<1158x128xf32> to vector<1088x128xf32>
    %51 = vector.extract_strided_slice %46 {offsets = [34, 0], sizes = [1088, 128], strides = [1, 1]} : vector<1158x128xf32> to vector<1088x128xf32>
    %52 = arith.addf %50, %51 : vector<1088x128xf32>
    %53 = vector.extract_strided_slice %49 {offsets = [68, 0], sizes = [1088, 128], strides = [1, 1]} : vector<1158x128xf32> to vector<1088x128xf32>
    %54 = arith.addf %52, %53 : vector<1088x128xf32>
    %55 = vector.extract_strided_slice %43 {offsets = [1, 0], sizes = [1088, 128], strides = [1, 1]} : vector<1158x128xf32> to vector<1088x128xf32>
    %56 = vector.extract_strided_slice %46 {offsets = [35, 0], sizes = [1088, 128], strides = [1, 1]} : vector<1158x128xf32> to vector<1088x128xf32>
    %57 = arith.addf %55, %56 : vector<1088x128xf32>
    %58 = vector.extract_strided_slice %49 {offsets = [69, 0], sizes = [1088, 128], strides = [1, 1]} : vector<1158x128xf32> to vector<1088x128xf32>
    %59 = arith.addf %57, %58 : vector<1088x128xf32>
    %60 = vector.extract_strided_slice %43 {offsets = [2, 0], sizes = [1088, 128], strides = [1, 1]} : vector<1158x128xf32> to vector<1088x128xf32>
    %61 = vector.extract_strided_slice %46 {offsets = [36, 0], sizes = [1088, 128], strides = [1, 1]} : vector<1158x128xf32> to vector<1088x128xf32>
    %62 = arith.addf %60, %61 : vector<1088x128xf32>
    %63 = vector.extract_strided_slice %49 {offsets = [70, 0], sizes = [1088, 128], strides = [1, 1]} : vector<1158x128xf32> to vector<1088x128xf32>
    %64 = arith.addf %62, %63 : vector<1088x128xf32>
    %65 = vector.extract_strided_slice %59 {offsets = [0, 8], sizes = [1088, 120], strides = [1, 1]} : vector<1088x128xf32> to vector<1088x120xf32>
    %66 = vector.extract_strided_slice %59 {offsets = [0, 0], sizes = [1088, 8], strides = [1, 1]} : vector<1088x128xf32> to vector<1088x8xf32>
    %67 = tpu.concatenate %65, %66 in 1 : vector<1088x120xf32>, vector<1088x8xf32> -> vector<1088x128xf32>
    %68 = arith.addf %54, %67 : vector<1088x128xf32>
    %69 = vector.extract_strided_slice %64 {offsets = [0, 16], sizes = [1088, 112], strides = [1, 1]} : vector<1088x128xf32> to vector<1088x112xf32>
    %70 = vector.extract_strided_slice %64 {offsets = [0, 0], sizes = [1088, 16], strides = [1, 1]} : vector<1088x128xf32> to vector<1088x16xf32>
    %71 = tpu.concatenate %69, %70 in 1 : vector<1088x112xf32>, vector<1088x16xf32> -> vector<1088x128xf32>
    %72 = arith.addf %68, %71 : vector<1088x128xf32>
    %c0_32 = arith.constant 0 : index
    %c0_33 = arith.constant 0 : index
    %73 = vector.load %arg7[%c0_32, %c0_33] : memref<1x128xf32, #tpu.memory_space<vmem>>, vector<1x128xf32>
    %74 = vector.broadcast %73 : vector<1x128xf32> to vector<1088x128xf32>
    %75 = arith.addf %72, %74 : vector<1088x128xf32>
    %76 = vector.shape_cast %75 : vector<1088x128xf32> to vector<1x1088x128xf32>
    %c0_34 = arith.constant 0 : index
    %c0_35 = arith.constant 0 : index
    %c0_36 = arith.constant 0 : index
    %77 = vector.load %arg8[%c0_34, %c0_35, %c0_36] : memref<1x1088x128xf32, #tpu.memory_space<vmem>>, vector<1x1088x128xf32>
    tpu.vector_store %arg8[%c0_34, %c0_35, %c0_36], %76 {strides = array<i32>} : memref<1x1088x128xf32, #tpu.memory_space<vmem>>, vector<1x1088x128xf32>,
    return
  }
  func.func @transform_0(%arg0: i32) -> (i32, i32, i32) {
    %c0_i32 = arith.constant 0 : i32
    %c0_i32_0 = arith.constant 0 : i32
    %c0_i32_1 = arith.constant 0 : i32
    return %arg0, %c0_i32, %c0_i32_0 : i32, i32, i32
  }
  func.func @transform_1(%arg0: i32) -> (i32, i32) {
    %c0_i32 = arith.constant 0 : i32
    %c0_i32_0 = arith.constant 0 : i32
    %c0_i32_1 = arith.constant 0 : i32
    return %c0_i32, %c0_i32_0 : i32, i32
  }
  func.func @transform_2(%arg0: i32) -> (i32, i32) {
    %c0_i32 = arith.constant 0 : i32
    %c0_i32_0 = arith.constant 0 : i32
    %c0_i32_1 = arith.constant 0 : i32
    return %c0_i32, %c0_i32_0 : i32, i32
  }
  func.func @transform_3(%arg0: i32) -> (i32, i32, i32) {
    %c0_i32 = arith.constant 0 : i32
    %c0_i32_0 = arith.constant 0 : i32
    %c0_i32_1 = arith.constant 0 : i32
    %c0_i32_2 = arith.constant 0 : i32
    return %c0_i32, %c0_i32_0, %c0_i32_1 : i32, i32, i32
  }
  func.func @transform_4(%arg0: i32) -> (i32, i32) {
    %c0_i32 = arith.constant 0 : i32
    %c0_i32_0 = arith.constant 0 : i32
    %c0_i32_1 = arith.constant 0 : i32
    return %c0_i32, %c0_i32_0 : i32, i32
  }
  func.func @transform_5(%arg0: i32) -> (i32, i32, i32) {
    %c0_i32 = arith.constant 0 : i32
    %c0_i32_0 = arith.constant 0 : i32
    %c0_i32_1 = arith.constant 0 : i32
    %c0_i32_2 = arith.constant 0 : i32
    return %c0_i32, %c0_i32_0, %c0_i32_1 : i32, i32, i32
  }
  func.func @transform_6(%arg0: i32) -> (i32, i32) {
    %c0_i32 = arith.constant 0 : i32
    %c0_i32_0 = arith.constant 0 : i32
    %c0_i32_1 = arith.constant 0 : i32
    return %c0_i32, %c0_i32_0 : i32, i32
  }
  func.func @transform_7(%arg0: i32) -> (i32, i32, i32) {
    %c0_i32 = arith.constant 0 : i32
    %c0_i32_0 = arith.constant 0 : i32
    %c0_i32_1 = arith.constant 0 : i32
    return %arg0, %c0_i32, %c0_i32_0 : i32, i32, i32
  }
}

</mosaic_0001>

<llo_original>
// kernel: tpu_custom_call.1
$region0: #{tpu_custom_call.1}
  #allocation0 [shape = 'u32[]', space=smem, size = 0x4, offset = 0x4, fixed_abs, tag = 'smem constant byte address 0x4 - core index']
  #allocation1 [shape = 'u32[144,128]{1,0:T(1,128)}', space=vmem, size = 0x12000, scoped, tag = 'internal scratch']
  %s0 = inlined_call_operand.vmem [shape: f32[2,64,32], index: 0, kind: input, shape index: {}]
  %s1 = inlined_call_operand.vmem [shape: bf16[326,64], index: 1, kind: input, shape index: {}]
  %s2 = inlined_call_operand.vmem [shape: bf16[1158,288], index: 2, kind: input, shape index: {}]
  %s3 = inlined_call_operand.vmem [shape: bf16[3,32,384], index: 3, kind: input, shape index: {}]
  %s4 = inlined_call_operand.vmem [shape: f32[1,128], index: 4, kind: input, shape index: {}]
  %s5 = inlined_call_operand.vmem [shape: bf16[3,128,128], index: 5, kind: input, shape index: {}]
  %s6 = inlined_call_operand.vmem [shape: f32[1,128], index: 6, kind: input, shape index: {}]
  %s7 = inlined_call_operand.hbm [shape: f32[2,1088,128], index: 7, kind: output, shape index: {}]
  %s8 = sld [smem:[#allocation0]]
  $region61: #{tpu_custom_call.1} parent=0
    _
  %s10 = ssub.s32 1, %s8
  %s11 = scalar_select 0, %s10, %s8
  $region1: #{tpu_custom_call.1} parent=0
    #allocation2 [shape = 'u8[1114112]{0}', space=vmem, size = 0x110000, scoped, tag = 'output window, operand 0']
    #allocation3 [shape = 's32[2]{0}', space=sflag, size = 0x8, scoped, tag = 'scoped memory for tpu_custom_call.1']
    %12 = vsyncpa [#allocation3], 0
    %s13 = scalar_lea.sflag [#allocation3], 1
    %14 = vsyncpa %s13, 0
    loop: start=0, step=1, limit=4
    $region2: #{tpu_custom_call.1} parent=1 // loop_pre_header
      _
    $region3: #{tpu_custom_call.1} parent=1 // loop_header
      %s16 = sphi 0, %s20
      %p17 = scmp.ge.s32.totalorder %s16, 4
      %s26 = sphi 0, %s28
      %s29 = sphi 0, %s26
      %s30 = sphi 0, %s29
      %s46 = sphi 0, %s30
      %s50 = sphi 0, %s50
      %s52 = sphi 0, %s50
      %s53 = sphi 0, %s52
      %s67 = sphi 0, %s53
      %s71 = sphi 0, %s71
      %s73 = sphi 0, %s71
      %s74 = sphi 0, %s73
      %s88 = sphi 0, %s74
      %s92 = sphi 0, %s92
      %s94 = sphi 0, %s92
      %s95 = sphi 0, %s94
      %s109 = sphi 0, %s95
      %s113 = sphi 0, %s113
      %s115 = sphi 0, %s113
      %s116 = sphi 0, %s115
      %s130 = sphi 0, %s116
      %s134 = sphi 0, %s134
      %s136 = sphi 0, %s134
      %s137 = sphi 0, %s136
      %s151 = sphi 0, %s137
      %s155 = sphi 0, %s155
      %s157 = sphi 0, %s155
      %s158 = sphi 0, %s157
      %s172 = sphi 0, %s158
      %s178 = sphi 0, %s180
      %s181 = sphi 0, %s178
      %s182 = sphi 0, %s181
      %s198 = sphi 0, %s182
    $region4: #{tpu_custom_call.1} parent=1 // loop_header_branch
      %19 = sbr.rel (%p17) target = $region8
    $region5: #{tpu_custom_call.1} parent=1 // loop_body
      %s21 = ssub.s32 %s16, 1
      %s22 = ssub.s32 %s16, 2
      %s23 = sadd.s32 %s16, 1
      %s24 = ssub.s32 %s16, %s23
      %p25 = scmp.eq.s32.totalorder %s24, 0
      %s27 = sadd.s32 %s26, 1
      %s28 = scalar_select %p25, %s26, %s27
      %p31 = pneg %p25
      %p32 = scmp.eq.s32.totalorder %s16, 1
      %p33 = por %p31, %p32
      %p34 = scmp.ne.s32.totalorder %s26, %s29
      %p35 = scmp.eq.s32.totalorder %s16, 0
      %p36 = por %p34, %p35
      %p37 = scmp.ne.s32.totalorder %s26, %s29
      %p38 = scmp.eq.s32.totalorder %s21, 1
      %p39 = por %p37, %p38
      %p40 = scmp.ne.s32.totalorder %s29, %s30
      %p41 = scmp.eq.s32.totalorder %s21, 0
      %p42 = por %p40, %p41
      %p43 = scmp.ne.s32.totalorder %s29, %s30
      %p44 = scmp.eq.s32.totalorder %s22, 1
      %p45 = por %p43, %p44
      %p47 = scmp.ne.s32.totalorder %s30, %s46
      %p48 = scmp.eq.s32.totalorder %s22, 0
      %p49 = por %p47, %p48
      %s51 = sadd.s32 %s50, 1
      %p54 = scmp.eq.s32.totalorder %s16, 1
      %p55 = scmp.ne.s32.totalorder %s50, %s52
      %p56 = scmp.eq.s32.totalorder %s16, 0
      %p57 = por %p55, %p56
      %p58 = scmp.ne.s32.totalorder %s50, %s52
      %p59 = scmp.eq.s32.totalorder %s21, 1
      %p60 = por %p58, %p59
      %p61 = scmp.ne.s32.totalorder %s52, %s53
      %p62 = scmp.eq.s32.totalorder %s21, 0
      %p63 = por %p61, %p62
      %p64 = scmp.ne.s32.totalorder %s52, %s53
      %p65 = scmp.eq.s32.totalorder %s22, 1
      %p66 = por %p64, %p65
      %p68 = scmp.ne.s32.totalorder %s53, %s67
      %p69 = scmp.eq.s32.totalorder %s22, 0
      %p70 = por %p68, %p69
      %s72 = sadd.s32 %s71, 1
      %p75 = scmp.eq.s32.totalorder %s16, 1
      %p76 = scmp.ne.s32.totalorder %s71, %s73
      %p77 = scmp.eq.s32.totalorder %s16, 0
      %p78 = por %p76, %p77
      %p79 = scmp.ne.s32.totalorder %s71, %s73
      %p80 = scmp.eq.s32.totalorder %s21, 1
      %p81 = por %p79, %p80
      %p82 = scmp.ne.s32.totalorder %s73, %s74
      %p83 = scmp.eq.s32.totalorder %s21, 0
      %p84 = por %p82, %p83
      %p85 = scmp.ne.s32.totalorder %s73, %s74
      %p86 = scmp.eq.s32.totalorder %s22, 1
      %p87 = por %p85, %p86
      %p89 = scmp.ne.s32.totalorder %s74, %s88
      %p90 = scmp.eq.s32.totalorder %s22, 0
      %p91 = por %p89, %p90
      %s93 = sadd.s32 %s92, 1
      %p96 = scmp.eq.s32.totalorder %s16, 1
      %p97 = scmp.ne.s32.totalorder %s92, %s94
      %p98 = scmp.eq.s32.totalorder %s16, 0
      %p99 = por %p97, %p98
      %p100 = scmp.ne.s32.totalorder %s92, %s94
      %p101 = scmp.eq.s32.totalorder %s21, 1
      %p102 = por %p100, %p101
      %p103 = scmp.ne.s32.totalorder %s94, %s95
      %p104 = scmp.eq.s32.totalorder %s21, 0
      %p105 = por %p103, %p104
      %p106 = scmp.ne.s32.totalorder %s94, %s95
      %p107 = scmp.eq.s32.totalorder %s22, 1
      %p108 = por %p106, %p107
      %p110 = scmp.ne.s32.totalorder %s95, %s109
      %p111 = scmp.eq.s32.totalorder %s22, 0
      %p112 = por %p110, %p111
      %s114 = sadd.s32 %s113, 1
      %p117 = scmp.eq.s32.totalorder %s16, 1
      %p118 = scmp.ne.s32.totalorder %s113, %s115
      %p119 = scmp.eq.s32.totalorder %s16, 0
      %p120 = por %p118, %p119
      %p121 = scmp.ne.s32.totalorder %s113, %s115
      %p122 = scmp.eq.s32.totalorder %s21, 1
      %p123 = por %p121, %p122
      %p124 = scmp.ne.s32.totalorder %s115, %s116
      %p125 = scmp.eq.s32.totalorder %s21, 0
      %p126 = por %p124, %p125
      %p127 = scmp.ne.s32.totalorder %s115, %s116
      %p128 = scmp.eq.s32.totalorder %s22, 1
      %p129 = por %p127, %p128
      %p131 = scmp.ne.s32.totalorder %s116, %s130
      %p132 = scmp.eq.s32.totalorder %s22, 0
      %p133 = por %p131, %p132
      %s135 = sadd.s32 %s134, 1
      %p138 = scmp.eq.s32.totalorder %s16, 1
      %p139 = scmp.ne.s32.totalorder %s134, %s136
      %p140 = scmp.eq.s32.totalorder %s16, 0
      %p141 = por %p139, %p140
      %p142 = scmp.ne.s32.totalorder %s134, %s136
      %p143 = scmp.eq.s32.totalorder %s21, 1
      %p144 = por %p142, %p143
      %p145 = scmp.ne.s32.totalorder %s136, %s137
      %p146 = scmp.eq.s32.totalorder %s21, 0
      %p147 = por %p145, %p146
      %p148 = scmp.ne.s32.totalorder %s136, %s137
      %p149 = scmp.eq.s32.totalorder %s22, 1
      %p150 = por %p148, %p149
      %p152 = scmp.ne.s32.totalorder %s137, %s151
      %p153 = scmp.eq.s32.totalorder %s22, 0
      %p154 = por %p152, %p153
      %s156 = sadd.s32 %s155, 1
      %p159 = scmp.eq.s32.totalorder %s16, 1
      %p160 = scmp.ne.s32.totalorder %s155, %s157
      %p161 = scmp.eq.s32.totalorder %s16, 0
      %p162 = por %p160, %p161
      %p163 = scmp.ne.s32.totalorder %s155, %s157
      %p164 = scmp.eq.s32.totalorder %s21, 1
      %p165 = por %p163, %p164
      %p166 = scmp.ne.s32.totalorder %s157, %s158
      %p167 = scmp.eq.s32.totalorder %s21, 0
      %p168 = por %p166, %p167
      %p169 = scmp.ne.s32.totalorder %s157, %s158
      %p170 = scmp.eq.s32.totalorder %s22, 1
      %p171 = por %p169, %p170
      %p173 = scmp.ne.s32.totalorder %s158, %s172
      %p174 = scmp.eq.s32.totalorder %s22, 0
      %p175 = por %p173, %p174
      %s176 = ssub.s32 %s16, %s23
      %p177 = scmp.eq.s32.totalorder %s176, 0
      %s179 = sadd.s32 %s178, 1
      %s180 = scalar_select %p177, %s178, %s179
      %p183 = pneg %p177
      %p184 = scmp.eq.s32.totalorder %s16, 1
      %p185 = por %p183, %p184
      %p186 = scmp.ne.s32.totalorder %s178, %s181
      %p187 = scmp.eq.s32.totalorder %s16, 0
      %p188 = por %p186, %p187
      %p189 = scmp.ne.s32.totalorder %s178, %s181
      %p190 = scmp.eq.s32.totalorder %s21, 1
      %p191 = por %p189, %p190
      %p192 = scmp.ne.s32.totalorder %s181, %s182
      %p193 = scmp.eq.s32.totalorder %s21, 0
      %p194 = por %p192, %p193
      %p195 = scmp.ne.s32.totalorder %s181, %s182
      %p196 = scmp.eq.s32.totalorder %s22, 1
      %p197 = por %p195, %p196
      %p199 = scmp.ne.s32.totalorder %s182, %s198
      %p200 = scmp.eq.s32.totalorder %s22, 0
      %p201 = por %p199, %p200
      %p202 = scmp.le.s32.totalorder 1, %s16
      %p203 = scmp.lt.s32.totalorder %s16, 3
      %p204 = pnand %p202, %p203
      %p205 = pneg %p204
      // Predicated region
      $region9: #{tpu_custom_call.1} parent=5 // pred_check
        _
      $region10: #{tpu_custom_call.1} parent=5 // pred_check_branch
        %207 = sbr.rel (%p204) target = $region12
      $region11: #{tpu_custom_call.1} parent=5 // pred_region
        %s208 = ssub.s32 %s16, 1
        // Predicated region
        $region13: #{tpu_custom_call.1} parent=11 // pred_check
          %p209 = pneg %p63
        $region14: #{tpu_custom_call.1} parent=11 // pred_check_branch
          %211 = sbr.rel (%p209) target = $region16
        $region15: #{tpu_custom_call.1} parent=11 // pred_region
          _
        $region16: #{tpu_custom_call.1} parent=11 // pred_fallthru
          _
        // Predicated region
        $region17: #{tpu_custom_call.1} parent=11 // pred_check
          %p212 = pneg %p84
        $region18: #{tpu_custom_call.1} parent=11 // pred_check_branch
          %214 = sbr.rel (%p212) target = $region20
        $region19: #{tpu_custom_call.1} parent=11 // pred_region
          _
        $region20: #{tpu_custom_call.1} parent=11 // pred_fallthru
          _
        // Predicated region
        $region21: #{tpu_custom_call.1} parent=11 // pred_check
          %p215 = pneg %p105
        $region22: #{tpu_custom_call.1} parent=11 // pred_check_branch
          %217 = sbr.rel (%p215) target = $region24
        $region23: #{tpu_custom_call.1} parent=11 // pred_region
          _
        $region24: #{tpu_custom_call.1} parent=11 // pred_fallthru
          _
        // Predicated region
        $region25: #{tpu_custom_call.1} parent=11 // pred_check
          %p218 = pneg %p126
        $region26: #{tpu_custom_call.1} parent=11 // pred_check_branch
          %220 = sbr.rel (%p218) target = $region28
        $region27: #{tpu_custom_call.1} parent=11 // pred_region
          _
        $region28: #{tpu_custom_call.1} parent=11 // pred_fallthru
          _
        // Predicated region
        $region29: #{tpu_custom_call.1} parent=11 // pred_check
          %p221 = pneg %p147
        $region30: #{tpu_custom_call.1} parent=11 // pred_check_branch
          %223 = sbr.rel (%p221) target = $region32
        $region31: #{tpu_custom_call.1} parent=11 // pred_region
          _
        $region32: #{tpu_custom_call.1} parent=11 // pred_fallthru
          _
        // Predicated region
        $region33: #{tpu_custom_call.1} parent=11 // pred_check
          %p224 = pneg %p168
        $region34: #{tpu_custom_call.1} parent=11 // pred_check_branch
          %226 = sbr.rel (%p224) target = $region36
        $region35: #{tpu_custom_call.1} parent=11 // pred_region
          _
        $region36: #{tpu_custom_call.1} parent=11 // pred_fallthru
          _
      $region12: #{tpu_custom_call.1} parent=5 // pred_fallthru
        _
      %p227 = scmp.lt.s32.totalorder %s16, 2
      // Predicated region
      $region37: #{tpu_custom_call.1} parent=5 // pred_check
        %p228 = pneg %p227
      $region38: #{tpu_custom_call.1} parent=5 // pred_check_branch
        %230 = sbr.rel (%p228) target = $region40
      $region39: #{tpu_custom_call.1} parent=5 // pred_region
        // Predicated region
        $region41: #{tpu_custom_call.1} parent=39 // pred_check
          %p231 = pneg %p36
        $region42: #{tpu_custom_call.1} parent=39 // pred_check_branch
          %233 = sbr.rel (%p231) target = $region44
        $region43: #{tpu_custom_call.1} parent=39 // pred_region
          %p234 = scmp.lt.s32.totalorder %s16, 1
          %s235 = scalar_select %p234, %s16, 1
          %s236 = smul.addr %s235, 8
          %s237 = smul.addr %s236, 8
          %s238 = scalar_lea.vmem %s0, %s237
        $region44: #{tpu_custom_call.1} parent=39 // pred_fallthru
          _
      $region40: #{tpu_custom_call.1} parent=5 // pred_fallthru
        _
      %p239 = scmp.le.s32.totalorder 1, %s16
      %p240 = scmp.lt.s32.totalorder %s16, 3
      %p241 = pnand %p239, %p240
      %p242 = pneg %p241
      // Predicated region
      $region45: #{tpu_custom_call.1} parent=5 // pred_check
        _
      $region46: #{tpu_custom_call.1} parent=5 // pred_check_branch
        %244 = sbr.rel (%p241) target = $region48
      $region47: #{tpu_custom_call.1} parent=5 // pred_region
        %s245 = ssub.s32 %s16, 1
        %p246 = scmp.lt.s32.totalorder %s21, 1
        %s247 = scalar_select %p246, %s21, 1
        %s248 = smul.addr %s247, 8
        %s249 = smul.addr %s248, 8
        %s250 = scalar_lea.vmem %s0, %s249
        %p251 = pneg %p42
        %p252 = pneg %p39
        %p253 = pneg %p63
        %p254 = pneg %p60
        %p255 = pneg %p84
        %p256 = pneg %p81
        %p257 = pneg %p105
        %p258 = pneg %p102
        %p259 = pneg %p126
        %p260 = pneg %p123
        %p261 = pneg %p147
        %p262 = pneg %p144
        %p263 = pneg %p168
        %p264 = pneg %p165
        %p265 = pneg %p194
        %p266 = pneg %p191
        %s267 = sand.u32 %s181, 1
        %s268 = scalar_lea.sflag [#allocation3], %s267
        %s269 = sand.u32 %s181, 1
        %s270 = smul.addr %s269, 1088
        %s271 = scalar_lea.vmem [#allocation2], %s270
        %p272 = scmp.lt.s32.totalorder %s21, 1
        %s273 = scalar_select %p272, %s21, 1
        %s274 = smul.addr %s273, 8
        %s275 = smul.addr %s274, 8
        %s276 = scalar_lea.vmem %s0, %s275
        %v278 = vld [vmem:[%s276] sm:$0xff]
        %v279 = vld [vmem:[%s276 + $0x8] sm:$0xff]
        %v280 = vld [vmem:[%s276 + $0x10] sm:$0xff]
        %v281 = vld [vmem:[%s276 + $0x18] sm:$0xff]
        %v282 = vld [vmem:[%s276 + $0x20] sm:$0xff]
        %v283 = vld [vmem:[%s276 + $0x28] sm:$0xff]
        %v284 = vld [vmem:[%s276 + $0x30] sm:$0xff]
        %v285 = vld [vmem:[%s276 + $0x38] sm:$0xff]
        %v286 = vpack.c.bf16 %v279, %v278
        %v287 = vpack.c.bf16 %v281, %v280
        %v288 = vpack.c.bf16 %v283, %v282
        %v289 = vpack.c.bf16 %v285, %v284
        %v290 = vld [vmem:[%s1] sm:$0xf]
        %v291 = vld [vmem:[%s1 + $0x4] sm:$0xf]
        %v292 = vld [vmem:[%s1 + $0x8] sm:$0xf]
        %v293 = vld [vmem:[%s1 + $0xc] sm:$0xf]
        %v294 = vld [vmem:[%s1 + $0x10] sm:$0xf]
        %v295 = vld [vmem:[%s1 + $0x14] sm:$0xf]
        %v296 = vld [vmem:[%s1 + $0x18] sm:$0xf]
        %v297 = vld [vmem:[%s1 + $0x1c] sm:$0xf]
        %v298 = vld [vmem:[%s1 + $0x20] sm:$0xf]
        %v299 = vld [vmem:[%s1 + $0x24] sm:$0xf]
        %v300 = vld [vmem:[%s1 + $0x28] sm:$0xf]
        %v301 = vld [vmem:[%s1 + $0x2c] sm:$0xf]
        %v302 = vld [vmem:[%s1 + $0x30] sm:$0xf]
        %v303 = vld [vmem:[%s1 + $0x34] sm:$0xf]
        %v304 = vld [vmem:[%s1 + $0x38] sm:$0xf]
        %v305 = vld [vmem:[%s1 + $0x3c] sm:$0xf]
        %v306 = vld [vmem:[%s1 + $0x40] sm:$0xf]
        %v307 = vld [vmem:[%s1 + $0x44] sm:$0xf]
        %v308 = vld [vmem:[%s1 + $0x48] sm:$0xf]
        %v309 = vld [vmem:[%s1 + $0x4c] sm:$0xf]
        %v310 = vld [vmem:[%s1 + $0x50] sm:$0xf]
        %v311 = vld [vmem:[%s1 + $0x54] sm:$0xf]
        %v312 = vld [vmem:[%s1 + $0x58] sm:$0xf]
        %v313 = vld [vmem:[%s1 + $0x5c] sm:$0xf]
        %v314 = vld [vmem:[%s1 + $0x60] sm:$0xf]
        %v315 = vld [vmem:[%s1 + $0x64] sm:$0xf]
        %v316 = vld [vmem:[%s1 + $0x68] sm:$0xf]
        %v317 = vld [vmem:[%s1 + $0x6c] sm:$0xf]
        %v318 = vld [vmem:[%s1 + $0x70] sm:$0xf]
        %v319 = vld [vmem:[%s1 + $0x74] sm:$0xf]
        %v320 = vld [vmem:[%s1 + $0x78] sm:$0xf]
        %v321 = vld [vmem:[%s1 + $0x7c] sm:$0xf]
        %v322 = vld [vmem:[%s1 + $0x80] sm:$0xf]
        %v323 = vld [vmem:[%s1 + $0x84] sm:$0xf]
        %v324 = vld [vmem:[%s1 + $0x88] sm:$0xf]
        %v325 = vld [vmem:[%s1 + $0x8c] sm:$0xf]
        %v326 = vld [vmem:[%s1 + $0x90] sm:$0xf]
        %v327 = vld [vmem:[%s1 + $0x94] sm:$0xf]
        %v328 = vld [vmem:[%s1 + $0x98] sm:$0xf]
        %v329 = vld [vmem:[%s1 + $0x9c] sm:$0xf]
        %v330 = vld [vmem:[%s1 + $0xa0] sm:$0x7]
        %v372 = vunpack.c.l.b16 %v290
        %v373 = vunpack.c.l.b16 %v291
        %v374 = vunpack.c.l.b16 %v292
        %v375 = vunpack.c.l.b16 %v293
        %v376 = vunpack.c.l.b16 %v294
        %v377 = vunpack.c.l.b16 %v295
        %v378 = vunpack.c.l.b16 %v296
        %v379 = vunpack.c.l.b16 %v297
        %v380 = vunpack.c.l.b16 %v298
        %v381 = vunpack.c.l.b16 %v299
        %v382 = vunpack.c.l.b16 %v300
        %v383 = vunpack.c.l.b16 %v301
        %v384 = vunpack.c.l.b16 %v302
        %v385 = vunpack.c.l.b16 %v303
        %v386 = vunpack.c.l.b16 %v304
        %v387 = vunpack.c.l.b16 %v305
        %v388 = vunpack.c.l.b16 %v306
        %v389 = vunpack.c.l.b16 %v307
        %v390 = vunpack.c.l.b16 %v308
        %v391 = vunpack.c.l.b16 %v309
        %v392 = vunpack.c.l.b16 %v310
        %v393 = vunpack.c.l.b16 %v311
        %v394 = vunpack.c.l.b16 %v312
        %v395 = vunpack.c.l.b16 %v313
        %v396 = vunpack.c.l.b16 %v314
        %v397 = vunpack.c.l.b16 %v315
        %v398 = vunpack.c.l.b16 %v316
        %v399 = vunpack.c.l.b16 %v317
        %v400 = vunpack.c.l.b16 %v318
        %v401 = vunpack.c.l.b16 %v319
        %v402 = vunpack.c.l.b16 %v320
        %v403 = vunpack.c.l.b16 %v321
        %v404 = vunpack.c.l.b16 %v322
        %v405 = vunpack.c.l.b16 %v323
        %v406 = vunpack.c.l.b16 %v324
        %v407 = vunpack.c.l.b16 %v325
        %v408 = vunpack.c.l.b16 %v326
        %v409 = vunpack.c.l.b16 %v327
        %v410 = vunpack.c.l.b16 %v328
        %v411 = vunpack.c.l.b16 %v329
        %v412 = vunpack.c.l.b16 %v330
        %v413 = vpack.c.b16 %v373, %v372
        %v414 = vpack.c.b16 %v375, %v374
        %v415 = vpack.c.b16 %v377, %v376
        %v416 = vpack.c.b16 %v379, %v378
        %v417 = vpack.c.b16 %v381, %v380
        %v418 = vpack.c.b16 %v383, %v382
        %v419 = vpack.c.b16 %v385, %v384
        %v420 = vpack.c.b16 %v387, %v386
        %v421 = vpack.c.b16 %v389, %v388
        %v422 = vpack.c.b16 %v391, %v390
        %v423 = vpack.c.b16 %v393, %v392
        %v424 = vpack.c.b16 %v395, %v394
        %v425 = vpack.c.b16 %v397, %v396
        %v426 = vpack.c.b16 %v399, %v398
        %v427 = vpack.c.b16 %v401, %v400
        %v428 = vpack.c.b16 %v403, %v402
        %v429 = vpack.c.b16 %v405, %v404
        %v430 = vpack.c.b16 %v407, %v406
        %v431 = vpack.c.b16 %v409, %v408
        %v432 = vpack.c.b16 %v411, %v410
        %v433 = vpack.c.b16 %v412, %v412
        %vm434 = vcmask 523264
        %v436 = vsel %vm434, %v413, 0
        %v439 = vsel %vm434, %v414, 0
        %v442 = vsel %vm434, %v415, 0
        %v445 = vsel %vm434, %v416, 0
        %v448 = vsel %vm434, %v417, 0
        %v451 = vsel %vm434, %v418, 0
        %v454 = vsel %vm434, %v419, 0
        %v457 = vsel %vm434, %v420, 0
        %v460 = vsel %vm434, %v421, 0
        %v463 = vsel %vm434, %v422, 0
        %v466 = vsel %vm434, %v423, 0
        %v469 = vsel %vm434, %v424, 0
        %v472 = vsel %vm434, %v425, 0
        %v475 = vsel %vm434, %v426, 0
        %v478 = vsel %vm434, %v427, 0
        %v481 = vsel %vm434, %v428, 0
        %v484 = vsel %vm434, %v429, 0
        %v487 = vsel %vm434, %v430, 0
        %v490 = vsel %vm434, %v431, 0
        %v493 = vsel %vm434, %v432, 0
        %v496 = vsel %vm434, %v433, 0
        %498 = vmatprep.subr.bf16.mxu0 0
        %499 = vmatpush1.bf16.msra.mxu0 %v286
        %500 = vmatprep.subr.bf16.mxu0 0
        %501 = vmatpush1.bf16.msra.mxu0 %v287
        %502 = vmatprep.subr.bf16.mxu0 0
        %503 = vmatpush1.bf16.msra.mxu0 %v288
        %504 = vmatprep.subr.bf16.mxu0 0
        %505 = vmatpush1.bf16.msra.mxu0 %v289
        %506 = vmatprep.subr.bf16.mxu0 0
        %507 = vmatpush1.bf16.msra.mxu0 0
        %508 = vmatprep.subr.bf16.mxu0 0
        %509 = vmatpush1.bf16.msra.mxu0 0
        %510 = vmatprep.subr.bf16.mxu0 0
        %511 = vmatpush1.bf16.msra.mxu0 0
        %512 = vmatprep.subr.bf16.mxu0 0
        %513 = vmatpush1.bf16.msra.mxu0 0
        %514 = vmatprep.subr.bf16.mxu0 0
        %515 = vmatpush1.bf16.msra.mxu0 0
        %516 = vmatprep.subr.bf16.mxu0 0
        %517 = vmatpush1.bf16.msra.mxu0 0
        %518 = vmatprep.subr.bf16.mxu0 0
        %519 = vmatpush1.bf16.msra.mxu0 0
        %520 = vmatprep.subr.bf16.mxu0 0
        %521 = vmatpush1.bf16.msra.mxu0 0
        %522 = vmatprep.subr.bf16.mxu0 0
        %523 = vmatpush1.bf16.msra.mxu0 0
        %524 = vmatprep.subr.bf16.mxu0 0
        %525 = vmatpush1.bf16.msra.mxu0 0
        %526 = vmatprep.subr.bf16.mxu0 0
        %527 = vmatpush1.bf16.msra.mxu0 0
        %528 = vmatprep.subr.bf16.mxu0 0
        %529 = vmatpush1.bf16.msra.mxu0 0
        %530 = vmatprep.mubr.bf16.mxu0 0
        %531 = vmatmul.mubr.bf16.gmra.mrb[0].mxu0 %v436
        %v532 = vpop.f32.mrb[0].mxu0
        %v533 = vadd.f32 0.0, %v532
        %v534 = vpop.f32.mrb[0].mxu0
        %v535 = vpop.f32.mrb[0].mxu0
        %v536 = vadd.f32 0.0, %v535
        %v537 = vpop.f32.mrb[0].mxu0
        %538 = vmatprep.mubr.bf16.mxu0 0
        %539 = vmatmul.mubr.bf16.gmra.mrb[0].mxu0 %v439
        %v540 = vpop.f32.mrb[0].mxu0
        %v541 = vadd.f32 0.0, %v540
        %v542 = vpop.f32.mrb[0].mxu0
        %v543 = vpop.f32.mrb[0].mxu0
        %v544 = vadd.f32 0.0, %v543
        %v545 = vpop.f32.mrb[0].mxu0
        %546 = vmatprep.mubr.bf16.mxu0 0
        %547 = vmatmul.mubr.bf16.gmra.mrb[0].mxu0 %v442
        %v548 = vpop.f32.mrb[0].mxu0
        %v549 = vadd.f32 0.0, %v548
        %v550 = vpop.f32.mrb[0].mxu0
        %v551 = vpop.f32.mrb[0].mxu0
        %v552 = vadd.f32 0.0, %v551
        %v553 = vpop.f32.mrb[0].mxu0
        %554 = vmatprep.mubr.bf16.mxu0 0
        %555 = vmatmul.mubr.bf16.gmra.mrb[0].mxu0 %v445
        %v556 = vpop.f32.mrb[0].mxu0
        %v557 = vadd.f32 0.0, %v556
        %v558 = vpop.f32.mrb[0].mxu0
        %v559 = vpop.f32.mrb[0].mxu0
        %v560 = vadd.f32 0.0, %v559
        %v561 = vpop.f32.mrb[0].mxu0
        %562 = vmatprep.mubr.bf16.mxu0 0
        %563 = vmatmul.mubr.bf16.gmra.mrb[0].mxu0 %v448
        %v564 = vpop.f32.mrb[0].mxu0
        %v565 = vadd.f32 0.0, %v564
        %v566 = vpop.f32.mrb[0].mxu0
        %v567 = vpop.f32.mrb[0].mxu0
        %v568 = vadd.f32 0.0, %v567
        %v569 = vpop.f32.mrb[0].mxu0
        %570 = vmatprep.mubr.bf16.mxu0 0
        %571 = vmatmul.mubr.bf16.gmra.mrb[0].mxu0 %v451
        %v572 = vpop.f32.mrb[0].mxu0
        %v573 = vadd.f32 0.0, %v572
        %v574 = vpop.f32.mrb[0].mxu0
        %v575 = vpop.f32.mrb[0].mxu0
        %v576 = vadd.f32 0.0, %v575
        %v577 = vpop.f32.mrb[0].mxu0
        %578 = vmatprep.mubr.bf16.mxu0 0
        %579 = vmatmul.mubr.bf16.gmra.mrb[0].mxu0 %v454
        %v580 = vpop.f32.mrb[0].mxu0
        %v581 = vadd.f32 0.0, %v580
        %v582 = vpop.f32.mrb[0].mxu0
        %v583 = vpop.f32.mrb[0].mxu0
        %v584 = vadd.f32 0.0, %v583
        %v585 = vpop.f32.mrb[0].mxu0
        %586 = vmatprep.mubr.bf16.mxu0 0
        %587 = vmatmul.mubr.bf16.gmra.mrb[0].mxu0 %v457
        %v588 = vpop.f32.mrb[0].mxu0
        %v589 = vadd.f32 0.0, %v588
        %v590 = vpop.f32.mrb[0].mxu0
        %v591 = vpop.f32.mrb[0].mxu0
        %v592 = vadd.f32 0.0, %v591
        %v593 = vpop.f32.mrb[0].mxu0
        %594 = vmatprep.mubr.bf16.mxu0 0
        %595 = vmatmul.mubr.bf16.gmra.mrb[0].mxu0 %v460
        %v596 = vpop.f32.mrb[0].mxu0
        %v597 = vadd.f32 0.0, %v596
        %v598 = vpop.f32.mrb[0].mxu0
        %v599 = vpop.f32.mrb[0].mxu0
        %v600 = vadd.f32 0.0, %v599
        %v601 = vpop.f32.mrb[0].mxu0
        %602 = vmatprep.mubr.bf16.mxu0 0
        %603 = vmatmul.mubr.bf16.gmra.mrb[0].mxu0 %v463
        %v604 = vpop.f32.mrb[0].mxu0
        %v605 = vadd.f32 0.0, %v604
        %v606 = vpop.f32.mrb[0].mxu0
        %v607 = vpop.f32.mrb[0].mxu0
        %v608 = vadd.f32 0.0, %v607
        %v609 = vpop.f32.mrb[0].mxu0
        %610 = vmatprep.mubr.bf16.mxu0 0
        %611 = vmatmul.mubr.bf16.gmra.mrb[0].mxu0 %v466
        %v612 = vpop.f32.mrb[0].mxu0
        %v613 = vadd.f32 0.0, %v612
        %v614 = vpop.f32.mrb[0].mxu0
        %v615 = vpop.f32.mrb[0].mxu0
        %v616 = vadd.f32 0.0, %v615
        %v617 = vpop.f32.mrb[0].mxu0
        %618 = vmatprep.mubr.bf16.mxu0 0
        %619 = vmatmul.mubr.bf16.gmra.mrb[0].mxu0 %v469
        %v620 = vpop.f32.mrb[0].mxu0
        %v621 = vadd.f32 0.0, %v620
        %v622 = vpop.f32.mrb[0].mxu0
        %v623 = vpop.f32.mrb[0].mxu0
        %v624 = vadd.f32 0.0, %v623
        %v625 = vpop.f32.mrb[0].mxu0
        %626 = vmatprep.mubr.bf16.mxu0 0
        %627 = vmatmul.mubr.bf16.gmra.mrb[0].mxu0 %v472
        %v628 = vpop.f32.mrb[0].mxu0
        %v629 = vadd.f32 0.0, %v628
        %v630 = vpop.f32.mrb[0].mxu0
        %v631 = vpop.f32.mrb[0].mxu0
        %v632 = vadd.f32 0.0, %v631
        %v633 = vpop.f32.mrb[0].mxu0
        %634 = vmatprep.mubr.bf16.mxu0 0
        %635 = vmatmul.mubr.bf16.gmra.mrb[0].mxu0 %v475
        %v636 = vpop.f32.mrb[0].mxu0
        %v637 = vadd.f32 0.0, %v636
        %v638 = vpop.f32.mrb[0].mxu0
        %v639 = vpop.f32.mrb[0].mxu0
        %v640 = vadd.f32 0.0, %v639
        %v641 = vpop.f32.mrb[0].mxu0
        %642 = vmatprep.mubr.bf16.mxu0 0
        %643 = vmatmul.mubr.bf16.gmra.mrb[0].mxu0 %v478
        %v644 = vpop.f32.mrb[0].mxu0
        %v645 = vadd.f32 0.0, %v644
        %v646 = vpop.f32.mrb[0].mxu0
        %v647 = vpop.f32.mrb[0].mxu0
        %v648 = vadd.f32 0.0, %v647
        %v649 = vpop.f32.mrb[0].mxu0
        %650 = vmatprep.mubr.bf16.mxu0 0
        %651 = vmatmul.mubr.bf16.gmra.mrb[0].mxu0 %v481
        %v652 = vpop.f32.mrb[0].mxu0
        %v653 = vadd.f32 0.0, %v652
        %v654 = vpop.f32.mrb[0].mxu0
        %v655 = vpop.f32.mrb[0].mxu0
        %v656 = vadd.f32 0.0, %v655
        %v657 = vpop.f32.mrb[0].mxu0
        %658 = vmatprep.mubr.bf16.mxu0 0
        %659 = vmatmul.mubr.bf16.gmra.mrb[0].mxu0 %v484
        %v660 = vpop.f32.mrb[0].mxu0
        %v661 = vadd.f32 0.0, %v660
        %v662 = vpop.f32.mrb[0].mxu0
        %v663 = vpop.f32.mrb[0].mxu0
        %v664 = vadd.f32 0.0, %v663
        %v665 = vpop.f32.mrb[0].mxu0
        %666 = vmatprep.mubr.bf16.mxu0 0
        %667 = vmatmul.mubr.bf16.gmra.mrb[0].mxu0 %v487
        %v668 = vpop.f32.mrb[0].mxu0
        %v669 = vadd.f32 0.0, %v668
        %v670 = vpop.f32.mrb[0].mxu0
        %v671 = vpop.f32.mrb[0].mxu0
        %v672 = vadd.f32 0.0, %v671
        %v673 = vpop.f32.mrb[0].mxu0
        %674 = vmatprep.mubr.bf16.mxu0 0
        %675 = vmatmul.mubr.bf16.gmra.mrb[0].mxu0 %v490
        %v676 = vpop.f32.mrb[0].mxu0
        %v677 = vadd.f32 0.0, %v676
        %v678 = vpop.f32.mrb[0].mxu0
        %v679 = vpop.f32.mrb[0].mxu0
        %v680 = vadd.f32 0.0, %v679
        %v681 = vpop.f32.mrb[0].mxu0
        %682 = vmatprep.mubr.bf16.mxu0 0
        %683 = vmatmul.mubr.bf16.gmra.mrb[0].mxu0 %v493
        %v684 = vpop.f32.mrb[0].mxu0
        %v685 = vadd.f32 0.0, %v684
        %v686 = vpop.f32.mrb[0].mxu0
        %v687 = vpop.f32.mrb[0].mxu0
        %v688 = vadd.f32 0.0, %v687
        %v689 = vpop.f32.mrb[0].mxu0
        %690 = vmatprep.mubr.bf16.mxu0 0
        %691 = vmatmul.mubr.bf16.gmra.mrb[0].mxu0 %v496
        %v692 = vpop.f32.mrb[0].mxu0
        %v693 = vadd.f32 0.0, %v692
        %v694 = vpop.f32.mrb[0].mxu0
        %v695 = vpop.f32.mrb[0].mxu0
        %v696 = vpop.f32.mrb[0].mxu0
        %697 = vdwg.mxu0
        %v698 = vpack.c.bf16 %v536, %v533
        %v699 = vpack.c.bf16 %v544, %v541
        %v700 = vpack.c.bf16 %v552, %v549
        %v701 = vpack.c.bf16 %v560, %v557
        %v702 = vpack.c.bf16 %v568, %v565
        %v703 = vpack.c.bf16 %v576, %v573
        %v704 = vpack.c.bf16 %v584, %v581
        %v705 = vpack.c.bf16 %v592, %v589
        %v706 = vpack.c.bf16 %v600, %v597
        %v707 = vpack.c.bf16 %v608, %v605
        %v708 = vpack.c.bf16 %v616, %v613
        %v709 = vpack.c.bf16 %v624, %v621
        %v710 = vpack.c.bf16 %v632, %v629
        %v711 = vpack.c.bf16 %v640, %v637
        %v712 = vpack.c.bf16 %v648, %v645
        %v713 = vpack.c.bf16 %v656, %v653
        %v714 = vpack.c.bf16 %v664, %v661
        %v715 = vpack.c.bf16 %v672, %v669
        %v716 = vpack.c.bf16 %v680, %v677
        %v717 = vpack.c.bf16 %v688, %v685
        %v718 = vpack.c.bf16 %v693, %v693
        %v719 = vld [vmem:[%s3] sm:$0xff]
        %v720 = vld [vmem:[%s3 + $0x8] sm:$0xf]
        %v721 = vld [vmem:[%s3 + $0xc] sm:$0xff]
        %v722 = vld [vmem:[%s3 + $0x14] sm:$0xf]
        %v723 = vld [vmem:[%s3 + $0x18] sm:$0xff]
        %v724 = vld [vmem:[%s3 + $0x20] sm:$0xf]
        %v725 = vld [vmem:[%s3 + $0x24] sm:$0xff]
        %v726 = vld [vmem:[%s3 + $0x2c] sm:$0xf]
        %v735 = vunpack.c.l.b16 %v719
        %v736 = vunpack.c.h.b16 %v719
        %v737 = vunpack.c.l.b16 %v720
        %v738 = vunpack.c.l.b16 %v721
        %v739 = vunpack.c.h.b16 %v721
        %v740 = vunpack.c.l.b16 %v722
        %v741 = vunpack.c.l.b16 %v723
        %v742 = vunpack.c.h.b16 %v723
        %v743 = vunpack.c.l.b16 %v724
        %v744 = vunpack.c.l.b16 %v725
        %v745 = vunpack.c.h.b16 %v725
        %v746 = vunpack.c.l.b16 %v726
        %v747 = vpack.c.b16 %v738, %v735
        %v748 = vpack.c.b16 %v739, %v736
        %v749 = vpack.c.b16 %v740, %v737
        %v750 = vpack.c.b16 %v744, %v741
        %v751 = vpack.c.b16 %v745, %v742
        %v752 = vpack.c.b16 %v746, %v743
        %vm759 = vcmask 261120
        %v761 = vsel %vm759, %v698, 0
        %v764 = vsel %vm759, %v699, 0
        %v767 = vsel %vm759, %v700, 0
        %v770 = vsel %vm759, %v701, 0
        %v773 = vsel %vm759, %v702, 0
        %v776 = vsel %vm759, %v703, 0
        %v779 = vsel %vm759, %v704, 0
        %v782 = vsel %vm759, %v705, 0
        %v785 = vsel %vm759, %v706, 0
        %v788 = vsel %vm759, %v707, 0
        %v791 = vsel %vm759, %v708, 0
        %v794 = vsel %vm759, %v709, 0
        %v797 = vsel %vm759, %v710, 0
        %v800 = vsel %vm759, %v711, 0
        %v803 = vsel %vm759, %v712, 0
        %v806 = vsel %vm759, %v713, 0
        %v809 = vsel %vm759, %v714, 0
        %v812 = vsel %vm759, %v715, 0
        %v815 = vsel %vm759, %v716, 0
        %v818 = vsel %vm759, %v717, 0
        %v821 = vsel %vm759, %v718, 0
        %823 = vmatprep.subr.bf16.mxu0 %v748
        %824 = vmatpush1.bf16.msra.mxu0 %v747
        %825 = vmatprep.subr.bf16.mxu0 %v751
        %826 = vmatpush1.bf16.msra.mxu0 %v750
        %827 = vmatprep.subr.bf16.mxu0 0
        %828 = vmatpush1.bf16.msra.mxu0 0
        %829 = vmatprep.subr.bf16.mxu0 0
        %830 = vmatpush1.bf16.msra.mxu0 0
        %831 = vmatprep.subr.bf16.mxu0 0
        %832 = vmatpush1.bf16.msra.mxu0 0
        %833 = vmatprep.subr.bf16.mxu0 0
        %834 = vmatpush1.bf16.msra.mxu0 0
        %835 = vmatprep.subr.bf16.mxu0 0
        %836 = vmatpush1.bf16.msra.mxu0 0
        %837 = vmatprep.subr.bf16.mxu0 0
        %838 = vmatpush1.bf16.msra.mxu0 0
        %839 = vmatprep.subr.bf16.mxu0 0
        %840 = vmatpush1.bf16.msra.mxu0 0
        %841 = vmatprep.subr.bf16.mxu0 0
        %842 = vmatpush1.bf16.msra.mxu0 0
        %843 = vmatprep.subr.bf16.mxu0 0
        %844 = vmatpush1.bf16.msra.mxu0 0
        %845 = vmatprep.subr.bf16.mxu0 0
        %846 = vmatpush1.bf16.msra.mxu0 0
        %847 = vmatprep.subr.bf16.mxu0 0
        %848 = vmatpush1.bf16.msra.mxu0 0
        %849 = vmatprep.subr.bf16.mxu0 0
        %850 = vmatpush1.bf16.msra.mxu0 0
        %851 = vmatprep.subr.bf16.mxu0 0
        %852 = vmatpush1.bf16.msra.mxu0 0
        %853 = vmatprep.subr.bf16.mxu0 0
        %854 = vmatpush1.bf16.msra.mxu0 0
        %855 = vmatprep.mubr.bf16.mxu0 0
        %856 = vmatmul.mubr.bf16.gmra.mrb[0].mxu0 %v761
        %v857 = vpop.f32.mrb[0].mxu0
        %v858 = vadd.f32 0.0, %v857
        %v859 = vpop.f32.mrb[0].mxu0
        %v860 = vadd.f32 0.0, %v859
        %v861 = vpop.f32.mrb[0].mxu0
        %v862 = vadd.f32 0.0, %v861
        %v863 = vpop.f32.mrb[0].mxu0
        %v864 = vadd.f32 0.0, %v863
        %865 = vmatprep.mubr.bf16.mxu0 0
        %866 = vmatmul.mubr.bf16.gmra.mrb[0].mxu0 %v764
        %v867 = vpop.f32.mrb[0].mxu0
        %v868 = vadd.f32 0.0, %v867
        %v869 = vpop.f32.mrb[0].mxu0
        %v870 = vadd.f32 0.0, %v869
        %v871 = vpop.f32.mrb[0].mxu0
        %v872 = vadd.f32 0.0, %v871
        %v873 = vpop.f32.mrb[0].mxu0
        %v874 = vadd.f32 0.0, %v873
        %875 = vmatprep.mubr.bf16.mxu0 0
        %876 = vmatmul.mubr.bf16.gmra.mrb[0].mxu0 %v767
        %v877 = vpop.f32.mrb[0].mxu0
        %v878 = vadd.f32 0.0, %v877
        %v879 = vpop.f32.mrb[0].mxu0
        %v880 = vadd.f32 0.0, %v879
        %v881 = vpop.f32.mrb[0].mxu0
        %v882 = vadd.f32 0.0, %v881
        %v883 = vpop.f32.mrb[0].mxu0
        %v884 = vadd.f32 0.0, %v883
        %885 = vmatprep.mubr.bf16.mxu0 0
        %886 = vmatmul.mubr.bf16.gmra.mrb[0].mxu0 %v770
        %v887 = vpop.f32.mrb[0].mxu0
        %v888 = vadd.f32 0.0, %v887
        %v889 = vpop.f32.mrb[0].mxu0
        %v890 = vadd.f32 0.0, %v889
        %v891 = vpop.f32.mrb[0].mxu0
        %v892 = vadd.f32 0.0, %v891
        %v893 = vpop.f32.mrb[0].mxu0
        %v894 = vadd.f32 0.0, %v893
        %895 = vmatprep.mubr.bf16.mxu0 0
        %896 = vmatmul.mubr.bf16.gmra.mrb[0].mxu0 %v773
        %v897 = vpop.f32.mrb[0].mxu0
        %v898 = vadd.f32 0.0, %v897
        %v899 = vpop.f32.mrb[0].mxu0
        %v900 = vadd.f32 0.0, %v899
        %v901 = vpop.f32.mrb[0].mxu0
        %v902 = vadd.f32 0.0, %v901
        %v903 = vpop.f32.mrb[0].mxu0
        %v904 = vadd.f32 0.0, %v903
        %905 = vmatprep.mubr.bf16.mxu0 0
        %906 = vmatmul.mubr.bf16.gmra.mrb[0].mxu0 %v776
        %v907 = vpop.f32.mrb[0].mxu0
        %v908 = vadd.f32 0.0, %v907
        %v909 = vpop.f32.mrb[0].mxu0
        %v910 = vadd.f32 0.0, %v909
        %v911 = vpop.f32.mrb[0].mxu0
        %v912 = vadd.f32 0.0, %v911
        %v913 = vpop.f32.mrb[0].mxu0
        %v914 = vadd.f32 0.0, %v913
        %915 = vmatprep.mubr.bf16.mxu0 0
        %916 = vmatmul.mubr.bf16.gmra.mrb[0].mxu0 %v779
        %v917 = vpop.f32.mrb[0].mxu0
        %v918 = vadd.f32 0.0, %v917
        %v919 = vpop.f32.mrb[0].mxu0
        %v920 = vadd.f32 0.0, %v919
        %v921 = vpop.f32.mrb[0].mxu0
        %v922 = vadd.f32 0.0, %v921
        %v923 = vpop.f32.mrb[0].mxu0
        %v924 = vadd.f32 0.0, %v923
        %925 = vmatprep.mubr.bf16.mxu0 0
        %926 = vmatmul.mubr.bf16.gmra.mrb[0].mxu0 %v782
        %v927 = vpop.f32.mrb[0].mxu0
        %v928 = vadd.f32 0.0, %v927
        %v929 = vpop.f32.mrb[0].mxu0
        %v930 = vadd.f32 0.0, %v929
        %v931 = vpop.f32.mrb[0].mxu0
        %v932 = vadd.f32 0.0, %v931
        %v933 = vpop.f32.mrb[0].mxu0
        %v934 = vadd.f32 0.0, %v933
        %935 = vmatprep.mubr.bf16.mxu0 0
        %936 = vmatmul.mubr.bf16.gmra.mrb[0].mxu0 %v785
        %v937 = vpop.f32.mrb[0].mxu0
        %v938 = vadd.f32 0.0, %v937
        %v939 = vpop.f32.mrb[0].mxu0
        %v940 = vadd.f32 0.0, %v939
        %v941 = vpop.f32.mrb[0].mxu0
        %v942 = vadd.f32 0.0, %v941
        %v943 = vpop.f32.mrb[0].mxu0
        %v944 = vadd.f32 0.0, %v943
        %945 = vmatprep.mubr.bf16.mxu0 0
        %946 = vmatmul.mubr.bf16.gmra.mrb[0].mxu0 %v788
        %v947 = vpop.f32.mrb[0].mxu0
        %v948 = vadd.f32 0.0, %v947
        %v949 = vpop.f32.mrb[0].mxu0
        %v950 = vadd.f32 0.0, %v949
        %v951 = vpop.f32.mrb[0].mxu0
        %v952 = vadd.f32 0.0, %v951
        %v953 = vpop.f32.mrb[0].mxu0
        %v954 = vadd.f32 0.0, %v953
        %955 = vmatprep.mubr.bf16.mxu0 0
        %956 = vmatmul.mubr.bf16.gmra.mrb[0].mxu0 %v791
        %v957 = vpop.f32.mrb[0].mxu0
        %v958 = vadd.f32 0.0, %v957
        %v959 = vpop.f32.mrb[0].mxu0
        %v960 = vadd.f32 0.0, %v959
        %v961 = vpop.f32.mrb[0].mxu0
        %v962 = vadd.f32 0.0, %v961
        %v963 = vpop.f32.mrb[0].mxu0
        %v964 = vadd.f32 0.0, %v963
        %965 = vmatprep.mubr.bf16.mxu0 0
        %966 = vmatmul.mubr.bf16.gmra.mrb[0].mxu0 %v794
        %v967 = vpop.f32.mrb[0].mxu0
        %v968 = vadd.f32 0.0, %v967
        %v969 = vpop.f32.mrb[0].mxu0
        %v970 = vadd.f32 0.0, %v969
        %v971 = vpop.f32.mrb[0].mxu0
        %v972 = vadd.f32 0.0, %v971
        %v973 = vpop.f32.mrb[0].mxu0
        %v974 = vadd.f32 0.0, %v973
        %975 = vmatprep.mubr.bf16.mxu0 0
        %976 = vmatmul.mubr.bf16.gmra.mrb[0].mxu0 %v797
        %v977 = vpop.f32.mrb[0].mxu0
        %v978 = vadd.f32 0.0, %v977
        %v979 = vpop.f32.mrb[0].mxu0
        %v980 = vadd.f32 0.0, %v979
        %v981 = vpop.f32.mrb[0].mxu0
        %v982 = vadd.f32 0.0, %v981
        %v983 = vpop.f32.mrb[0].mxu0
        %v984 = vadd.f32 0.0, %v983
        %985 = vmatprep.mubr.bf16.mxu0 0
        %986 = vmatmul.mubr.bf16.gmra.mrb[0].mxu0 %v800
        %v987 = vpop.f32.mrb[0].mxu0
        %v988 = vadd.f32 0.0, %v987
        %v989 = vpop.f32.mrb[0].mxu0
        %v990 = vadd.f32 0.0, %v989
        %v991 = vpop.f32.mrb[0].mxu0
        %v992 = vadd.f32 0.0, %v991
        %v993 = vpop.f32.mrb[0].mxu0
        %v994 = vadd.f32 0.0, %v993
        %995 = vmatprep.mubr.bf16.mxu0 0
        %996 = vmatmul.mubr.bf16.gmra.mrb[0].mxu0 %v803
        %v997 = vpop.f32.mrb[0].mxu0
        %v998 = vadd.f32 0.0, %v997
        %v999 = vpop.f32.mrb[0].mxu0
        %v1000 = vadd.f32 0.0, %v999
        %v1001 = vpop.f32.mrb[0].mxu0
        %v1002 = vadd.f32 0.0, %v1001
        %v1003 = vpop.f32.mrb[0].mxu0
        %v1004 = vadd.f32 0.0, %v1003
        %1005 = vmatprep.mubr.bf16.mxu0 0
        %1006 = vmatmul.mubr.bf16.gmra.mrb[0].mxu0 %v806
        %v1007 = vpop.f32.mrb[0].mxu0
        %v1008 = vadd.f32 0.0, %v1007
        %v1009 = vpop.f32.mrb[0].mxu0
        %v1010 = vadd.f32 0.0, %v1009
        %v1011 = vpop.f32.mrb[0].mxu0
        %v1012 = vadd.f32 0.0, %v1011
        %v1013 = vpop.f32.mrb[0].mxu0
        %v1014 = vadd.f32 0.0, %v1013
        %1015 = vmatprep.mubr.bf16.mxu0 0
        %1016 = vmatmul.mubr.bf16.gmra.mrb[0].mxu0 %v809
        %v1017 = vpop.f32.mrb[0].mxu0
        %v1018 = vadd.f32 0.0, %v1017
        %v1019 = vpop.f32.mrb[0].mxu0
        %v1020 = vadd.f32 0.0, %v1019
        %v1021 = vpop.f32.mrb[0].mxu0
        %v1022 = vadd.f32 0.0, %v1021
        %v1023 = vpop.f32.mrb[0].mxu0
        %v1024 = vadd.f32 0.0, %v1023
        %1025 = vmatprep.mubr.bf16.mxu0 0
        %1026 = vmatmul.mubr.bf16.gmra.mrb[0].mxu0 %v812
        %v1027 = vpop.f32.mrb[0].mxu0
        %v1028 = vadd.f32 0.0, %v1027
        %v1029 = vpop.f32.mrb[0].mxu0
        %v1030 = vadd.f32 0.0, %v1029
        %v1031 = vpop.f32.mrb[0].mxu0
        %v1032 = vadd.f32 0.0, %v1031
        %v1033 = vpop.f32.mrb[0].mxu0
        %v1034 = vadd.f32 0.0, %v1033
        %1035 = vmatprep.mubr.bf16.mxu0 0
        %1036 = vmatmul.mubr.bf16.gmra.mrb[0].mxu0 %v815
        %v1037 = vpop.f32.mrb[0].mxu0
        %v1038 = vpop.f32.mrb[0].mxu0
        %v1039 = vadd.f32 0.0, %v1038
        %v1040 = vpop.f32.mrb[0].mxu0
        %v1041 = vpop.f32.mrb[0].mxu0
        %1042 = vmatprep.mubr.bf16.mxu0 0
        %1043 = vmatmul.mubr.bf16.gmra.mrb[0].mxu0 %v818
        %v1044 = vpop.f32.mrb[0].mxu0
        %v1045 = vpop.f32.mrb[0].mxu0
        %v1046 = vpop.f32.mrb[0].mxu0
        %v1047 = vpop.f32.mrb[0].mxu0
        %1048 = vmatprep.mubr.bf16.mxu0 0
        %1049 = vmatmul.mubr.bf16.gmra.mrb[0].mxu0 %v821
        %v1050 = vpop.f32.mrb[0].mxu0
        %v1051 = vpop.f32.mrb[0].mxu0
        %v1052 = vpop.f32.mrb[0].mxu0
        %v1053 = vpop.f32.mrb[0].mxu0
        %1054 = vdwg.mxu0
        %1055 = vmatprep.subr.bf16.mxu0 0
        %1056 = vmatpush1.bf16.msra.mxu0 %v749
        %1057 = vmatprep.subr.bf16.mxu0 0
        %1058 = vmatpush1.bf16.msra.mxu0 %v752
        %1059 = vmatprep.subr.bf16.mxu0 0
        %1060 = vmatpush1.bf16.msra.mxu0 0
        %1061 = vmatprep.subr.bf16.mxu0 0
        %1062 = vmatpush1.bf16.msra.mxu0 0
        %1063 = vmatprep.subr.bf16.mxu0 0
        %1064 = vmatpush1.bf16.msra.mxu0 0
        %1065 = vmatprep.subr.bf16.mxu0 0
        %1066 = vmatpush1.bf16.msra.mxu0 0
        %1067 = vmatprep.subr.bf16.mxu0 0
        %1068 = vmatpush1.bf16.msra.mxu0 0
        %1069 = vmatprep.subr.bf16.mxu0 0
        %1070 = vmatpush1.bf16.msra.mxu0 0
        %1071 = vmatprep.subr.bf16.mxu0 0
        %1072 = vmatpush1.bf16.msra.mxu0 0
        %1073 = vmatprep.subr.bf16.mxu0 0
        %1074 = vmatpush1.bf16.msra.mxu0 0
        %1075 = vmatprep.subr.bf16.mxu0 0
        %1076 = vmatpush1.bf16.msra.mxu0 0
        %1077 = vmatprep.subr.bf16.mxu0 0
        %1078 = vmatpush1.bf16.msra.mxu0 0
        %1079 = vmatprep.subr.bf16.mxu0 0
        %1080 = vmatpush1.bf16.msra.mxu0 0
        %1081 = vmatprep.subr.bf16.mxu0 0
        %1082 = vmatpush1.bf16.msra.mxu0 0
        %1083 = vmatprep.subr.bf16.mxu0 0
        %1084 = vmatpush1.bf16.msra.mxu0 0
        %1085 = vmatprep.subr.bf16.mxu0 0
        %1086 = vmatpush1.bf16.msra.mxu0 0
        %1087 = vmatprep.mubr.bf16.mxu0 0
        %1088 = vmatmul.mubr.bf16.gmra.mrb[0].mxu0 %v761
        %v1089 = vpop.f32.mrb[0].mxu0
        %v1090 = vadd.f32 0.0, %v1089
        %v1091 = vpop.f32.mrb[0].mxu0
        %v1092 = vpop.f32.mrb[0].mxu0
        %v1093 = vadd.f32 0.0, %v1092
        %v1094 = vpop.f32.mrb[0].mxu0
        %1095 = vmatprep.mubr.bf16.mxu0 0
        %1096 = vmatmul.mubr.bf16.gmra.mrb[0].mxu0 %v764
        %v1097 = vpop.f32.mrb[0].mxu0
        %v1098 = vadd.f32 0.0, %v1097
        %v1099 = vpop.f32.mrb[0].mxu0
        %v1100 = vpop.f32.mrb[0].mxu0
        %v1101 = vadd.f32 0.0, %v1100
        %v1102 = vpop.f32.mrb[0].mxu0
        %1103 = vmatprep.mubr.bf16.mxu0 0
        %1104 = vmatmul.mubr.bf16.gmra.mrb[0].mxu0 %v767
        %v1105 = vpop.f32.mrb[0].mxu0
        %v1106 = vadd.f32 0.0, %v1105
        %v1107 = vpop.f32.mrb[0].mxu0
        %v1108 = vpop.f32.mrb[0].mxu0
        %v1109 = vadd.f32 0.0, %v1108
        %v1110 = vpop.f32.mrb[0].mxu0
        %1111 = vmatprep.mubr.bf16.mxu0 0
        %1112 = vmatmul.mubr.bf16.gmra.mrb[0].mxu0 %v770
        %v1113 = vpop.f32.mrb[0].mxu0
        %v1114 = vadd.f32 0.0, %v1113
        %v1115 = vpop.f32.mrb[0].mxu0
        %v1116 = vpop.f32.mrb[0].mxu0
        %v1117 = vadd.f32 0.0, %v1116
        %v1118 = vpop.f32.mrb[0].mxu0
        %1119 = vmatprep.mubr.bf16.mxu0 0
        %1120 = vmatmul.mubr.bf16.gmra.mrb[0].mxu0 %v773
        %v1121 = vpop.f32.mrb[0].mxu0
        %v1122 = vadd.f32 0.0, %v1121
        %v1123 = vpop.f32.mrb[0].mxu0
        %v1124 = vpop.f32.mrb[0].mxu0
        %v1125 = vadd.f32 0.0, %v1124
        %v1126 = vpop.f32.mrb[0].mxu0
        %1127 = vmatprep.mubr.bf16.mxu0 0
        %1128 = vmatmul.mubr.bf16.gmra.mrb[0].mxu0 %v776
        %v1129 = vpop.f32.mrb[0].mxu0
        %v1130 = vadd.f32 0.0, %v1129
        %v1131 = vpop.f32.mrb[0].mxu0
        %v1132 = vpop.f32.mrb[0].mxu0
        %v1133 = vadd.f32 0.0, %v1132
        %v1134 = vpop.f32.mrb[0].mxu0
        %1135 = vmatprep.mubr.bf16.mxu0 0
        %1136 = vmatmul.mubr.bf16.gmra.mrb[0].mxu0 %v779
        %v1137 = vpop.f32.mrb[0].mxu0
        %v1138 = vadd.f32 0.0, %v1137
        %v1139 = vpop.f32.mrb[0].mxu0
        %v1140 = vpop.f32.mrb[0].mxu0
        %v1141 = vadd.f32 0.0, %v1140
        %v1142 = vpop.f32.mrb[0].mxu0
        %1143 = vmatprep.mubr.bf16.mxu0 0
        %1144 = vmatmul.mubr.bf16.gmra.mrb[0].mxu0 %v782
        %v1145 = vpop.f32.mrb[0].mxu0
        %v1146 = vadd.f32 0.0, %v1145
        %v1147 = vpop.f32.mrb[0].mxu0
        %v1148 = vpop.f32.mrb[0].mxu0
        %v1149 = vadd.f32 0.0, %v1148
        %v1150 = vpop.f32.mrb[0].mxu0
        %1151 = vmatprep.mubr.bf16.mxu0 0
        %1152 = vmatmul.mubr.bf16.gmra.mrb[0].mxu0 %v785
        %v1153 = vpop.f32.mrb[0].mxu0
        %v1154 = vadd.f32 0.0, %v1153
        %v1155 = vpop.f32.mrb[0].mxu0
        %v1156 = vpop.f32.mrb[0].mxu0
        %v1157 = vadd.f32 0.0, %v1156
        %v1158 = vpop.f32.mrb[0].mxu0
        %1159 = vmatprep.mubr.bf16.mxu0 0
        %1160 = vmatmul.mubr.bf16.gmra.mrb[0].mxu0 %v788
        %v1161 = vpop.f32.mrb[0].mxu0
        %v1162 = vadd.f32 0.0, %v1161
        %v1163 = vpop.f32.mrb[0].mxu0
        %v1164 = vpop.f32.mrb[0].mxu0
        %v1165 = vadd.f32 0.0, %v1164
        %v1166 = vpop.f32.mrb[0].mxu0
        %1167 = vmatprep.mubr.bf16.mxu0 0
        %1168 = vmatmul.mubr.bf16.gmra.mrb[0].mxu0 %v791
        %v1169 = vpop.f32.mrb[0].mxu0
        %v1170 = vadd.f32 0.0, %v1169
        %v1171 = vpop.f32.mrb[0].mxu0
        %v1172 = vpop.f32.mrb[0].mxu0
        %v1173 = vadd.f32 0.0, %v1172
        %v1174 = vpop.f32.mrb[0].mxu0
        %1175 = vmatprep.mubr.bf16.mxu0 0
        %1176 = vmatmul.mubr.bf16.gmra.mrb[0].mxu0 %v794
        %v1177 = vpop.f32.mrb[0].mxu0
        %v1178 = vadd.f32 0.0, %v1177
        %v1179 = vpop.f32.mrb[0].mxu0
        %v1180 = vpop.f32.mrb[0].mxu0
        %v1181 = vadd.f32 0.0, %v1180
        %v1182 = vpop.f32.mrb[0].mxu0
        %1183 = vmatprep.mubr.bf16.mxu0 0
        %1184 = vmatmul.mubr.bf16.gmra.mrb[0].mxu0 %v797
        %v1185 = vpop.f32.mrb[0].mxu0
        %v1186 = vadd.f32 0.0, %v1185
        %v1187 = vpop.f32.mrb[0].mxu0
        %v1188 = vpop.f32.mrb[0].mxu0
        %v1189 = vadd.f32 0.0, %v1188
        %v1190 = vpop.f32.mrb[0].mxu0
        %1191 = vmatprep.mubr.bf16.mxu0 0
        %1192 = vmatmul.mubr.bf16.gmra.mrb[0].mxu0 %v800
        %v1193 = vpop.f32.mrb[0].mxu0
        %v1194 = vadd.f32 0.0, %v1193
        %v1195 = vpop.f32.mrb[0].mxu0
        %v1196 = vpop.f32.mrb[0].mxu0
        %v1197 = vadd.f32 0.0, %v1196
        %v1198 = vpop.f32.mrb[0].mxu0
        %1199 = vmatprep.mubr.bf16.mxu0 0
        %1200 = vmatmul.mubr.bf16.gmra.mrb[0].mxu0 %v803
        %v1201 = vpop.f32.mrb[0].mxu0
        %v1202 = vadd.f32 0.0, %v1201
        %v1203 = vpop.f32.mrb[0].mxu0
        %v1204 = vpop.f32.mrb[0].mxu0
        %v1205 = vadd.f32 0.0, %v1204
        %v1206 = vpop.f32.mrb[0].mxu0
        %1207 = vmatprep.mubr.bf16.mxu0 0
        %1208 = vmatmul.mubr.bf16.gmra.mrb[0].mxu0 %v806
        %v1209 = vpop.f32.mrb[0].mxu0
        %v1210 = vadd.f32 0.0, %v1209
        %v1211 = vpop.f32.mrb[0].mxu0
        %v1212 = vpop.f32.mrb[0].mxu0
        %v1213 = vadd.f32 0.0, %v1212
        %v1214 = vpop.f32.mrb[0].mxu0
        %1215 = vmatprep.mubr.bf16.mxu0 0
        %1216 = vmatmul.mubr.bf16.gmra.mrb[0].mxu0 %v809
        %v1217 = vpop.f32.mrb[0].mxu0
        %v1218 = vadd.f32 0.0, %v1217
        %v1219 = vpop.f32.mrb[0].mxu0
        %v1220 = vpop.f32.mrb[0].mxu0
        %v1221 = vadd.f32 0.0, %v1220
        %v1222 = vpop.f32.mrb[0].mxu0
        %1223 = vmatprep.mubr.bf16.mxu0 0
        %1224 = vmatmul.mubr.bf16.gmra.mrb[0].mxu0 %v812
        %v1225 = vpop.f32.mrb[0].mxu0
        %v1226 = vadd.f32 0.0, %v1225
        %v1227 = vpop.f32.mrb[0].mxu0
        %v1228 = vpop.f32.mrb[0].mxu0
        %v1229 = vadd.f32 0.0, %v1228
        %v1230 = vpop.f32.mrb[0].mxu0
        %1231 = vmatprep.mubr.bf16.mxu0 0
        %1232 = vmatmul.mubr.bf16.gmra.mrb[0].mxu0 %v815
        %v1233 = vpop.f32.mrb[0].mxu0
        %v1234 = vadd.f32 0.0, %v1233
        %v1235 = vpop.f32.mrb[0].mxu0
        %v1236 = vpop.f32.mrb[0].mxu0
        %v1237 = vpop.f32.mrb[0].mxu0
        %1238 = vmatprep.mubr.bf16.mxu0 0
        %1239 = vmatmul.mubr.bf16.gmra.mrb[0].mxu0 %v818
        %v1240 = vpop.f32.mrb[0].mxu0
        %v1241 = vpop.f32.mrb[0].mxu0
        %v1242 = vpop.f32.mrb[0].mxu0
        %v1243 = vpop.f32.mrb[0].mxu0
        %1244 = vmatprep.mubr.bf16.mxu0 0
        %1245 = vmatmul.mubr.bf16.gmra.mrb[0].mxu0 %v821
        %v1246 = vpop.f32.mrb[0].mxu0
        %v1247 = vpop.f32.mrb[0].mxu0
        %v1248 = vpop.f32.mrb[0].mxu0
        %v1249 = vpop.f32.mrb[0].mxu0
        %1250 = vdwg.mxu0
        %s1251 = scalar_lea.vmem %s3, 48
        %v1252 = vld [vmem:[%s1251] sm:$0xff]
        %v1253 = vld [vmem:[%s1251 + $0x8] sm:$0xf]
        %v1254 = vld [vmem:[%s1251 + $0xc] sm:$0xff]
        %v1255 = vld [vmem:[%s1251 + $0x14] sm:$0xf]
        %v1256 = vld [vmem:[%s1251 + $0x18] sm:$0xff]
        %v1257 = vld [vmem:[%s1251 + $0x20] sm:$0xf]
        %v1258 = vld [vmem:[%s1251 + $0x24] sm:$0xff]
        %v1259 = vld [vmem:[%s1251 + $0x2c] sm:$0xf]
        %v1268 = vunpack.c.l.b16 %v1252
        %v1269 = vunpack.c.h.b16 %v1252
        %v1270 = vunpack.c.l.b16 %v1253
        %v1271 = vunpack.c.l.b16 %v1254
        %v1272 = vunpack.c.h.b16 %v1254
        %v1273 = vunpack.c.l.b16 %v1255
        %v1274 = vunpack.c.l.b16 %v1256
        %v1275 = vunpack.c.h.b16 %v1256
        %v1276 = vunpack.c.l.b16 %v1257
        %v1277 = vunpack.c.l.b16 %v1258
        %v1278 = vunpack.c.h.b16 %v1258
        %v1279 = vunpack.c.l.b16 %v1259
        %v1280 = vpack.c.b16 %v1271, %v1268
        %v1281 = vpack.c.b16 %v1272, %v1269
        %v1282 = vpack.c.b16 %v1273, %v1270
        %v1283 = vpack.c.b16 %v1277, %v1274
        %v1284 = vpack.c.b16 %v1278, %v1275
        %v1285 = vpack.c.b16 %v1279, %v1276
        %1292 = vmatprep.subr.bf16.mxu0 %v1281
        %1293 = vmatpush1.bf16.msra.mxu0 %v1280
        %1294 = vmatprep.subr.bf16.mxu0 %v1284
        %1295 = vmatpush1.bf16.msra.mxu0 %v1283
        %1296 = vmatprep.subr.bf16.mxu0 0
        %1297 = vmatpush1.bf16.msra.mxu0 0
        %1298 = vmatprep.subr.bf16.mxu0 0
        %1299 = vmatpush1.bf16.msra.mxu0 0
        %1300 = vmatprep.subr.bf16.mxu0 0
        %1301 = vmatpush1.bf16.msra.mxu0 0
        %1302 = vmatprep.subr.bf16.mxu0 0
        %1303 = vmatpush1.bf16.msra.mxu0 0
        %1304 = vmatprep.subr.bf16.mxu0 0
        %1305 = vmatpush1.bf16.msra.mxu0 0
        %1306 = vmatprep.subr.bf16.mxu0 0
        %1307 = vmatpush1.bf16.msra.mxu0 0
        %1308 = vmatprep.subr.bf16.mxu0 0
        %1309 = vmatpush1.bf16.msra.mxu0 0
        %1310 = vmatprep.subr.bf16.mxu0 0
        %1311 = vmatpush1.bf16.msra.mxu0 0
        %1312 = vmatprep.subr.bf16.mxu0 0
        %1313 = vmatpush1.bf16.msra.mxu0 0
        %1314 = vmatprep.subr.bf16.mxu0 0
        %1315 = vmatpush1.bf16.msra.mxu0 0
        %1316 = vmatprep.subr.bf16.mxu0 0
        %1317 = vmatpush1.bf16.msra.mxu0 0
        %1318 = vmatprep.subr.bf16.mxu0 0
        %1319 = vmatpush1.bf16.msra.mxu0 0
        %1320 = vmatprep.subr.bf16.mxu0 0
        %1321 = vmatpush1.bf16.msra.mxu0 0
        %1322 = vmatprep.subr.bf16.mxu0 0
        %1323 = vmatpush1.bf16.msra.mxu0 0
        %1324 = vmatprep.mubr.bf16.mxu0 0
        %1325 = vmatmul.mubr.bf16.gmra.mrb[0].mxu0 %v761
        %v1326 = vpop.f32.mrb[0].mxu0
        %v1327 = vpop.f32.mrb[0].mxu0
        %v1328 = vpop.f32.mrb[0].mxu0
        %v1329 = vpop.f32.mrb[0].mxu0
        %1330 = vmatprep.mubr.bf16.mxu0 0
        %1331 = vmatmul.mubr.bf16.gmra.mrb[0].mxu0 %v764
        %v1332 = vpop.f32.mrb[0].mxu0
        %v1333 = vadd.f32 0.0, %v1332
        %v1334 = vpop.f32.mrb[0].mxu0
        %v1335 = vadd.f32 0.0, %v1334
        %v1336 = vpop.f32.mrb[0].mxu0
        %v1337 = vadd.f32 0.0, %v1336
        %v1338 = vpop.f32.mrb[0].mxu0
        %v1339 = vadd.f32 0.0, %v1338
        %1340 = vmatprep.mubr.bf16.mxu0 0
        %1341 = vmatmul.mubr.bf16.gmra.mrb[0].mxu0 %v767
        %v1342 = vpop.f32.mrb[0].mxu0
        %v1343 = vadd.f32 0.0, %v1342
        %v1344 = vpop.f32.mrb[0].mxu0
        %v1345 = vadd.f32 0.0, %v1344
        %v1346 = vpop.f32.mrb[0].mxu0
        %v1347 = vadd.f32 0.0, %v1346
        %v1348 = vpop.f32.mrb[0].mxu0
        %v1349 = vadd.f32 0.0, %v1348
        %1350 = vmatprep.mubr.bf16.mxu0 0
        %1351 = vmatmul.mubr.bf16.gmra.mrb[0].mxu0 %v770
        %v1352 = vpop.f32.mrb[0].mxu0
        %v1353 = vadd.f32 0.0, %v1352
        %v1354 = vpop.f32.mrb[0].mxu0
        %v1355 = vadd.f32 0.0, %v1354
        %v1356 = vpop.f32.mrb[0].mxu0
        %v1357 = vadd.f32 0.0, %v1356
        %v1358 = vpop.f32.mrb[0].mxu0
        %v1359 = vadd.f32 0.0, %v1358
        %1360 = vmatprep.mubr.bf16.mxu0 0
        %1361 = vmatmul.mubr.bf16.gmra.mrb[0].mxu0 %v773
        %v1362 = vpop.f32.mrb[0].mxu0
        %v1363 = vadd.f32 0.0, %v1362
        %v1364 = vpop.f32.mrb[0].mxu0
        %v1365 = vadd.f32 0.0, %v1364
        %v1366 = vpop.f32.mrb[0].mxu0
        %v1367 = vadd.f32 0.0, %v1366
        %v1368 = vpop.f32.mrb[0].mxu0
        %v1369 = vadd.f32 0.0, %v1368
        %1370 = vmatprep.mubr.bf16.mxu0 0
        %1371 = vmatmul.mubr.bf16.gmra.mrb[0].mxu0 %v776
        %v1372 = vpop.f32.mrb[0].mxu0
        %v1373 = vadd.f32 0.0, %v1372
        %v1374 = vpop.f32.mrb[0].mxu0
        %v1375 = vadd.f32 0.0, %v1374
        %v1376 = vpop.f32.mrb[0].mxu0
        %v1377 = vadd.f32 0.0, %v1376
        %v1378 = vpop.f32.mrb[0].mxu0
        %v1379 = vadd.f32 0.0, %v1378
        %1380 = vmatprep.mubr.bf16.mxu0 0
        %1381 = vmatmul.mubr.bf16.gmra.mrb[0].mxu0 %v779
        %v1382 = vpop.f32.mrb[0].mxu0
        %v1383 = vadd.f32 0.0, %v1382
        %v1384 = vpop.f32.mrb[0].mxu0
        %v1385 = vadd.f32 0.0, %v1384
        %v1386 = vpop.f32.mrb[0].mxu0
        %v1387 = vadd.f32 0.0, %v1386
        %v1388 = vpop.f32.mrb[0].mxu0
        %v1389 = vadd.f32 0.0, %v1388
        %1390 = vmatprep.mubr.bf16.mxu0 0
        %1391 = vmatmul.mubr.bf16.gmra.mrb[0].mxu0 %v782
        %v1392 = vpop.f32.mrb[0].mxu0
        %v1393 = vadd.f32 0.0, %v1392
        %v1394 = vpop.f32.mrb[0].mxu0
        %v1395 = vadd.f32 0.0, %v1394
        %v1396 = vpop.f32.mrb[0].mxu0
        %v1397 = vadd.f32 0.0, %v1396
        %v1398 = vpop.f32.mrb[0].mxu0
        %v1399 = vadd.f32 0.0, %v1398
        %1400 = vmatprep.mubr.bf16.mxu0 0
        %1401 = vmatmul.mubr.bf16.gmra.mrb[0].mxu0 %v785
        %v1402 = vpop.f32.mrb[0].mxu0
        %v1403 = vadd.f32 0.0, %v1402
        %v1404 = vpop.f32.mrb[0].mxu0
        %v1405 = vadd.f32 0.0, %v1404
        %v1406 = vpop.f32.mrb[0].mxu0
        %v1407 = vadd.f32 0.0, %v1406
        %v1408 = vpop.f32.mrb[0].mxu0
        %v1409 = vadd.f32 0.0, %v1408
        %1410 = vmatprep.mubr.bf16.mxu0 0
        %1411 = vmatmul.mubr.bf16.gmra.mrb[0].mxu0 %v788
        %v1412 = vpop.f32.mrb[0].mxu0
        %v1413 = vadd.f32 0.0, %v1412
        %v1414 = vpop.f32.mrb[0].mxu0
        %v1415 = vadd.f32 0.0, %v1414
        %v1416 = vpop.f32.mrb[0].mxu0
        %v1417 = vadd.f32 0.0, %v1416
        %v1418 = vpop.f32.mrb[0].mxu0
        %v1419 = vadd.f32 0.0, %v1418
        %1420 = vmatprep.mubr.bf16.mxu0 0
        %1421 = vmatmul.mubr.bf16.gmra.mrb[0].mxu0 %v791
        %v1422 = vpop.f32.mrb[0].mxu0
        %v1423 = vadd.f32 0.0, %v1422
        %v1424 = vpop.f32.mrb[0].mxu0
        %v1425 = vadd.f32 0.0, %v1424
        %v1426 = vpop.f32.mrb[0].mxu0
        %v1427 = vadd.f32 0.0, %v1426
        %v1428 = vpop.f32.mrb[0].mxu0
        %v1429 = vadd.f32 0.0, %v1428
        %1430 = vmatprep.mubr.bf16.mxu0 0
        %1431 = vmatmul.mubr.bf16.gmra.mrb[0].mxu0 %v794
        %v1432 = vpop.f32.mrb[0].mxu0
        %v1433 = vadd.f32 0.0, %v1432
        %v1434 = vpop.f32.mrb[0].mxu0
        %v1435 = vadd.f32 0.0, %v1434
        %v1436 = vpop.f32.mrb[0].mxu0
        %v1437 = vadd.f32 0.0, %v1436
        %v1438 = vpop.f32.mrb[0].mxu0
        %v1439 = vadd.f32 0.0, %v1438
        %1440 = vmatprep.mubr.bf16.mxu0 0
        %1441 = vmatmul.mubr.bf16.gmra.mrb[0].mxu0 %v797
        %v1442 = vpop.f32.mrb[0].mxu0
        %v1443 = vadd.f32 0.0, %v1442
        %v1444 = vpop.f32.mrb[0].mxu0
        %v1445 = vadd.f32 0.0, %v1444
        %v1446 = vpop.f32.mrb[0].mxu0
        %v1447 = vadd.f32 0.0, %v1446
        %v1448 = vpop.f32.mrb[0].mxu0
        %v1449 = vadd.f32 0.0, %v1448
        %1450 = vmatprep.mubr.bf16.mxu0 0
        %1451 = vmatmul.mubr.bf16.gmra.mrb[0].mxu0 %v800
        %v1452 = vpop.f32.mrb[0].mxu0
        %v1453 = vadd.f32 0.0, %v1452
        %v1454 = vpop.f32.mrb[0].mxu0
        %v1455 = vadd.f32 0.0, %v1454
        %v1456 = vpop.f32.mrb[0].mxu0
        %v1457 = vadd.f32 0.0, %v1456
        %v1458 = vpop.f32.mrb[0].mxu0
        %v1459 = vadd.f32 0.0, %v1458
        %1460 = vmatprep.mubr.bf16.mxu0 0
        %1461 = vmatmul.mubr.bf16.gmra.mrb[0].mxu0 %v803
        %v1462 = vpop.f32.mrb[0].mxu0
        %v1463 = vadd.f32 0.0, %v1462
        %v1464 = vpop.f32.mrb[0].mxu0
        %v1465 = vadd.f32 0.0, %v1464
        %v1466 = vpop.f32.mrb[0].mxu0
        %v1467 = vadd.f32 0.0, %v1466
        %v1468 = vpop.f32.mrb[0].mxu0
        %v1469 = vadd.f32 0.0, %v1468
        %1470 = vmatprep.mubr.bf16.mxu0 0
        %1471 = vmatmul.mubr.bf16.gmra.mrb[0].mxu0 %v806
        %v1472 = vpop.f32.mrb[0].mxu0
        %v1473 = vadd.f32 0.0, %v1472
        %v1474 = vpop.f32.mrb[0].mxu0
        %v1475 = vadd.f32 0.0, %v1474
        %v1476 = vpop.f32.mrb[0].mxu0
        %v1477 = vadd.f32 0.0, %v1476
        %v1478 = vpop.f32.mrb[0].mxu0
        %v1479 = vadd.f32 0.0, %v1478
        %1480 = vmatprep.mubr.bf16.mxu0 0
        %1481 = vmatmul.mubr.bf16.gmra.mrb[0].mxu0 %v809
        %v1482 = vpop.f32.mrb[0].mxu0
        %v1483 = vadd.f32 0.0, %v1482
        %v1484 = vpop.f32.mrb[0].mxu0
        %v1485 = vadd.f32 0.0, %v1484
        %v1486 = vpop.f32.mrb[0].mxu0
        %v1487 = vadd.f32 0.0, %v1486
        %v1488 = vpop.f32.mrb[0].mxu0
        %v1489 = vadd.f32 0.0, %v1488
        %1490 = vmatprep.mubr.bf16.mxu0 0
        %1491 = vmatmul.mubr.bf16.gmra.mrb[0].mxu0 %v812
        %v1492 = vpop.f32.mrb[0].mxu0
        %v1493 = vadd.f32 0.0, %v1492
        %v1494 = vpop.f32.mrb[0].mxu0
        %v1495 = vadd.f32 0.0, %v1494
        %v1496 = vpop.f32.mrb[0].mxu0
        %v1497 = vadd.f32 0.0, %v1496
        %v1498 = vpop.f32.mrb[0].mxu0
        %v1499 = vadd.f32 0.0, %v1498
        %1500 = vmatprep.mubr.bf16.mxu0 0
        %1501 = vmatmul.mubr.bf16.gmra.mrb[0].mxu0 %v815
        %v1502 = vpop.f32.mrb[0].mxu0
        %v1503 = vadd.f32 0.0, %v1502
        %v1504 = vpop.f32.mrb[0].mxu0
        %v1505 = vadd.f32 0.0, %v1504
        %v1506 = vpop.f32.mrb[0].mxu0
        %v1507 = vadd.f32 0.0, %v1506
        %v1508 = vpop.f32.mrb[0].mxu0
        %v1509 = vadd.f32 0.0, %v1508
        %1510 = vmatprep.mubr.bf16.mxu0 0
        %1511 = vmatmul.mubr.bf16.gmra.mrb[0].mxu0 %v818
        %v1512 = vpop.f32.mrb[0].mxu0
        %v1513 = vadd.f32 0.0, %v1512
        %v1514 = vpop.f32.mrb[0].mxu0
        %v1515 = vadd.f32 0.0, %v1514
        %v1516 = vpop.f32.mrb[0].mxu0
        %v1517 = vpop.f32.mrb[0].mxu0
        %1518 = vmatprep.mubr.bf16.mxu0 0
        %1519 = vmatmul.mubr.bf16.gmra.mrb[0].mxu0 %v821
        %v1520 = vpop.f32.mrb[0].mxu0
        %v1521 = vpop.f32.mrb[0].mxu0
        %v1522 = vpop.f32.mrb[0].mxu0
        %v1523 = vpop.f32.mrb[0].mxu0
        %1524 = vdwg.mxu0
        %1525 = vmatprep.subr.bf16.mxu0 0
        %1526 = vmatpush1.bf16.msra.mxu0 %v1282
        %1527 = vmatprep.subr.bf16.mxu0 0
        %1528 = vmatpush1.bf16.msra.mxu0 %v1285
        %1529 = vmatprep.subr.bf16.mxu0 0
        %1530 = vmatpush1.bf16.msra.mxu0 0
        %1531 = vmatprep.subr.bf16.mxu0 0
        %1532 = vmatpush1.bf16.msra.mxu0 0
        %1533 = vmatprep.subr.bf16.mxu0 0
        %1534 = vmatpush1.bf16.msra.mxu0 0
        %1535 = vmatprep.subr.bf16.mxu0 0
        %1536 = vmatpush1.bf16.msra.mxu0 0
        %1537 = vmatprep.subr.bf16.mxu0 0
        %1538 = vmatpush1.bf16.msra.mxu0 0
        %1539 = vmatprep.subr.bf16.mxu0 0
        %1540 = vmatpush1.bf16.msra.mxu0 0
        %1541 = vmatprep.subr.bf16.mxu0 0
        %1542 = vmatpush1.bf16.msra.mxu0 0
        %1543 = vmatprep.subr.bf16.mxu0 0
        %1544 = vmatpush1.bf16.msra.mxu0 0
        %1545 = vmatprep.subr.bf16.mxu0 0
        %1546 = vmatpush1.bf16.msra.mxu0 0
        %1547 = vmatprep.subr.bf16.mxu0 0
        %1548 = vmatpush1.bf16.msra.mxu0 0
        %1549 = vmatprep.subr.bf16.mxu0 0
        %1550 = vmatpush1.bf16.msra.mxu0 0
        %1551 = vmatprep.subr.bf16.mxu0 0
        %1552 = vmatpush1.bf16.msra.mxu0 0
        %1553 = vmatprep.subr.bf16.mxu0 0
        %1554 = vmatpush1.bf16.msra.mxu0 0
        %1555 = vmatprep.subr.bf16.mxu0 0
        %1556 = vmatpush1.bf16.msra.mxu0 0
        %1557 = vmatprep.mubr.bf16.mxu0 0
        %1558 = vmatmul.mubr.bf16.gmra.mrb[0].mxu0 %v761
        %v1559 = vpop.f32.mrb[0].mxu0
        %v1560 = vpop.f32.mrb[0].mxu0
        %v1561 = vpop.f32.mrb[0].mxu0
        %v1562 = vpop.f32.mrb[0].mxu0
        %1563 = vmatprep.mubr.bf16.mxu0 0
        %1564 = vmatmul.mubr.bf16.gmra.mrb[0].mxu0 %v764
        %v1565 = vpop.f32.mrb[0].mxu0
        %v1566 = vadd.f32 0.0, %v1565
        %v1567 = vpop.f32.mrb[0].mxu0
        %v1568 = vpop.f32.mrb[0].mxu0
        %v1569 = vadd.f32 0.0, %v1568
        %v1570 = vpop.f32.mrb[0].mxu0
        %1571 = vmatprep.mubr.bf16.mxu0 0
        %1572 = vmatmul.mubr.bf16.gmra.mrb[0].mxu0 %v767
        %v1573 = vpop.f32.mrb[0].mxu0
        %v1574 = vadd.f32 0.0, %v1573
        %v1575 = vpop.f32.mrb[0].mxu0
        %v1576 = vpop.f32.mrb[0].mxu0
        %v1577 = vadd.f32 0.0, %v1576
        %v1578 = vpop.f32.mrb[0].mxu0
        %1579 = vmatprep.mubr.bf16.mxu0 0
        %1580 = vmatmul.mubr.bf16.gmra.mrb[0].mxu0 %v770
        %v1581 = vpop.f32.mrb[0].mxu0
        %v1582 = vadd.f32 0.0, %v1581
        %v1583 = vpop.f32.mrb[0].mxu0
        %v1584 = vpop.f32.mrb[0].mxu0
        %v1585 = vadd.f32 0.0, %v1584
        %v1586 = vpop.f32.mrb[0].mxu0
        %1587 = vmatprep.mubr.bf16.mxu0 0
        %1588 = vmatmul.mubr.bf16.gmra.mrb[0].mxu0 %v773
        %v1589 = vpop.f32.mrb[0].mxu0
        %v1590 = vadd.f32 0.0, %v1589
        %v1591 = vpop.f32.mrb[0].mxu0
        %v1592 = vpop.f32.mrb[0].mxu0
        %v1593 = vadd.f32 0.0, %v1592
        %v1594 = vpop.f32.mrb[0].mxu0
        %1595 = vmatprep.mubr.bf16.mxu0 0
        %1596 = vmatmul.mubr.bf16.gmra.mrb[0].mxu0 %v776
        %v1597 = vpop.f32.mrb[0].mxu0
        %v1598 = vadd.f32 0.0, %v1597
        %v1599 = vpop.f32.mrb[0].mxu0
        %v1600 = vpop.f32.mrb[0].mxu0
        %v1601 = vadd.f32 0.0, %v1600
        %v1602 = vpop.f32.mrb[0].mxu0
        %1603 = vmatprep.mubr.bf16.mxu0 0
        %1604 = vmatmul.mubr.bf16.gmra.mrb[0].mxu0 %v779
        %v1605 = vpop.f32.mrb[0].mxu0
        %v1606 = vadd.f32 0.0, %v1605
        %v1607 = vpop.f32.mrb[0].mxu0
        %v1608 = vpop.f32.mrb[0].mxu0
        %v1609 = vadd.f32 0.0, %v1608
        %v1610 = vpop.f32.mrb[0].mxu0
        %1611 = vmatprep.mubr.bf16.mxu0 0
        %1612 = vmatmul.mubr.bf16.gmra.mrb[0].mxu0 %v782
        %v1613 = vpop.f32.mrb[0].mxu0
        %v1614 = vadd.f32 0.0, %v1613
        %v1615 = vpop.f32.mrb[0].mxu0
        %v1616 = vpop.f32.mrb[0].mxu0
        %v1617 = vadd.f32 0.0, %v1616
        %v1618 = vpop.f32.mrb[0].mxu0
        %1619 = vmatprep.mubr.bf16.mxu0 0
        %1620 = vmatmul.mubr.bf16.gmra.mrb[0].mxu0 %v785
        %v1621 = vpop.f32.mrb[0].mxu0
        %v1622 = vadd.f32 0.0, %v1621
        %v1623 = vpop.f32.mrb[0].mxu0
        %v1624 = vpop.f32.mrb[0].mxu0
        %v1625 = vadd.f32 0.0, %v1624
        %v1626 = vpop.f32.mrb[0].mxu0
        %1627 = vmatprep.mubr.bf16.mxu0 0
        %1628 = vmatmul.mubr.bf16.gmra.mrb[0].mxu0 %v788
        %v1629 = vpop.f32.mrb[0].mxu0
        %v1630 = vadd.f32 0.0, %v1629
        %v1631 = vpop.f32.mrb[0].mxu0
        %v1632 = vpop.f32.mrb[0].mxu0
        %v1633 = vadd.f32 0.0, %v1632
        %v1634 = vpop.f32.mrb[0].mxu0
        %1635 = vmatprep.mubr.bf16.mxu0 0
        %1636 = vmatmul.mubr.bf16.gmra.mrb[0].mxu0 %v791
        %v1637 = vpop.f32.mrb[0].mxu0
        %v1638 = vadd.f32 0.0, %v1637
        %v1639 = vpop.f32.mrb[0].mxu0
        %v1640 = vpop.f32.mrb[0].mxu0
        %v1641 = vadd.f32 0.0, %v1640
        %v1642 = vpop.f32.mrb[0].mxu0
        %1643 = vmatprep.mubr.bf16.mxu0 0
        %1644 = vmatmul.mubr.bf16.gmra.mrb[0].mxu0 %v794
        %v1645 = vpop.f32.mrb[0].mxu0
        %v1646 = vadd.f32 0.0, %v1645
        %v1647 = vpop.f32.mrb[0].mxu0
        %v1648 = vpop.f32.mrb[0].mxu0
        %v1649 = vadd.f32 0.0, %v1648
        %v1650 = vpop.f32.mrb[0].mxu0
        %1651 = vmatprep.mubr.bf16.mxu0 0
        %1652 = vmatmul.mubr.bf16.gmra.mrb[0].mxu0 %v797
        %v1653 = vpop.f32.mrb[0].mxu0
        %v1654 = vadd.f32 0.0, %v1653
        %v1655 = vpop.f32.mrb[0].mxu0
        %v1656 = vpop.f32.mrb[0].mxu0
        %v1657 = vadd.f32 0.0, %v1656
        %v1658 = vpop.f32.mrb[0].mxu0
        %1659 = vmatprep.mubr.bf16.mxu0 0
        %1660 = vmatmul.mubr.bf16.gmra.mrb[0].mxu0 %v800
        %v1661 = vpop.f32.mrb[0].mxu0
        %v1662 = vadd.f32 0.0, %v1661
        %v1663 = vpop.f32.mrb[0].mxu0
        %v1664 = vpop.f32.mrb[0].mxu0
        %v1665 = vadd.f32 0.0, %v1664
        %v1666 = vpop.f32.mrb[0].mxu0
        %1667 = vmatprep.mubr.bf16.mxu0 0
        %1668 = vmatmul.mubr.bf16.gmra.mrb[0].mxu0 %v803
        %v1669 = vpop.f32.mrb[0].mxu0
        %v1670 = vadd.f32 0.0, %v1669
        %v1671 = vpop.f32.mrb[0].mxu0
        %v1672 = vpop.f32.mrb[0].mxu0
        %v1673 = vadd.f32 0.0, %v1672
        %v1674 = vpop.f32.mrb[0].mxu0
        %1675 = vmatprep.mubr.bf16.mxu0 0
        %1676 = vmatmul.mubr.bf16.gmra.mrb[0].mxu0 %v806
        %v1677 = vpop.f32.mrb[0].mxu0
        %v1678 = vadd.f32 0.0, %v1677
        %v1679 = vpop.f32.mrb[0].mxu0
        %v1680 = vpop.f32.mrb[0].mxu0
        %v1681 = vadd.f32 0.0, %v1680
        %v1682 = vpop.f32.mrb[0].mxu0
        %1683 = vmatprep.mubr.bf16.mxu0 0
        %1684 = vmatmul.mubr.bf16.gmra.mrb[0].mxu0 %v809
        %v1685 = vpop.f32.mrb[0].mxu0
        %v1686 = vadd.f32 0.0, %v1685
        %v1687 = vpop.f32.mrb[0].mxu0
        %v1688 = vpop.f32.mrb[0].mxu0
        %v1689 = vadd.f32 0.0, %v1688
        %v1690 = vpop.f32.mrb[0].mxu0
        %1691 = vmatprep.mubr.bf16.mxu0 0
        %1692 = vmatmul.mubr.bf16.gmra.mrb[0].mxu0 %v812
        %v1693 = vpop.f32.mrb[0].mxu0
        %v1694 = vadd.f32 0.0, %v1693
        %v1695 = vpop.f32.mrb[0].mxu0
        %v1696 = vpop.f32.mrb[0].mxu0
        %v1697 = vadd.f32 0.0, %v1696
        %v1698 = vpop.f32.mrb[0].mxu0
        %1699 = vmatprep.mubr.bf16.mxu0 0
        %1700 = vmatmul.mubr.bf16.gmra.mrb[0].mxu0 %v815
        %v1701 = vpop.f32.mrb[0].mxu0
        %v1702 = vadd.f32 0.0, %v1701
        %v1703 = vpop.f32.mrb[0].mxu0
        %v1704 = vpop.f32.mrb[0].mxu0
        %v1705 = vadd.f32 0.0, %v1704
        %v1706 = vpop.f32.mrb[0].mxu0
        %1707 = vmatprep.mubr.bf16.mxu0 0
        %1708 = vmatmul.mubr.bf16.gmra.mrb[0].mxu0 %v818
        %v1709 = vpop.f32.mrb[0].mxu0
        %v1710 = vadd.f32 0.0, %v1709
        %v1711 = vpop.f32.mrb[0].mxu0
        %v1712 = vpop.f32.mrb[0].mxu0
        %v1713 = vpop.f32.mrb[0].mxu0
        %1714 = vmatprep.mubr.bf16.mxu0 0
        %1715 = vmatmul.mubr.bf16.gmra.mrb[0].mxu0 %v821
        %v1716 = vpop.f32.mrb[0].mxu0
        %v1717 = vpop.f32.mrb[0].mxu0
        %v1718 = vpop.f32.mrb[0].mxu0
        %v1719 = vpop.f32.mrb[0].mxu0
        %1720 = vdwg.mxu0
        %s1721 = scalar_lea.vmem %s3, 96
        %v1722 = vld [vmem:[%s1721] sm:$0xff]
        %v1723 = vld [vmem:[%s1721 + $0x8] sm:$0xf]
        %v1724 = vld [vmem:[%s1721 + $0xc] sm:$0xff]
        %v1725 = vld [vmem:[%s1721 + $0x14] sm:$0xf]
        %v1726 = vld [vmem:[%s1721 + $0x18] sm:$0xff]
        %v1727 = vld [vmem:[%s1721 + $0x20] sm:$0xf]
        %v1728 = vld [vmem:[%s1721 + $0x24] sm:$0xff]
        %v1729 = vld [vmem:[%s1721 + $0x2c] sm:$0xf]
        %v1738 = vunpack.c.l.b16 %v1722
        %v1739 = vunpack.c.h.b16 %v1722
        %v1740 = vunpack.c.l.b16 %v1723
        %v1741 = vunpack.c.l.b16 %v1724
        %v1742 = vunpack.c.h.b16 %v1724
        %v1743 = vunpack.c.l.b16 %v1725
        %v1744 = vunpack.c.l.b16 %v1726
        %v1745 = vunpack.c.h.b16 %v1726
        %v1746 = vunpack.c.l.b16 %v1727
        %v1747 = vunpack.c.l.b16 %v1728
        %v1748 = vunpack.c.h.b16 %v1728
        %v1749 = vunpack.c.l.b16 %v1729
        %v1750 = vpack.c.b16 %v1741, %v1738
        %v1751 = vpack.c.b16 %v1742, %v1739
        %v1752 = vpack.c.b16 %v1743, %v1740
        %v1753 = vpack.c.b16 %v1747, %v1744
        %v1754 = vpack.c.b16 %v1748, %v1745
        %v1755 = vpack.c.b16 %v1749, %v1746
        %1762 = vmatprep.subr.bf16.mxu0 %v1751
        %1763 = vmatpush1.bf16.msra.mxu0 %v1750
        %1764 = vmatprep.subr.bf16.mxu0 %v1754
        %1765 = vmatpush1.bf16.msra.mxu0 %v1753
        %1766 = vmatprep.subr.bf16.mxu0 0
        %1767 = vmatpush1.bf16.msra.mxu0 0
        %1768 = vmatprep.subr.bf16.mxu0 0
        %1769 = vmatpush1.bf16.msra.mxu0 0
        %1770 = vmatprep.subr.bf16.mxu0 0
        %1771 = vmatpush1.bf16.msra.mxu0 0
        %1772 = vmatprep.subr.bf16.mxu0 0
        %1773 = vmatpush1.bf16.msra.mxu0 0
        %1774 = vmatprep.subr.bf16.mxu0 0
        %1775 = vmatpush1.bf16.msra.mxu0 0
        %1776 = vmatprep.subr.bf16.mxu0 0
        %1777 = vmatpush1.bf16.msra.mxu0 0
        %1778 = vmatprep.subr.bf16.mxu0 0
        %1779 = vmatpush1.bf16.msra.mxu0 0
        %1780 = vmatprep.subr.bf16.mxu0 0
        %1781 = vmatpush1.bf16.msra.mxu0 0
        %1782 = vmatprep.subr.bf16.mxu0 0
        %1783 = vmatpush1.bf16.msra.mxu0 0
        %1784 = vmatprep.subr.bf16.mxu0 0
        %1785 = vmatpush1.bf16.msra.mxu0 0
        %1786 = vmatprep.subr.bf16.mxu0 0
        %1787 = vmatpush1.bf16.msra.mxu0 0
        %1788 = vmatprep.subr.bf16.mxu0 0
        %1789 = vmatpush1.bf16.msra.mxu0 0
        %1790 = vmatprep.subr.bf16.mxu0 0
        %1791 = vmatpush1.bf16.msra.mxu0 0
        %1792 = vmatprep.subr.bf16.mxu0 0
        %1793 = vmatpush1.bf16.msra.mxu0 0
        %1794 = vmatprep.mubr.bf16.mxu0 0
        %1795 = vmatmul.mubr.bf16.gmra.mrb[0].mxu0 %v761
        %v1796 = vpop.f32.mrb[0].mxu0
        %v1797 = vpop.f32.mrb[0].mxu0
        %v1798 = vpop.f32.mrb[0].mxu0
        %v1799 = vpop.f32.mrb[0].mxu0
        %1800 = vmatprep.mubr.bf16.mxu0 0
        %1801 = vmatmul.mubr.bf16.gmra.mrb[0].mxu0 %v764
        %v1802 = vpop.f32.mrb[0].mxu0
        %v1803 = vpop.f32.mrb[0].mxu0
        %v1804 = vpop.f32.mrb[0].mxu0
        %v1805 = vpop.f32.mrb[0].mxu0
        %1806 = vmatprep.mubr.bf16.mxu0 0
        %1807 = vmatmul.mubr.bf16.gmra.mrb[0].mxu0 %v767
        %v1808 = vpop.f32.mrb[0].mxu0
        %v1809 = vadd.f32 0.0, %v1808
        %v1810 = vpop.f32.mrb[0].mxu0
        %v1811 = vadd.f32 0.0, %v1810
        %v1812 = vpop.f32.mrb[0].mxu0
        %v1813 = vadd.f32 0.0, %v1812
        %v1814 = vpop.f32.mrb[0].mxu0
        %v1815 = vadd.f32 0.0, %v1814
        %1816 = vmatprep.mubr.bf16.mxu0 0
        %1817 = vmatmul.mubr.bf16.gmra.mrb[0].mxu0 %v770
        %v1818 = vpop.f32.mrb[0].mxu0
        %v1819 = vadd.f32 0.0, %v1818
        %v1820 = vpop.f32.mrb[0].mxu0
        %v1821 = vadd.f32 0.0, %v1820
        %v1822 = vpop.f32.mrb[0].mxu0
        %v1823 = vadd.f32 0.0, %v1822
        %v1824 = vpop.f32.mrb[0].mxu0
        %v1825 = vadd.f32 0.0, %v1824
        %1826 = vmatprep.mubr.bf16.mxu0 0
        %1827 = vmatmul.mubr.bf16.gmra.mrb[0].mxu0 %v773
        %v1828 = vpop.f32.mrb[0].mxu0
        %v1829 = vadd.f32 0.0, %v1828
        %v1830 = vpop.f32.mrb[0].mxu0
        %v1831 = vadd.f32 0.0, %v1830
        %v1832 = vpop.f32.mrb[0].mxu0
        %v1833 = vadd.f32 0.0, %v1832
        %v1834 = vpop.f32.mrb[0].mxu0
        %v1835 = vadd.f32 0.0, %v1834
        %1836 = vmatprep.mubr.bf16.mxu0 0
        %1837 = vmatmul.mubr.bf16.gmra.mrb[0].mxu0 %v776
        %v1838 = vpop.f32.mrb[0].mxu0
        %v1839 = vadd.f32 0.0, %v1838
        %v1840 = vpop.f32.mrb[0].mxu0
        %v1841 = vadd.f32 0.0, %v1840
        %v1842 = vpop.f32.mrb[0].mxu0
        %v1843 = vadd.f32 0.0, %v1842
        %v1844 = vpop.f32.mrb[0].mxu0
        %v1845 = vadd.f32 0.0, %v1844
        %1846 = vmatprep.mubr.bf16.mxu0 0
        %1847 = vmatmul.mubr.bf16.gmra.mrb[0].mxu0 %v779
        %v1848 = vpop.f32.mrb[0].mxu0
        %v1849 = vadd.f32 0.0, %v1848
        %v1850 = vpop.f32.mrb[0].mxu0
        %v1851 = vadd.f32 0.0, %v1850
        %v1852 = vpop.f32.mrb[0].mxu0
        %v1853 = vadd.f32 0.0, %v1852
        %v1854 = vpop.f32.mrb[0].mxu0
        %v1855 = vadd.f32 0.0, %v1854
        %1856 = vmatprep.mubr.bf16.mxu0 0
        %1857 = vmatmul.mubr.bf16.gmra.mrb[0].mxu0 %v782
        %v1858 = vpop.f32.mrb[0].mxu0
        %v1859 = vadd.f32 0.0, %v1858
        %v1860 = vpop.f32.mrb[0].mxu0
        %v1861 = vadd.f32 0.0, %v1860
        %v1862 = vpop.f32.mrb[0].mxu0
        %v1863 = vadd.f32 0.0, %v1862
        %v1864 = vpop.f32.mrb[0].mxu0
        %v1865 = vadd.f32 0.0, %v1864
        %1866 = vmatprep.mubr.bf16.mxu0 0
        %1867 = vmatmul.mubr.bf16.gmra.mrb[0].mxu0 %v785
        %v1868 = vpop.f32.mrb[0].mxu0
        %v1869 = vadd.f32 0.0, %v1868
        %v1870 = vpop.f32.mrb[0].mxu0
        %v1871 = vadd.f32 0.0, %v1870
        %v1872 = vpop.f32.mrb[0].mxu0
        %v1873 = vadd.f32 0.0, %v1872
        %v1874 = vpop.f32.mrb[0].mxu0
        %v1875 = vadd.f32 0.0, %v1874
        %1876 = vmatprep.mubr.bf16.mxu0 0
        %1877 = vmatmul.mubr.bf16.gmra.mrb[0].mxu0 %v788
        %v1878 = vpop.f32.mrb[0].mxu0
        %v1879 = vadd.f32 0.0, %v1878
        %v1880 = vpop.f32.mrb[0].mxu0
        %v1881 = vadd.f32 0.0, %v1880
        %v1882 = vpop.f32.mrb[0].mxu0
        %v1883 = vadd.f32 0.0, %v1882
        %v1884 = vpop.f32.mrb[0].mxu0
        %v1885 = vadd.f32 0.0, %v1884
        %1886 = vmatprep.mubr.bf16.mxu0 0
        %1887 = vmatmul.mubr.bf16.gmra.mrb[0].mxu0 %v791
        %v1888 = vpop.f32.mrb[0].mxu0
        %v1889 = vadd.f32 0.0, %v1888
        %v1890 = vpop.f32.mrb[0].mxu0
        %v1891 = vadd.f32 0.0, %v1890
        %v1892 = vpop.f32.mrb[0].mxu0
        %v1893 = vadd.f32 0.0, %v1892
        %v1894 = vpop.f32.mrb[0].mxu0
        %v1895 = vadd.f32 0.0, %v1894
        %1896 = vmatprep.mubr.bf16.mxu0 0
        %1897 = vmatmul.mubr.bf16.gmra.mrb[0].mxu0 %v794
        %v1898 = vpop.f32.mrb[0].mxu0
        %v1899 = vadd.f32 0.0, %v1898
        %v1900 = vpop.f32.mrb[0].mxu0
        %v1901 = vadd.f32 0.0, %v1900
        %v1902 = vpop.f32.mrb[0].mxu0
        %v1903 = vadd.f32 0.0, %v1902
        %v1904 = vpop.f32.mrb[0].mxu0
        %v1905 = vadd.f32 0.0, %v1904
        %1906 = vmatprep.mubr.bf16.mxu0 0
        %1907 = vmatmul.mubr.bf16.gmra.mrb[0].mxu0 %v797
        %v1908 = vpop.f32.mrb[0].mxu0
        %v1909 = vadd.f32 0.0, %v1908
        %v1910 = vpop.f32.mrb[0].mxu0
        %v1911 = vadd.f32 0.0, %v1910
        %v1912 = vpop.f32.mrb[0].mxu0
        %v1913 = vadd.f32 0.0, %v1912
        %v1914 = vpop.f32.mrb[0].mxu0
        %v1915 = vadd.f32 0.0, %v1914
        %1916 = vmatprep.mubr.bf16.mxu0 0
        %1917 = vmatmul.mubr.bf16.gmra.mrb[0].mxu0 %v800
        %v1918 = vpop.f32.mrb[0].mxu0
        %v1919 = vadd.f32 0.0, %v1918
        %v1920 = vpop.f32.mrb[0].mxu0
        %v1921 = vadd.f32 0.0, %v1920
        %v1922 = vpop.f32.mrb[0].mxu0
        %v1923 = vadd.f32 0.0, %v1922
        %v1924 = vpop.f32.mrb[0].mxu0
        %v1925 = vadd.f32 0.0, %v1924
        %1926 = vmatprep.mubr.bf16.mxu0 0
        %1927 = vmatmul.mubr.bf16.gmra.mrb[0].mxu0 %v803
        %v1928 = vpop.f32.mrb[0].mxu0
        %v1929 = vadd.f32 0.0, %v1928
        %v1930 = vpop.f32.mrb[0].mxu0
        %v1931 = vadd.f32 0.0, %v1930
        %v1932 = vpop.f32.mrb[0].mxu0
        %v1933 = vadd.f32 0.0, %v1932
        %v1934 = vpop.f32.mrb[0].mxu0
        %v1935 = vadd.f32 0.0, %v1934
        %1936 = vmatprep.mubr.bf16.mxu0 0
        %1937 = vmatmul.mubr.bf16.gmra.mrb[0].mxu0 %v806
        %v1938 = vpop.f32.mrb[0].mxu0
        %v1939 = vadd.f32 0.0, %v1938
        %v1940 = vpop.f32.mrb[0].mxu0
        %v1941 = vadd.f32 0.0, %v1940
        %v1942 = vpop.f32.mrb[0].mxu0
        %v1943 = vadd.f32 0.0, %v1942
        %v1944 = vpop.f32.mrb[0].mxu0
        %v1945 = vadd.f32 0.0, %v1944
        %1946 = vmatprep.mubr.bf16.mxu0 0
        %1947 = vmatmul.mubr.bf16.gmra.mrb[0].mxu0 %v809
        %v1948 = vpop.f32.mrb[0].mxu0
        %v1949 = vadd.f32 0.0, %v1948
        %v1950 = vpop.f32.mrb[0].mxu0
        %v1951 = vadd.f32 0.0, %v1950
        %v1952 = vpop.f32.mrb[0].mxu0
        %v1953 = vadd.f32 0.0, %v1952
        %v1954 = vpop.f32.mrb[0].mxu0
        %v1955 = vadd.f32 0.0, %v1954
        %1956 = vmatprep.mubr.bf16.mxu0 0
        %1957 = vmatmul.mubr.bf16.gmra.mrb[0].mxu0 %v812
        %v1958 = vpop.f32.mrb[0].mxu0
        %v1959 = vadd.f32 0.0, %v1958
        %v1960 = vpop.f32.mrb[0].mxu0
        %v1961 = vadd.f32 0.0, %v1960
        %v1962 = vpop.f32.mrb[0].mxu0
        %v1963 = vadd.f32 0.0, %v1962
        %v1964 = vpop.f32.mrb[0].mxu0
        %v1965 = vadd.f32 0.0, %v1964
        %1966 = vmatprep.mubr.bf16.mxu0 0
        %1967 = vmatmul.mubr.bf16.gmra.mrb[0].mxu0 %v815
        %v1968 = vpop.f32.mrb[0].mxu0
        %v1969 = vadd.f32 0.0, %v1968
        %v1970 = vpop.f32.mrb[0].mxu0
        %v1971 = vadd.f32 0.0, %v1970
        %v1972 = vpop.f32.mrb[0].mxu0
        %v1973 = vadd.f32 0.0, %v1972
        %v1974 = vpop.f32.mrb[0].mxu0
        %v1975 = vadd.f32 0.0, %v1974
        %1976 = vmatprep.mubr.bf16.mxu0 0
        %1977 = vmatmul.mubr.bf16.gmra.mrb[0].mxu0 %v818
        %v1978 = vpop.f32.mrb[0].mxu0
        %v1979 = vadd.f32 0.0, %v1978
        %v1980 = vpop.f32.mrb[0].mxu0
        %v1981 = vadd.f32 0.0, %v1980
        %v1982 = vpop.f32.mrb[0].mxu0
        %v1983 = vadd.f32 0.0, %v1982
        %v1984 = vpop.f32.mrb[0].mxu0
        %v1985 = vadd.f32 0.0, %v1984
        %1986 = vmatprep.mubr.bf16.mxu0 0
        %1987 = vmatmul.mubr.bf16.gmra.mrb[0].mxu0 %v821
        %v1988 = vpop.f32.mrb[0].mxu0
        %v1989 = vadd.f32 0.0, %v1988
        %v1990 = vpop.f32.mrb[0].mxu0
        %v1991 = vadd.f32 0.0, %v1990
        %v1992 = vpop.f32.mrb[0].mxu0
        %v1993 = vpop.f32.mrb[0].mxu0
        %1994 = vdwg.mxu0
        %1995 = vmatprep.subr.bf16.mxu0 0
        %1996 = vmatpush1.bf16.msra.mxu0 %v1752
        %1997 = vmatprep.subr.bf16.mxu0 0
        %1998 = vmatpush1.bf16.msra.mxu0 %v1755
        %1999 = vmatprep.subr.bf16.mxu0 0
        %2000 = vmatpush1.bf16.msra.mxu0 0
        %2001 = vmatprep.subr.bf16.mxu0 0
        %2002 = vmatpush1.bf16.msra.mxu0 0
        %2003 = vmatprep.subr.bf16.mxu0 0
        %2004 = vmatpush1.bf16.msra.mxu0 0
        %2005 = vmatprep.subr.bf16.mxu0 0
        %2006 = vmatpush1.bf16.msra.mxu0 0
        %2007 = vmatprep.subr.bf16.mxu0 0
        %2008 = vmatpush1.bf16.msra.mxu0 0
        %2009 = vmatprep.subr.bf16.mxu0 0
        %2010 = vmatpush1.bf16.msra.mxu0 0
        %2011 = vmatprep.subr.bf16.mxu0 0
        %2012 = vmatpush1.bf16.msra.mxu0 0
        %2013 = vmatprep.subr.bf16.mxu0 0
        %2014 = vmatpush1.bf16.msra.mxu0 0
        %2015 = vmatprep.subr.bf16.mxu0 0
        %2016 = vmatpush1.bf16.msra.mxu0 0
        %2017 = vmatprep.subr.bf16.mxu0 0
        %2018 = vmatpush1.bf16.msra.mxu0 0
        %2019 = vmatprep.subr.bf16.mxu0 0
        %2020 = vmatpush1.bf16.msra.mxu0 0
        %2021 = vmatprep.subr.bf16.mxu0 0
        %2022 = vmatpush1.bf16.msra.mxu0 0
        %2023 = vmatprep.subr.bf16.mxu0 0
        %2024 = vmatpush1.bf16.msra.mxu0 0
        %2025 = vmatprep.subr.bf16.mxu0 0
        %2026 = vmatpush1.bf16.msra.mxu0 0
        %2027 = vmatprep.mubr.bf16.mxu0 0
        %2028 = vmatmul.mubr.bf16.gmra.mrb[0].mxu0 %v761
        %v2029 = vpop.f32.mrb[0].mxu0
        %v2030 = vpop.f32.mrb[0].mxu0
        %v2031 = vpop.f32.mrb[0].mxu0
        %v2032 = vpop.f32.mrb[0].mxu0
        %2033 = vmatprep.mubr.bf16.mxu0 0
        %2034 = vmatmul.mubr.bf16.gmra.mrb[0].mxu0 %v764
        %v2035 = vpop.f32.mrb[0].mxu0
        %v2036 = vpop.f32.mrb[0].mxu0
        %v2037 = vpop.f32.mrb[0].mxu0
        %v2038 = vpop.f32.mrb[0].mxu0
        %2039 = vmatprep.mubr.bf16.mxu0 0
        %2040 = vmatmul.mubr.bf16.gmra.mrb[0].mxu0 %v767
        %v2041 = vpop.f32.mrb[0].mxu0
        %v2042 = vadd.f32 0.0, %v2041
        %v2043 = vpop.f32.mrb[0].mxu0
        %v2044 = vpop.f32.mrb[0].mxu0
        %v2045 = vadd.f32 0.0, %v2044
        %v2046 = vpop.f32.mrb[0].mxu0
        %2047 = vmatprep.mubr.bf16.mxu0 0
        %2048 = vmatmul.mubr.bf16.gmra.mrb[0].mxu0 %v770
        %v2049 = vpop.f32.mrb[0].mxu0
        %v2050 = vadd.f32 0.0, %v2049
        %v2051 = vpop.f32.mrb[0].mxu0
        %v2052 = vpop.f32.mrb[0].mxu0
        %v2053 = vadd.f32 0.0, %v2052
        %v2054 = vpop.f32.mrb[0].mxu0
        %2055 = vmatprep.mubr.bf16.mxu0 0
        %2056 = vmatmul.mubr.bf16.gmra.mrb[0].mxu0 %v773
        %v2057 = vpop.f32.mrb[0].mxu0
        %v2058 = vadd.f32 0.0, %v2057
        %v2059 = vpop.f32.mrb[0].mxu0
        %v2060 = vpop.f32.mrb[0].mxu0
        %v2061 = vadd.f32 0.0, %v2060
        %v2062 = vpop.f32.mrb[0].mxu0
        %2063 = vmatprep.mubr.bf16.mxu0 0
        %2064 = vmatmul.mubr.bf16.gmra.mrb[0].mxu0 %v776
        %v2065 = vpop.f32.mrb[0].mxu0
        %v2066 = vadd.f32 0.0, %v2065
        %v2067 = vpop.f32.mrb[0].mxu0
        %v2068 = vpop.f32.mrb[0].mxu0
        %v2069 = vadd.f32 0.0, %v2068
        %v2070 = vpop.f32.mrb[0].mxu0
        %2071 = vmatprep.mubr.bf16.mxu0 0
        %2072 = vmatmul.mubr.bf16.gmra.mrb[0].mxu0 %v779
        %v2073 = vpop.f32.mrb[0].mxu0
        %v2074 = vadd.f32 0.0, %v2073
        %v2075 = vpop.f32.mrb[0].mxu0
        %v2076 = vpop.f32.mrb[0].mxu0
        %v2077 = vadd.f32 0.0, %v2076
        %v2078 = vpop.f32.mrb[0].mxu0
        %2079 = vmatprep.mubr.bf16.mxu0 0
        %2080 = vmatmul.mubr.bf16.gmra.mrb[0].mxu0 %v782
        %v2081 = vpop.f32.mrb[0].mxu0
        %v2082 = vadd.f32 0.0, %v2081
        %v2083 = vpop.f32.mrb[0].mxu0
        %v2084 = vpop.f32.mrb[0].mxu0
        %v2085 = vadd.f32 0.0, %v2084
        %v2086 = vpop.f32.mrb[0].mxu0
        %2087 = vmatprep.mubr.bf16.mxu0 0
        %2088 = vmatmul.mubr.bf16.gmra.mrb[0].mxu0 %v785
        %v2089 = vpop.f32.mrb[0].mxu0
        %v2090 = vadd.f32 0.0, %v2089
        %v2091 = vpop.f32.mrb[0].mxu0
        %v2092 = vpop.f32.mrb[0].mxu0
        %v2093 = vadd.f32 0.0, %v2092
        %v2094 = vpop.f32.mrb[0].mxu0
        %2095 = vmatprep.mubr.bf16.mxu0 0
        %2096 = vmatmul.mubr.bf16.gmra.mrb[0].mxu0 %v788
        %v2097 = vpop.f32.mrb[0].mxu0
        %v2098 = vadd.f32 0.0, %v2097
        %v2099 = vpop.f32.mrb[0].mxu0
        %v2100 = vpop.f32.mrb[0].mxu0
        %v2101 = vadd.f32 0.0, %v2100
        %v2102 = vpop.f32.mrb[0].mxu0
        %2103 = vmatprep.mubr.bf16.mxu0 0
        %2104 = vmatmul.mubr.bf16.gmra.mrb[0].mxu0 %v791
        %v2105 = vpop.f32.mrb[0].mxu0
        %v2106 = vadd.f32 0.0, %v2105
        %v2107 = vpop.f32.mrb[0].mxu0
        %v2108 = vpop.f32.mrb[0].mxu0
        %v2109 = vadd.f32 0.0, %v2108
        %v2110 = vpop.f32.mrb[0].mxu0
        %2111 = vmatprep.mubr.bf16.mxu0 0
        %2112 = vmatmul.mubr.bf16.gmra.mrb[0].mxu0 %v794
        %v2113 = vpop.f32.mrb[0].mxu0
        %v2114 = vadd.f32 0.0, %v2113
        %v2115 = vpop.f32.mrb[0].mxu0
        %v2116 = vpop.f32.mrb[0].mxu0
        %v2117 = vadd.f32 0.0, %v2116
        %v2118 = vpop.f32.mrb[0].mxu0
        %2119 = vmatprep.mubr.bf16.mxu0 0
        %2120 = vmatmul.mubr.bf16.gmra.mrb[0].mxu0 %v797
        %v2121 = vpop.f32.mrb[0].mxu0
        %v2122 = vadd.f32 0.0, %v2121
        %v2123 = vpop.f32.mrb[0].mxu0
        %v2124 = vpop.f32.mrb[0].mxu0
        %v2125 = vadd.f32 0.0, %v2124
        %v2126 = vpop.f32.mrb[0].mxu0
        %2127 = vmatprep.mubr.bf16.mxu0 0
        %2128 = vmatmul.mubr.bf16.gmra.mrb[0].mxu0 %v800
        %v2129 = vpop.f32.mrb[0].mxu0
        %v2130 = vadd.f32 0.0, %v2129
        %v2131 = vpop.f32.mrb[0].mxu0
        %v2132 = vpop.f32.mrb[0].mxu0
        %v2133 = vadd.f32 0.0, %v2132
        %v2134 = vpop.f32.mrb[0].mxu0
        %2135 = vmatprep.mubr.bf16.mxu0 0
        %2136 = vmatmul.mubr.bf16.gmra.mrb[0].mxu0 %v803
        %v2137 = vpop.f32.mrb[0].mxu0
        %v2138 = vadd.f32 0.0, %v2137
        %v2139 = vpop.f32.mrb[0].mxu0
        %v2140 = vpop.f32.mrb[0].mxu0
        %v2141 = vadd.f32 0.0, %v2140
        %v2142 = vpop.f32.mrb[0].mxu0
        %2143 = vmatprep.mubr.bf16.mxu0 0
        %2144 = vmatmul.mubr.bf16.gmra.mrb[0].mxu0 %v806
        %v2145 = vpop.f32.mrb[0].mxu0
        %v2146 = vadd.f32 0.0, %v2145
        %v2147 = vpop.f32.mrb[0].mxu0
        %v2148 = vpop.f32.mrb[0].mxu0
        %v2149 = vadd.f32 0.0, %v2148
        %v2150 = vpop.f32.mrb[0].mxu0
        %2151 = vmatprep.mubr.bf16.mxu0 0
        %2152 = vmatmul.mubr.bf16.gmra.mrb[0].mxu0 %v809
        %v2153 = vpop.f32.mrb[0].mxu0
        %v2154 = vadd.f32 0.0, %v2153
        %v2155 = vpop.f32.mrb[0].mxu0
        %v2156 = vpop.f32.mrb[0].mxu0
        %v2157 = vadd.f32 0.0, %v2156
        %v2158 = vpop.f32.mrb[0].mxu0
        %2159 = vmatprep.mubr.bf16.mxu0 0
        %2160 = vmatmul.mubr.bf16.gmra.mrb[0].mxu0 %v812
        %v2161 = vpop.f32.mrb[0].mxu0
        %v2162 = vadd.f32 0.0, %v2161
        %v2163 = vpop.f32.mrb[0].mxu0
        %v2164 = vpop.f32.mrb[0].mxu0
        %v2165 = vadd.f32 0.0, %v2164
        %v2166 = vpop.f32.mrb[0].mxu0
        %2167 = vmatprep.mubr.bf16.mxu0 0
        %2168 = vmatmul.mubr.bf16.gmra.mrb[0].mxu0 %v815
        %v2169 = vpop.f32.mrb[0].mxu0
        %v2170 = vadd.f32 0.0, %v2169
        %v2171 = vpop.f32.mrb[0].mxu0
        %v2172 = vpop.f32.mrb[0].mxu0
        %v2173 = vadd.f32 0.0, %v2172
        %v2174 = vpop.f32.mrb[0].mxu0
        %2175 = vmatprep.mubr.bf16.mxu0 0
        %2176 = vmatmul.mubr.bf16.gmra.mrb[0].mxu0 %v818
        %v2177 = vpop.f32.mrb[0].mxu0
        %v2178 = vadd.f32 0.0, %v2177
        %v2179 = vpop.f32.mrb[0].mxu0
        %v2180 = vpop.f32.mrb[0].mxu0
        %v2181 = vadd.f32 0.0, %v2180
        %v2182 = vpop.f32.mrb[0].mxu0
        %2183 = vmatprep.mubr.bf16.mxu0 0
        %2184 = vmatmul.mubr.bf16.gmra.mrb[0].mxu0 %v821
        %v2185 = vpop.f32.mrb[0].mxu0
        %v2186 = vadd.f32 0.0, %v2185
        %v2187 = vpop.f32.mrb[0].mxu0
        %v2188 = vpop.f32.mrb[0].mxu0
        %v2189 = vpop.f32.mrb[0].mxu0
        %2190 = vdwg.mxu0
        %v2191 = vld [vmem:[%s4] sm:$0x1]
        %v2193 = vlaneseq
        %v2194 = vshrl.u32 %v2193, 7
        %v2195 = vsub.s32 0, %v2194
        %v2196 = vrot.slane %v2191, %v2195
        %v2198 = vadd.f32 %v2196, %v858
        %v2199 = vadd.f32 %v2196, %v862
        %v2200 = vadd.f32 %v2196, %v868
        %v2201 = vadd.f32 %v2196, %v872
        %v2202 = vadd.f32 %v2196, %v878
        %v2203 = vadd.f32 %v2196, %v882
        %v2204 = vadd.f32 %v2196, %v888
        %v2205 = vadd.f32 %v2196, %v892
        %v2206 = vadd.f32 %v2196, %v898
        %v2207 = vadd.f32 %v2196, %v902
        %v2208 = vadd.f32 %v2196, %v908
        %v2209 = vadd.f32 %v2196, %v912
        %v2210 = vadd.f32 %v2196, %v918
        %v2211 = vadd.f32 %v2196, %v922
        %v2212 = vadd.f32 %v2196, %v928
        %v2213 = vadd.f32 %v2196, %v932
        %v2214 = vadd.f32 %v2196, %v938
        %v2215 = vadd.f32 %v2196, %v942
        %v2216 = vadd.f32 %v2196, %v948
        %v2217 = vadd.f32 %v2196, %v952
        %v2218 = vadd.f32 %v2196, %v958
        %v2219 = vadd.f32 %v2196, %v962
        %v2220 = vadd.f32 %v2196, %v968
        %v2221 = vadd.f32 %v2196, %v972
        %v2222 = vadd.f32 %v2196, %v978
        %v2223 = vadd.f32 %v2196, %v982
        %v2224 = vadd.f32 %v2196, %v988
        %v2225 = vadd.f32 %v2196, %v992
        %v2226 = vadd.f32 %v2196, %v998
        %v2227 = vadd.f32 %v2196, %v1002
        %v2228 = vadd.f32 %v2196, %v1008
        %v2229 = vadd.f32 %v2196, %v1012
        %v2230 = vadd.f32 %v2196, %v1018
        %v2231 = vadd.f32 %v2196, %v1022
        %v2232 = vadd.f32 %v2196, %v1028
        %v2233 = vadd.f32 %v2196, %v1032
        %vm2271 = vcmask 1046528
        %v2272 = vrot.slane %v860, 1
        %v2273 = vrot.slane %v864, 1
        %v2274 = vsel %vm2271, %v2272, %v2273
        %v2275 = vrot.slane %v870, 1
        %v2276 = vsel %vm2271, %v2273, %v2275
        %v2277 = vrot.slane %v874, 1
        %v2278 = vsel %vm2271, %v2275, %v2277
        %v2279 = vrot.slane %v880, 1
        %v2280 = vsel %vm2271, %v2277, %v2279
        %v2281 = vrot.slane %v884, 1
        %v2282 = vsel %vm2271, %v2279, %v2281
        %v2283 = vrot.slane %v890, 1
        %v2284 = vsel %vm2271, %v2281, %v2283
        %v2285 = vrot.slane %v894, 1
        %v2286 = vsel %vm2271, %v2283, %v2285
        %v2287 = vrot.slane %v900, 1
        %v2288 = vsel %vm2271, %v2285, %v2287
        %v2289 = vrot.slane %v904, 1
        %v2290 = vsel %vm2271, %v2287, %v2289
        %v2291 = vrot.slane %v910, 1
        %v2292 = vsel %vm2271, %v2289, %v2291
        %v2293 = vrot.slane %v914, 1
        %v2294 = vsel %vm2271, %v2291, %v2293
        %v2295 = vrot.slane %v920, 1
        %v2296 = vsel %vm2271, %v2293, %v2295
        %v2297 = vrot.slane %v924, 1
        %v2298 = vsel %vm2271, %v2295, %v2297
        %v2299 = vrot.slane %v930, 1
        %v2300 = vsel %vm2271, %v2297, %v2299
        %v2301 = vrot.slane %v934, 1
        %v2302 = vsel %vm2271, %v2299, %v2301
        %v2303 = vrot.slane %v940, 1
        %v2304 = vsel %vm2271, %v2301, %v2303
        %v2305 = vrot.slane %v944, 1
        %v2306 = vsel %vm2271, %v2303, %v2305
        %v2307 = vrot.slane %v950, 1
        %v2308 = vsel %vm2271, %v2305, %v2307
        %v2309 = vrot.slane %v954, 1
        %v2310 = vsel %vm2271, %v2307, %v2309
        %v2311 = vrot.slane %v960, 1
        %v2312 = vsel %vm2271, %v2309, %v2311
        %v2313 = vrot.slane %v964, 1
        %v2314 = vsel %vm2271, %v2311, %v2313
        %v2315 = vrot.slane %v970, 1
        %v2316 = vsel %vm2271, %v2313, %v2315
        %v2317 = vrot.slane %v974, 1
        %v2318 = vsel %vm2271, %v2315, %v2317
        %v2319 = vrot.slane %v980, 1
        %v2320 = vsel %vm2271, %v2317, %v2319
        %v2321 = vrot.slane %v984, 1
        %v2322 = vsel %vm2271, %v2319, %v2321
        %v2323 = vrot.slane %v990, 1
        %v2324 = vsel %vm2271, %v2321, %v2323
        %v2325 = vrot.slane %v994, 1
        %v2326 = vsel %vm2271, %v2323, %v2325
        %v2327 = vrot.slane %v1000, 1
        %v2328 = vsel %vm2271, %v2325, %v2327
        %v2329 = vrot.slane %v1004, 1
        %v2330 = vsel %vm2271, %v2327, %v2329
        %v2331 = vrot.slane %v1010, 1
        %v2332 = vsel %vm2271, %v2329, %v2331
        %v2333 = vrot.slane %v1014, 1
        %v2334 = vsel %vm2271, %v2331, %v2333
        %v2335 = vrot.slane %v1020, 1
        %v2336 = vsel %vm2271, %v2333, %v2335
        %v2337 = vrot.slane %v1024, 1
        %v2338 = vsel %vm2271, %v2335, %v2337
        %v2339 = vrot.slane %v1030, 1
        %v2340 = vsel %vm2271, %v2337, %v2339
        %v2341 = vrot.slane %v1034, 1
        %v2342 = vsel %vm2271, %v2339, %v2341
        %v2343 = vrot.slane %v1039, 1
        %v2344 = vsel %vm2271, %v2341, %v2343
        %v2381 = vadd.f32 %v2198, %v2274
        %v2382 = vadd.f32 %v2199, %v2276
        %v2383 = vadd.f32 %v2200, %v2278
        %v2384 = vadd.f32 %v2201, %v2280
        %v2385 = vadd.f32 %v2202, %v2282
        %v2386 = vadd.f32 %v2203, %v2284
        %v2387 = vadd.f32 %v2204, %v2286
        %v2388 = vadd.f32 %v2205, %v2288
        %v2389 = vadd.f32 %v2206, %v2290
        %v2390 = vadd.f32 %v2207, %v2292
        %v2391 = vadd.f32 %v2208, %v2294
        %v2392 = vadd.f32 %v2209, %v2296
        %v2393 = vadd.f32 %v2210, %v2298
        %v2394 = vadd.f32 %v2211, %v2300
        %v2395 = vadd.f32 %v2212, %v2302
        %v2396 = vadd.f32 %v2213, %v2304
        %v2397 = vadd.f32 %v2214, %v2306
        %v2398 = vadd.f32 %v2215, %v2308
        %v2399 = vadd.f32 %v2216, %v2310
        %v2400 = vadd.f32 %v2217, %v2312
        %v2401 = vadd.f32 %v2218, %v2314
        %v2402 = vadd.f32 %v2219, %v2316
        %v2403 = vadd.f32 %v2220, %v2318
        %v2404 = vadd.f32 %v2221, %v2320
        %v2405 = vadd.f32 %v2222, %v2322
        %v2406 = vadd.f32 %v2223, %v2324
        %v2407 = vadd.f32 %v2224, %v2326
        %v2408 = vadd.f32 %v2225, %v2328
        %v2409 = vadd.f32 %v2226, %v2330
        %v2410 = vadd.f32 %v2227, %v2332
        %v2411 = vadd.f32 %v2228, %v2334
        %v2412 = vadd.f32 %v2229, %v2336
        %v2413 = vadd.f32 %v2230, %v2338
        %v2414 = vadd.f32 %v2231, %v2340
        %v2415 = vadd.f32 %v2232, %v2342
        %v2416 = vadd.f32 %v2233, %v2344
        %vm2454 = vcmask 1045504
        %v2455 = vrot.slane %v1090, 2
        %v2456 = vrot.slane %v1093, 2
        %v2457 = vsel %vm2454, %v2455, %v2456
        %v2458 = vrot.slane %v1098, 2
        %v2459 = vsel %vm2454, %v2456, %v2458
        %v2460 = vrot.slane %v1101, 2
        %v2461 = vsel %vm2454, %v2458, %v2460
        %v2462 = vrot.slane %v1106, 2
        %v2463 = vsel %vm2454, %v2460, %v2462
        %v2464 = vrot.slane %v1109, 2
        %v2465 = vsel %vm2454, %v2462, %v2464
        %v2466 = vrot.slane %v1114, 2
        %v2467 = vsel %vm2454, %v2464, %v2466
        %v2468 = vrot.slane %v1117, 2
        %v2469 = vsel %vm2454, %v2466, %v2468
        %v2470 = vrot.slane %v1122, 2
        %v2471 = vsel %vm2454, %v2468, %v2470
        %v2472 = vrot.slane %v1125, 2
        %v2473 = vsel %vm2454, %v2470, %v2472
        %v2474 = vrot.slane %v1130, 2
        %v2475 = vsel %vm2454, %v2472, %v2474
        %v2476 = vrot.slane %v1133, 2
        %v2477 = vsel %vm2454, %v2474, %v2476
        %v2478 = vrot.slane %v1138, 2
        %v2479 = vsel %vm2454, %v2476, %v2478
        %v2480 = vrot.slane %v1141, 2
        %v2481 = vsel %vm2454, %v2478, %v2480
        %v2482 = vrot.slane %v1146, 2
        %v2483 = vsel %vm2454, %v2480, %v2482
        %v2484 = vrot.slane %v1149, 2
        %v2485 = vsel %vm2454, %v2482, %v2484
        %v2486 = vrot.slane %v1154, 2
        %v2487 = vsel %vm2454, %v2484, %v2486
        %v2488 = vrot.slane %v1157, 2
        %v2489 = vsel %vm2454, %v2486, %v2488
        %v2490 = vrot.slane %v1162, 2
        %v2491 = vsel %vm2454, %v2488, %v2490
        %v2492 = vrot.slane %v1165, 2
        %v2493 = vsel %vm2454, %v2490, %v2492
        %v2494 = vrot.slane %v1170, 2
        %v2495 = vsel %vm2454, %v2492, %v2494
        %v2496 = vrot.slane %v1173, 2
        %v2497 = vsel %vm2454, %v2494, %v2496
        %v2498 = vrot.slane %v1178, 2
        %v2499 = vsel %vm2454, %v2496, %v2498
        %v2500 = vrot.slane %v1181, 2
        %v2501 = vsel %vm2454, %v2498, %v2500
        %v2502 = vrot.slane %v1186, 2
        %v2503 = vsel %vm2454, %v2500, %v2502
        %v2504 = vrot.slane %v1189, 2
        %v2505 = vsel %vm2454, %v2502, %v2504
        %v2506 = vrot.slane %v1194, 2
        %v2507 = vsel %vm2454, %v2504, %v2506
        %v2508 = vrot.slane %v1197, 2
        %v2509 = vsel %vm2454, %v2506, %v2508
        %v2510 = vrot.slane %v1202, 2
        %v2511 = vsel %vm2454, %v2508, %v2510
        %v2512 = vrot.slane %v1205, 2
        %v2513 = vsel %vm2454, %v2510, %v2512
        %v2514 = vrot.slane %v1210, 2
        %v2515 = vsel %vm2454, %v2512, %v2514
        %v2516 = vrot.slane %v1213, 2
        %v2517 = vsel %vm2454, %v2514, %v2516
        %v2518 = vrot.slane %v1218, 2
        %v2519 = vsel %vm2454, %v2516, %v2518
        %v2520 = vrot.slane %v1221, 2
        %v2521 = vsel %vm2454, %v2518, %v2520
        %v2522 = vrot.slane %v1226, 2
        %v2523 = vsel %vm2454, %v2520, %v2522
        %v2524 = vrot.slane %v1229, 2
        %v2525 = vsel %vm2454, %v2522, %v2524
        %v2526 = vrot.slane %v1234, 2
        %v2527 = vsel %vm2454, %v2524, %v2526
        %v2564 = vadd.f32 %v2381, %v2457
        %v2565 = vadd.f32 %v2382, %v2459
        %v2566 = vadd.f32 %v2383, %v2461
        %v2567 = vadd.f32 %v2384, %v2463
        %v2568 = vadd.f32 %v2385, %v2465
        %v2569 = vadd.f32 %v2386, %v2467
        %v2570 = vadd.f32 %v2387, %v2469
        %v2571 = vadd.f32 %v2388, %v2471
        %v2572 = vadd.f32 %v2389, %v2473
        %v2573 = vadd.f32 %v2390, %v2475
        %v2574 = vadd.f32 %v2391, %v2477
        %v2575 = vadd.f32 %v2392, %v2479
        %v2576 = vadd.f32 %v2393, %v2481
        %v2577 = vadd.f32 %v2394, %v2483
        %v2578 = vadd.f32 %v2395, %v2485
        %v2579 = vadd.f32 %v2396, %v2487
        %v2580 = vadd.f32 %v2397, %v2489
        %v2581 = vadd.f32 %v2398, %v2491
        %v2582 = vadd.f32 %v2399, %v2493
        %v2583 = vadd.f32 %v2400, %v2495
        %v2584 = vadd.f32 %v2401, %v2497
        %v2585 = vadd.f32 %v2402, %v2499
        %v2586 = vadd.f32 %v2403, %v2501
        %v2587 = vadd.f32 %v2404, %v2503
        %v2588 = vadd.f32 %v2405, %v2505
        %v2589 = vadd.f32 %v2406, %v2507
        %v2590 = vadd.f32 %v2407, %v2509
        %v2591 = vadd.f32 %v2408, %v2511
        %v2592 = vadd.f32 %v2409, %v2513
        %v2593 = vadd.f32 %v2410, %v2515
        %v2594 = vadd.f32 %v2411, %v2517
        %v2595 = vadd.f32 %v2412, %v2519
        %v2596 = vadd.f32 %v2413, %v2521
        %v2597 = vadd.f32 %v2414, %v2523
        %v2598 = vadd.f32 %v2415, %v2525
        %v2599 = vadd.f32 %v2416, %v2527
        %v2637 = vrot.slane %v1333, 2
        %v2638 = vrot.slane %v1337, 2
        %v2639 = vsel %vm2454, %v2637, %v2638
        %v2640 = vrot.slane %v1343, 2
        %v2641 = vsel %vm2454, %v2638, %v2640
        %v2642 = vrot.slane %v1347, 2
        %v2643 = vsel %vm2454, %v2640, %v2642
        %v2644 = vrot.slane %v1353, 2
        %v2645 = vsel %vm2454, %v2642, %v2644
        %v2646 = vrot.slane %v1357, 2
        %v2647 = vsel %vm2454, %v2644, %v2646
        %v2648 = vrot.slane %v1363, 2
        %v2649 = vsel %vm2454, %v2646, %v2648
        %v2650 = vrot.slane %v1367, 2
        %v2651 = vsel %vm2454, %v2648, %v2650
        %v2652 = vrot.slane %v1373, 2
        %v2653 = vsel %vm2454, %v2650, %v2652
        %v2654 = vrot.slane %v1377, 2
        %v2655 = vsel %vm2454, %v2652, %v2654
        %v2656 = vrot.slane %v1383, 2
        %v2657 = vsel %vm2454, %v2654, %v2656
        %v2658 = vrot.slane %v1387, 2
        %v2659 = vsel %vm2454, %v2656, %v2658
        %v2660 = vrot.slane %v1393, 2
        %v2661 = vsel %vm2454, %v2658, %v2660
        %v2662 = vrot.slane %v1397, 2
        %v2663 = vsel %vm2454, %v2660, %v2662
        %v2664 = vrot.slane %v1403, 2
        %v2665 = vsel %vm2454, %v2662, %v2664
        %v2666 = vrot.slane %v1407, 2
        %v2667 = vsel %vm2454, %v2664, %v2666
        %v2668 = vrot.slane %v1413, 2
        %v2669 = vsel %vm2454, %v2666, %v2668
        %v2670 = vrot.slane %v1417, 2
        %v2671 = vsel %vm2454, %v2668, %v2670
        %v2672 = vrot.slane %v1423, 2
        %v2673 = vsel %vm2454, %v2670, %v2672
        %v2674 = vrot.slane %v1427, 2
        %v2675 = vsel %vm2454, %v2672, %v2674
        %v2676 = vrot.slane %v1433, 2
        %v2677 = vsel %vm2454, %v2674, %v2676
        %v2678 = vrot.slane %v1437, 2
        %v2679 = vsel %vm2454, %v2676, %v2678
        %v2680 = vrot.slane %v1443, 2
        %v2681 = vsel %vm2454, %v2678, %v2680
        %v2682 = vrot.slane %v1447, 2
        %v2683 = vsel %vm2454, %v2680, %v2682
        %v2684 = vrot.slane %v1453, 2
        %v2685 = vsel %vm2454, %v2682, %v2684
        %v2686 = vrot.slane %v1457, 2
        %v2687 = vsel %vm2454, %v2684, %v2686
        %v2688 = vrot.slane %v1463, 2
        %v2689 = vsel %vm2454, %v2686, %v2688
        %v2690 = vrot.slane %v1467, 2
        %v2691 = vsel %vm2454, %v2688, %v2690
        %v2692 = vrot.slane %v1473, 2
        %v2693 = vsel %vm2454, %v2690, %v2692
        %v2694 = vrot.slane %v1477, 2
        %v2695 = vsel %vm2454, %v2692, %v2694
        %v2696 = vrot.slane %v1483, 2
        %v2697 = vsel %vm2454, %v2694, %v2696
        %v2698 = vrot.slane %v1487, 2
        %v2699 = vsel %vm2454, %v2696, %v2698
        %v2700 = vrot.slane %v1493, 2
        %v2701 = vsel %vm2454, %v2698, %v2700
        %v2702 = vrot.slane %v1497, 2
        %v2703 = vsel %vm2454, %v2700, %v2702
        %v2704 = vrot.slane %v1503, 2
        %v2705 = vsel %vm2454, %v2702, %v2704
        %v2706 = vrot.slane %v1507, 2
        %v2707 = vsel %vm2454, %v2704, %v2706
        %v2708 = vrot.slane %v1513, 2
        %v2709 = vsel %vm2454, %v2706, %v2708
        %v2746 = vadd.f32 %v2564, %v2639
        %v2747 = vadd.f32 %v2565, %v2641
        %v2748 = vadd.f32 %v2566, %v2643
        %v2749 = vadd.f32 %v2567, %v2645
        %v2750 = vadd.f32 %v2568, %v2647
        %v2751 = vadd.f32 %v2569, %v2649
        %v2752 = vadd.f32 %v2570, %v2651
        %v2753 = vadd.f32 %v2571, %v2653
        %v2754 = vadd.f32 %v2572, %v2655
        %v2755 = vadd.f32 %v2573, %v2657
        %v2756 = vadd.f32 %v2574, %v2659
        %v2757 = vadd.f32 %v2575, %v2661
        %v2758 = vadd.f32 %v2576, %v2663
        %v2759 = vadd.f32 %v2577, %v2665
        %v2760 = vadd.f32 %v2578, %v2667
        %v2761 = vadd.f32 %v2579, %v2669
        %v2762 = vadd.f32 %v2580, %v2671
        %v2763 = vadd.f32 %v2581, %v2673
        %v2764 = vadd.f32 %v2582, %v2675
        %v2765 = vadd.f32 %v2583, %v2677
        %v2766 = vadd.f32 %v2584, %v2679
        %v2767 = vadd.f32 %v2585, %v2681
        %v2768 = vadd.f32 %v2586, %v2683
        %v2769 = vadd.f32 %v2587, %v2685
        %v2770 = vadd.f32 %v2588, %v2687
        %v2771 = vadd.f32 %v2589, %v2689
        %v2772 = vadd.f32 %v2590, %v2691
        %v2773 = vadd.f32 %v2591, %v2693
        %v2774 = vadd.f32 %v2592, %v2695
        %v2775 = vadd.f32 %v2593, %v2697
        %v2776 = vadd.f32 %v2594, %v2699
        %v2777 = vadd.f32 %v2595, %v2701
        %v2778 = vadd.f32 %v2596, %v2703
        %v2779 = vadd.f32 %v2597, %v2705
        %v2780 = vadd.f32 %v2598, %v2707
        %v2781 = vadd.f32 %v2599, %v2709
        %vm2819 = vcmask 1044480
        %v2820 = vrot.slane %v1335, 3
        %v2821 = vrot.slane %v1339, 3
        %v2822 = vsel %vm2819, %v2820, %v2821
        %v2823 = vrot.slane %v1345, 3
        %v2824 = vsel %vm2819, %v2821, %v2823
        %v2825 = vrot.slane %v1349, 3
        %v2826 = vsel %vm2819, %v2823, %v2825
        %v2827 = vrot.slane %v1355, 3
        %v2828 = vsel %vm2819, %v2825, %v2827
        %v2829 = vrot.slane %v1359, 3
        %v2830 = vsel %vm2819, %v2827, %v2829
        %v2831 = vrot.slane %v1365, 3
        %v2832 = vsel %vm2819, %v2829, %v2831
        %v2833 = vrot.slane %v1369, 3
        %v2834 = vsel %vm2819, %v2831, %v2833
        %v2835 = vrot.slane %v1375, 3
        %v2836 = vsel %vm2819, %v2833, %v2835
        %v2837 = vrot.slane %v1379, 3
        %v2838 = vsel %vm2819, %v2835, %v2837
        %v2839 = vrot.slane %v1385, 3
        %v2840 = vsel %vm2819, %v2837, %v2839
        %v2841 = vrot.slane %v1389, 3
        %v2842 = vsel %vm2819, %v2839, %v2841
        %v2843 = vrot.slane %v1395, 3
        %v2844 = vsel %vm2819, %v2841, %v2843
        %v2845 = vrot.slane %v1399, 3
        %v2846 = vsel %vm2819, %v2843, %v2845
        %v2847 = vrot.slane %v1405, 3
        %v2848 = vsel %vm2819, %v2845, %v2847
        %v2849 = vrot.slane %v1409, 3
        %v2850 = vsel %vm2819, %v2847, %v2849
        %v2851 = vrot.slane %v1415, 3
        %v2852 = vsel %vm2819, %v2849, %v2851
        %v2853 = vrot.slane %v1419, 3
        %v2854 = vsel %vm2819, %v2851, %v2853
        %v2855 = vrot.slane %v1425, 3
        %v2856 = vsel %vm2819, %v2853, %v2855
        %v2857 = vrot.slane %v1429, 3
        %v2858 = vsel %vm2819, %v2855, %v2857
        %v2859 = vrot.slane %v1435, 3
        %v2860 = vsel %vm2819, %v2857, %v2859
        %v2861 = vrot.slane %v1439, 3
        %v2862 = vsel %vm2819, %v2859, %v2861
        %v2863 = vrot.slane %v1445, 3
        %v2864 = vsel %vm2819, %v2861, %v2863
        %v2865 = vrot.slane %v1449, 3
        %v2866 = vsel %vm2819, %v2863, %v2865
        %v2867 = vrot.slane %v1455, 3
        %v2868 = vsel %vm2819, %v2865, %v2867
        %v2869 = vrot.slane %v1459, 3
        %v2870 = vsel %vm2819, %v2867, %v2869
        %v2871 = vrot.slane %v1465, 3
        %v2872 = vsel %vm2819, %v2869, %v2871
        %v2873 = vrot.slane %v1469, 3
        %v2874 = vsel %vm2819, %v2871, %v2873
        %v2875 = vrot.slane %v1475, 3
        %v2876 = vsel %vm2819, %v2873, %v2875
        %v2877 = vrot.slane %v1479, 3
        %v2878 = vsel %vm2819, %v2875, %v2877
        %v2879 = vrot.slane %v1485, 3
        %v2880 = vsel %vm2819, %v2877, %v2879
        %v2881 = vrot.slane %v1489, 3
        %v2882 = vsel %vm2819, %v2879, %v2881
        %v2883 = vrot.slane %v1495, 3
        %v2884 = vsel %vm2819, %v2881, %v2883
        %v2885 = vrot.slane %v1499, 3
        %v2886 = vsel %vm2819, %v2883, %v2885
        %v2887 = vrot.slane %v1505, 3
        %v2888 = vsel %vm2819, %v2885, %v2887
        %v2889 = vrot.slane %v1509, 3
        %v2890 = vsel %vm2819, %v2887, %v2889
        %v2891 = vrot.slane %v1515, 3
        %v2892 = vsel %vm2819, %v2889, %v2891
        %v2929 = vadd.f32 %v2746, %v2822
        %v2930 = vadd.f32 %v2747, %v2824
        %v2931 = vadd.f32 %v2748, %v2826
        %v2932 = vadd.f32 %v2749, %v2828
        %v2933 = vadd.f32 %v2750, %v2830
        %v2934 = vadd.f32 %v2751, %v2832
        %v2935 = vadd.f32 %v2752, %v2834
        %v2936 = vadd.f32 %v2753, %v2836
        %v2937 = vadd.f32 %v2754, %v2838
        %v2938 = vadd.f32 %v2755, %v2840
        %v2939 = vadd.f32 %v2756, %v2842
        %v2940 = vadd.f32 %v2757, %v2844
        %v2941 = vadd.f32 %v2758, %v2846
        %v2942 = vadd.f32 %v2759, %v2848
        %v2943 = vadd.f32 %v2760, %v2850
        %v2944 = vadd.f32 %v2761, %v2852
        %v2945 = vadd.f32 %v2762, %v2854
        %v2946 = vadd.f32 %v2763, %v2856
        %v2947 = vadd.f32 %v2764, %v2858
        %v2948 = vadd.f32 %v2765, %v2860
        %v2949 = vadd.f32 %v2766, %v2862
        %v2950 = vadd.f32 %v2767, %v2864
        %v2951 = vadd.f32 %v2768, %v2866
        %v2952 = vadd.f32 %v2769, %v2868
        %v2953 = vadd.f32 %v2770, %v2870
        %v2954 = vadd.f32 %v2771, %v2872
        %v2955 = vadd.f32 %v2772, %v2874
        %v2956 = vadd.f32 %v2773, %v2876
        %v2957 = vadd.f32 %v2774, %v2878
        %v2958 = vadd.f32 %v2775, %v2880
        %v2959 = vadd.f32 %v2776, %v2882
        %v2960 = vadd.f32 %v2777, %v2884
        %v2961 = vadd.f32 %v2778, %v2886
        %v2962 = vadd.f32 %v2779, %v2888
        %v2963 = vadd.f32 %v2780, %v2890
        %v2964 = vadd.f32 %v2781, %v2892
        %vm3002 = vcmask 1043456
        %v3003 = vrot.slane %v1566, 4
        %v3004 = vrot.slane %v1569, 4
        %v3005 = vsel %vm3002, %v3003, %v3004
        %v3006 = vrot.slane %v1574, 4
        %v3007 = vsel %vm3002, %v3004, %v3006
        %v3008 = vrot.slane %v1577, 4
        %v3009 = vsel %vm3002, %v3006, %v3008
        %v3010 = vrot.slane %v1582, 4
        %v3011 = vsel %vm3002, %v3008, %v3010
        %v3012 = vrot.slane %v1585, 4
        %v3013 = vsel %vm3002, %v3010, %v3012
        %v3014 = vrot.slane %v1590, 4
        %v3015 = vsel %vm3002, %v3012, %v3014
        %v3016 = vrot.slane %v1593, 4
        %v3017 = vsel %vm3002, %v3014, %v3016
        %v3018 = vrot.slane %v1598, 4
        %v3019 = vsel %vm3002, %v3016, %v3018
        %v3020 = vrot.slane %v1601, 4
        %v3021 = vsel %vm3002, %v3018, %v3020
        %v3022 = vrot.slane %v1606, 4
        %v3023 = vsel %vm3002, %v3020, %v3022
        %v3024 = vrot.slane %v1609, 4
        %v3025 = vsel %vm3002, %v3022, %v3024
        %v3026 = vrot.slane %v1614, 4
        %v3027 = vsel %vm3002, %v3024, %v3026
        %v3028 = vrot.slane %v1617, 4
        %v3029 = vsel %vm3002, %v3026, %v3028
        %v3030 = vrot.slane %v1622, 4
        %v3031 = vsel %vm3002, %v3028, %v3030
        %v3032 = vrot.slane %v1625, 4
        %v3033 = vsel %vm3002, %v3030, %v3032
        %v3034 = vrot.slane %v1630, 4
        %v3035 = vsel %vm3002, %v3032, %v3034
        %v3036 = vrot.slane %v1633, 4
        %v3037 = vsel %vm3002, %v3034, %v3036
        %v3038 = vrot.slane %v1638, 4
        %v3039 = vsel %vm3002, %v3036, %v3038
        %v3040 = vrot.slane %v1641, 4
        %v3041 = vsel %vm3002, %v3038, %v3040
        %v3042 = vrot.slane %v1646, 4
        %v3043 = vsel %vm3002, %v3040, %v3042
        %v3044 = vrot.slane %v1649, 4
        %v3045 = vsel %vm3002, %v3042, %v3044
        %v3046 = vrot.slane %v1654, 4
        %v3047 = vsel %vm3002, %v3044, %v3046
        %v3048 = vrot.slane %v1657, 4
        %v3049 = vsel %vm3002, %v3046, %v3048
        %v3050 = vrot.slane %v1662, 4
        %v3051 = vsel %vm3002, %v3048, %v3050
        %v3052 = vrot.slane %v1665, 4
        %v3053 = vsel %vm3002, %v3050, %v3052
        %v3054 = vrot.slane %v1670, 4
        %v3055 = vsel %vm3002, %v3052, %v3054
        %v3056 = vrot.slane %v1673, 4
        %v3057 = vsel %vm3002, %v3054, %v3056
        %v3058 = vrot.slane %v1678, 4
        %v3059 = vsel %vm3002, %v3056, %v3058
        %v3060 = vrot.slane %v1681, 4
        %v3061 = vsel %vm3002, %v3058, %v3060
        %v3062 = vrot.slane %v1686, 4
        %v3063 = vsel %vm3002, %v3060, %v3062
        %v3064 = vrot.slane %v1689, 4
        %v3065 = vsel %vm3002, %v3062, %v3064
        %v3066 = vrot.slane %v1694, 4
        %v3067 = vsel %vm3002, %v3064, %v3066
        %v3068 = vrot.slane %v1697, 4
        %v3069 = vsel %vm3002, %v3066, %v3068
        %v3070 = vrot.slane %v1702, 4
        %v3071 = vsel %vm3002, %v3068, %v3070
        %v3072 = vrot.slane %v1705, 4
        %v3073 = vsel %vm3002, %v3070, %v3072
        %v3074 = vrot.slane %v1710, 4
        %v3075 = vsel %vm3002, %v3072, %v3074
        %v3112 = vadd.f32 %v2929, %v3005
        %v3113 = vadd.f32 %v2930, %v3007
        %v3114 = vadd.f32 %v2931, %v3009
        %v3115 = vadd.f32 %v2932, %v3011
        %v3116 = vadd.f32 %v2933, %v3013
        %v3117 = vadd.f32 %v2934, %v3015
        %v3118 = vadd.f32 %v2935, %v3017
        %v3119 = vadd.f32 %v2936, %v3019
        %v3120 = vadd.f32 %v2937, %v3021
        %v3121 = vadd.f32 %v2938, %v3023
        %v3122 = vadd.f32 %v2939, %v3025
        %v3123 = vadd.f32 %v2940, %v3027
        %v3124 = vadd.f32 %v2941, %v3029
        %v3125 = vadd.f32 %v2942, %v3031
        %v3126 = vadd.f32 %v2943, %v3033
        %v3127 = vadd.f32 %v2944, %v3035
        %v3128 = vadd.f32 %v2945, %v3037
        %v3129 = vadd.f32 %v2946, %v3039
        %v3130 = vadd.f32 %v2947, %v3041
        %v3131 = vadd.f32 %v2948, %v3043
        %v3132 = vadd.f32 %v2949, %v3045
        %v3133 = vadd.f32 %v2950, %v3047
        %v3134 = vadd.f32 %v2951, %v3049
        %v3135 = vadd.f32 %v2952, %v3051
        %v3136 = vadd.f32 %v2953, %v3053
        %v3137 = vadd.f32 %v2954, %v3055
        %v3138 = vadd.f32 %v2955, %v3057
        %v3139 = vadd.f32 %v2956, %v3059
        %v3140 = vadd.f32 %v2957, %v3061
        %v3141 = vadd.f32 %v2958, %v3063
        %v3142 = vadd.f32 %v2959, %v3065
        %v3143 = vadd.f32 %v2960, %v3067
        %v3144 = vadd.f32 %v2961, %v3069
        %v3145 = vadd.f32 %v2962, %v3071
        %v3146 = vadd.f32 %v2963, %v3073
        %v3147 = vadd.f32 %v2964, %v3075
        %v3185 = vrot.slane %v1809, 4
        %v3186 = vrot.slane %v1813, 4
        %v3187 = vsel %vm3002, %v3185, %v3186
        %v3188 = vrot.slane %v1819, 4
        %v3189 = vsel %vm3002, %v3186, %v3188
        %v3190 = vrot.slane %v1823, 4
        %v3191 = vsel %vm3002, %v3188, %v3190
        %v3192 = vrot.slane %v1829, 4
        %v3193 = vsel %vm3002, %v3190, %v3192
        %v3194 = vrot.slane %v1833, 4
        %v3195 = vsel %vm3002, %v3192, %v3194
        %v3196 = vrot.slane %v1839, 4
        %v3197 = vsel %vm3002, %v3194, %v3196
        %v3198 = vrot.slane %v1843, 4
        %v3199 = vsel %vm3002, %v3196, %v3198
        %v3200 = vrot.slane %v1849, 4
        %v3201 = vsel %vm3002, %v3198, %v3200
        %v3202 = vrot.slane %v1853, 4
        %v3203 = vsel %vm3002, %v3200, %v3202
        %v3204 = vrot.slane %v1859, 4
        %v3205 = vsel %vm3002, %v3202, %v3204
        %v3206 = vrot.slane %v1863, 4
        %v3207 = vsel %vm3002, %v3204, %v3206
        %v3208 = vrot.slane %v1869, 4
        %v3209 = vsel %vm3002, %v3206, %v3208
        %v3210 = vrot.slane %v1873, 4
        %v3211 = vsel %vm3002, %v3208, %v3210
        %v3212 = vrot.slane %v1879, 4
        %v3213 = vsel %vm3002, %v3210, %v3212
        %v3214 = vrot.slane %v1883, 4
        %v3215 = vsel %vm3002, %v3212, %v3214
        %v3216 = vrot.slane %v1889, 4
        %v3217 = vsel %vm3002, %v3214, %v3216
        %v3218 = vrot.slane %v1893, 4
        %v3219 = vsel %vm3002, %v3216, %v3218
        %v3220 = vrot.slane %v1899, 4
        %v3221 = vsel %vm3002, %v3218, %v3220
        %v3222 = vrot.slane %v1903, 4
        %v3223 = vsel %vm3002, %v3220, %v3222
        %v3224 = vrot.slane %v1909, 4
        %v3225 = vsel %vm3002, %v3222, %v3224
        %v3226 = vrot.slane %v1913, 4
        %v3227 = vsel %vm3002, %v3224, %v3226
        %v3228 = vrot.slane %v1919, 4
        %v3229 = vsel %vm3002, %v3226, %v3228
        %v3230 = vrot.slane %v1923, 4
        %v3231 = vsel %vm3002, %v3228, %v3230
        %v3232 = vrot.slane %v1929, 4
        %v3233 = vsel %vm3002, %v3230, %v3232
        %v3234 = vrot.slane %v1933, 4
        %v3235 = vsel %vm3002, %v3232, %v3234
        %v3236 = vrot.slane %v1939, 4
        %v3237 = vsel %vm3002, %v3234, %v3236
        %v3238 = vrot.slane %v1943, 4
        %v3239 = vsel %vm3002, %v3236, %v3238
        %v3240 = vrot.slane %v1949, 4
        %v3241 = vsel %vm3002, %v3238, %v3240
        %v3242 = vrot.slane %v1953, 4
        %v3243 = vsel %vm3002, %v3240, %v3242
        %v3244 = vrot.slane %v1959, 4
        %v3245 = vsel %vm3002, %v3242, %v3244
        %v3246 = vrot.slane %v1963, 4
        %v3247 = vsel %vm3002, %v3244, %v3246
        %v3248 = vrot.slane %v1969, 4
        %v3249 = vsel %vm3002, %v3246, %v3248
        %v3250 = vrot.slane %v1973, 4
        %v3251 = vsel %vm3002, %v3248, %v3250
        %v3252 = vrot.slane %v1979, 4
        %v3253 = vsel %vm3002, %v3250, %v3252
        %v3254 = vrot.slane %v1983, 4
        %v3255 = vsel %vm3002, %v3252, %v3254
        %v3256 = vrot.slane %v1989, 4
        %v3257 = vsel %vm3002, %v3254, %v3256
        %v3294 = vadd.f32 %v3112, %v3187
        %v3295 = vadd.f32 %v3113, %v3189
        %v3296 = vadd.f32 %v3114, %v3191
        %v3297 = vadd.f32 %v3115, %v3193
        %v3298 = vadd.f32 %v3116, %v3195
        %v3299 = vadd.f32 %v3117, %v3197
        %v3300 = vadd.f32 %v3118, %v3199
        %v3301 = vadd.f32 %v3119, %v3201
        %v3302 = vadd.f32 %v3120, %v3203
        %v3303 = vadd.f32 %v3121, %v3205
        %v3304 = vadd.f32 %v3122, %v3207
        %v3305 = vadd.f32 %v3123, %v3209
        %v3306 = vadd.f32 %v3124, %v3211
        %v3307 = vadd.f32 %v3125, %v3213
        %v3308 = vadd.f32 %v3126, %v3215
        %v3309 = vadd.f32 %v3127, %v3217
        %v3310 = vadd.f32 %v3128, %v3219
        %v3311 = vadd.f32 %v3129, %v3221
        %v3312 = vadd.f32 %v3130, %v3223
        %v3313 = vadd.f32 %v3131, %v3225
        %v3314 = vadd.f32 %v3132, %v3227
        %v3315 = vadd.f32 %v3133, %v3229
        %v3316 = vadd.f32 %v3134, %v3231
        %v3317 = vadd.f32 %v3135, %v3233
        %v3318 = vadd.f32 %v3136, %v3235
        %v3319 = vadd.f32 %v3137, %v3237
        %v3320 = vadd.f32 %v3138, %v3239
        %v3321 = vadd.f32 %v3139, %v3241
        %v3322 = vadd.f32 %v3140, %v3243
        %v3323 = vadd.f32 %v3141, %v3245
        %v3324 = vadd.f32 %v3142, %v3247
        %v3325 = vadd.f32 %v3143, %v3249
        %v3326 = vadd.f32 %v3144, %v3251
        %v3327 = vadd.f32 %v3145, %v3253
        %v3328 = vadd.f32 %v3146, %v3255
        %v3329 = vadd.f32 %v3147, %v3257
        %vm3367 = vcmask 1042432
        %v3368 = vrot.slane %v1811, 5
        %v3369 = vrot.slane %v1815, 5
        %v3370 = vsel %vm3367, %v3368, %v3369
        %v3371 = vrot.slane %v1821, 5
        %v3372 = vsel %vm3367, %v3369, %v3371
        %v3373 = vrot.slane %v1825, 5
        %v3374 = vsel %vm3367, %v3371, %v3373
        %v3375 = vrot.slane %v1831, 5
        %v3376 = vsel %vm3367, %v3373, %v3375
        %v3377 = vrot.slane %v1835, 5
        %v3378 = vsel %vm3367, %v3375, %v3377
        %v3379 = vrot.slane %v1841, 5
        %v3380 = vsel %vm3367, %v3377, %v3379
        %v3381 = vrot.slane %v1845, 5
        %v3382 = vsel %vm3367, %v3379, %v3381
        %v3383 = vrot.slane %v1851, 5
        %v3384 = vsel %vm3367, %v3381, %v3383
        %v3385 = vrot.slane %v1855, 5
        %v3386 = vsel %vm3367, %v3383, %v3385
        %v3387 = vrot.slane %v1861, 5
        %v3388 = vsel %vm3367, %v3385, %v3387
        %v3389 = vrot.slane %v1865, 5
        %v3390 = vsel %vm3367, %v3387, %v3389
        %v3391 = vrot.slane %v1871, 5
        %v3392 = vsel %vm3367, %v3389, %v3391
        %v3393 = vrot.slane %v1875, 5
        %v3394 = vsel %vm3367, %v3391, %v3393
        %v3395 = vrot.slane %v1881, 5
        %v3396 = vsel %vm3367, %v3393, %v3395
        %v3397 = vrot.slane %v1885, 5
        %v3398 = vsel %vm3367, %v3395, %v3397
        %v3399 = vrot.slane %v1891, 5
        %v3400 = vsel %vm3367, %v3397, %v3399
        %v3401 = vrot.slane %v1895, 5
        %v3402 = vsel %vm3367, %v3399, %v3401
        %v3403 = vrot.slane %v1901, 5
        %v3404 = vsel %vm3367, %v3401, %v3403
        %v3405 = vrot.slane %v1905, 5
        %v3406 = vsel %vm3367, %v3403, %v3405
        %v3407 = vrot.slane %v1911, 5
        %v3408 = vsel %vm3367, %v3405, %v3407
        %v3409 = vrot.slane %v1915, 5
        %v3410 = vsel %vm3367, %v3407, %v3409
        %v3411 = vrot.slane %v1921, 5
        %v3412 = vsel %vm3367, %v3409, %v3411
        %v3413 = vrot.slane %v1925, 5
        %v3414 = vsel %vm3367, %v3411, %v3413
        %v3415 = vrot.slane %v1931, 5
        %v3416 = vsel %vm3367, %v3413, %v3415
        %v3417 = vrot.slane %v1935, 5
        %v3418 = vsel %vm3367, %v3415, %v3417
        %v3419 = vrot.slane %v1941, 5
        %v3420 = vsel %vm3367, %v3417, %v3419
        %v3421 = vrot.slane %v1945, 5
        %v3422 = vsel %vm3367, %v3419, %v3421
        %v3423 = vrot.slane %v1951, 5
        %v3424 = vsel %vm3367, %v3421, %v3423
        %v3425 = vrot.slane %v1955, 5
        %v3426 = vsel %vm3367, %v3423, %v3425
        %v3427 = vrot.slane %v1961, 5
        %v3428 = vsel %vm3367, %v3425, %v3427
        %v3429 = vrot.slane %v1965, 5
        %v3430 = vsel %vm3367, %v3427, %v3429
        %v3431 = vrot.slane %v1971, 5
        %v3432 = vsel %vm3367, %v3429, %v3431
        %v3433 = vrot.slane %v1975, 5
        %v3434 = vsel %vm3367, %v3431, %v3433
        %v3435 = vrot.slane %v1981, 5
        %v3436 = vsel %vm3367, %v3433, %v3435
        %v3437 = vrot.slane %v1985, 5
        %v3438 = vsel %vm3367, %v3435, %v3437
        %v3439 = vrot.slane %v1991, 5
        %v3440 = vsel %vm3367, %v3437, %v3439
        %v3477 = vadd.f32 %v3294, %v3370
        %v3478 = vadd.f32 %v3295, %v3372
        %v3479 = vadd.f32 %v3296, %v3374
        %v3480 = vadd.f32 %v3297, %v3376
        %v3481 = vadd.f32 %v3298, %v3378
        %v3482 = vadd.f32 %v3299, %v3380
        %v3483 = vadd.f32 %v3300, %v3382
        %v3484 = vadd.f32 %v3301, %v3384
        %v3485 = vadd.f32 %v3302, %v3386
        %v3486 = vadd.f32 %v3303, %v3388
        %v3487 = vadd.f32 %v3304, %v3390
        %v3488 = vadd.f32 %v3305, %v3392
        %v3489 = vadd.f32 %v3306, %v3394
        %v3490 = vadd.f32 %v3307, %v3396
        %v3491 = vadd.f32 %v3308, %v3398
        %v3492 = vadd.f32 %v3309, %v3400
        %v3493 = vadd.f32 %v3310, %v3402
        %v3494 = vadd.f32 %v3311, %v3404
        %v3495 = vadd.f32 %v3312, %v3406
        %v3496 = vadd.f32 %v3313, %v3408
        %v3497 = vadd.f32 %v3314, %v3410
        %v3498 = vadd.f32 %v3315, %v3412
        %v3499 = vadd.f32 %v3316, %v3414
        %v3500 = vadd.f32 %v3317, %v3416
        %v3501 = vadd.f32 %v3318, %v3418
        %v3502 = vadd.f32 %v3319, %v3420
        %v3503 = vadd.f32 %v3320, %v3422
        %v3504 = vadd.f32 %v3321, %v3424
        %v3505 = vadd.f32 %v3322, %v3426
        %v3506 = vadd.f32 %v3323, %v3428
        %v3507 = vadd.f32 %v3324, %v3430
        %v3508 = vadd.f32 %v3325, %v3432
        %v3509 = vadd.f32 %v3326, %v3434
        %v3510 = vadd.f32 %v3327, %v3436
        %v3511 = vadd.f32 %v3328, %v3438
        %v3512 = vadd.f32 %v3329, %v3440
        %vm3550 = vcmask 1041408
        %v3551 = vrot.slane %v2042, 6
        %v3552 = vrot.slane %v2045, 6
        %v3553 = vsel %vm3550, %v3551, %v3552
        %v3554 = vrot.slane %v2050, 6
        %v3555 = vsel %vm3550, %v3552, %v3554
        %v3556 = vrot.slane %v2053, 6
        %v3557 = vsel %vm3550, %v3554, %v3556
        %v3558 = vrot.slane %v2058, 6
        %v3559 = vsel %vm3550, %v3556, %v3558
        %v3560 = vrot.slane %v2061, 6
        %v3561 = vsel %vm3550, %v3558, %v3560
        %v3562 = vrot.slane %v2066, 6
        %v3563 = vsel %vm3550, %v3560, %v3562
        %v3564 = vrot.slane %v2069, 6
        %v3565 = vsel %vm3550, %v3562, %v3564
        %v3566 = vrot.slane %v2074, 6
        %v3567 = vsel %vm3550, %v3564, %v3566
        %v3568 = vrot.slane %v2077, 6
        %v3569 = vsel %vm3550, %v3566, %v3568
        %v3570 = vrot.slane %v2082, 6
        %v3571 = vsel %vm3550, %v3568, %v3570
        %v3572 = vrot.slane %v2085, 6
        %v3573 = vsel %vm3550, %v3570, %v3572
        %v3574 = vrot.slane %v2090, 6
        %v3575 = vsel %vm3550, %v3572, %v3574
        %v3576 = vrot.slane %v2093, 6
        %v3577 = vsel %vm3550, %v3574, %v3576
        %v3578 = vrot.slane %v2098, 6
        %v3579 = vsel %vm3550, %v3576, %v3578
        %v3580 = vrot.slane %v2101, 6
        %v3581 = vsel %vm3550, %v3578, %v3580
        %v3582 = vrot.slane %v2106, 6
        %v3583 = vsel %vm3550, %v3580, %v3582
        %v3584 = vrot.slane %v2109, 6
        %v3585 = vsel %vm3550, %v3582, %v3584
        %v3586 = vrot.slane %v2114, 6
        %v3587 = vsel %vm3550, %v3584, %v3586
        %v3588 = vrot.slane %v2117, 6
        %v3589 = vsel %vm3550, %v3586, %v3588
        %v3590 = vrot.slane %v2122, 6
        %v3591 = vsel %vm3550, %v3588, %v3590
        %v3592 = vrot.slane %v2125, 6
        %v3593 = vsel %vm3550, %v3590, %v3592
        %v3594 = vrot.slane %v2130, 6
        %v3595 = vsel %vm3550, %v3592, %v3594
        %v3596 = vrot.slane %v2133, 6
        %v3597 = vsel %vm3550, %v3594, %v3596
        %v3598 = vrot.slane %v2138, 6
        %v3599 = vsel %vm3550, %v3596, %v3598
        %v3600 = vrot.slane %v2141, 6
        %v3601 = vsel %vm3550, %v3598, %v3600
        %v3602 = vrot.slane %v2146, 6
        %v3603 = vsel %vm3550, %v3600, %v3602
        %v3604 = vrot.slane %v2149, 6
        %v3605 = vsel %vm3550, %v3602, %v3604
        %v3606 = vrot.slane %v2154, 6
        %v3607 = vsel %vm3550, %v3604, %v3606
        %v3608 = vrot.slane %v2157, 6
        %v3609 = vsel %vm3550, %v3606, %v3608
        %v3610 = vrot.slane %v2162, 6
        %v3611 = vsel %vm3550, %v3608, %v3610
        %v3612 = vrot.slane %v2165, 6
        %v3613 = vsel %vm3550, %v3610, %v3612
        %v3614 = vrot.slane %v2170, 6
        %v3615 = vsel %vm3550, %v3612, %v3614
        %v3616 = vrot.slane %v2173, 6
        %v3617 = vsel %vm3550, %v3614, %v3616
        %v3618 = vrot.slane %v2178, 6
        %v3619 = vsel %vm3550, %v3616, %v3618
        %v3620 = vrot.slane %v2181, 6
        %v3621 = vsel %vm3550, %v3618, %v3620
        %v3622 = vrot.slane %v2186, 6
        %v3623 = vsel %vm3550, %v3620, %v3622
        %v3660 = vadd.f32 %v3477, %v3553
        %v3661 = vadd.f32 %v3478, %v3555
        %v3662 = vadd.f32 %v3479, %v3557
        %v3663 = vadd.f32 %v3480, %v3559
        %v3664 = vadd.f32 %v3481, %v3561
        %v3665 = vadd.f32 %v3482, %v3563
        %v3666 = vadd.f32 %v3483, %v3565
        %v3667 = vadd.f32 %v3484, %v3567
        %v3668 = vadd.f32 %v3485, %v3569
        %v3669 = vadd.f32 %v3486, %v3571
        %v3670 = vadd.f32 %v3487, %v3573
        %v3671 = vadd.f32 %v3488, %v3575
        %v3672 = vadd.f32 %v3489, %v3577
        %v3673 = vadd.f32 %v3490, %v3579
        %v3674 = vadd.f32 %v3491, %v3581
        %v3675 = vadd.f32 %v3492, %v3583
        %v3676 = vadd.f32 %v3493, %v3585
        %v3677 = vadd.f32 %v3494, %v3587
        %v3678 = vadd.f32 %v3495, %v3589
        %v3679 = vadd.f32 %v3496, %v3591
        %v3680 = vadd.f32 %v3497, %v3593
        %v3681 = vadd.f32 %v3498, %v3595
        %v3682 = vadd.f32 %v3499, %v3597
        %v3683 = vadd.f32 %v3500, %v3599
        %v3684 = vadd.f32 %v3501, %v3601
        %v3685 = vadd.f32 %v3502, %v3603
        %v3686 = vadd.f32 %v3503, %v3605
        %v3687 = vadd.f32 %v3504, %v3607
        %v3688 = vadd.f32 %v3505, %v3609
        %v3689 = vadd.f32 %v3506, %v3611
        %v3690 = vadd.f32 %v3507, %v3613
        %v3691 = vadd.f32 %v3508, %v3615
        %v3692 = vadd.f32 %v3509, %v3617
        %v3693 = vadd.f32 %v3510, %v3619
        %v3694 = vadd.f32 %v3511, %v3621
        %v3695 = vadd.f32 %v3512, %v3623
        %v3696 = vmax.f32 %v3660, 0.0
        %v3697 = vmax.f32 %v3661, 0.0
        %v3698 = vmax.f32 %v3662, 0.0
        %v3699 = vmax.f32 %v3663, 0.0
        %v3700 = vmax.f32 %v3664, 0.0
        %v3701 = vmax.f32 %v3665, 0.0
        %v3702 = vmax.f32 %v3666, 0.0
        %v3703 = vmax.f32 %v3667, 0.0
        %v3704 = vmax.f32 %v3668, 0.0
        %v3705 = vmax.f32 %v3669, 0.0
        %v3706 = vmax.f32 %v3670, 0.0
        %v3707 = vmax.f32 %v3671, 0.0
        %v3708 = vmax.f32 %v3672, 0.0
        %v3709 = vmax.f32 %v3673, 0.0
        %v3710 = vmax.f32 %v3674, 0.0
        %v3711 = vmax.f32 %v3675, 0.0
        %v3712 = vmax.f32 %v3676, 0.0
        %v3713 = vmax.f32 %v3677, 0.0
        %v3714 = vmax.f32 %v3678, 0.0
        %v3715 = vmax.f32 %v3679, 0.0
        %v3716 = vmax.f32 %v3680, 0.0
        %v3717 = vmax.f32 %v3681, 0.0
        %v3718 = vmax.f32 %v3682, 0.0
        %v3719 = vmax.f32 %v3683, 0.0
        %v3720 = vmax.f32 %v3684, 0.0
        %v3721 = vmax.f32 %v3685, 0.0
        %v3722 = vmax.f32 %v3686, 0.0
        %v3723 = vmax.f32 %v3687, 0.0
        %v3724 = vmax.f32 %v3688, 0.0
        %v3725 = vmax.f32 %v3689, 0.0
        %v3726 = vmax.f32 %v3690, 0.0
        %v3727 = vmax.f32 %v3691, 0.0
        %v3728 = vmax.f32 %v3692, 0.0
        %v3729 = vmax.f32 %v3693, 0.0
        %v3730 = vmax.f32 %v3694, 0.0
        %v3731 = vmax.f32 %v3695, 0.0
        %v3732 = vpack.c.bf16 %v3697, %v3696
        %v3733 = vpack.c.bf16 %v3699, %v3698
        %v3734 = vpack.c.bf16 %v3701, %v3700
        %v3735 = vpack.c.bf16 %v3703, %v3702
        %v3736 = vpack.c.bf16 %v3705, %v3704
        %v3737 = vpack.c.bf16 %v3707, %v3706
        %v3738 = vpack.c.bf16 %v3709, %v3708
        %v3739 = vpack.c.bf16 %v3711, %v3710
        %v3740 = vpack.c.bf16 %v3713, %v3712
        %v3741 = vpack.c.bf16 %v3715, %v3714
        %v3742 = vpack.c.bf16 %v3717, %v3716
        %v3743 = vpack.c.bf16 %v3719, %v3718
        %v3744 = vpack.c.bf16 %v3721, %v3720
        %v3745 = vpack.c.bf16 %v3723, %v3722
        %v3746 = vpack.c.bf16 %v3725, %v3724
        %v3747 = vpack.c.bf16 %v3727, %v3726
        %v3748 = vpack.c.bf16 %v3729, %v3728
        %v3749 = vpack.c.bf16 %v3731, %v3730
        %v3750 = vld [vmem:[%s2] sm:$0xff]
        %v3751 = vld [vmem:[%s2 + $0x8] sm:$0xf]
        %v3752 = vld [vmem:[%s2 + $0xc] sm:$0xff]
        %v3753 = vld [vmem:[%s2 + $0x14] sm:$0xf]
        %v3754 = vld [vmem:[%s2 + $0x18] sm:$0xff]
        %v3755 = vld [vmem:[%s2 + $0x20] sm:$0xf]
        %v3756 = vld [vmem:[%s2 + $0x24] sm:$0xff]
        %v3757 = vld [vmem:[%s2 + $0x2c] sm:$0xf]
        %v3758 = vld [vmem:[%s2 + $0x30] sm:$0xff]
        %v3759 = vld [vmem:[%s2 + $0x38] sm:$0xf]
        %v3760 = vld [vmem:[%s2 + $0x3c] sm:$0xff]
        %v3761 = vld [vmem:[%s2 + $0x44] sm:$0xf]
        %v3762 = vld [vmem:[%s2 + $0x48] sm:$0xff]
        %v3763 = vld [vmem:[%s2 + $0x50] sm:$0xf]
        %v3764 = vld [vmem:[%s2 + $0x54] sm:$0xff]
        %v3765 = vld [vmem:[%s2 + $0x5c] sm:$0xf]
        %v3766 = vld [vmem:[%s2 + $0x60] sm:$0xff]
        %v3767 = vld [vmem:[%s2 + $0x68] sm:$0xf]
        %v3768 = vld [vmem:[%s2 + $0x6c] sm:$0xff]
        %v3769 = vld [vmem:[%s2 + $0x74] sm:$0xf]
        %v3770 = vld [vmem:[%s2 + $0x78] sm:$0xff]
        %v3771 = vld [vmem:[%s2 + $0x80] sm:$0xf]
        %v3772 = vld [vmem:[%s2 + $0x84] sm:$0xff]
        %v3773 = vld [vmem:[%s2 + $0x8c] sm:$0xf]
        %v3774 = vld [vmem:[%s2 + $0x90] sm:$0xff]
        %v3775 = vld [vmem:[%s2 + $0x98] sm:$0xf]
        %v3776 = vld [vmem:[%s2 + $0x9c] sm:$0xff]
        %v3777 = vld [vmem:[%s2 + $0xa4] sm:$0xf]
        %v3778 = vld [vmem:[%s2 + $0xa8] sm:$0xff]
        %v3779 = vld [vmem:[%s2 + $0xb0] sm:$0xf]
        %v3780 = vld [vmem:[%s2 + $0xb4] sm:$0xff]
        %v3781 = vld [vmem:[%s2 + $0xbc] sm:$0xf]
        %v3782 = vld [vmem:[%s2 + $0xc0] sm:$0xff]
        %v3783 = vld [vmem:[%s2 + $0xc8] sm:$0xf]
        %v3784 = vld [vmem:[%s2 + $0xcc] sm:$0xff]
        %v3785 = vld [vmem:[%s2 + $0xd4] sm:$0xf]
        %v3786 = vld [vmem:[%s2 + $0xd8] sm:$0xff]
        %v3787 = vld [vmem:[%s2 + $0xe0] sm:$0xf]
        %v3788 = vld [vmem:[%s2 + $0xe4] sm:$0xff]
        %v3789 = vld [vmem:[%s2 + $0xec] sm:$0xf]
        %v3790 = vld [vmem:[%s2 + $0xf0] sm:$0xff]
        %v3791 = vld [vmem:[%s2 + $0xf8] sm:$0xf]
        %v3792 = vld [vmem:[%s2 + $0xfc] sm:$0xff]
        %v3793 = vld [vmem:[%s2 + $0x104] sm:$0xf]
        %v3794 = vld [vmem:[%s2 + $0x108] sm:$0xff]
        %v3795 = vld [vmem:[%s2 + $0x110] sm:$0xf]
        %v3796 = vld [vmem:[%s2 + $0x114] sm:$0xff]
        %v3797 = vld [vmem:[%s2 + $0x11c] sm:$0xf]
        %v3798 = vld [vmem:[%s2 + $0x120] sm:$0xff]
        %v3799 = vld [vmem:[%s2 + $0x128] sm:$0xf]
        %v3800 = vld [vmem:[%s2 + $0x12c] sm:$0xff]
        %v3801 = vld [vmem:[%s2 + $0x134] sm:$0xf]
        %v3802 = vld [vmem:[%s2 + $0x138] sm:$0xff]
        %v3803 = vld [vmem:[%s2 + $0x140] sm:$0xf]
        %v3804 = vld [vmem:[%s2 + $0x144] sm:$0xff]
        %v3805 = vld [vmem:[%s2 + $0x14c] sm:$0xf]
        %v3806 = vld [vmem:[%s2 + $0x150] sm:$0xff]
        %v3807 = vld [vmem:[%s2 + $0x158] sm:$0xf]
        %v3808 = vld [vmem:[%s2 + $0x15c] sm:$0xff]
        %v3809 = vld [vmem:[%s2 + $0x164] sm:$0xf]
        %v3810 = vld [vmem:[%s2 + $0x168] sm:$0xff]
        %v3811 = vld [vmem:[%s2 + $0x170] sm:$0xf]
        %v3812 = vld [vmem:[%s2 + $0x174] sm:$0xff]
        %v3813 = vld [vmem:[%s2 + $0x17c] sm:$0xf]
        %v3814 = vld [vmem:[%s2 + $0x180] sm:$0xff]
        %v3815 = vld [vmem:[%s2 + $0x188] sm:$0xf]
        %v3816 = vld [vmem:[%s2 + $0x18c] sm:$0xff]
        %v3817 = vld [vmem:[%s2 + $0x194] sm:$0xf]
        %v3818 = vld [vmem:[%s2 + $0x198] sm:$0xff]
        %v3819 = vld [vmem:[%s2 + $0x1a0] sm:$0xf]
        %v3820 = vld [vmem:[%s2 + $0x1a4] sm:$0xff]
        %v3821 = vld [vmem:[%s2 + $0x1ac] sm:$0xf]
        %v3822 = vld [vmem:[%s2 + $0x1b0] sm:$0xff]
        %v3823 = vld [vmem:[%s2 + $0x1b8] sm:$0xf]
        %v3824 = vld [vmem:[%s2 + $0x1bc] sm:$0xff]
        %v3825 = vld [vmem:[%s2 + $0x1c4] sm:$0xf]
        %v3826 = vld [vmem:[%s2 + $0x1c8] sm:$0xff]
        %v3827 = vld [vmem:[%s2 + $0x1d0] sm:$0xf]
        %v3828 = vld [vmem:[%s2 + $0x1d4] sm:$0xff]
        %v3829 = vld [vmem:[%s2 + $0x1dc] sm:$0xf]
        %v3830 = vld [vmem:[%s2 + $0x1e0] sm:$0xff]
        %v3831 = vld [vmem:[%s2 + $0x1e8] sm:$0xf]
        %v3832 = vld [vmem:[%s2 + $0x1ec] sm:$0xff]
        %v3833 = vld [vmem:[%s2 + $0x1f4] sm:$0xf]
        %v3834 = vld [vmem:[%s2 + $0x1f8] sm:$0xff]
        %v3835 = vld [vmem:[%s2 + $0x200] sm:$0xf]
        %v3836 = vld [vmem:[%s2 + $0x204] sm:$0xff]
        %v3837 = vld [vmem:[%s2 + $0x20c] sm:$0xf]
        %v3838 = vld [vmem:[%s2 + $0x210] sm:$0xff]
        %v3839 = vld [vmem:[%s2 + $0x218] sm:$0xf]
        %v3840 = vld [vmem:[%s2 + $0x21c] sm:$0xff]
        %v3841 = vld [vmem:[%s2 + $0x224] sm:$0xf]
        %v3842 = vld [vmem:[%s2 + $0x228] sm:$0xff]
        %v3843 = vld [vmem:[%s2 + $0x230] sm:$0xf]
        %v3844 = vld [vmem:[%s2 + $0x234] sm:$0xff]
        %v3845 = vld [vmem:[%s2 + $0x23c] sm:$0xf]
        %v3846 = vld [vmem:[%s2 + $0x240] sm:$0xff]
        %v3847 = vld [vmem:[%s2 + $0x248] sm:$0xf]
        %v3848 = vld [vmem:[%s2 + $0x24c] sm:$0xff]
        %v3849 = vld [vmem:[%s2 + $0x254] sm:$0xf]
        %v3850 = vld [vmem:[%s2 + $0x258] sm:$0xff]
        %v3851 = vld [vmem:[%s2 + $0x260] sm:$0xf]
        %v3852 = vld [vmem:[%s2 + $0x264] sm:$0xff]
        %v3853 = vld [vmem:[%s2 + $0x26c] sm:$0xf]
        %v3854 = vld [vmem:[%s2 + $0x270] sm:$0xff]
        %v3855 = vld [vmem:[%s2 + $0x278] sm:$0xf]
        %v3856 = vld [vmem:[%s2 + $0x27c] sm:$0xff]
        %v3857 = vld [vmem:[%s2 + $0x284] sm:$0xf]
        %v3858 = vld [vmem:[%s2 + $0x288] sm:$0xff]
        %v3859 = vld [vmem:[%s2 + $0x290] sm:$0xf]
        %v3860 = vld [vmem:[%s2 + $0x294] sm:$0xff]
        %v3861 = vld [vmem:[%s2 + $0x29c] sm:$0xf]
        %v3862 = vld [vmem:[%s2 + $0x2a0] sm:$0xff]
        %v3863 = vld [vmem:[%s2 + $0x2a8] sm:$0xf]
        %v3864 = vld [vmem:[%s2 + $0x2ac] sm:$0xff]
        %v3865 = vld [vmem:[%s2 + $0x2b4] sm:$0xf]
        %v3866 = vld [vmem:[%s2 + $0x2b8] sm:$0xff]
        %v3867 = vld [vmem:[%s2 + $0x2c0] sm:$0xf]
        %v3868 = vld [vmem:[%s2 + $0x2c4] sm:$0xff]
        %v3869 = vld [vmem:[%s2 + $0x2cc] sm:$0xf]
        %v3870 = vld [vmem:[%s2 + $0x2d0] sm:$0xff]
        %v3871 = vld [vmem:[%s2 + $0x2d8] sm:$0xf]
        %v3872 = vld [vmem:[%s2 + $0x2dc] sm:$0xff]
        %v3873 = vld [vmem:[%s2 + $0x2e4] sm:$0xf]
        %v3874 = vld [vmem:[%s2 + $0x2e8] sm:$0xff]
        %v3875 = vld [vmem:[%s2 + $0x2f0] sm:$0xf]
        %v3876 = vld [vmem:[%s2 + $0x2f4] sm:$0xff]
        %v3877 = vld [vmem:[%s2 + $0x2fc] sm:$0xf]
        %v3878 = vld [vmem:[%s2 + $0x300] sm:$0xff]
        %v3879 = vld [vmem:[%s2 + $0x308] sm:$0xf]
        %v3880 = vld [vmem:[%s2 + $0x30c] sm:$0xff]
        %v3881 = vld [vmem:[%s2 + $0x314] sm:$0xf]
        %v3882 = vld [vmem:[%s2 + $0x318] sm:$0xff]
        %v3883 = vld [vmem:[%s2 + $0x320] sm:$0xf]
        %v3884 = vld [vmem:[%s2 + $0x324] sm:$0xff]
        %v3885 = vld [vmem:[%s2 + $0x32c] sm:$0xf]
        %v3886 = vld [vmem:[%s2 + $0x330] sm:$0xff]
        %v3887 = vld [vmem:[%s2 + $0x338] sm:$0xf]
        %v3888 = vld [vmem:[%s2 + $0x33c] sm:$0xff]
        %v3889 = vld [vmem:[%s2 + $0x344] sm:$0xf]
        %v3890 = vld [vmem:[%s2 + $0x348] sm:$0xff]
        %v3891 = vld [vmem:[%s2 + $0x350] sm:$0xf]
        %v3892 = vld [vmem:[%s2 + $0x354] sm:$0xff]
        %v3893 = vld [vmem:[%s2 + $0x35c] sm:$0xf]
        %v3894 = vld [vmem:[%s2 + $0x360] sm:$0xff]
        %v3895 = vld [vmem:[%s2 + $0x368] sm:$0xf]
        %v3896 = vld [vmem:[%s2 + $0x36c] sm:$0xff]
        %v3897 = vld [vmem:[%s2 + $0x374] sm:$0xf]
        %v3898 = vld [vmem:[%s2 + $0x378] sm:$0xff]
        %v3899 = vld [vmem:[%s2 + $0x380] sm:$0xf]
        %v3900 = vld [vmem:[%s2 + $0x384] sm:$0xff]
        %v3901 = vld [vmem:[%s2 + $0x38c] sm:$0xf]
        %v3902 = vld [vmem:[%s2 + $0x390] sm:$0xff]
        %v3903 = vld [vmem:[%s2 + $0x398] sm:$0xf]
        %v3904 = vld [vmem:[%s2 + $0x39c] sm:$0xff]
        %v3905 = vld [vmem:[%s2 + $0x3a4] sm:$0xf]
        %v3906 = vld [vmem:[%s2 + $0x3a8] sm:$0xff]
        %v3907 = vld [vmem:[%s2 + $0x3b0] sm:$0xf]
        %v3908 = vld [vmem:[%s2 + $0x3b4] sm:$0xff]
        %v3909 = vld [vmem:[%s2 + $0x3bc] sm:$0xf]
        %v3910 = vld [vmem:[%s2 + $0x3c0] sm:$0xff]
        %v3911 = vld [vmem:[%s2 + $0x3c8] sm:$0xf]
        %v3912 = vld [vmem:[%s2 + $0x3cc] sm:$0xff]
        %v3913 = vld [vmem:[%s2 + $0x3d4] sm:$0xf]
        %v3914 = vld [vmem:[%s2 + $0x3d8] sm:$0xff]
        %v3915 = vld [vmem:[%s2 + $0x3e0] sm:$0xf]
        %v3916 = vld [vmem:[%s2 + $0x3e4] sm:$0xff]
        %v3917 = vld [vmem:[%s2 + $0x3ec] sm:$0xf]
        %v3918 = vld [vmem:[%s2 + $0x3f0] sm:$0xff]
        %v3919 = vld [vmem:[%s2 + $0x3f8] sm:$0xf]
        %v3920 = vld [vmem:[%s2 + $0x3fc] sm:$0xff]
        %v3921 = vld [vmem:[%s2 + $0x404] sm:$0xf]
        %v3922 = vld [vmem:[%s2 + $0x408] sm:$0xff]
        %v3923 = vld [vmem:[%s2 + $0x410] sm:$0xf]
        %v3924 = vld [vmem:[%s2 + $0x414] sm:$0xff]
        %v3925 = vld [vmem:[%s2 + $0x41c] sm:$0xf]
        %v3926 = vld [vmem:[%s2 + $0x420] sm:$0xff]
        %v3927 = vld [vmem:[%s2 + $0x428] sm:$0xf]
        %v3928 = vld [vmem:[%s2 + $0x42c] sm:$0xff]
        %v3929 = vld [vmem:[%s2 + $0x434] sm:$0xf]
        %v3930 = vld [vmem:[%s2 + $0x438] sm:$0xff]
        %v3931 = vld [vmem:[%s2 + $0x440] sm:$0xf]
        %v3932 = vld [vmem:[%s2 + $0x444] sm:$0xff]
        %v3933 = vld [vmem:[%s2 + $0x44c] sm:$0xf]
        %v3934 = vld [vmem:[%s2 + $0x450] sm:$0xff]
        %v3935 = vld [vmem:[%s2 + $0x458] sm:$0xf]
        %v3936 = vld [vmem:[%s2 + $0x45c] sm:$0xff]
        %v3937 = vld [vmem:[%s2 + $0x464] sm:$0xf]
        %v3938 = vld [vmem:[%s2 + $0x468] sm:$0xff]
        %v3939 = vld [vmem:[%s2 + $0x470] sm:$0xf]
        %v3940 = vld [vmem:[%s2 + $0x474] sm:$0xff]
        %v3941 = vld [vmem:[%s2 + $0x47c] sm:$0xf]
        %v3942 = vld [vmem:[%s2 + $0x480] sm:$0xff]
        %v3943 = vld [vmem:[%s2 + $0x488] sm:$0xf]
        %v3944 = vld [vmem:[%s2 + $0x48c] sm:$0xff]
        %v3945 = vld [vmem:[%s2 + $0x494] sm:$0xf]
        %v3946 = vld [vmem:[%s2 + $0x498] sm:$0xff]
        %v3947 = vld [vmem:[%s2 + $0x4a0] sm:$0xf]
        %v3948 = vld [vmem:[%s2 + $0x4a4] sm:$0xff]
        %v3949 = vld [vmem:[%s2 + $0x4ac] sm:$0xf]
        %v3950 = vld [vmem:[%s2 + $0x4b0] sm:$0xff]
        %v3951 = vld [vmem:[%s2 + $0x4b8] sm:$0xf]
        %v3952 = vld [vmem:[%s2 + $0x4bc] sm:$0xff]
        %v3953 = vld [vmem:[%s2 + $0x4c4] sm:$0xf]
        %v3954 = vld [vmem:[%s2 + $0x4c8] sm:$0xff]
        %v3955 = vld [vmem:[%s2 + $0x4d0] sm:$0xf]
        %v3956 = vld [vmem:[%s2 + $0x4d4] sm:$0xff]
        %v3957 = vld [vmem:[%s2 + $0x4dc] sm:$0xf]
        %v3958 = vld [vmem:[%s2 + $0x4e0] sm:$0xff]
        %v3959 = vld [vmem:[%s2 + $0x4e8] sm:$0xf]
        %v3960 = vld [vmem:[%s2 + $0x4ec] sm:$0xff]
        %v3961 = vld [vmem:[%s2 + $0x4f4] sm:$0xf]
        %v3962 = vld [vmem:[%s2 + $0x4f8] sm:$0xff]
        %v3963 = vld [vmem:[%s2 + $0x500] sm:$0xf]
        %v3964 = vld [vmem:[%s2 + $0x504] sm:$0xff]
        %v3965 = vld [vmem:[%s2 + $0x50c] sm:$0xf]
        %v3966 = vld [vmem:[%s2 + $0x510] sm:$0xff]
        %v3967 = vld [vmem:[%s2 + $0x518] sm:$0xf]
        %v3968 = vld [vmem:[%s2 + $0x51c] sm:$0xff]
        %v3969 = vld [vmem:[%s2 + $0x524] sm:$0xf]
        %v3970 = vld [vmem:[%s2 + $0x528] sm:$0xff]
        %v3971 = vld [vmem:[%s2 + $0x530] sm:$0xf]
        %v3972 = vld [vmem:[%s2 + $0x534] sm:$0xff]
        %v3973 = vld [vmem:[%s2 + $0x53c] sm:$0xf]
        %v3974 = vld [vmem:[%s2 + $0x540] sm:$0xff]
        %v3975 = vld [vmem:[%s2 + $0x548] sm:$0xf]
        %v3976 = vld [vmem:[%s2 + $0x54c] sm:$0xff]
        %v3977 = vld [vmem:[%s2 + $0x554] sm:$0xf]
        %v3978 = vld [vmem:[%s2 + $0x558] sm:$0xff]
        %v3979 = vld [vmem:[%s2 + $0x560] sm:$0xf]
        %v3980 = vld [vmem:[%s2 + $0x564] sm:$0xff]
        %v3981 = vld [vmem:[%s2 + $0x56c] sm:$0xf]
        %v3982 = vld [vmem:[%s2 + $0x570] sm:$0xff]
        %v3983 = vld [vmem:[%s2 + $0x578] sm:$0xf]
        %v3984 = vld [vmem:[%s2 + $0x57c] sm:$0xff]
        %v3985 = vld [vmem:[%s2 + $0x584] sm:$0xf]
        %v3986 = vld [vmem:[%s2 + $0x588] sm:$0xff]
        %v3987 = vld [vmem:[%s2 + $0x590] sm:$0xf]
        %v3988 = vld [vmem:[%s2 + $0x594] sm:$0xff]
        %v3989 = vld [vmem:[%s2 + $0x59c] sm:$0xf]
        %v3990 = vld [vmem:[%s2 + $0x5a0] sm:$0xff]
        %v3991 = vld [vmem:[%s2 + $0x5a8] sm:$0xf]
        %v3992 = vld [vmem:[%s2 + $0x5ac] sm:$0xff]
        %v3993 = vld [vmem:[%s2 + $0x5b4] sm:$0xf]
        %v3994 = vld [vmem:[%s2 + $0x5b8] sm:$0xff]
        %v3995 = vld [vmem:[%s2 + $0x5c0] sm:$0xf]
        %v3996 = vld [vmem:[%s2 + $0x5c4] sm:$0xff]
        %v3997 = vld [vmem:[%s2 + $0x5cc] sm:$0xf]
        %v3998 = vld [vmem:[%s2 + $0x5d0] sm:$0xff]
        %v3999 = vld [vmem:[%s2 + $0x5d8] sm:$0xf]
        %v4000 = vld [vmem:[%s2 + $0x5dc] sm:$0xff]
        %v4001 = vld [vmem:[%s2 + $0x5e4] sm:$0xf]
        %v4002 = vld [vmem:[%s2 + $0x5e8] sm:$0xff]
        %v4003 = vld [vmem:[%s2 + $0x5f0] sm:$0xf]
        %v4004 = vld [vmem:[%s2 + $0x5f4] sm:$0xff]
        %v4005 = vld [vmem:[%s2 + $0x5fc] sm:$0xf]
        %v4006 = vld [vmem:[%s2 + $0x600] sm:$0xff]
        %v4007 = vld [vmem:[%s2 + $0x608] sm:$0xf]
        %v4008 = vld [vmem:[%s2 + $0x60c] sm:$0xff]
        %v4009 = vld [vmem:[%s2 + $0x614] sm:$0xf]
        %v4010 = vld [vmem:[%s2 + $0x618] sm:$0xff]
        %v4011 = vld [vmem:[%s2 + $0x620] sm:$0xf]
        %v4012 = vld [vmem:[%s2 + $0x624] sm:$0xff]
        %v4013 = vld [vmem:[%s2 + $0x62c] sm:$0xf]
        %v4014 = vld [vmem:[%s2 + $0x630] sm:$0xff]
        %v4015 = vld [vmem:[%s2 + $0x638] sm:$0xf]
        %v4016 = vld [vmem:[%s2 + $0x63c] sm:$0xff]
        %v4017 = vld [vmem:[%s2 + $0x644] sm:$0xf]
        %v4018 = vld [vmem:[%s2 + $0x648] sm:$0xff]
        %v4019 = vld [vmem:[%s2 + $0x650] sm:$0xf]
        %v4020 = vld [vmem:[%s2 + $0x654] sm:$0xff]
        %v4021 = vld [vmem:[%s2 + $0x65c] sm:$0xf]
        %v4022 = vld [vmem:[%s2 + $0x660] sm:$0xff]
        %v4023 = vld [vmem:[%s2 + $0x668] sm:$0xf]
        %v4024 = vld [vmem:[%s2 + $0x66c] sm:$0xff]
        %v4025 = vld [vmem:[%s2 + $0x674] sm:$0xf]
        %v4026 = vld [vmem:[%s2 + $0x678] sm:$0xff]
        %v4027 = vld [vmem:[%s2 + $0x680] sm:$0xf]
        %v4028 = vld [vmem:[%s2 + $0x684] sm:$0xff]
        %v4029 = vld [vmem:[%s2 + $0x68c] sm:$0xf]
        %v4030 = vld [vmem:[%s2 + $0x690] sm:$0xff]
        %v4031 = vld [vmem:[%s2 + $0x698] sm:$0xf]
        %v4032 = vld [vmem:[%s2 + $0x69c] sm:$0xff]
        %v4033 = vld [vmem:[%s2 + $0x6a4] sm:$0xf]
        %v4034 = vld [vmem:[%s2 + $0x6a8] sm:$0xff]
        %v4035 = vld [vmem:[%s2 + $0x6b0] sm:$0xf]
        %v4036 = vld [vmem:[%s2 + $0x6b4] sm:$0xff]
        %v4037 = vld [vmem:[%s2 + $0x6bc] sm:$0xf]
        %v4038 = vld [vmem:[%s2 + $0x6c0] sm:$0x77]
        %v4039 = vld [vmem:[%s2 + $0x6c8] sm:$0x7]
        %v4330 = vunpack.c.l.b16 %v3750
        %v4331 = vunpack.c.h.b16 %v3750
        %v4332 = vunpack.c.l.b16 %v3751
        %v4333 = vunpack.c.l.b16 %v3752
        %v4334 = vunpack.c.h.b16 %v3752
        %v4335 = vunpack.c.l.b16 %v3753
        %v4336 = vunpack.c.l.b16 %v3754
        %v4337 = vunpack.c.h.b16 %v3754
        %v4338 = vunpack.c.l.b16 %v3755
        %v4339 = vunpack.c.l.b16 %v3756
        %v4340 = vunpack.c.h.b16 %v3756
        %v4341 = vunpack.c.l.b16 %v3757
        %v4342 = vunpack.c.l.b16 %v3758
        %v4343 = vunpack.c.h.b16 %v3758
        %v4344 = vunpack.c.l.b16 %v3759
        %v4345 = vunpack.c.l.b16 %v3760
        %v4346 = vunpack.c.h.b16 %v3760
        %v4347 = vunpack.c.l.b16 %v3761
        %v4348 = vunpack.c.l.b16 %v3762
        %v4349 = vunpack.c.h.b16 %v3762
        %v4350 = vunpack.c.l.b16 %v3763
        %v4351 = vunpack.c.l.b16 %v3764
        %v4352 = vunpack.c.h.b16 %v3764
        %v4353 = vunpack.c.l.b16 %v3765
        %v4354 = vunpack.c.l.b16 %v3766
        %v4355 = vunpack.c.h.b16 %v3766
        %v4356 = vunpack.c.l.b16 %v3767
        %v4357 = vunpack.c.l.b16 %v3768
        %v4358 = vunpack.c.h.b16 %v3768
        %v4359 = vunpack.c.l.b16 %v3769
        %v4360 = vunpack.c.l.b16 %v3770
        %v4361 = vunpack.c.h.b16 %v3770
        %v4362 = vunpack.c.l.b16 %v3771
        %v4363 = vunpack.c.l.b16 %v3772
        %v4364 = vunpack.c.h.b16 %v3772
        %v4365 = vunpack.c.l.b16 %v3773
        %v4366 = vunpack.c.l.b16 %v3774
        %v4367 = vunpack.c.h.b16 %v3774
        %v4368 = vunpack.c.l.b16 %v3775
        %v4369 = vunpack.c.l.b16 %v3776
        %v4370 = vunpack.c.h.b16 %v3776
        %v4371 = vunpack.c.l.b16 %v3777
        %v4372 = vunpack.c.l.b16 %v3778
        %v4373 = vunpack.c.h.b16 %v3778
        %v4374 = vunpack.c.l.b16 %v3779
        %v4375 = vunpack.c.l.b16 %v3780
        %v4376 = vunpack.c.h.b16 %v3780
        %v4377 = vunpack.c.l.b16 %v3781
        %v4378 = vunpack.c.l.b16 %v3782
        %v4379 = vunpack.c.h.b16 %v3782
        %v4380 = vunpack.c.l.b16 %v3783
        %v4381 = vunpack.c.l.b16 %v3784
        %v4382 = vunpack.c.h.b16 %v3784
        %v4383 = vunpack.c.l.b16 %v3785
        %v4384 = vunpack.c.l.b16 %v3786
        %v4385 = vunpack.c.h.b16 %v3786
        %v4386 = vunpack.c.l.b16 %v3787
        %v4387 = vunpack.c.l.b16 %v3788
        %v4388 = vunpack.c.h.b16 %v3788
        %v4389 = vunpack.c.l.b16 %v3789
        %v4390 = vunpack.c.l.b16 %v3790
        %v4391 = vunpack.c.h.b16 %v3790
        %v4392 = vunpack.c.l.b16 %v3791
        %v4393 = vunpack.c.l.b16 %v3792
        %v4394 = vunpack.c.h.b16 %v3792
        %v4395 = vunpack.c.l.b16 %v3793
        %v4396 = vunpack.c.l.b16 %v3794
        %v4397 = vunpack.c.h.b16 %v3794
        %v4398 = vunpack.c.l.b16 %v3795
        %v4399 = vunpack.c.l.b16 %v3796
        %v4400 = vunpack.c.h.b16 %v3796
        %v4401 = vunpack.c.l.b16 %v3797
        %v4402 = vunpack.c.l.b16 %v3798
        %v4403 = vunpack.c.h.b16 %v3798
        %v4404 = vunpack.c.l.b16 %v3799
        %v4405 = vunpack.c.l.b16 %v3800
        %v4406 = vunpack.c.h.b16 %v3800
        %v4407 = vunpack.c.l.b16 %v3801
        %v4408 = vunpack.c.l.b16 %v3802
        %v4409 = vunpack.c.h.b16 %v3802
        %v4410 = vunpack.c.l.b16 %v3803
        %v4411 = vunpack.c.l.b16 %v3804
        %v4412 = vunpack.c.h.b16 %v3804
        %v4413 = vunpack.c.l.b16 %v3805
        %v4414 = vunpack.c.l.b16 %v3806
        %v4415 = vunpack.c.h.b16 %v3806
        %v4416 = vunpack.c.l.b16 %v3807
        %v4417 = vunpack.c.l.b16 %v3808
        %v4418 = vunpack.c.h.b16 %v3808
        %v4419 = vunpack.c.l.b16 %v3809
        %v4420 = vunpack.c.l.b16 %v3810
        %v4421 = vunpack.c.h.b16 %v3810
        %v4422 = vunpack.c.l.b16 %v3811
        %v4423 = vunpack.c.l.b16 %v3812
        %v4424 = vunpack.c.h.b16 %v3812
        %v4425 = vunpack.c.l.b16 %v3813
        %v4426 = vunpack.c.l.b16 %v3814
        %v4427 = vunpack.c.h.b16 %v3814
        %v4428 = vunpack.c.l.b16 %v3815
        %v4429 = vunpack.c.l.b16 %v3816
        %v4430 = vunpack.c.h.b16 %v3816
        %v4431 = vunpack.c.l.b16 %v3817
        %v4432 = vunpack.c.l.b16 %v3818
        %v4433 = vunpack.c.h.b16 %v3818
        %v4434 = vunpack.c.l.b16 %v3819
        %v4435 = vunpack.c.l.b16 %v3820
        %v4436 = vunpack.c.h.b16 %v3820
        %v4437 = vunpack.c.l.b16 %v3821
        %v4438 = vunpack.c.l.b16 %v3822
        %v4439 = vunpack.c.h.b16 %v3822
        %v4440 = vunpack.c.l.b16 %v3823
        %v4441 = vunpack.c.l.b16 %v3824
        %v4442 = vunpack.c.h.b16 %v3824
        %v4443 = vunpack.c.l.b16 %v3825
        %v4444 = vunpack.c.l.b16 %v3826
        %v4445 = vunpack.c.h.b16 %v3826
        %v4446 = vunpack.c.l.b16 %v3827
        %v4447 = vunpack.c.l.b16 %v3828
        %v4448 = vunpack.c.h.b16 %v3828
        %v4449 = vunpack.c.l.b16 %v3829
        %v4450 = vunpack.c.l.b16 %v3830
        %v4451 = vunpack.c.h.b16 %v3830
        %v4452 = vunpack.c.l.b16 %v3831
        %v4453 = vunpack.c.l.b16 %v3832
        %v4454 = vunpack.c.h.b16 %v3832
        %v4455 = vunpack.c.l.b16 %v3833
        %v4456 = vunpack.c.l.b16 %v3834
        %v4457 = vunpack.c.h.b16 %v3834
        %v4458 = vunpack.c.l.b16 %v3835
        %v4459 = vunpack.c.l.b16 %v3836
        %v4460 = vunpack.c.h.b16 %v3836
        %v4461 = vunpack.c.l.b16 %v3837
        %v4462 = vunpack.c.l.b16 %v3838
        %v4463 = vunpack.c.h.b16 %v3838
        %v4464 = vunpack.c.l.b16 %v3839
        %v4465 = vunpack.c.l.b16 %v3840
        %v4466 = vunpack.c.h.b16 %v3840
        %v4467 = vunpack.c.l.b16 %v3841
        %v4468 = vunpack.c.l.b16 %v3842
        %v4469 = vunpack.c.h.b16 %v3842
        %v4470 = vunpack.c.l.b16 %v3843
        %v4471 = vunpack.c.l.b16 %v3844
        %v4472 = vunpack.c.h.b16 %v3844
        %v4473 = vunpack.c.l.b16 %v3845
        %v4474 = vunpack.c.l.b16 %v3846
        %v4475 = vunpack.c.h.b16 %v3846
        %v4476 = vunpack.c.l.b16 %v3847
        %v4477 = vunpack.c.l.b16 %v3848
        %v4478 = vunpack.c.h.b16 %v3848
        %v4479 = vunpack.c.l.b16 %v3849
        %v4480 = vunpack.c.l.b16 %v3850
        %v4481 = vunpack.c.h.b16 %v3850
        %v4482 = vunpack.c.l.b16 %v3851
        %v4483 = vunpack.c.l.b16 %v3852
        %v4484 = vunpack.c.h.b16 %v3852
        %v4485 = vunpack.c.l.b16 %v3853
        %v4486 = vunpack.c.l.b16 %v3854
        %v4487 = vunpack.c.h.b16 %v3854
        %v4488 = vunpack.c.l.b16 %v3855
        %v4489 = vunpack.c.l.b16 %v3856
        %v4490 = vunpack.c.h.b16 %v3856
        %v4491 = vunpack.c.l.b16 %v3857
        %v4492 = vunpack.c.l.b16 %v3858
        %v4493 = vunpack.c.h.b16 %v3858
        %v4494 = vunpack.c.l.b16 %v3859
        %v4495 = vunpack.c.l.b16 %v3860
        %v4496 = vunpack.c.h.b16 %v3860
        %v4497 = vunpack.c.l.b16 %v3861
        %v4498 = vunpack.c.l.b16 %v3862
        %v4499 = vunpack.c.h.b16 %v3862
        %v4500 = vunpack.c.l.b16 %v3863
        %v4501 = vunpack.c.l.b16 %v3864
        %v4502 = vunpack.c.h.b16 %v3864
        %v4503 = vunpack.c.l.b16 %v3865
        %v4504 = vunpack.c.l.b16 %v3866
        %v4505 = vunpack.c.h.b16 %v3866
        %v4506 = vunpack.c.l.b16 %v3867
        %v4507 = vunpack.c.l.b16 %v3868
        %v4508 = vunpack.c.h.b16 %v3868
        %v4509 = vunpack.c.l.b16 %v3869
        %v4510 = vunpack.c.l.b16 %v3870
        %v4511 = vunpack.c.h.b16 %v3870
        %v4512 = vunpack.c.l.b16 %v3871
        %v4513 = vunpack.c.l.b16 %v3872
        %v4514 = vunpack.c.h.b16 %v3872
        %v4515 = vunpack.c.l.b16 %v3873
        %v4516 = vunpack.c.l.b16 %v3874
        %v4517 = vunpack.c.h.b16 %v3874
        %v4518 = vunpack.c.l.b16 %v3875
        %v4519 = vunpack.c.l.b16 %v3876
        %v4520 = vunpack.c.h.b16 %v3876
        %v4521 = vunpack.c.l.b16 %v3877
        %v4522 = vunpack.c.l.b16 %v3878
        %v4523 = vunpack.c.h.b16 %v3878
        %v4524 = vunpack.c.l.b16 %v3879
        %v4525 = vunpack.c.l.b16 %v3880
        %v4526 = vunpack.c.h.b16 %v3880
        %v4527 = vunpack.c.l.b16 %v3881
        %v4528 = vunpack.c.l.b16 %v3882
        %v4529 = vunpack.c.h.b16 %v3882
        %v4530 = vunpack.c.l.b16 %v3883
        %v4531 = vunpack.c.l.b16 %v3884
        %v4532 = vunpack.c.h.b16 %v3884
        %v4533 = vunpack.c.l.b16 %v3885
        %v4534 = vunpack.c.l.b16 %v3886
        %v4535 = vunpack.c.h.b16 %v3886
        %v4536 = vunpack.c.l.b16 %v3887
        %v4537 = vunpack.c.l.b16 %v3888
        %v4538 = vunpack.c.h.b16 %v3888
        %v4539 = vunpack.c.l.b16 %v3889
        %v4540 = vunpack.c.l.b16 %v3890
        %v4541 = vunpack.c.h.b16 %v3890
        %v4542 = vunpack.c.l.b16 %v3891
        %v4543 = vunpack.c.l.b16 %v3892
        %v4544 = vunpack.c.h.b16 %v3892
        %v4545 = vunpack.c.l.b16 %v3893
        %v4546 = vunpack.c.l.b16 %v3894
        %v4547 = vunpack.c.h.b16 %v3894
        %v4548 = vunpack.c.l.b16 %v3895
        %v4549 = vunpack.c.l.b16 %v3896
        %v4550 = vunpack.c.h.b16 %v3896
        %v4551 = vunpack.c.l.b16 %v3897
        %v4552 = vunpack.c.l.b16 %v3898
        %v4553 = vunpack.c.h.b16 %v3898
        %v4554 = vunpack.c.l.b16 %v3899
        %v4555 = vunpack.c.l.b16 %v3900
        %v4556 = vunpack.c.h.b16 %v3900
        %v4557 = vunpack.c.l.b16 %v3901
        %v4558 = vunpack.c.l.b16 %v3902
        %v4559 = vunpack.c.h.b16 %v3902
        %v4560 = vunpack.c.l.b16 %v3903
        %v4561 = vunpack.c.l.b16 %v3904
        %v4562 = vunpack.c.h.b16 %v3904
        %v4563 = vunpack.c.l.b16 %v3905
        %v4564 = vunpack.c.l.b16 %v3906
        %v4565 = vunpack.c.h.b16 %v3906
        %v4566 = vunpack.c.l.b16 %v3907
        %v4567 = vunpack.c.l.b16 %v3908
        %v4568 = vunpack.c.h.b16 %v3908
        %v4569 = vunpack.c.l.b16 %v3909
        %v4570 = vunpack.c.l.b16 %v3910
        %v4571 = vunpack.c.h.b16 %v3910
        %v4572 = vunpack.c.l.b16 %v3911
        %v4573 = vunpack.c.l.b16 %v3912
        %v4574 = vunpack.c.h.b16 %v3912
        %v4575 = vunpack.c.l.b16 %v3913
        %v4576 = vunpack.c.l.b16 %v3914
        %v4577 = vunpack.c.h.b16 %v3914
        %v4578 = vunpack.c.l.b16 %v3915
        %v4579 = vunpack.c.l.b16 %v3916
        %v4580 = vunpack.c.h.b16 %v3916
        %v4581 = vunpack.c.l.b16 %v3917
        %v4582 = vunpack.c.l.b16 %v3918
        %v4583 = vunpack.c.h.b16 %v3918
        %v4584 = vunpack.c.l.b16 %v3919
        %v4585 = vunpack.c.l.b16 %v3920
        %v4586 = vunpack.c.h.b16 %v3920
        %v4587 = vunpack.c.l.b16 %v3921
        %v4588 = vunpack.c.l.b16 %v3922
        %v4589 = vunpack.c.h.b16 %v3922
        %v4590 = vunpack.c.l.b16 %v3923
        %v4591 = vunpack.c.l.b16 %v3924
        %v4592 = vunpack.c.h.b16 %v3924
        %v4593 = vunpack.c.l.b16 %v3925
        %v4594 = vunpack.c.l.b16 %v3926
        %v4595 = vunpack.c.h.b16 %v3926
        %v4596 = vunpack.c.l.b16 %v3927
        %v4597 = vunpack.c.l.b16 %v3928
        %v4598 = vunpack.c.h.b16 %v3928
        %v4599 = vunpack.c.l.b16 %v3929
        %v4600 = vunpack.c.l.b16 %v3930
        %v4601 = vunpack.c.h.b16 %v3930
        %v4602 = vunpack.c.l.b16 %v3931
        %v4603 = vunpack.c.l.b16 %v3932
        %v4604 = vunpack.c.h.b16 %v3932
        %v4605 = vunpack.c.l.b16 %v3933
        %v4606 = vunpack.c.l.b16 %v3934
        %v4607 = vunpack.c.h.b16 %v3934
        %v4608 = vunpack.c.l.b16 %v3935
        %v4609 = vunpack.c.l.b16 %v3936
        %v4610 = vunpack.c.h.b16 %v3936
        %v4611 = vunpack.c.l.b16 %v3937
        %v4612 = vunpack.c.l.b16 %v3938
        %v4613 = vunpack.c.h.b16 %v3938
        %v4614 = vunpack.c.l.b16 %v3939
        %v4615 = vunpack.c.l.b16 %v3940
        %v4616 = vunpack.c.h.b16 %v3940
        %v4617 = vunpack.c.l.b16 %v3941
        %v4618 = vunpack.c.l.b16 %v3942
        %v4619 = vunpack.c.h.b16 %v3942
        %v4620 = vunpack.c.l.b16 %v3943
        %v4621 = vunpack.c.l.b16 %v3944
        %v4622 = vunpack.c.h.b16 %v3944
        %v4623 = vunpack.c.l.b16 %v3945
        %v4624 = vunpack.c.l.b16 %v3946
        %v4625 = vunpack.c.h.b16 %v3946
        %v4626 = vunpack.c.l.b16 %v3947
        %v4627 = vunpack.c.l.b16 %v3948
        %v4628 = vunpack.c.h.b16 %v3948
        %v4629 = vunpack.c.l.b16 %v3949
        %v4630 = vunpack.c.l.b16 %v3950
        %v4631 = vunpack.c.h.b16 %v3950
        %v4632 = vunpack.c.l.b16 %v3951
        %v4633 = vunpack.c.l.b16 %v3952
        %v4634 = vunpack.c.h.b16 %v3952
        %v4635 = vunpack.c.l.b16 %v3953
        %v4636 = vunpack.c.l.b16 %v3954
        %v4637 = vunpack.c.h.b16 %v3954
        %v4638 = vunpack.c.l.b16 %v3955
        %v4639 = vunpack.c.l.b16 %v3956
        %v4640 = vunpack.c.h.b16 %v3956
        %v4641 = vunpack.c.l.b16 %v3957
        %v4642 = vunpack.c.l.b16 %v3958
        %v4643 = vunpack.c.h.b16 %v3958
        %v4644 = vunpack.c.l.b16 %v3959
        %v4645 = vunpack.c.l.b16 %v3960
        %v4646 = vunpack.c.h.b16 %v3960
        %v4647 = vunpack.c.l.b16 %v3961
        %v4648 = vunpack.c.l.b16 %v3962
        %v4649 = vunpack.c.h.b16 %v3962
        %v4650 = vunpack.c.l.b16 %v3963
        %v4651 = vunpack.c.l.b16 %v3964
        %v4652 = vunpack.c.h.b16 %v3964
        %v4653 = vunpack.c.l.b16 %v3965
        %v4654 = vunpack.c.l.b16 %v3966
        %v4655 = vunpack.c.h.b16 %v3966
        %v4656 = vunpack.c.l.b16 %v3967
        %v4657 = vunpack.c.l.b16 %v3968
        %v4658 = vunpack.c.h.b16 %v3968
        %v4659 = vunpack.c.l.b16 %v3969
        %v4660 = vunpack.c.l.b16 %v3970
        %v4661 = vunpack.c.h.b16 %v3970
        %v4662 = vunpack.c.l.b16 %v3971
        %v4663 = vunpack.c.l.b16 %v3972
        %v4664 = vunpack.c.h.b16 %v3972
        %v4665 = vunpack.c.l.b16 %v3973
        %v4666 = vunpack.c.l.b16 %v3974
        %v4667 = vunpack.c.h.b16 %v3974
        %v4668 = vunpack.c.l.b16 %v3975
        %v4669 = vunpack.c.l.b16 %v3976
        %v4670 = vunpack.c.h.b16 %v3976
        %v4671 = vunpack.c.l.b16 %v3977
        %v4672 = vunpack.c.l.b16 %v3978
        %v4673 = vunpack.c.h.b16 %v3978
        %v4674 = vunpack.c.l.b16 %v3979
        %v4675 = vunpack.c.l.b16 %v3980
        %v4676 = vunpack.c.h.b16 %v3980
        %v4677 = vunpack.c.l.b16 %v3981
        %v4678 = vunpack.c.l.b16 %v3982
        %v4679 = vunpack.c.h.b16 %v3982
        %v4680 = vunpack.c.l.b16 %v3983
        %v4681 = vunpack.c.l.b16 %v3984
        %v4682 = vunpack.c.h.b16 %v3984
        %v4683 = vunpack.c.l.b16 %v3985
        %v4684 = vunpack.c.l.b16 %v3986
        %v4685 = vunpack.c.h.b16 %v3986
        %v4686 = vunpack.c.l.b16 %v3987
        %v4687 = vunpack.c.l.b16 %v3988
        %v4688 = vunpack.c.h.b16 %v3988
        %v4689 = vunpack.c.l.b16 %v3989
        %v4690 = vunpack.c.l.b16 %v3990
        %v4691 = vunpack.c.h.b16 %v3990
        %v4692 = vunpack.c.l.b16 %v3991
        %v4693 = vunpack.c.l.b16 %v3992
        %v4694 = vunpack.c.h.b16 %v3992
        %v4695 = vunpack.c.l.b16 %v3993
        %v4696 = vunpack.c.l.b16 %v3994
        %v4697 = vunpack.c.h.b16 %v3994
        %v4698 = vunpack.c.l.b16 %v3995
        %v4699 = vunpack.c.l.b16 %v3996
        %v4700 = vunpack.c.h.b16 %v3996
        %v4701 = vunpack.c.l.b16 %v3997
        %v4702 = vunpack.c.l.b16 %v3998
        %v4703 = vunpack.c.h.b16 %v3998
        %v4704 = vunpack.c.l.b16 %v3999
        %v4705 = vunpack.c.l.b16 %v4000
        %v4706 = vunpack.c.h.b16 %v4000
        %v4707 = vunpack.c.l.b16 %v4001
        %v4708 = vunpack.c.l.b16 %v4002
        %v4709 = vunpack.c.h.b16 %v4002
        %v4710 = vunpack.c.l.b16 %v4003
        %v4711 = vunpack.c.l.b16 %v4004
        %v4712 = vunpack.c.h.b16 %v4004
        %v4713 = vunpack.c.l.b16 %v4005
        %v4714 = vunpack.c.l.b16 %v4006
        %v4715 = vunpack.c.h.b16 %v4006
        %v4716 = vunpack.c.l.b16 %v4007
        %v4717 = vunpack.c.l.b16 %v4008
        %v4718 = vunpack.c.h.b16 %v4008
        %v4719 = vunpack.c.l.b16 %v4009
        %v4720 = vunpack.c.l.b16 %v4010
        %v4721 = vunpack.c.h.b16 %v4010
        %v4722 = vunpack.c.l.b16 %v4011
        %v4723 = vunpack.c.l.b16 %v4012
        %v4724 = vunpack.c.h.b16 %v4012
        %v4725 = vunpack.c.l.b16 %v4013
        %v4726 = vunpack.c.l.b16 %v4014
        %v4727 = vunpack.c.h.b16 %v4014
        %v4728 = vunpack.c.l.b16 %v4015
        %v4729 = vunpack.c.l.b16 %v4016
        %v4730 = vunpack.c.h.b16 %v4016
        %v4731 = vunpack.c.l.b16 %v4017
        %v4732 = vunpack.c.l.b16 %v4018
        %v4733 = vunpack.c.h.b16 %v4018
        %v4734 = vunpack.c.l.b16 %v4019
        %v4735 = vunpack.c.l.b16 %v4020
        %v4736 = vunpack.c.h.b16 %v4020
        %v4737 = vunpack.c.l.b16 %v4021
        %v4738 = vunpack.c.l.b16 %v4022
        %v4739 = vunpack.c.h.b16 %v4022
        %v4740 = vunpack.c.l.b16 %v4023
        %v4741 = vunpack.c.l.b16 %v4024
        %v4742 = vunpack.c.h.b16 %v4024
        %v4743 = vunpack.c.l.b16 %v4025
        %v4744 = vunpack.c.l.b16 %v4026
        %v4745 = vunpack.c.h.b16 %v4026
        %v4746 = vunpack.c.l.b16 %v4027
        %v4747 = vunpack.c.l.b16 %v4028
        %v4748 = vunpack.c.h.b16 %v4028
        %v4749 = vunpack.c.l.b16 %v4029
        %v4750 = vunpack.c.l.b16 %v4030
        %v4751 = vunpack.c.h.b16 %v4030
        %v4752 = vunpack.c.l.b16 %v4031
        %v4753 = vunpack.c.l.b16 %v4032
        %v4754 = vunpack.c.h.b16 %v4032
        %v4755 = vunpack.c.l.b16 %v4033
        %v4756 = vunpack.c.l.b16 %v4034
        %v4757 = vunpack.c.h.b16 %v4034
        %v4758 = vunpack.c.l.b16 %v4035
        %v4759 = vunpack.c.l.b16 %v4036
        %v4760 = vunpack.c.h.b16 %v4036
        %v4761 = vunpack.c.l.b16 %v4037
        %v4762 = vunpack.c.l.b16 %v4038
        %v4763 = vunpack.c.h.b16 %v4038
        %v4764 = vunpack.c.l.b16 %v4039
        %v4765 = vpack.c.b16 %v4333, %v4330
        %v4766 = vpack.c.b16 %v4334, %v4331
        %v4767 = vpack.c.b16 %v4335, %v4332
        %v4768 = vpack.c.b16 %v4339, %v4336
        %v4769 = vpack.c.b16 %v4340, %v4337
        %v4770 = vpack.c.b16 %v4341, %v4338
        %v4771 = vpack.c.b16 %v4345, %v4342
        %v4772 = vpack.c.b16 %v4346, %v4343
        %v4773 = vpack.c.b16 %v4347, %v4344
        %v4774 = vpack.c.b16 %v4351, %v4348
        %v4775 = vpack.c.b16 %v4352, %v4349
        %v4776 = vpack.c.b16 %v4353, %v4350
        %v4777 = vpack.c.b16 %v4357, %v4354
        %v4778 = vpack.c.b16 %v4358, %v4355
        %v4779 = vpack.c.b16 %v4359, %v4356
        %v4780 = vpack.c.b16 %v4363, %v4360
        %v4781 = vpack.c.b16 %v4364, %v4361
        %v4782 = vpack.c.b16 %v4365, %v4362
        %v4783 = vpack.c.b16 %v4369, %v4366
        %v4784 = vpack.c.b16 %v4370, %v4367
        %v4785 = vpack.c.b16 %v4371, %v4368
        %v4786 = vpack.c.b16 %v4375, %v4372
        %v4787 = vpack.c.b16 %v4376, %v4373
        %v4788 = vpack.c.b16 %v4377, %v4374
        %v4789 = vpack.c.b16 %v4381, %v4378
        %v4790 = vpack.c.b16 %v4382, %v4379
        %v4791 = vpack.c.b16 %v4383, %v4380
        %v4792 = vpack.c.b16 %v4387, %v4384
        %v4793 = vpack.c.b16 %v4388, %v4385
        %v4794 = vpack.c.b16 %v4389, %v4386
        %v4795 = vpack.c.b16 %v4393, %v4390
        %v4796 = vpack.c.b16 %v4394, %v4391
        %v4797 = vpack.c.b16 %v4395, %v4392
        %v4798 = vpack.c.b16 %v4399, %v4396
        %v4799 = vpack.c.b16 %v4400, %v4397
        %v4800 = vpack.c.b16 %v4401, %v4398
        %v4801 = vpack.c.b16 %v4405, %v4402
        %v4802 = vpack.c.b16 %v4406, %v4403
        %v4803 = vpack.c.b16 %v4407, %v4404
        %v4804 = vpack.c.b16 %v4411, %v4408
        %v4805 = vpack.c.b16 %v4412, %v4409
        %v4806 = vpack.c.b16 %v4413, %v4410
        %v4807 = vpack.c.b16 %v4417, %v4414
        %v4808 = vpack.c.b16 %v4418, %v4415
        %v4809 = vpack.c.b16 %v4419, %v4416
        %v4810 = vpack.c.b16 %v4423, %v4420
        %v4811 = vpack.c.b16 %v4424, %v4421
        %v4812 = vpack.c.b16 %v4425, %v4422
        %v4813 = vpack.c.b16 %v4429, %v4426
        %v4814 = vpack.c.b16 %v4430, %v4427
        %v4815 = vpack.c.b16 %v4431, %v4428
        %v4816 = vpack.c.b16 %v4435, %v4432
        %v4817 = vpack.c.b16 %v4436, %v4433
        %v4818 = vpack.c.b16 %v4437, %v4434
        %v4819 = vpack.c.b16 %v4441, %v4438
        %v4820 = vpack.c.b16 %v4442, %v4439
        %v4821 = vpack.c.b16 %v4443, %v4440
        %v4822 = vpack.c.b16 %v4447, %v4444
        %v4823 = vpack.c.b16 %v4448, %v4445
        %v4824 = vpack.c.b16 %v4449, %v4446
        %v4825 = vpack.c.b16 %v4453, %v4450
        %v4826 = vpack.c.b16 %v4454, %v4451
        %v4827 = vpack.c.b16 %v4455, %v4452
        %v4828 = vpack.c.b16 %v4459, %v4456
        %v4829 = vpack.c.b16 %v4460, %v4457
        %v4830 = vpack.c.b16 %v4461, %v4458
        %v4831 = vpack.c.b16 %v4465, %v4462
        %v4832 = vpack.c.b16 %v4466, %v4463
        %v4833 = vpack.c.b16 %v4467, %v4464
        %v4834 = vpack.c.b16 %v4471, %v4468
        %v4835 = vpack.c.b16 %v4472, %v4469
        %v4836 = vpack.c.b16 %v4473, %v4470
        %v4837 = vpack.c.b16 %v4477, %v4474
        %v4838 = vpack.c.b16 %v4478, %v4475
        %v4839 = vpack.c.b16 %v4479, %v4476
        %v4840 = vpack.c.b16 %v4483, %v4480
        %v4841 = vpack.c.b16 %v4484, %v4481
        %v4842 = vpack.c.b16 %v4485, %v4482
        %v4843 = vpack.c.b16 %v4489, %v4486
        %v4844 = vpack.c.b16 %v4490, %v4487
        %v4845 = vpack.c.b16 %v4491, %v4488
        %v4846 = vpack.c.b16 %v4495, %v4492
        %v4847 = vpack.c.b16 %v4496, %v4493
        %v4848 = vpack.c.b16 %v4497, %v4494
        %v4849 = vpack.c.b16 %v4501, %v4498
        %v4850 = vpack.c.b16 %v4502, %v4499
        %v4851 = vpack.c.b16 %v4503, %v4500
        %v4852 = vpack.c.b16 %v4507, %v4504
        %v4853 = vpack.c.b16 %v4508, %v4505
        %v4854 = vpack.c.b16 %v4509, %v4506
        %v4855 = vpack.c.b16 %v4513, %v4510
        %v4856 = vpack.c.b16 %v4514, %v4511
        %v4857 = vpack.c.b16 %v4515, %v4512
        %v4858 = vpack.c.b16 %v4519, %v4516
        %v4859 = vpack.c.b16 %v4520, %v4517
        %v4860 = vpack.c.b16 %v4521, %v4518
        %v4861 = vpack.c.b16 %v4525, %v4522
        %v4862 = vpack.c.b16 %v4526, %v4523
        %v4863 = vpack.c.b16 %v4527, %v4524
        %v4864 = vpack.c.b16 %v4531, %v4528
        %v4865 = vpack.c.b16 %v4532, %v4529
        %v4866 = vpack.c.b16 %v4533, %v4530
        %v4867 = vpack.c.b16 %v4537, %v4534
        %v4868 = vpack.c.b16 %v4538, %v4535
        %v4869 = vpack.c.b16 %v4539, %v4536
        %v4870 = vpack.c.b16 %v4543, %v4540
        %v4871 = vpack.c.b16 %v4544, %v4541
        %v4872 = vpack.c.b16 %v4545, %v4542
        %v4873 = vpack.c.b16 %v4549, %v4546
        %v4874 = vpack.c.b16 %v4550, %v4547
        %v4875 = vpack.c.b16 %v4551, %v4548
        %v4876 = vpack.c.b16 %v4555, %v4552
        %v4877 = vpack.c.b16 %v4556, %v4553
        %v4878 = vpack.c.b16 %v4557, %v4554
        %v4879 = vpack.c.b16 %v4561, %v4558
        %v4880 = vpack.c.b16 %v4562, %v4559
        %v4881 = vpack.c.b16 %v4563, %v4560
        %v4882 = vpack.c.b16 %v4567, %v4564
        %v4883 = vpack.c.b16 %v4568, %v4565
        %v4884 = vpack.c.b16 %v4569, %v4566
        %v4885 = vpack.c.b16 %v4573, %v4570
        %v4886 = vpack.c.b16 %v4574, %v4571
        %v4887 = vpack.c.b16 %v4575, %v4572
        %v4888 = vpack.c.b16 %v4579, %v4576
        %v4889 = vpack.c.b16 %v4580, %v4577
        %v4890 = vpack.c.b16 %v4581, %v4578
        %v4891 = vpack.c.b16 %v4585, %v4582
        %v4892 = vpack.c.b16 %v4586, %v4583
        %v4893 = vpack.c.b16 %v4587, %v4584
        %v4894 = vpack.c.b16 %v4591, %v4588
        %v4895 = vpack.c.b16 %v4592, %v4589
        %v4896 = vpack.c.b16 %v4593, %v4590
        %v4897 = vpack.c.b16 %v4597, %v4594
        %v4898 = vpack.c.b16 %v4598, %v4595
        %v4899 = vpack.c.b16 %v4599, %v4596
        %v4900 = vpack.c.b16 %v4603, %v4600
        %v4901 = vpack.c.b16 %v4604, %v4601
        %v4902 = vpack.c.b16 %v4605, %v4602
        %v4903 = vpack.c.b16 %v4609, %v4606
        %v4904 = vpack.c.b16 %v4610, %v4607
        %v4905 = vpack.c.b16 %v4611, %v4608
        %v4906 = vpack.c.b16 %v4615, %v4612
        %v4907 = vpack.c.b16 %v4616, %v4613
        %v4908 = vpack.c.b16 %v4617, %v4614
        %v4909 = vpack.c.b16 %v4621, %v4618
        %v4910 = vpack.c.b16 %v4622, %v4619
        %v4911 = vpack.c.b16 %v4623, %v4620
        %v4912 = vpack.c.b16 %v4627, %v4624
        %v4913 = vpack.c.b16 %v4628, %v4625
        %v4914 = vpack.c.b16 %v4629, %v4626
        %v4915 = vpack.c.b16 %v4633, %v4630
        %v4916 = vpack.c.b16 %v4634, %v4631
        %v4917 = vpack.c.b16 %v4635, %v4632
        %v4918 = vpack.c.b16 %v4639, %v4636
        %v4919 = vpack.c.b16 %v4640, %v4637
        %v4920 = vpack.c.b16 %v4641, %v4638
        %v4921 = vpack.c.b16 %v4645, %v4642
        %v4922 = vpack.c.b16 %v4646, %v4643
        %v4923 = vpack.c.b16 %v4647, %v4644
        %v4924 = vpack.c.b16 %v4651, %v4648
        %v4925 = vpack.c.b16 %v4652, %v4649
        %v4926 = vpack.c.b16 %v4653, %v4650
        %v4927 = vpack.c.b16 %v4657, %v4654
        %v4928 = vpack.c.b16 %v4658, %v4655
        %v4929 = vpack.c.b16 %v4659, %v4656
        %v4930 = vpack.c.b16 %v4663, %v4660
        %v4931 = vpack.c.b16 %v4664, %v4661
        %v4932 = vpack.c.b16 %v4665, %v4662
        %v4933 = vpack.c.b16 %v4669, %v4666
        %v4934 = vpack.c.b16 %v4670, %v4667
        %v4935 = vpack.c.b16 %v4671, %v4668
        %v4936 = vpack.c.b16 %v4675, %v4672
        %v4937 = vpack.c.b16 %v4676, %v4673
        %v4938 = vpack.c.b16 %v4677, %v4674
        %v4939 = vpack.c.b16 %v4681, %v4678
        %v4940 = vpack.c.b16 %v4682, %v4679
        %v4941 = vpack.c.b16 %v4683, %v4680
        %v4942 = vpack.c.b16 %v4687, %v4684
        %v4943 = vpack.c.b16 %v4688, %v4685
        %v4944 = vpack.c.b16 %v4689, %v4686
        %v4945 = vpack.c.b16 %v4693, %v4690
        %v4946 = vpack.c.b16 %v4694, %v4691
        %v4947 = vpack.c.b16 %v4695, %v4692
        %v4948 = vpack.c.b16 %v4699, %v4696
        %v4949 = vpack.c.b16 %v4700, %v4697
        %v4950 = vpack.c.b16 %v4701, %v4698
        %v4951 = vpack.c.b16 %v4705, %v4702
        %v4952 = vpack.c.b16 %v4706, %v4703
        %v4953 = vpack.c.b16 %v4707, %v4704
        %v4954 = vpack.c.b16 %v4711, %v4708
        %v4955 = vpack.c.b16 %v4712, %v4709
        %v4956 = vpack.c.b16 %v4713, %v4710
        %v4957 = vpack.c.b16 %v4717, %v4714
        %v4958 = vpack.c.b16 %v4718, %v4715
        %v4959 = vpack.c.b16 %v4719, %v4716
        %v4960 = vpack.c.b16 %v4723, %v4720
        %v4961 = vpack.c.b16 %v4724, %v4721
        %v4962 = vpack.c.b16 %v4725, %v4722
        %v4963 = vpack.c.b16 %v4729, %v4726
        %v4964 = vpack.c.b16 %v4730, %v4727
        %v4965 = vpack.c.b16 %v4731, %v4728
        %v4966 = vpack.c.b16 %v4735, %v4732
        %v4967 = vpack.c.b16 %v4736, %v4733
        %v4968 = vpack.c.b16 %v4737, %v4734
        %v4969 = vpack.c.b16 %v4741, %v4738
        %v4970 = vpack.c.b16 %v4742, %v4739
        %v4971 = vpack.c.b16 %v4743, %v4740
        %v4972 = vpack.c.b16 %v4747, %v4744
        %v4973 = vpack.c.b16 %v4748, %v4745
        %v4974 = vpack.c.b16 %v4749, %v4746
        %v4975 = vpack.c.b16 %v4753, %v4750
        %v4976 = vpack.c.b16 %v4754, %v4751
        %v4977 = vpack.c.b16 %v4755, %v4752
        %v4978 = vpack.c.b16 %v4759, %v4756
        %v4979 = vpack.c.b16 %v4760, %v4757
        %v4980 = vpack.c.b16 %v4761, %v4758
        %v4981 = vpack.c.b16 %v4762, %v4762
        %v4982 = vpack.c.b16 %v4763, %v4763
        %v4983 = vpack.c.b16 %v4764, %v4764
        %v5131 = vsel %vm759, %v4767, 0
        %v5134 = vsel %vm759, %v4770, 0
        %v5137 = vsel %vm759, %v4773, 0
        %v5140 = vsel %vm759, %v4776, 0
        %v5143 = vsel %vm759, %v4779, 0
        %v5146 = vsel %vm759, %v4782, 0
        %v5149 = vsel %vm759, %v4785, 0
        %v5152 = vsel %vm759, %v4788, 0
        %v5155 = vsel %vm759, %v4791, 0
        %v5158 = vsel %vm759, %v4794, 0
        %v5161 = vsel %vm759, %v4797, 0
        %v5164 = vsel %vm759, %v4800, 0
        %v5167 = vsel %vm759, %v4803, 0
        %v5170 = vsel %vm759, %v4806, 0
        %v5173 = vsel %vm759, %v4809, 0
        %v5176 = vsel %vm759, %v4812, 0
        %v5179 = vsel %vm759, %v4815, 0
        %v5182 = vsel %vm759, %v4818, 0
        %v5185 = vsel %vm759, %v4821, 0
        %v5188 = vsel %vm759, %v4824, 0
        %v5191 = vsel %vm759, %v4827, 0
        %v5194 = vsel %vm759, %v4830, 0
        %v5197 = vsel %vm759, %v4833, 0
        %v5200 = vsel %vm759, %v4836, 0
        %v5203 = vsel %vm759, %v4839, 0
        %v5206 = vsel %vm759, %v4842, 0
        %v5209 = vsel %vm759, %v4845, 0
        %v5212 = vsel %vm759, %v4848, 0
        %v5215 = vsel %vm759, %v4851, 0
        %v5218 = vsel %vm759, %v4854, 0
        %v5221 = vsel %vm759, %v4857, 0
        %v5224 = vsel %vm759, %v4860, 0
        %v5227 = vsel %vm759, %v4863, 0
        %v5230 = vsel %vm759, %v4866, 0
        %v5233 = vsel %vm759, %v4869, 0
        %v5236 = vsel %vm759, %v4872, 0
        %v5239 = vsel %vm759, %v4875, 0
        %v5242 = vsel %vm759, %v4878, 0
        %v5245 = vsel %vm759, %v4881, 0
        %v5248 = vsel %vm759, %v4884, 0
        %v5251 = vsel %vm759, %v4887, 0
        %v5254 = vsel %vm759, %v4890, 0
        %v5257 = vsel %vm759, %v4893, 0
        %v5260 = vsel %vm759, %v4896, 0
        %v5263 = vsel %vm759, %v4899, 0
        %v5266 = vsel %vm759, %v4902, 0
        %v5269 = vsel %vm759, %v4905, 0
        %v5272 = vsel %vm759, %v4908, 0
        %v5275 = vsel %vm759, %v4911, 0
        %v5278 = vsel %vm759, %v4914, 0
        %v5281 = vsel %vm759, %v4917, 0
        %v5284 = vsel %vm759, %v4920, 0
        %v5287 = vsel %vm759, %v4923, 0
        %v5290 = vsel %vm759, %v4926, 0
        %v5293 = vsel %vm759, %v4929, 0
        %v5296 = vsel %vm759, %v4932, 0
        %v5299 = vsel %vm759, %v4935, 0
        %v5302 = vsel %vm759, %v4938, 0
        %v5305 = vsel %vm759, %v4941, 0
        %v5308 = vsel %vm759, %v4944, 0
        %v5311 = vsel %vm759, %v4947, 0
        %v5314 = vsel %vm759, %v4950, 0
        %v5317 = vsel %vm759, %v4953, 0
        %v5320 = vsel %vm759, %v4956, 0
        %v5323 = vsel %vm759, %v4959, 0
        %v5326 = vsel %vm759, %v4962, 0
        %v5329 = vsel %vm759, %v4965, 0
        %v5332 = vsel %vm759, %v4968, 0
        %v5335 = vsel %vm759, %v4971, 0
        %v5338 = vsel %vm759, %v4974, 0
        %v5341 = vsel %vm759, %v4977, 0
        %v5344 = vsel %vm759, %v4980, 0
        %v5347 = vsel %vm759, %v4983, 0
        %5349 = vmatprep.subr.bf16.mxu0 0
        %5350 = vmatpush1.bf16.msra.mxu0 %v3732
        %5351 = vmatprep.subr.bf16.mxu0 0
        %5352 = vmatpush1.bf16.msra.mxu0 %v3733
        %5353 = vmatprep.subr.bf16.mxu0 0
        %5354 = vmatpush1.bf16.msra.mxu0 %v3734
        %5355 = vmatprep.subr.bf16.mxu0 0
        %5356 = vmatpush1.bf16.msra.mxu0 %v3735
        %5357 = vmatprep.subr.bf16.mxu0 0
        %5358 = vmatpush1.bf16.msra.mxu0 %v3736
        %5359 = vmatprep.subr.bf16.mxu0 0
        %5360 = vmatpush1.bf16.msra.mxu0 %v3737
        %5361 = vmatprep.subr.bf16.mxu0 0
        %5362 = vmatpush1.bf16.msra.mxu0 %v3738
        %5363 = vmatprep.subr.bf16.mxu0 0
        %5364 = vmatpush1.bf16.msra.mxu0 %v3739
        %5365 = vmatprep.subr.bf16.mxu0 0
        %5366 = vmatpush1.bf16.msra.mxu0 %v3740
        %5367 = vmatprep.subr.bf16.mxu0 0
        %5368 = vmatpush1.bf16.msra.mxu0 %v3741
        %5369 = vmatprep.subr.bf16.mxu0 0
        %5370 = vmatpush1.bf16.msra.mxu0 %v3742
        %5371 = vmatprep.subr.bf16.mxu0 0
        %5372 = vmatpush1.bf16.msra.mxu0 %v3743
        %5373 = vmatprep.subr.bf16.mxu0 0
        %5374 = vmatpush1.bf16.msra.mxu0 %v3744
        %5375 = vmatprep.subr.bf16.mxu0 0
        %5376 = vmatpush1.bf16.msra.mxu0 %v3745
        %5377 = vmatprep.subr.bf16.mxu0 0
        %5378 = vmatpush1.bf16.msra.mxu0 %v3746
        %5379 = vmatprep.subr.bf16.mxu0 0
        %5380 = vmatpush1.bf16.msra.mxu0 %v3747
        %5381 = vmatprep.mubr.bf16.mxu0 %v4766
        %5382 = vmatmul.mubr.bf16.gmra.mrb[0].mxu0 %v4765
        %v5383 = vpop.f32.mrb[0].mxu0
        %v5384 = vadd.f32 0.0, %v5383
        %v5385 = vpop.f32.mrb[0].mxu0
        %v5386 = vpop.f32.mrb[0].mxu0
        %v5387 = vadd.f32 0.0, %v5386
        %v5388 = vpop.f32.mrb[0].mxu0
        %5389 = vmatprep.mubr.bf16.mxu0 %v4769
        %5390 = vmatmul.mubr.bf16.gmra.mrb[0].mxu0 %v4768
        %v5391 = vpop.f32.mrb[0].mxu0
        %v5392 = vadd.f32 0.0, %v5391
        %v5393 = vpop.f32.mrb[0].mxu0
        %v5394 = vpop.f32.mrb[0].mxu0
        %v5395 = vadd.f32 0.0, %v5394
        %v5396 = vpop.f32.mrb[0].mxu0
        %5397 = vmatprep.mubr.bf16.mxu0 %v4772
        %5398 = vmatmul.mubr.bf16.gmra.mrb[0].mxu0 %v4771
        %v5399 = vpop.f32.mrb[0].mxu0
        %v5400 = vadd.f32 0.0, %v5399
        %v5401 = vpop.f32.mrb[0].mxu0
        %v5402 = vpop.f32.mrb[0].mxu0
        %v5403 = vadd.f32 0.0, %v5402
        %v5404 = vpop.f32.mrb[0].mxu0
        %5405 = vmatprep.mubr.bf16.mxu0 %v4775
        %5406 = vmatmul.mubr.bf16.gmra.mrb[0].mxu0 %v4774
        %v5407 = vpop.f32.mrb[0].mxu0
        %v5408 = vadd.f32 0.0, %v5407
        %v5409 = vpop.f32.mrb[0].mxu0
        %v5410 = vpop.f32.mrb[0].mxu0
        %v5411 = vadd.f32 0.0, %v5410
        %v5412 = vpop.f32.mrb[0].mxu0
        %5413 = vmatprep.mubr.bf16.mxu0 %v4778
        %5414 = vmatmul.mubr.bf16.gmra.mrb[0].mxu0 %v4777
        %v5415 = vpop.f32.mrb[0].mxu0
        %v5416 = vadd.f32 0.0, %v5415
        %v5417 = vpop.f32.mrb[0].mxu0
        %v5418 = vpop.f32.mrb[0].mxu0
        %v5419 = vadd.f32 0.0, %v5418
        %v5420 = vpop.f32.mrb[0].mxu0
        %5421 = vmatprep.mubr.bf16.mxu0 %v4781
        %5422 = vmatmul.mubr.bf16.gmra.mrb[0].mxu0 %v4780
        %v5423 = vpop.f32.mrb[0].mxu0
        %v5424 = vadd.f32 0.0, %v5423
        %v5425 = vpop.f32.mrb[0].mxu0
        %v5426 = vpop.f32.mrb[0].mxu0
        %v5427 = vadd.f32 0.0, %v5426
        %v5428 = vpop.f32.mrb[0].mxu0
        %5429 = vmatprep.mubr.bf16.mxu0 %v4784
        %5430 = vmatmul.mubr.bf16.gmra.mrb[0].mxu0 %v4783
        %v5431 = vpop.f32.mrb[0].mxu0
        %v5432 = vadd.f32 0.0, %v5431
        %v5433 = vpop.f32.mrb[0].mxu0
        %v5434 = vpop.f32.mrb[0].mxu0
        %v5435 = vadd.f32 0.0, %v5434
        %v5436 = vpop.f32.mrb[0].mxu0
        %5437 = vmatprep.mubr.bf16.mxu0 %v4787
        %5438 = vmatmul.mubr.bf16.gmra.mrb[0].mxu0 %v4786
        %v5439 = vpop.f32.mrb[0].mxu0
        %v5440 = vadd.f32 0.0, %v5439
        %v5441 = vpop.f32.mrb[0].mxu0
        %v5442 = vpop.f32.mrb[0].mxu0
        %v5443 = vadd.f32 0.0, %v5442
        %v5444 = vpop.f32.mrb[0].mxu0
        %5445 = vmatprep.mubr.bf16.mxu0 %v4790
        %5446 = vmatmul.mubr.bf16.gmra.mrb[0].mxu0 %v4789
        %v5447 = vpop.f32.mrb[0].mxu0
        %v5448 = vadd.f32 0.0, %v5447
        %v5449 = vpop.f32.mrb[0].mxu0
        %v5450 = vpop.f32.mrb[0].mxu0
        %v5451 = vadd.f32 0.0, %v5450
        %v5452 = vpop.f32.mrb[0].mxu0
        %5453 = vmatprep.mubr.bf16.mxu0 %v4793
        %5454 = vmatmul.mubr.bf16.gmra.mrb[0].mxu0 %v4792
        %v5455 = vpop.f32.mrb[0].mxu0
        %v5456 = vadd.f32 0.0, %v5455
        %v5457 = vpop.f32.mrb[0].mxu0
        %v5458 = vpop.f32.mrb[0].mxu0
        %v5459 = vadd.f32 0.0, %v5458
        %v5460 = vpop.f32.mrb[0].mxu0
        %5461 = vmatprep.mubr.bf16.mxu0 %v4796
        %5462 = vmatmul.mubr.bf16.gmra.mrb[0].mxu0 %v4795
        %v5463 = vpop.f32.mrb[0].mxu0
        %v5464 = vadd.f32 0.0, %v5463
        %v5465 = vpop.f32.mrb[0].mxu0
        %v5466 = vpop.f32.mrb[0].mxu0
        %v5467 = vadd.f32 0.0, %v5466
        %v5468 = vpop.f32.mrb[0].mxu0
        %5469 = vmatprep.mubr.bf16.mxu0 %v4799
        %5470 = vmatmul.mubr.bf16.gmra.mrb[0].mxu0 %v4798
        %v5471 = vpop.f32.mrb[0].mxu0
        %v5472 = vadd.f32 0.0, %v5471
        %v5473 = vpop.f32.mrb[0].mxu0
        %v5474 = vpop.f32.mrb[0].mxu0
        %v5475 = vadd.f32 0.0, %v5474
        %v5476 = vpop.f32.mrb[0].mxu0
        %5477 = vmatprep.mubr.bf16.mxu0 %v4802
        %5478 = vmatmul.mubr.bf16.gmra.mrb[0].mxu0 %v4801
        %v5479 = vpop.f32.mrb[0].mxu0
        %v5480 = vadd.f32 0.0, %v5479
        %v5481 = vpop.f32.mrb[0].mxu0
        %v5482 = vpop.f32.mrb[0].mxu0
        %v5483 = vadd.f32 0.0, %v5482
        %v5484 = vpop.f32.mrb[0].mxu0
        %5485 = vmatprep.mubr.bf16.mxu0 %v4805
        %5486 = vmatmul.mubr.bf16.gmra.mrb[0].mxu0 %v4804
        %v5487 = vpop.f32.mrb[0].mxu0
        %v5488 = vadd.f32 0.0, %v5487
        %v5489 = vpop.f32.mrb[0].mxu0
        %v5490 = vpop.f32.mrb[0].mxu0
        %v5491 = vadd.f32 0.0, %v5490
        %v5492 = vpop.f32.mrb[0].mxu0
        %5493 = vmatprep.mubr.bf16.mxu0 %v4808
        %5494 = vmatmul.mubr.bf16.gmra.mrb[0].mxu0 %v4807
        %v5495 = vpop.f32.mrb[0].mxu0
        %v5496 = vadd.f32 0.0, %v5495
        %v5497 = vpop.f32.mrb[0].mxu0
        %v5498 = vpop.f32.mrb[0].mxu0
        %v5499 = vadd.f32 0.0, %v5498
        %v5500 = vpop.f32.mrb[0].mxu0
        %5501 = vmatprep.mubr.bf16.mxu0 %v4811
        %5502 = vmatmul.mubr.bf16.gmra.mrb[0].mxu0 %v4810
        %v5503 = vpop.f32.mrb[0].mxu0
        %v5504 = vadd.f32 0.0, %v5503
        %v5505 = vpop.f32.mrb[0].mxu0
        %v5506 = vpop.f32.mrb[0].mxu0
        %v5507 = vadd.f32 0.0, %v5506
        %v5508 = vpop.f32.mrb[0].mxu0
        %5509 = vmatprep.mubr.bf16.mxu0 %v4814
        %5510 = vmatmul.mubr.bf16.gmra.mrb[0].mxu0 %v4813
        %v5511 = vpop.f32.mrb[0].mxu0
        %v5512 = vadd.f32 0.0, %v5511
        %v5513 = vpop.f32.mrb[0].mxu0
        %v5514 = vpop.f32.mrb[0].mxu0
        %v5515 = vadd.f32 0.0, %v5514
        %v5516 = vpop.f32.mrb[0].mxu0
        %5517 = vmatprep.mubr.bf16.mxu0 %v4817
        %5518 = vmatmul.mubr.bf16.gmra.mrb[0].mxu0 %v4816
        %v5519 = vpop.f32.mrb[0].mxu0
        %v5520 = vadd.f32 0.0, %v5519
        %v5521 = vpop.f32.mrb[0].mxu0
        %v5522 = vpop.f32.mrb[0].mxu0
        %v5523 = vadd.f32 0.0, %v5522
        %v5524 = vpop.f32.mrb[0].mxu0
        %5525 = vmatprep.mubr.bf16.mxu0 %v4820
        %5526 = vmatmul.mubr.bf16.gmra.mrb[0].mxu0 %v4819
        %v5527 = vpop.f32.mrb[0].mxu0
        %v5528 = vadd.f32 0.0, %v5527
        %v5529 = vpop.f32.mrb[0].mxu0
        %v5530 = vpop.f32.mrb[0].mxu0
        %v5531 = vadd.f32 0.0, %v5530
        %v5532 = vpop.f32.mrb[0].mxu0
        %5533 = vmatprep.mubr.bf16.mxu0 %v4823
        %5534 = vmatmul.mubr.bf16.gmra.mrb[0].mxu0 %v4822
        %v5535 = vpop.f32.mrb[0].mxu0
        %v5536 = vadd.f32 0.0, %v5535
        %v5537 = vpop.f32.mrb[0].mxu0
        %v5538 = vpop.f32.mrb[0].mxu0
        %v5539 = vadd.f32 0.0, %v5538
        %v5540 = vpop.f32.mrb[0].mxu0
        %5541 = vmatprep.mubr.bf16.mxu0 %v4826
        %5542 = vmatmul.mubr.bf16.gmra.mrb[0].mxu0 %v4825
        %v5543 = vpop.f32.mrb[0].mxu0
        %v5544 = vadd.f32 0.0, %v5543
        %v5545 = vpop.f32.mrb[0].mxu0
        %v5546 = vpop.f32.mrb[0].mxu0
        %v5547 = vadd.f32 0.0, %v5546
        %v5548 = vpop.f32.mrb[0].mxu0
        %5549 = vmatprep.mubr.bf16.mxu0 %v4829
        %5550 = vmatmul.mubr.bf16.gmra.mrb[0].mxu0 %v4828
        %v5551 = vpop.f32.mrb[0].mxu0
        %v5552 = vadd.f32 0.0, %v5551
        %v5553 = vpop.f32.mrb[0].mxu0
        %v5554 = vpop.f32.mrb[0].mxu0
        %v5555 = vadd.f32 0.0, %v5554
        %v5556 = vpop.f32.mrb[0].mxu0
        %5557 = vmatprep.mubr.bf16.mxu0 %v4832
        %5558 = vmatmul.mubr.bf16.gmra.mrb[0].mxu0 %v4831
        %v5559 = vpop.f32.mrb[0].mxu0
        %v5560 = vadd.f32 0.0, %v5559
        %v5561 = vpop.f32.mrb[0].mxu0
        %v5562 = vpop.f32.mrb[0].mxu0
        %v5563 = vadd.f32 0.0, %v5562
        %v5564 = vpop.f32.mrb[0].mxu0
        %5565 = vmatprep.mubr.bf16.mxu0 %v4835
        %5566 = vmatmul.mubr.bf16.gmra.mrb[0].mxu0 %v4834
        %v5567 = vpop.f32.mrb[0].mxu0
        %v5568 = vadd.f32 0.0, %v5567
        %v5569 = vpop.f32.mrb[0].mxu0
        %v5570 = vpop.f32.mrb[0].mxu0
        %v5571 = vadd.f32 0.0, %v5570
        %v5572 = vpop.f32.mrb[0].mxu0
        %5573 = vmatprep.mubr.bf16.mxu0 %v4838
        %5574 = vmatmul.mubr.bf16.gmra.mrb[0].mxu0 %v4837
        %v5575 = vpop.f32.mrb[0].mxu0
        %v5576 = vadd.f32 0.0, %v5575
        %v5577 = vpop.f32.mrb[0].mxu0
        %v5578 = vpop.f32.mrb[0].mxu0
        %v5579 = vadd.f32 0.0, %v5578
        %v5580 = vpop.f32.mrb[0].mxu0
        %5581 = vmatprep.mubr.bf16.mxu0 %v4841
        %5582 = vmatmul.mubr.bf16.gmra.mrb[0].mxu0 %v4840
        %v5583 = vpop.f32.mrb[0].mxu0
        %v5584 = vadd.f32 0.0, %v5583
        %v5585 = vpop.f32.mrb[0].mxu0
        %v5586 = vpop.f32.mrb[0].mxu0
        %v5587 = vadd.f32 0.0, %v5586
        %v5588 = vpop.f32.mrb[0].mxu0
        %5589 = vmatprep.mubr.bf16.mxu0 %v4844
        %5590 = vmatmul.mubr.bf16.gmra.mrb[0].mxu0 %v4843
        %v5591 = vpop.f32.mrb[0].mxu0
        %v5592 = vadd.f32 0.0, %v5591
        %v5593 = vpop.f32.mrb[0].mxu0
        %v5594 = vpop.f32.mrb[0].mxu0
        %v5595 = vadd.f32 0.0, %v5594
        %v5596 = vpop.f32.mrb[0].mxu0
        %5597 = vmatprep.mubr.bf16.mxu0 %v4847
        %5598 = vmatmul.mubr.bf16.gmra.mrb[0].mxu0 %v4846
        %v5599 = vpop.f32.mrb[0].mxu0
        %v5600 = vadd.f32 0.0, %v5599
        %v5601 = vpop.f32.mrb[0].mxu0
        %v5602 = vpop.f32.mrb[0].mxu0
        %v5603 = vadd.f32 0.0, %v5602
        %v5604 = vpop.f32.mrb[0].mxu0
        %5605 = vmatprep.mubr.bf16.mxu0 %v4850
        %5606 = vmatmul.mubr.bf16.gmra.mrb[0].mxu0 %v4849
        %v5607 = vpop.f32.mrb[0].mxu0
        %v5608 = vadd.f32 0.0, %v5607
        %v5609 = vpop.f32.mrb[0].mxu0
        %v5610 = vpop.f32.mrb[0].mxu0
        %v5611 = vadd.f32 0.0, %v5610
        %v5612 = vpop.f32.mrb[0].mxu0
        %5613 = vmatprep.mubr.bf16.mxu0 %v4853
        %5614 = vmatmul.mubr.bf16.gmra.mrb[0].mxu0 %v4852
        %v5615 = vpop.f32.mrb[0].mxu0
        %v5616 = vadd.f32 0.0, %v5615
        %v5617 = vpop.f32.mrb[0].mxu0
        %v5618 = vpop.f32.mrb[0].mxu0
        %v5619 = vadd.f32 0.0, %v5618
        %v5620 = vpop.f32.mrb[0].mxu0
        %5621 = vmatprep.mubr.bf16.mxu0 %v4856
        %5622 = vmatmul.mubr.bf16.gmra.mrb[0].mxu0 %v4855
        %v5623 = vpop.f32.mrb[0].mxu0
        %v5624 = vadd.f32 0.0, %v5623
        %v5625 = vpop.f32.mrb[0].mxu0
        %v5626 = vpop.f32.mrb[0].mxu0
        %v5627 = vadd.f32 0.0, %v5626
        %v5628 = vpop.f32.mrb[0].mxu0
        %5629 = vmatprep.mubr.bf16.mxu0 %v4859
        %5630 = vmatmul.mubr.bf16.gmra.mrb[0].mxu0 %v4858
        %v5631 = vpop.f32.mrb[0].mxu0
        %v5632 = vadd.f32 0.0, %v5631
        %v5633 = vpop.f32.mrb[0].mxu0
        %v5634 = vpop.f32.mrb[0].mxu0
        %v5635 = vadd.f32 0.0, %v5634
        %v5636 = vpop.f32.mrb[0].mxu0
        %5637 = vmatprep.mubr.bf16.mxu0 %v4862
        %5638 = vmatmul.mubr.bf16.gmra.mrb[0].mxu0 %v4861
        %v5639 = vpop.f32.mrb[0].mxu0
        %v5640 = vadd.f32 0.0, %v5639
        %v5641 = vpop.f32.mrb[0].mxu0
        %v5642 = vpop.f32.mrb[0].mxu0
        %v5643 = vadd.f32 0.0, %v5642
        %v5644 = vpop.f32.mrb[0].mxu0
        %5645 = vmatprep.mubr.bf16.mxu0 %v4865
        %5646 = vmatmul.mubr.bf16.gmra.mrb[0].mxu0 %v4864
        %v5647 = vpop.f32.mrb[0].mxu0
        %v5648 = vadd.f32 0.0, %v5647
        %v5649 = vpop.f32.mrb[0].mxu0
        %v5650 = vpop.f32.mrb[0].mxu0
        %v5651 = vadd.f32 0.0, %v5650
        %v5652 = vpop.f32.mrb[0].mxu0
        %5653 = vmatprep.mubr.bf16.mxu0 %v4868
        %5654 = vmatmul.mubr.bf16.gmra.mrb[0].mxu0 %v4867
        %v5655 = vpop.f32.mrb[0].mxu0
        %v5656 = vadd.f32 0.0, %v5655
        %v5657 = vpop.f32.mrb[0].mxu0
        %v5658 = vpop.f32.mrb[0].mxu0
        %v5659 = vadd.f32 0.0, %v5658
        %v5660 = vpop.f32.mrb[0].mxu0
        %5661 = vmatprep.mubr.bf16.mxu0 %v4871
        %5662 = vmatmul.mubr.bf16.gmra.mrb[0].mxu0 %v4870
        %v5663 = vpop.f32.mrb[0].mxu0
        %v5664 = vadd.f32 0.0, %v5663
        %v5665 = vpop.f32.mrb[0].mxu0
        %v5666 = vpop.f32.mrb[0].mxu0
        %v5667 = vadd.f32 0.0, %v5666
        %v5668 = vpop.f32.mrb[0].mxu0
        %5669 = vmatprep.mubr.bf16.mxu0 %v4874
        %5670 = vmatmul.mubr.bf16.gmra.mrb[0].mxu0 %v4873
        %v5671 = vpop.f32.mrb[0].mxu0
        %v5672 = vadd.f32 0.0, %v5671
        %v5673 = vpop.f32.mrb[0].mxu0
        %v5674 = vpop.f32.mrb[0].mxu0
        %v5675 = vadd.f32 0.0, %v5674
        %v5676 = vpop.f32.mrb[0].mxu0
        %5677 = vmatprep.mubr.bf16.mxu0 %v4877
        %5678 = vmatmul.mubr.bf16.gmra.mrb[0].mxu0 %v4876
        %v5679 = vpop.f32.mrb[0].mxu0
        %v5680 = vadd.f32 0.0, %v5679
        %v5681 = vpop.f32.mrb[0].mxu0
        %v5682 = vpop.f32.mrb[0].mxu0
        %v5683 = vadd.f32 0.0, %v5682
        %v5684 = vpop.f32.mrb[0].mxu0
        %5685 = vmatprep.mubr.bf16.mxu0 %v4880
        %5686 = vmatmul.mubr.bf16.gmra.mrb[0].mxu0 %v4879
        %v5687 = vpop.f32.mrb[0].mxu0
        %v5688 = vadd.f32 0.0, %v5687
        %v5689 = vpop.f32.mrb[0].mxu0
        %v5690 = vpop.f32.mrb[0].mxu0
        %v5691 = vadd.f32 0.0, %v5690
        %v5692 = vpop.f32.mrb[0].mxu0
        %5693 = vmatprep.mubr.bf16.mxu0 %v4883
        %5694 = vmatmul.mubr.bf16.gmra.mrb[0].mxu0 %v4882
        %v5695 = vpop.f32.mrb[0].mxu0
        %v5696 = vadd.f32 0.0, %v5695
        %v5697 = vpop.f32.mrb[0].mxu0
        %v5698 = vpop.f32.mrb[0].mxu0
        %v5699 = vadd.f32 0.0, %v5698
        %v5700 = vpop.f32.mrb[0].mxu0
        %5701 = vmatprep.mubr.bf16.mxu0 %v4886
        %5702 = vmatmul.mubr.bf16.gmra.mrb[0].mxu0 %v4885
        %v5703 = vpop.f32.mrb[0].mxu0
        %v5704 = vadd.f32 0.0, %v5703
        %v5705 = vpop.f32.mrb[0].mxu0
        %v5706 = vpop.f32.mrb[0].mxu0
        %v5707 = vadd.f32 0.0, %v5706
        %v5708 = vpop.f32.mrb[0].mxu0
        %5709 = vmatprep.mubr.bf16.mxu0 %v4889
        %5710 = vmatmul.mubr.bf16.gmra.mrb[0].mxu0 %v4888
        %v5711 = vpop.f32.mrb[0].mxu0
        %v5712 = vadd.f32 0.0, %v5711
        %v5713 = vpop.f32.mrb[0].mxu0
        %v5714 = vpop.f32.mrb[0].mxu0
        %v5715 = vadd.f32 0.0, %v5714
        %v5716 = vpop.f32.mrb[0].mxu0
        %5717 = vmatprep.mubr.bf16.mxu0 %v4892
        %5718 = vmatmul.mubr.bf16.gmra.mrb[0].mxu0 %v4891
        %v5719 = vpop.f32.mrb[0].mxu0
        %v5720 = vadd.f32 0.0, %v5719
        %v5721 = vpop.f32.mrb[0].mxu0
        %v5722 = vpop.f32.mrb[0].mxu0
        %v5723 = vadd.f32 0.0, %v5722
        %v5724 = vpop.f32.mrb[0].mxu0
        %5725 = vmatprep.mubr.bf16.mxu0 %v4895
        %5726 = vmatmul.mubr.bf16.gmra.mrb[0].mxu0 %v4894
        %v5727 = vpop.f32.mrb[0].mxu0
        %v5728 = vadd.f32 0.0, %v5727
        %v5729 = vpop.f32.mrb[0].mxu0
        %v5730 = vpop.f32.mrb[0].mxu0
        %v5731 = vadd.f32 0.0, %v5730
        %v5732 = vpop.f32.mrb[0].mxu0
        %5733 = vmatprep.mubr.bf16.mxu0 %v4898
        %5734 = vmatmul.mubr.bf16.gmra.mrb[0].mxu0 %v4897
        %v5735 = vpop.f32.mrb[0].mxu0
        %v5736 = vadd.f32 0.0, %v5735
        %v5737 = vpop.f32.mrb[0].mxu0
        %v5738 = vpop.f32.mrb[0].mxu0
        %v5739 = vadd.f32 0.0, %v5738
        %v5740 = vpop.f32.mrb[0].mxu0
        %5741 = vmatprep.mubr.bf16.mxu0 %v4901
        %5742 = vmatmul.mubr.bf16.gmra.mrb[0].mxu0 %v4900
        %v5743 = vpop.f32.mrb[0].mxu0
        %v5744 = vadd.f32 0.0, %v5743
        %v5745 = vpop.f32.mrb[0].mxu0
        %v5746 = vpop.f32.mrb[0].mxu0
        %v5747 = vadd.f32 0.0, %v5746
        %v5748 = vpop.f32.mrb[0].mxu0
        %5749 = vmatprep.mubr.bf16.mxu0 %v4904
        %5750 = vmatmul.mubr.bf16.gmra.mrb[0].mxu0 %v4903
        %v5751 = vpop.f32.mrb[0].mxu0
        %v5752 = vadd.f32 0.0, %v5751
        %v5753 = vpop.f32.mrb[0].mxu0
        %v5754 = vpop.f32.mrb[0].mxu0
        %v5755 = vadd.f32 0.0, %v5754
        %v5756 = vpop.f32.mrb[0].mxu0
        %5757 = vmatprep.mubr.bf16.mxu0 %v4907
        %5758 = vmatmul.mubr.bf16.gmra.mrb[0].mxu0 %v4906
        %v5759 = vpop.f32.mrb[0].mxu0
        %v5760 = vadd.f32 0.0, %v5759
        %v5761 = vpop.f32.mrb[0].mxu0
        %v5762 = vpop.f32.mrb[0].mxu0
        %v5763 = vadd.f32 0.0, %v5762
        %v5764 = vpop.f32.mrb[0].mxu0
        %5765 = vmatprep.mubr.bf16.mxu0 %v4910
        %5766 = vmatmul.mubr.bf16.gmra.mrb[0].mxu0 %v4909
        %v5767 = vpop.f32.mrb[0].mxu0
        %v5768 = vadd.f32 0.0, %v5767
        %v5769 = vpop.f32.mrb[0].mxu0
        %v5770 = vpop.f32.mrb[0].mxu0
        %v5771 = vadd.f32 0.0, %v5770
        %v5772 = vpop.f32.mrb[0].mxu0
        %5773 = vmatprep.mubr.bf16.mxu0 %v4913
        %5774 = vmatmul.mubr.bf16.gmra.mrb[0].mxu0 %v4912
        %v5775 = vpop.f32.mrb[0].mxu0
        %v5776 = vadd.f32 0.0, %v5775
        %v5777 = vpop.f32.mrb[0].mxu0
        %v5778 = vpop.f32.mrb[0].mxu0
        %v5779 = vadd.f32 0.0, %v5778
        %v5780 = vpop.f32.mrb[0].mxu0
        %5781 = vmatprep.mubr.bf16.mxu0 %v4916
        %5782 = vmatmul.mubr.bf16.gmra.mrb[0].mxu0 %v4915
        %v5783 = vpop.f32.mrb[0].mxu0
        %v5784 = vadd.f32 0.0, %v5783
        %v5785 = vpop.f32.mrb[0].mxu0
        %v5786 = vpop.f32.mrb[0].mxu0
        %v5787 = vadd.f32 0.0, %v5786
        %v5788 = vpop.f32.mrb[0].mxu0
        %5789 = vmatprep.mubr.bf16.mxu0 %v4919
        %5790 = vmatmul.mubr.bf16.gmra.mrb[0].mxu0 %v4918
        %v5791 = vpop.f32.mrb[0].mxu0
        %v5792 = vadd.f32 0.0, %v5791
        %v5793 = vpop.f32.mrb[0].mxu0
        %v5794 = vpop.f32.mrb[0].mxu0
        %v5795 = vadd.f32 0.0, %v5794
        %v5796 = vpop.f32.mrb[0].mxu0
        %5797 = vmatprep.mubr.bf16.mxu0 %v4922
        %5798 = vmatmul.mubr.bf16.gmra.mrb[0].mxu0 %v4921
        %v5799 = vpop.f32.mrb[0].mxu0
        %v5800 = vadd.f32 0.0, %v5799
        %v5801 = vpop.f32.mrb[0].mxu0
        %v5802 = vpop.f32.mrb[0].mxu0
        %v5803 = vadd.f32 0.0, %v5802
        %v5804 = vpop.f32.mrb[0].mxu0
        %5805 = vmatprep.mubr.bf16.mxu0 %v4925
        %5806 = vmatmul.mubr.bf16.gmra.mrb[0].mxu0 %v4924
        %v5807 = vpop.f32.mrb[0].mxu0
        %v5808 = vadd.f32 0.0, %v5807
        %v5809 = vpop.f32.mrb[0].mxu0
        %v5810 = vpop.f32.mrb[0].mxu0
        %v5811 = vadd.f32 0.0, %v5810
        %v5812 = vpop.f32.mrb[0].mxu0
        %5813 = vmatprep.mubr.bf16.mxu0 %v4928
        %5814 = vmatmul.mubr.bf16.gmra.mrb[0].mxu0 %v4927
        %v5815 = vpop.f32.mrb[0].mxu0
        %v5816 = vadd.f32 0.0, %v5815
        %v5817 = vpop.f32.mrb[0].mxu0
        %v5818 = vpop.f32.mrb[0].mxu0
        %v5819 = vadd.f32 0.0, %v5818
        %v5820 = vpop.f32.mrb[0].mxu0
        %5821 = vmatprep.mubr.bf16.mxu0 %v4931
        %5822 = vmatmul.mubr.bf16.gmra.mrb[0].mxu0 %v4930
        %v5823 = vpop.f32.mrb[0].mxu0
        %v5824 = vadd.f32 0.0, %v5823
        %v5825 = vpop.f32.mrb[0].mxu0
        %v5826 = vpop.f32.mrb[0].mxu0
        %v5827 = vadd.f32 0.0, %v5826
        %v5828 = vpop.f32.mrb[0].mxu0
        %5829 = vmatprep.mubr.bf16.mxu0 %v4934
        %5830 = vmatmul.mubr.bf16.gmra.mrb[0].mxu0 %v4933
        %v5831 = vpop.f32.mrb[0].mxu0
        %v5832 = vadd.f32 0.0, %v5831
        %v5833 = vpop.f32.mrb[0].mxu0
        %v5834 = vpop.f32.mrb[0].mxu0
        %v5835 = vadd.f32 0.0, %v5834
        %v5836 = vpop.f32.mrb[0].mxu0
        %5837 = vmatprep.mubr.bf16.mxu0 %v4937
        %5838 = vmatmul.mubr.bf16.gmra.mrb[0].mxu0 %v4936
        %v5839 = vpop.f32.mrb[0].mxu0
        %v5840 = vadd.f32 0.0, %v5839
        %v5841 = vpop.f32.mrb[0].mxu0
        %v5842 = vpop.f32.mrb[0].mxu0
        %v5843 = vadd.f32 0.0, %v5842
        %v5844 = vpop.f32.mrb[0].mxu0
        %5845 = vmatprep.mubr.bf16.mxu0 %v4940
        %5846 = vmatmul.mubr.bf16.gmra.mrb[0].mxu0 %v4939
        %v5847 = vpop.f32.mrb[0].mxu0
        %v5848 = vadd.f32 0.0, %v5847
        %v5849 = vpop.f32.mrb[0].mxu0
        %v5850 = vpop.f32.mrb[0].mxu0
        %v5851 = vadd.f32 0.0, %v5850
        %v5852 = vpop.f32.mrb[0].mxu0
        %5853 = vmatprep.mubr.bf16.mxu0 %v4943
        %5854 = vmatmul.mubr.bf16.gmra.mrb[0].mxu0 %v4942
        %v5855 = vpop.f32.mrb[0].mxu0
        %v5856 = vadd.f32 0.0, %v5855
        %v5857 = vpop.f32.mrb[0].mxu0
        %v5858 = vpop.f32.mrb[0].mxu0
        %v5859 = vadd.f32 0.0, %v5858
        %v5860 = vpop.f32.mrb[0].mxu0
        %5861 = vmatprep.mubr.bf16.mxu0 %v4946
        %5862 = vmatmul.mubr.bf16.gmra.mrb[0].mxu0 %v4945
        %v5863 = vpop.f32.mrb[0].mxu0
        %v5864 = vadd.f32 0.0, %v5863
        %v5865 = vpop.f32.mrb[0].mxu0
        %v5866 = vpop.f32.mrb[0].mxu0
        %v5867 = vadd.f32 0.0, %v5866
        %v5868 = vpop.f32.mrb[0].mxu0
        %5869 = vmatprep.mubr.bf16.mxu0 %v4949
        %5870 = vmatmul.mubr.bf16.gmra.mrb[0].mxu0 %v4948
        %v5871 = vpop.f32.mrb[0].mxu0
        %v5872 = vadd.f32 0.0, %v5871
        %v5873 = vpop.f32.mrb[0].mxu0
        %v5874 = vpop.f32.mrb[0].mxu0
        %v5875 = vadd.f32 0.0, %v5874
        %v5876 = vpop.f32.mrb[0].mxu0
        %5877 = vmatprep.mubr.bf16.mxu0 %v4952
        %5878 = vmatmul.mubr.bf16.gmra.mrb[0].mxu0 %v4951
        %v5879 = vpop.f32.mrb[0].mxu0
        %v5880 = vadd.f32 0.0, %v5879
        %v5881 = vpop.f32.mrb[0].mxu0
        %v5882 = vpop.f32.mrb[0].mxu0
        %v5883 = vadd.f32 0.0, %v5882
        %v5884 = vpop.f32.mrb[0].mxu0
        %5885 = vmatprep.mubr.bf16.mxu0 %v4955
        %5886 = vmatmul.mubr.bf16.gmra.mrb[0].mxu0 %v4954
        %v5887 = vpop.f32.mrb[0].mxu0
        %v5888 = vadd.f32 0.0, %v5887
        %v5889 = vpop.f32.mrb[0].mxu0
        %v5890 = vpop.f32.mrb[0].mxu0
        %v5891 = vadd.f32 0.0, %v5890
        %v5892 = vpop.f32.mrb[0].mxu0
        %5893 = vmatprep.mubr.bf16.mxu0 %v4958
        %5894 = vmatmul.mubr.bf16.gmra.mrb[0].mxu0 %v4957
        %v5895 = vpop.f32.mrb[0].mxu0
        %v5896 = vadd.f32 0.0, %v5895
        %v5897 = vpop.f32.mrb[0].mxu0
        %v5898 = vpop.f32.mrb[0].mxu0
        %v5899 = vadd.f32 0.0, %v5898
        %v5900 = vpop.f32.mrb[0].mxu0
        %5901 = vmatprep.mubr.bf16.mxu0 %v4961
        %5902 = vmatmul.mubr.bf16.gmra.mrb[0].mxu0 %v4960
        %v5903 = vpop.f32.mrb[0].mxu0
        %v5904 = vadd.f32 0.0, %v5903
        %v5905 = vpop.f32.mrb[0].mxu0
        %v5906 = vpop.f32.mrb[0].mxu0
        %v5907 = vadd.f32 0.0, %v5906
        %v5908 = vpop.f32.mrb[0].mxu0
        %5909 = vmatprep.mubr.bf16.mxu0 %v4964
        %5910 = vmatmul.mubr.bf16.gmra.mrb[0].mxu0 %v4963
        %v5911 = vpop.f32.mrb[0].mxu0
        %v5912 = vadd.f32 0.0, %v5911
        %v5913 = vpop.f32.mrb[0].mxu0
        %v5914 = vpop.f32.mrb[0].mxu0
        %v5915 = vadd.f32 0.0, %v5914
        %v5916 = vpop.f32.mrb[0].mxu0
        %5917 = vmatprep.mubr.bf16.mxu0 %v4967
        %5918 = vmatmul.mubr.bf16.gmra.mrb[0].mxu0 %v4966
        %v5919 = vpop.f32.mrb[0].mxu0
        %v5920 = vadd.f32 0.0, %v5919
        %v5921 = vpop.f32.mrb[0].mxu0
        %v5922 = vpop.f32.mrb[0].mxu0
        %v5923 = vadd.f32 0.0, %v5922
        %v5924 = vpop.f32.mrb[0].mxu0
        %5925 = vmatprep.mubr.bf16.mxu0 %v4970
        %5926 = vmatmul.mubr.bf16.gmra.mrb[0].mxu0 %v4969
        %v5927 = vpop.f32.mrb[0].mxu0
        %v5928 = vadd.f32 0.0, %v5927
        %v5929 = vpop.f32.mrb[0].mxu0
        %v5930 = vpop.f32.mrb[0].mxu0
        %v5931 = vadd.f32 0.0, %v5930
        %v5932 = vpop.f32.mrb[0].mxu0
        %5933 = vmatprep.mubr.bf16.mxu0 %v4973
        %5934 = vmatmul.mubr.bf16.gmra.mrb[0].mxu0 %v4972
        %v5935 = vpop.f32.mrb[0].mxu0
        %v5936 = vadd.f32 0.0, %v5935
        %v5937 = vpop.f32.mrb[0].mxu0
        %v5938 = vpop.f32.mrb[0].mxu0
        %v5939 = vadd.f32 0.0, %v5938
        %v5940 = vpop.f32.mrb[0].mxu0
        %5941 = vmatprep.mubr.bf16.mxu0 %v4976
        %5942 = vmatmul.mubr.bf16.gmra.mrb[0].mxu0 %v4975
        %v5943 = vpop.f32.mrb[0].mxu0
        %v5944 = vadd.f32 0.0, %v5943
        %v5945 = vpop.f32.mrb[0].mxu0
        %v5946 = vpop.f32.mrb[0].mxu0
        %v5947 = vadd.f32 0.0, %v5946
        %v5948 = vpop.f32.mrb[0].mxu0
        %5949 = vmatprep.mubr.bf16.mxu0 %v4979
        %5950 = vmatmul.mubr.bf16.gmra.mrb[0].mxu0 %v4978
        %v5951 = vpop.f32.mrb[0].mxu0
        %v5952 = vadd.f32 0.0, %v5951
        %v5953 = vpop.f32.mrb[0].mxu0
        %v5954 = vpop.f32.mrb[0].mxu0
        %v5955 = vadd.f32 0.0, %v5954
        %v5956 = vpop.f32.mrb[0].mxu0
        %5957 = vmatprep.mubr.bf16.mxu0 %v4982
        %5958 = vmatmul.mubr.bf16.gmra.mrb[0].mxu0 %v4981
        %v5959 = vpop.f32.mrb[0].mxu0
        %v5960 = vadd.f32 0.0, %v5959
        %v5961 = vpop.f32.mrb[0].mxu0
        %v5962 = vpop.f32.mrb[0].mxu0
        %v5963 = vpop.f32.mrb[0].mxu0
        %5964 = vdwg.mxu0
        %5965 = vmatprep.subr.bf16.mxu0 0
        %5966 = vmatpush1.bf16.msra.mxu0 %v3748
        %5967 = vmatprep.subr.bf16.mxu0 0
        %5968 = vmatpush1.bf16.msra.mxu0 %v3749
        %5969 = vmatprep.subr.bf16.mxu0 0
        %5970 = vmatpush1.bf16.msra.mxu0 0
        %5971 = vmatprep.subr.bf16.mxu0 0
        %5972 = vmatpush1.bf16.msra.mxu0 0
        %5973 = vmatprep.subr.bf16.mxu0 0
        %5974 = vmatpush1.bf16.msra.mxu0 0
        %5975 = vmatprep.subr.bf16.mxu0 0
        %5976 = vmatpush1.bf16.msra.mxu0 0
        %5977 = vmatprep.subr.bf16.mxu0 0
        %5978 = vmatpush1.bf16.msra.mxu0 0
        %5979 = vmatprep.subr.bf16.mxu0 0
        %5980 = vmatpush1.bf16.msra.mxu0 0
        %5981 = vmatprep.subr.bf16.mxu0 0
        %5982 = vmatpush1.bf16.msra.mxu0 0
        %5983 = vmatprep.subr.bf16.mxu0 0
        %5984 = vmatpush1.bf16.msra.mxu0 0
        %5985 = vmatprep.subr.bf16.mxu0 0
        %5986 = vmatpush1.bf16.msra.mxu0 0
        %5987 = vmatprep.subr.bf16.mxu0 0
        %5988 = vmatpush1.bf16.msra.mxu0 0
        %5989 = vmatprep.subr.bf16.mxu0 0
        %5990 = vmatpush1.bf16.msra.mxu0 0
        %5991 = vmatprep.subr.bf16.mxu0 0
        %5992 = vmatpush1.bf16.msra.mxu0 0
        %5993 = vmatprep.subr.bf16.mxu0 0
        %5994 = vmatpush1.bf16.msra.mxu0 0
        %5995 = vmatprep.subr.bf16.mxu0 0
        %5996 = vmatpush1.bf16.msra.mxu0 0
        %5997 = vmatprep.mubr.bf16.mxu0 0
        %5998 = vmatmul.mubr.bf16.gmra.mrb[0].mxu0 %v5131
        %v5999 = vpop.f32.mrb[0].mxu0
        %v6000 = vadd.f32 %v5384, %v5999
        %v6001 = vpop.f32.mrb[0].mxu0
        %v6002 = vpop.f32.mrb[0].mxu0
        %v6003 = vadd.f32 %v5387, %v6002
        %v6004 = vpop.f32.mrb[0].mxu0
        %6005 = vmatprep.mubr.bf16.mxu0 0
        %6006 = vmatmul.mubr.bf16.gmra.mrb[0].mxu0 %v5134
        %v6007 = vpop.f32.mrb[0].mxu0
        %v6008 = vadd.f32 %v5392, %v6007
        %v6009 = vpop.f32.mrb[0].mxu0
        %v6010 = vpop.f32.mrb[0].mxu0
        %v6011 = vadd.f32 %v5395, %v6010
        %v6012 = vpop.f32.mrb[0].mxu0
        %6013 = vmatprep.mubr.bf16.mxu0 0
        %6014 = vmatmul.mubr.bf16.gmra.mrb[0].mxu0 %v5137
        %v6015 = vpop.f32.mrb[0].mxu0
        %v6016 = vadd.f32 %v5400, %v6015
        %v6017 = vpop.f32.mrb[0].mxu0
        %v6018 = vpop.f32.mrb[0].mxu0
        %v6019 = vadd.f32 %v5403, %v6018
        %v6020 = vpop.f32.mrb[0].mxu0
        %6021 = vmatprep.mubr.bf16.mxu0 0
        %6022 = vmatmul.mubr.bf16.gmra.mrb[0].mxu0 %v5140
        %v6023 = vpop.f32.mrb[0].mxu0
        %v6024 = vadd.f32 %v5408, %v6023
        %v6025 = vpop.f32.mrb[0].mxu0
        %v6026 = vpop.f32.mrb[0].mxu0
        %v6027 = vadd.f32 %v5411, %v6026
        %v6028 = vpop.f32.mrb[0].mxu0
        %6029 = vmatprep.mubr.bf16.mxu0 0
        %6030 = vmatmul.mubr.bf16.gmra.mrb[0].mxu0 %v5143
        %v6031 = vpop.f32.mrb[0].mxu0
        %v6032 = vadd.f32 %v5416, %v6031
        %v6033 = vpop.f32.mrb[0].mxu0
        %v6034 = vpop.f32.mrb[0].mxu0
        %v6035 = vadd.f32 %v5419, %v6034
        %v6036 = vpop.f32.mrb[0].mxu0
        %6037 = vmatprep.mubr.bf16.mxu0 0
        %6038 = vmatmul.mubr.bf16.gmra.mrb[0].mxu0 %v5146
        %v6039 = vpop.f32.mrb[0].mxu0
        %v6040 = vadd.f32 %v5424, %v6039
        %v6041 = vpop.f32.mrb[0].mxu0
        %v6042 = vpop.f32.mrb[0].mxu0
        %v6043 = vadd.f32 %v5427, %v6042
        %v6044 = vpop.f32.mrb[0].mxu0
        %6045 = vmatprep.mubr.bf16.mxu0 0
        %6046 = vmatmul.mubr.bf16.gmra.mrb[0].mxu0 %v5149
        %v6047 = vpop.f32.mrb[0].mxu0
        %v6048 = vadd.f32 %v5432, %v6047
        %v6049 = vpop.f32.mrb[0].mxu0
        %v6050 = vpop.f32.mrb[0].mxu0
        %v6051 = vadd.f32 %v5435, %v6050
        %v6052 = vpop.f32.mrb[0].mxu0
        %6053 = vmatprep.mubr.bf16.mxu0 0
        %6054 = vmatmul.mubr.bf16.gmra.mrb[0].mxu0 %v5152
        %v6055 = vpop.f32.mrb[0].mxu0
        %v6056 = vadd.f32 %v5440, %v6055
        %v6057 = vpop.f32.mrb[0].mxu0
        %v6058 = vpop.f32.mrb[0].mxu0
        %v6059 = vadd.f32 %v5443, %v6058
        %v6060 = vpop.f32.mrb[0].mxu0
        %6061 = vmatprep.mubr.bf16.mxu0 0
        %6062 = vmatmul.mubr.bf16.gmra.mrb[0].mxu0 %v5155
        %v6063 = vpop.f32.mrb[0].mxu0
        %v6064 = vadd.f32 %v5448, %v6063
        %v6065 = vpop.f32.mrb[0].mxu0
        %v6066 = vpop.f32.mrb[0].mxu0
        %v6067 = vadd.f32 %v5451, %v6066
        %v6068 = vpop.f32.mrb[0].mxu0
        %6069 = vmatprep.mubr.bf16.mxu0 0
        %6070 = vmatmul.mubr.bf16.gmra.mrb[0].mxu0 %v5158
        %v6071 = vpop.f32.mrb[0].mxu0
        %v6072 = vadd.f32 %v5456, %v6071
        %v6073 = vpop.f32.mrb[0].mxu0
        %v6074 = vpop.f32.mrb[0].mxu0
        %v6075 = vadd.f32 %v5459, %v6074
        %v6076 = vpop.f32.mrb[0].mxu0
        %6077 = vmatprep.mubr.bf16.mxu0 0
        %6078 = vmatmul.mubr.bf16.gmra.mrb[0].mxu0 %v5161
        %v6079 = vpop.f32.mrb[0].mxu0
        %v6080 = vadd.f32 %v5464, %v6079
        %v6081 = vpop.f32.mrb[0].mxu0
        %v6082 = vpop.f32.mrb[0].mxu0
        %v6083 = vadd.f32 %v5467, %v6082
        %v6084 = vpop.f32.mrb[0].mxu0
        %6085 = vmatprep.mubr.bf16.mxu0 0
        %6086 = vmatmul.mubr.bf16.gmra.mrb[0].mxu0 %v5164
        %v6087 = vpop.f32.mrb[0].mxu0
        %v6088 = vadd.f32 %v5472, %v6087
        %v6089 = vpop.f32.mrb[0].mxu0
        %v6090 = vpop.f32.mrb[0].mxu0
        %v6091 = vadd.f32 %v5475, %v6090
        %v6092 = vpop.f32.mrb[0].mxu0
        %6093 = vmatprep.mubr.bf16.mxu0 0
        %6094 = vmatmul.mubr.bf16.gmra.mrb[0].mxu0 %v5167
        %v6095 = vpop.f32.mrb[0].mxu0
        %v6096 = vadd.f32 %v5480, %v6095
        %v6097 = vpop.f32.mrb[0].mxu0
        %v6098 = vpop.f32.mrb[0].mxu0
        %v6099 = vadd.f32 %v5483, %v6098
        %v6100 = vpop.f32.mrb[0].mxu0
        %6101 = vmatprep.mubr.bf16.mxu0 0
        %6102 = vmatmul.mubr.bf16.gmra.mrb[0].mxu0 %v5170
        %v6103 = vpop.f32.mrb[0].mxu0
        %v6104 = vadd.f32 %v5488, %v6103
        %v6105 = vpop.f32.mrb[0].mxu0
        %v6106 = vpop.f32.mrb[0].mxu0
        %v6107 = vadd.f32 %v5491, %v6106
        %v6108 = vpop.f32.mrb[0].mxu0
        %6109 = vmatprep.mubr.bf16.mxu0 0
        %6110 = vmatmul.mubr.bf16.gmra.mrb[0].mxu0 %v5173
        %v6111 = vpop.f32.mrb[0].mxu0
        %v6112 = vadd.f32 %v5496, %v6111
        %v6113 = vpop.f32.mrb[0].mxu0
        %v6114 = vpop.f32.mrb[0].mxu0
        %v6115 = vadd.f32 %v5499, %v6114
        %v6116 = vpop.f32.mrb[0].mxu0
        %6117 = vmatprep.mubr.bf16.mxu0 0
        %6118 = vmatmul.mubr.bf16.gmra.mrb[0].mxu0 %v5176
        %v6119 = vpop.f32.mrb[0].mxu0
        %v6120 = vadd.f32 %v5504, %v6119
        %v6121 = vpop.f32.mrb[0].mxu0
        %v6122 = vpop.f32.mrb[0].mxu0
        %v6123 = vadd.f32 %v5507, %v6122
        %v6124 = vpop.f32.mrb[0].mxu0
        %6125 = vmatprep.mubr.bf16.mxu0 0
        %6126 = vmatmul.mubr.bf16.gmra.mrb[0].mxu0 %v5179
        %v6127 = vpop.f32.mrb[0].mxu0
        %v6128 = vadd.f32 %v5512, %v6127
        %v6129 = vpop.f32.mrb[0].mxu0
        %v6130 = vpop.f32.mrb[0].mxu0
        %v6131 = vadd.f32 %v5515, %v6130
        %v6132 = vpop.f32.mrb[0].mxu0
        %6133 = vmatprep.mubr.bf16.mxu0 0
        %6134 = vmatmul.mubr.bf16.gmra.mrb[0].mxu0 %v5182
        %v6135 = vpop.f32.mrb[0].mxu0
        %v6136 = vadd.f32 %v5520, %v6135
        %v6137 = vpop.f32.mrb[0].mxu0
        %v6138 = vpop.f32.mrb[0].mxu0
        %v6139 = vadd.f32 %v5523, %v6138
        %v6140 = vpop.f32.mrb[0].mxu0
        %6141 = vmatprep.mubr.bf16.mxu0 0
        %6142 = vmatmul.mubr.bf16.gmra.mrb[0].mxu0 %v5185
        %v6143 = vpop.f32.mrb[0].mxu0
        %v6144 = vadd.f32 %v5528, %v6143
        %v6145 = vpop.f32.mrb[0].mxu0
        %v6146 = vpop.f32.mrb[0].mxu0
        %v6147 = vadd.f32 %v5531, %v6146
        %v6148 = vpop.f32.mrb[0].mxu0
        %6149 = vmatprep.mubr.bf16.mxu0 0
        %6150 = vmatmul.mubr.bf16.gmra.mrb[0].mxu0 %v5188
        %v6151 = vpop.f32.mrb[0].mxu0
        %v6152 = vadd.f32 %v5536, %v6151
        %v6153 = vpop.f32.mrb[0].mxu0
        %v6154 = vpop.f32.mrb[0].mxu0
        %v6155 = vadd.f32 %v5539, %v6154
        %v6156 = vpop.f32.mrb[0].mxu0
        %6157 = vmatprep.mubr.bf16.mxu0 0
        %6158 = vmatmul.mubr.bf16.gmra.mrb[0].mxu0 %v5191
        %v6159 = vpop.f32.mrb[0].mxu0
        %v6160 = vadd.f32 %v5544, %v6159
        %v6161 = vpop.f32.mrb[0].mxu0
        %v6162 = vpop.f32.mrb[0].mxu0
        %v6163 = vadd.f32 %v5547, %v6162
        %v6164 = vpop.f32.mrb[0].mxu0
        %6165 = vmatprep.mubr.bf16.mxu0 0
        %6166 = vmatmul.mubr.bf16.gmra.mrb[0].mxu0 %v5194
        %v6167 = vpop.f32.mrb[0].mxu0
        %v6168 = vadd.f32 %v5552, %v6167
        %v6169 = vpop.f32.mrb[0].mxu0
        %v6170 = vpop.f32.mrb[0].mxu0
        %v6171 = vadd.f32 %v5555, %v6170
        %v6172 = vpop.f32.mrb[0].mxu0
        %6173 = vmatprep.mubr.bf16.mxu0 0
        %6174 = vmatmul.mubr.bf16.gmra.mrb[0].mxu0 %v5197
        %v6175 = vpop.f32.mrb[0].mxu0
        %v6176 = vadd.f32 %v5560, %v6175
        %v6177 = vpop.f32.mrb[0].mxu0
        %v6178 = vpop.f32.mrb[0].mxu0
        %v6179 = vadd.f32 %v5563, %v6178
        %v6180 = vpop.f32.mrb[0].mxu0
        %6181 = vmatprep.mubr.bf16.mxu0 0
        %6182 = vmatmul.mubr.bf16.gmra.mrb[0].mxu0 %v5200
        %v6183 = vpop.f32.mrb[0].mxu0
        %v6184 = vadd.f32 %v5568, %v6183
        %v6185 = vpop.f32.mrb[0].mxu0
        %v6186 = vpop.f32.mrb[0].mxu0
        %v6187 = vadd.f32 %v5571, %v6186
        %v6188 = vpop.f32.mrb[0].mxu0
        %6189 = vmatprep.mubr.bf16.mxu0 0
        %6190 = vmatmul.mubr.bf16.gmra.mrb[0].mxu0 %v5203
        %v6191 = vpop.f32.mrb[0].mxu0
        %v6192 = vadd.f32 %v5576, %v6191
        %v6193 = vpop.f32.mrb[0].mxu0
        %v6194 = vpop.f32.mrb[0].mxu0
        %v6195 = vadd.f32 %v5579, %v6194
        %v6196 = vpop.f32.mrb[0].mxu0
        %6197 = vmatprep.mubr.bf16.mxu0 0
        %6198 = vmatmul.mubr.bf16.gmra.mrb[0].mxu0 %v5206
        %v6199 = vpop.f32.mrb[0].mxu0
        %v6200 = vadd.f32 %v5584, %v6199
        %v6201 = vpop.f32.mrb[0].mxu0
        %v6202 = vpop.f32.mrb[0].mxu0
        %v6203 = vadd.f32 %v5587, %v6202
        %v6204 = vpop.f32.mrb[0].mxu0
        %6205 = vmatprep.mubr.bf16.mxu0 0
        %6206 = vmatmul.mubr.bf16.gmra.mrb[0].mxu0 %v5209
        %v6207 = vpop.f32.mrb[0].mxu0
        %v6208 = vadd.f32 %v5592, %v6207
        %v6209 = vpop.f32.mrb[0].mxu0
        %v6210 = vpop.f32.mrb[0].mxu0
        %v6211 = vadd.f32 %v5595, %v6210
        %v6212 = vpop.f32.mrb[0].mxu0
        %6213 = vmatprep.mubr.bf16.mxu0 0
        %6214 = vmatmul.mubr.bf16.gmra.mrb[0].mxu0 %v5212
        %v6215 = vpop.f32.mrb[0].mxu0
        %v6216 = vadd.f32 %v5600, %v6215
        %v6217 = vpop.f32.mrb[0].mxu0
        %v6218 = vpop.f32.mrb[0].mxu0
        %v6219 = vadd.f32 %v5603, %v6218
        %v6220 = vpop.f32.mrb[0].mxu0
        %6221 = vmatprep.mubr.bf16.mxu0 0
        %6222 = vmatmul.mubr.bf16.gmra.mrb[0].mxu0 %v5215
        %v6223 = vpop.f32.mrb[0].mxu0
        %v6224 = vadd.f32 %v5608, %v6223
        %v6225 = vpop.f32.mrb[0].mxu0
        %v6226 = vpop.f32.mrb[0].mxu0
        %v6227 = vadd.f32 %v5611, %v6226
        %v6228 = vpop.f32.mrb[0].mxu0
        %6229 = vmatprep.mubr.bf16.mxu0 0
        %6230 = vmatmul.mubr.bf16.gmra.mrb[0].mxu0 %v5218
        %v6231 = vpop.f32.mrb[0].mxu0
        %v6232 = vadd.f32 %v5616, %v6231
        %v6233 = vpop.f32.mrb[0].mxu0
        %v6234 = vpop.f32.mrb[0].mxu0
        %v6235 = vadd.f32 %v5619, %v6234
        %v6236 = vpop.f32.mrb[0].mxu0
        %6237 = vmatprep.mubr.bf16.mxu0 0
        %6238 = vmatmul.mubr.bf16.gmra.mrb[0].mxu0 %v5221
        %v6239 = vpop.f32.mrb[0].mxu0
        %v6240 = vadd.f32 %v5624, %v6239
        %v6241 = vpop.f32.mrb[0].mxu0
        %v6242 = vpop.f32.mrb[0].mxu0
        %v6243 = vadd.f32 %v5627, %v6242
        %v6244 = vpop.f32.mrb[0].mxu0
        %6245 = vmatprep.mubr.bf16.mxu0 0
        %6246 = vmatmul.mubr.bf16.gmra.mrb[0].mxu0 %v5224
        %v6247 = vpop.f32.mrb[0].mxu0
        %v6248 = vadd.f32 %v5632, %v6247
        %v6249 = vpop.f32.mrb[0].mxu0
        %v6250 = vpop.f32.mrb[0].mxu0
        %v6251 = vadd.f32 %v5635, %v6250
        %v6252 = vpop.f32.mrb[0].mxu0
        %6253 = vmatprep.mubr.bf16.mxu0 0
        %6254 = vmatmul.mubr.bf16.gmra.mrb[0].mxu0 %v5227
        %v6255 = vpop.f32.mrb[0].mxu0
        %v6256 = vadd.f32 %v5640, %v6255
        %v6257 = vpop.f32.mrb[0].mxu0
        %v6258 = vpop.f32.mrb[0].mxu0
        %v6259 = vadd.f32 %v5643, %v6258
        %v6260 = vpop.f32.mrb[0].mxu0
        %6261 = vmatprep.mubr.bf16.mxu0 0
        %6262 = vmatmul.mubr.bf16.gmra.mrb[0].mxu0 %v5230
        %v6263 = vpop.f32.mrb[0].mxu0
        %v6264 = vadd.f32 %v5648, %v6263
        %v6265 = vpop.f32.mrb[0].mxu0
        %v6266 = vpop.f32.mrb[0].mxu0
        %v6267 = vadd.f32 %v5651, %v6266
        %v6268 = vpop.f32.mrb[0].mxu0
        %6269 = vmatprep.mubr.bf16.mxu0 0
        %6270 = vmatmul.mubr.bf16.gmra.mrb[0].mxu0 %v5233
        %v6271 = vpop.f32.mrb[0].mxu0
        %v6272 = vadd.f32 %v5656, %v6271
        %v6273 = vpop.f32.mrb[0].mxu0
        %v6274 = vpop.f32.mrb[0].mxu0
        %v6275 = vadd.f32 %v5659, %v6274
        %v6276 = vpop.f32.mrb[0].mxu0
        %6277 = vmatprep.mubr.bf16.mxu0 0
        %6278 = vmatmul.mubr.bf16.gmra.mrb[0].mxu0 %v5236
        %v6279 = vpop.f32.mrb[0].mxu0
        %v6280 = vadd.f32 %v5664, %v6279
        %v6281 = vpop.f32.mrb[0].mxu0
        %v6282 = vpop.f32.mrb[0].mxu0
        %v6283 = vadd.f32 %v5667, %v6282
        %v6284 = vpop.f32.mrb[0].mxu0
        %6285 = vmatprep.mubr.bf16.mxu0 0
        %6286 = vmatmul.mubr.bf16.gmra.mrb[0].mxu0 %v5239
        %v6287 = vpop.f32.mrb[0].mxu0
        %v6288 = vadd.f32 %v5672, %v6287
        %v6289 = vpop.f32.mrb[0].mxu0
        %v6290 = vpop.f32.mrb[0].mxu0
        %v6291 = vadd.f32 %v5675, %v6290
        %v6292 = vpop.f32.mrb[0].mxu0
        %6293 = vmatprep.mubr.bf16.mxu0 0
        %6294 = vmatmul.mubr.bf16.gmra.mrb[0].mxu0 %v5242
        %v6295 = vpop.f32.mrb[0].mxu0
        %v6296 = vadd.f32 %v5680, %v6295
        %v6297 = vpop.f32.mrb[0].mxu0
        %v6298 = vpop.f32.mrb[0].mxu0
        %v6299 = vadd.f32 %v5683, %v6298
        %v6300 = vpop.f32.mrb[0].mxu0
        %6301 = vmatprep.mubr.bf16.mxu0 0
        %6302 = vmatmul.mubr.bf16.gmra.mrb[0].mxu0 %v5245
        %v6303 = vpop.f32.mrb[0].mxu0
        %v6304 = vadd.f32 %v5688, %v6303
        %v6305 = vpop.f32.mrb[0].mxu0
        %v6306 = vpop.f32.mrb[0].mxu0
        %v6307 = vadd.f32 %v5691, %v6306
        %v6308 = vpop.f32.mrb[0].mxu0
        %6309 = vmatprep.mubr.bf16.mxu0 0
        %6310 = vmatmul.mubr.bf16.gmra.mrb[0].mxu0 %v5248
        %v6311 = vpop.f32.mrb[0].mxu0
        %v6312 = vadd.f32 %v5696, %v6311
        %v6313 = vpop.f32.mrb[0].mxu0
        %v6314 = vpop.f32.mrb[0].mxu0
        %v6315 = vadd.f32 %v5699, %v6314
        %v6316 = vpop.f32.mrb[0].mxu0
        %6317 = vmatprep.mubr.bf16.mxu0 0
        %6318 = vmatmul.mubr.bf16.gmra.mrb[0].mxu0 %v5251
        %v6319 = vpop.f32.mrb[0].mxu0
        %v6320 = vadd.f32 %v5704, %v6319
        %v6321 = vpop.f32.mrb[0].mxu0
        %v6322 = vpop.f32.mrb[0].mxu0
        %v6323 = vadd.f32 %v5707, %v6322
        %v6324 = vpop.f32.mrb[0].mxu0
        %6325 = vmatprep.mubr.bf16.mxu0 0
        %6326 = vmatmul.mubr.bf16.gmra.mrb[0].mxu0 %v5254
        %v6327 = vpop.f32.mrb[0].mxu0
        %v6328 = vadd.f32 %v5712, %v6327
        %v6329 = vpop.f32.mrb[0].mxu0
        %v6330 = vpop.f32.mrb[0].mxu0
        %v6331 = vadd.f32 %v5715, %v6330
        %v6332 = vpop.f32.mrb[0].mxu0
        %6333 = vmatprep.mubr.bf16.mxu0 0
        %6334 = vmatmul.mubr.bf16.gmra.mrb[0].mxu0 %v5257
        %v6335 = vpop.f32.mrb[0].mxu0
        %v6336 = vadd.f32 %v5720, %v6335
        %v6337 = vpop.f32.mrb[0].mxu0
        %v6338 = vpop.f32.mrb[0].mxu0
        %v6339 = vadd.f32 %v5723, %v6338
        %v6340 = vpop.f32.mrb[0].mxu0
        %6341 = vmatprep.mubr.bf16.mxu0 0
        %6342 = vmatmul.mubr.bf16.gmra.mrb[0].mxu0 %v5260
        %v6343 = vpop.f32.mrb[0].mxu0
        %v6344 = vadd.f32 %v5728, %v6343
        %v6345 = vpop.f32.mrb[0].mxu0
        %v6346 = vpop.f32.mrb[0].mxu0
        %v6347 = vadd.f32 %v5731, %v6346
        %v6348 = vpop.f32.mrb[0].mxu0
        %6349 = vmatprep.mubr.bf16.mxu0 0
        %6350 = vmatmul.mubr.bf16.gmra.mrb[0].mxu0 %v5263
        %v6351 = vpop.f32.mrb[0].mxu0
        %v6352 = vadd.f32 %v5736, %v6351
        %v6353 = vpop.f32.mrb[0].mxu0
        %v6354 = vpop.f32.mrb[0].mxu0
        %v6355 = vadd.f32 %v5739, %v6354
        %v6356 = vpop.f32.mrb[0].mxu0
        %6357 = vmatprep.mubr.bf16.mxu0 0
        %6358 = vmatmul.mubr.bf16.gmra.mrb[0].mxu0 %v5266
        %v6359 = vpop.f32.mrb[0].mxu0
        %v6360 = vadd.f32 %v5744, %v6359
        %v6361 = vpop.f32.mrb[0].mxu0
        %v6362 = vpop.f32.mrb[0].mxu0
        %v6363 = vadd.f32 %v5747, %v6362
        %v6364 = vpop.f32.mrb[0].mxu0
        %6365 = vmatprep.mubr.bf16.mxu0 0
        %6366 = vmatmul.mubr.bf16.gmra.mrb[0].mxu0 %v5269
        %v6367 = vpop.f32.mrb[0].mxu0
        %v6368 = vadd.f32 %v5752, %v6367
        %v6369 = vpop.f32.mrb[0].mxu0
        %v6370 = vpop.f32.mrb[0].mxu0
        %v6371 = vadd.f32 %v5755, %v6370
        %v6372 = vpop.f32.mrb[0].mxu0
        %6373 = vmatprep.mubr.bf16.mxu0 0
        %6374 = vmatmul.mubr.bf16.gmra.mrb[0].mxu0 %v5272
        %v6375 = vpop.f32.mrb[0].mxu0
        %v6376 = vadd.f32 %v5760, %v6375
        %v6377 = vpop.f32.mrb[0].mxu0
        %v6378 = vpop.f32.mrb[0].mxu0
        %v6379 = vadd.f32 %v5763, %v6378
        %v6380 = vpop.f32.mrb[0].mxu0
        %6381 = vmatprep.mubr.bf16.mxu0 0
        %6382 = vmatmul.mubr.bf16.gmra.mrb[0].mxu0 %v5275
        %v6383 = vpop.f32.mrb[0].mxu0
        %v6384 = vadd.f32 %v5768, %v6383
        %v6385 = vpop.f32.mrb[0].mxu0
        %v6386 = vpop.f32.mrb[0].mxu0
        %v6387 = vadd.f32 %v5771, %v6386
        %v6388 = vpop.f32.mrb[0].mxu0
        %6389 = vmatprep.mubr.bf16.mxu0 0
        %6390 = vmatmul.mubr.bf16.gmra.mrb[0].mxu0 %v5278
        %v6391 = vpop.f32.mrb[0].mxu0
        %v6392 = vadd.f32 %v5776, %v6391
        %v6393 = vpop.f32.mrb[0].mxu0
        %v6394 = vpop.f32.mrb[0].mxu0
        %v6395 = vadd.f32 %v5779, %v6394
        %v6396 = vpop.f32.mrb[0].mxu0
        %6397 = vmatprep.mubr.bf16.mxu0 0
        %6398 = vmatmul.mubr.bf16.gmra.mrb[0].mxu0 %v5281
        %v6399 = vpop.f32.mrb[0].mxu0
        %v6400 = vadd.f32 %v5784, %v6399
        %v6401 = vpop.f32.mrb[0].mxu0
        %v6402 = vpop.f32.mrb[0].mxu0
        %v6403 = vadd.f32 %v5787, %v6402
        %v6404 = vpop.f32.mrb[0].mxu0
        %6405 = vmatprep.mubr.bf16.mxu0 0
        %6406 = vmatmul.mubr.bf16.gmra.mrb[0].mxu0 %v5284
        %v6407 = vpop.f32.mrb[0].mxu0
        %v6408 = vadd.f32 %v5792, %v6407
        %v6409 = vpop.f32.mrb[0].mxu0
        %v6410 = vpop.f32.mrb[0].mxu0
        %v6411 = vadd.f32 %v5795, %v6410
        %v6412 = vpop.f32.mrb[0].mxu0
        %6413 = vmatprep.mubr.bf16.mxu0 0
        %6414 = vmatmul.mubr.bf16.gmra.mrb[0].mxu0 %v5287
        %v6415 = vpop.f32.mrb[0].mxu0
        %v6416 = vadd.f32 %v5800, %v6415
        %v6417 = vpop.f32.mrb[0].mxu0
        %v6418 = vpop.f32.mrb[0].mxu0
        %v6419 = vadd.f32 %v5803, %v6418
        %v6420 = vpop.f32.mrb[0].mxu0
        %6421 = vmatprep.mubr.bf16.mxu0 0
        %6422 = vmatmul.mubr.bf16.gmra.mrb[0].mxu0 %v5290
        %v6423 = vpop.f32.mrb[0].mxu0
        %v6424 = vadd.f32 %v5808, %v6423
        %v6425 = vpop.f32.mrb[0].mxu0
        %v6426 = vpop.f32.mrb[0].mxu0
        %v6427 = vadd.f32 %v5811, %v6426
        %v6428 = vpop.f32.mrb[0].mxu0
        %6429 = vmatprep.mubr.bf16.mxu0 0
        %6430 = vmatmul.mubr.bf16.gmra.mrb[0].mxu0 %v5293
        %v6431 = vpop.f32.mrb[0].mxu0
        %v6432 = vadd.f32 %v5816, %v6431
        %v6433 = vpop.f32.mrb[0].mxu0
        %v6434 = vpop.f32.mrb[0].mxu0
        %v6435 = vadd.f32 %v5819, %v6434
        %v6436 = vpop.f32.mrb[0].mxu0
        %6437 = vmatprep.mubr.bf16.mxu0 0
        %6438 = vmatmul.mubr.bf16.gmra.mrb[0].mxu0 %v5296
        %v6439 = vpop.f32.mrb[0].mxu0
        %v6440 = vadd.f32 %v5824, %v6439
        %v6441 = vpop.f32.mrb[0].mxu0
        %v6442 = vpop.f32.mrb[0].mxu0
        %v6443 = vadd.f32 %v5827, %v6442
        %v6444 = vpop.f32.mrb[0].mxu0
        %6445 = vmatprep.mubr.bf16.mxu0 0
        %6446 = vmatmul.mubr.bf16.gmra.mrb[0].mxu0 %v5299
        %v6447 = vpop.f32.mrb[0].mxu0
        %v6448 = vadd.f32 %v5832, %v6447
        %v6449 = vpop.f32.mrb[0].mxu0
        %v6450 = vpop.f32.mrb[0].mxu0
        %v6451 = vadd.f32 %v5835, %v6450
        %v6452 = vpop.f32.mrb[0].mxu0
        %6453 = vmatprep.mubr.bf16.mxu0 0
        %6454 = vmatmul.mubr.bf16.gmra.mrb[0].mxu0 %v5302
        %v6455 = vpop.f32.mrb[0].mxu0
        %v6456 = vadd.f32 %v5840, %v6455
        %v6457 = vpop.f32.mrb[0].mxu0
        %v6458 = vpop.f32.mrb[0].mxu0
        %v6459 = vadd.f32 %v5843, %v6458
        %v6460 = vpop.f32.mrb[0].mxu0
        %6461 = vmatprep.mubr.bf16.mxu0 0
        %6462 = vmatmul.mubr.bf16.gmra.mrb[0].mxu0 %v5305
        %v6463 = vpop.f32.mrb[0].mxu0
        %v6464 = vadd.f32 %v5848, %v6463
        %v6465 = vpop.f32.mrb[0].mxu0
        %v6466 = vpop.f32.mrb[0].mxu0
        %v6467 = vadd.f32 %v5851, %v6466
        %v6468 = vpop.f32.mrb[0].mxu0
        %6469 = vmatprep.mubr.bf16.mxu0 0
        %6470 = vmatmul.mubr.bf16.gmra.mrb[0].mxu0 %v5308
        %v6471 = vpop.f32.mrb[0].mxu0
        %v6472 = vadd.f32 %v5856, %v6471
        %v6473 = vpop.f32.mrb[0].mxu0
        %v6474 = vpop.f32.mrb[0].mxu0
        %v6475 = vadd.f32 %v5859, %v6474
        %v6476 = vpop.f32.mrb[0].mxu0
        %6477 = vmatprep.mubr.bf16.mxu0 0
        %6478 = vmatmul.mubr.bf16.gmra.mrb[0].mxu0 %v5311
        %v6479 = vpop.f32.mrb[0].mxu0
        %v6480 = vadd.f32 %v5864, %v6479
        %v6481 = vpop.f32.mrb[0].mxu0
        %v6482 = vpop.f32.mrb[0].mxu0
        %v6483 = vadd.f32 %v5867, %v6482
        %v6484 = vpop.f32.mrb[0].mxu0
        %6485 = vmatprep.mubr.bf16.mxu0 0
        %6486 = vmatmul.mubr.bf16.gmra.mrb[0].mxu0 %v5314
        %v6487 = vpop.f32.mrb[0].mxu0
        %v6488 = vadd.f32 %v5872, %v6487
        %v6489 = vpop.f32.mrb[0].mxu0
        %v6490 = vpop.f32.mrb[0].mxu0
        %v6491 = vadd.f32 %v5875, %v6490
        %v6492 = vpop.f32.mrb[0].mxu0
        %6493 = vmatprep.mubr.bf16.mxu0 0
        %6494 = vmatmul.mubr.bf16.gmra.mrb[0].mxu0 %v5317
        %v6495 = vpop.f32.mrb[0].mxu0
        %v6496 = vadd.f32 %v5880, %v6495
        %v6497 = vpop.f32.mrb[0].mxu0
        %v6498 = vpop.f32.mrb[0].mxu0
        %v6499 = vadd.f32 %v5883, %v6498
        %v6500 = vpop.f32.mrb[0].mxu0
        %6501 = vmatprep.mubr.bf16.mxu0 0
        %6502 = vmatmul.mubr.bf16.gmra.mrb[0].mxu0 %v5320
        %v6503 = vpop.f32.mrb[0].mxu0
        %v6504 = vadd.f32 %v5888, %v6503
        %v6505 = vpop.f32.mrb[0].mxu0
        %v6506 = vpop.f32.mrb[0].mxu0
        %v6507 = vadd.f32 %v5891, %v6506
        %v6508 = vpop.f32.mrb[0].mxu0
        %6509 = vmatprep.mubr.bf16.mxu0 0
        %6510 = vmatmul.mubr.bf16.gmra.mrb[0].mxu0 %v5323
        %v6511 = vpop.f32.mrb[0].mxu0
        %v6512 = vadd.f32 %v5896, %v6511
        %v6513 = vpop.f32.mrb[0].mxu0
        %v6514 = vpop.f32.mrb[0].mxu0
        %v6515 = vadd.f32 %v5899, %v6514
        %v6516 = vpop.f32.mrb[0].mxu0
        %6517 = vmatprep.mubr.bf16.mxu0 0
        %6518 = vmatmul.mubr.bf16.gmra.mrb[0].mxu0 %v5326
        %v6519 = vpop.f32.mrb[0].mxu0
        %v6520 = vadd.f32 %v5904, %v6519
        %v6521 = vpop.f32.mrb[0].mxu0
        %v6522 = vpop.f32.mrb[0].mxu0
        %v6523 = vadd.f32 %v5907, %v6522
        %v6524 = vpop.f32.mrb[0].mxu0
        %6525 = vmatprep.mubr.bf16.mxu0 0
        %6526 = vmatmul.mubr.bf16.gmra.mrb[0].mxu0 %v5329
        %v6527 = vpop.f32.mrb[0].mxu0
        %v6528 = vadd.f32 %v5912, %v6527
        %v6529 = vpop.f32.mrb[0].mxu0
        %v6530 = vpop.f32.mrb[0].mxu0
        %v6531 = vadd.f32 %v5915, %v6530
        %v6532 = vpop.f32.mrb[0].mxu0
        %6533 = vmatprep.mubr.bf16.mxu0 0
        %6534 = vmatmul.mubr.bf16.gmra.mrb[0].mxu0 %v5332
        %v6535 = vpop.f32.mrb[0].mxu0
        %v6536 = vadd.f32 %v5920, %v6535
        %v6537 = vpop.f32.mrb[0].mxu0
        %v6538 = vpop.f32.mrb[0].mxu0
        %v6539 = vadd.f32 %v5923, %v6538
        %v6540 = vpop.f32.mrb[0].mxu0
        %6541 = vmatprep.mubr.bf16.mxu0 0
        %6542 = vmatmul.mubr.bf16.gmra.mrb[0].mxu0 %v5335
        %v6543 = vpop.f32.mrb[0].mxu0
        %v6544 = vadd.f32 %v5928, %v6543
        %v6545 = vpop.f32.mrb[0].mxu0
        %v6546 = vpop.f32.mrb[0].mxu0
        %v6547 = vadd.f32 %v5931, %v6546
        %v6548 = vpop.f32.mrb[0].mxu0
        %6549 = vmatprep.mubr.bf16.mxu0 0
        %6550 = vmatmul.mubr.bf16.gmra.mrb[0].mxu0 %v5338
        %v6551 = vpop.f32.mrb[0].mxu0
        %v6552 = vadd.f32 %v5936, %v6551
        %v6553 = vpop.f32.mrb[0].mxu0
        %v6554 = vpop.f32.mrb[0].mxu0
        %v6555 = vadd.f32 %v5939, %v6554
        %v6556 = vpop.f32.mrb[0].mxu0
        %6557 = vmatprep.mubr.bf16.mxu0 0
        %6558 = vmatmul.mubr.bf16.gmra.mrb[0].mxu0 %v5341
        %v6559 = vpop.f32.mrb[0].mxu0
        %v6560 = vadd.f32 %v5944, %v6559
        %v6561 = vpop.f32.mrb[0].mxu0
        %v6562 = vpop.f32.mrb[0].mxu0
        %v6563 = vadd.f32 %v5947, %v6562
        %v6564 = vpop.f32.mrb[0].mxu0
        %6565 = vmatprep.mubr.bf16.mxu0 0
        %6566 = vmatmul.mubr.bf16.gmra.mrb[0].mxu0 %v5344
        %v6567 = vpop.f32.mrb[0].mxu0
        %v6568 = vadd.f32 %v5952, %v6567
        %v6569 = vpop.f32.mrb[0].mxu0
        %v6570 = vpop.f32.mrb[0].mxu0
        %v6571 = vadd.f32 %v5955, %v6570
        %v6572 = vpop.f32.mrb[0].mxu0
        %6573 = vmatprep.mubr.bf16.mxu0 0
        %6574 = vmatmul.mubr.bf16.gmra.mrb[0].mxu0 %v5347
        %v6575 = vpop.f32.mrb[0].mxu0
        %v6576 = vadd.f32 %v5960, %v6575
        %v6577 = vpop.f32.mrb[0].mxu0
        %v6578 = vpop.f32.mrb[0].mxu0
        %v6579 = vpop.f32.mrb[0].mxu0
        %6580 = vdwg.mxu0
        %v6581 = vpack.c.bf16 %v6003, %v6000
        %v6582 = vpack.c.bf16 %v6011, %v6008
        %v6583 = vpack.c.bf16 %v6019, %v6016
        %v6584 = vpack.c.bf16 %v6027, %v6024
        %v6585 = vpack.c.bf16 %v6035, %v6032
        %v6586 = vpack.c.bf16 %v6043, %v6040
        %v6587 = vpack.c.bf16 %v6051, %v6048
        %v6588 = vpack.c.bf16 %v6059, %v6056
        %v6589 = vpack.c.bf16 %v6067, %v6064
        %v6590 = vpack.c.bf16 %v6075, %v6072
        %v6591 = vpack.c.bf16 %v6083, %v6080
        %v6592 = vpack.c.bf16 %v6091, %v6088
        %v6593 = vpack.c.bf16 %v6099, %v6096
        %v6594 = vpack.c.bf16 %v6107, %v6104
        %v6595 = vpack.c.bf16 %v6115, %v6112
        %v6596 = vpack.c.bf16 %v6123, %v6120
        %v6597 = vpack.c.bf16 %v6131, %v6128
        %v6598 = vpack.c.bf16 %v6139, %v6136
        %v6599 = vpack.c.bf16 %v6147, %v6144
        %v6600 = vpack.c.bf16 %v6155, %v6152
        %v6601 = vpack.c.bf16 %v6163, %v6160
        %v6602 = vpack.c.bf16 %v6171, %v6168
        %v6603 = vpack.c.bf16 %v6179, %v6176
        %v6604 = vpack.c.bf16 %v6187, %v6184
        %v6605 = vpack.c.bf16 %v6195, %v6192
        %v6606 = vpack.c.bf16 %v6203, %v6200
        %v6607 = vpack.c.bf16 %v6211, %v6208
        %v6608 = vpack.c.bf16 %v6219, %v6216
        %v6609 = vpack.c.bf16 %v6227, %v6224
        %v6610 = vpack.c.bf16 %v6235, %v6232
        %v6611 = vpack.c.bf16 %v6243, %v6240
        %v6612 = vpack.c.bf16 %v6251, %v6248
        %v6613 = vpack.c.bf16 %v6259, %v6256
        %v6614 = vpack.c.bf16 %v6267, %v6264
        %v6615 = vpack.c.bf16 %v6275, %v6272
        %v6616 = vpack.c.bf16 %v6283, %v6280
        %v6617 = vpack.c.bf16 %v6291, %v6288
        %v6618 = vpack.c.bf16 %v6299, %v6296
        %v6619 = vpack.c.bf16 %v6307, %v6304
        %v6620 = vpack.c.bf16 %v6315, %v6312
        %v6621 = vpack.c.bf16 %v6323, %v6320
        %v6622 = vpack.c.bf16 %v6331, %v6328
        %v6623 = vpack.c.bf16 %v6339, %v6336
        %v6624 = vpack.c.bf16 %v6347, %v6344
        %v6625 = vpack.c.bf16 %v6355, %v6352
        %v6626 = vpack.c.bf16 %v6363, %v6360
        %v6627 = vpack.c.bf16 %v6371, %v6368
        %v6628 = vpack.c.bf16 %v6379, %v6376
        %v6629 = vpack.c.bf16 %v6387, %v6384
        %v6630 = vpack.c.bf16 %v6395, %v6392
        %v6631 = vpack.c.bf16 %v6403, %v6400
        %v6632 = vpack.c.bf16 %v6411, %v6408
        %v6633 = vpack.c.bf16 %v6419, %v6416
        %v6634 = vpack.c.bf16 %v6427, %v6424
        %v6635 = vpack.c.bf16 %v6435, %v6432
        %v6636 = vpack.c.bf16 %v6443, %v6440
        %v6637 = vpack.c.bf16 %v6451, %v6448
        %v6638 = vpack.c.bf16 %v6459, %v6456
        %v6639 = vpack.c.bf16 %v6467, %v6464
        %v6640 = vpack.c.bf16 %v6475, %v6472
        %v6641 = vpack.c.bf16 %v6483, %v6480
        %v6642 = vpack.c.bf16 %v6491, %v6488
        %v6643 = vpack.c.bf16 %v6499, %v6496
        %v6644 = vpack.c.bf16 %v6507, %v6504
        %v6645 = vpack.c.bf16 %v6515, %v6512
        %v6646 = vpack.c.bf16 %v6523, %v6520
        %v6647 = vpack.c.bf16 %v6531, %v6528
        %v6648 = vpack.c.bf16 %v6539, %v6536
        %v6649 = vpack.c.bf16 %v6547, %v6544
        %v6650 = vpack.c.bf16 %v6555, %v6552
        %v6651 = vpack.c.bf16 %v6563, %v6560
        %v6652 = vpack.c.bf16 %v6571, %v6568
        %v6653 = vpack.c.bf16 %v6576, %v6576
        %v6654 = vld [vmem:[%s5] sm:$0xf]
        %v6655 = vld [vmem:[%s5 + $0x4] sm:$0xf]
        %v6656 = vld [vmem:[%s5 + $0x8] sm:$0xf]
        %v6657 = vld [vmem:[%s5 + $0xc] sm:$0xf]
        %v6658 = vld [vmem:[%s5 + $0x10] sm:$0xf]
        %v6659 = vld [vmem:[%s5 + $0x14] sm:$0xf]
        %v6660 = vld [vmem:[%s5 + $0x18] sm:$0xf]
        %v6661 = vld [vmem:[%s5 + $0x1c] sm:$0xf]
        %v6662 = vld [vmem:[%s5 + $0x20] sm:$0xf]
        %v6663 = vld [vmem:[%s5 + $0x24] sm:$0xf]
        %v6664 = vld [vmem:[%s5 + $0x28] sm:$0xf]
        %v6665 = vld [vmem:[%s5 + $0x2c] sm:$0xf]
        %v6666 = vld [vmem:[%s5 + $0x30] sm:$0xf]
        %v6667 = vld [vmem:[%s5 + $0x34] sm:$0xf]
        %v6668 = vld [vmem:[%s5 + $0x38] sm:$0xf]
        %v6669 = vld [vmem:[%s5 + $0x3c] sm:$0xf]
        %v6686 = vunpack.c.l.b16 %v6654
        %v6687 = vunpack.c.l.b16 %v6655
        %v6688 = vunpack.c.l.b16 %v6656
        %v6689 = vunpack.c.l.b16 %v6657
        %v6690 = vunpack.c.l.b16 %v6658
        %v6691 = vunpack.c.l.b16 %v6659
        %v6692 = vunpack.c.l.b16 %v6660
        %v6693 = vunpack.c.l.b16 %v6661
        %v6694 = vunpack.c.l.b16 %v6662
        %v6695 = vunpack.c.l.b16 %v6663
        %v6696 = vunpack.c.l.b16 %v6664
        %v6697 = vunpack.c.l.b16 %v6665
        %v6698 = vunpack.c.l.b16 %v6666
        %v6699 = vunpack.c.l.b16 %v6667
        %v6700 = vunpack.c.l.b16 %v6668
        %v6701 = vunpack.c.l.b16 %v6669
        %v6702 = vpack.c.b16 %v6687, %v6686
        %v6703 = vpack.c.b16 %v6689, %v6688
        %v6704 = vpack.c.b16 %v6691, %v6690
        %v6705 = vpack.c.b16 %v6693, %v6692
        %v6706 = vpack.c.b16 %v6695, %v6694
        %v6707 = vpack.c.b16 %v6697, %v6696
        %v6708 = vpack.c.b16 %v6699, %v6698
        %v6709 = vpack.c.b16 %v6701, %v6700
        %6718 = vmatprep.subr.bf16.mxu0 0
        %6719 = vmatpush1.bf16.msra.mxu0 %v6702
        %6720 = vmatprep.subr.bf16.mxu0 0
        %6721 = vmatpush1.bf16.msra.mxu0 %v6703
        %6722 = vmatprep.subr.bf16.mxu0 0
        %6723 = vmatpush1.bf16.msra.mxu0 %v6704
        %6724 = vmatprep.subr.bf16.mxu0 0
        %6725 = vmatpush1.bf16.msra.mxu0 %v6705
        %6726 = vmatprep.subr.bf16.mxu0 0
        %6727 = vmatpush1.bf16.msra.mxu0 %v6706
        %6728 = vmatprep.subr.bf16.mxu0 0
        %6729 = vmatpush1.bf16.msra.mxu0 %v6707
        %6730 = vmatprep.subr.bf16.mxu0 0
        %6731 = vmatpush1.bf16.msra.mxu0 %v6708
        %6732 = vmatprep.subr.bf16.mxu0 0
        %6733 = vmatpush1.bf16.msra.mxu0 %v6709
        %6734 = vmatprep.subr.bf16.mxu0 0
        %6735 = vmatpush1.bf16.msra.mxu0 0
        %6736 = vmatprep.subr.bf16.mxu0 0
        %6737 = vmatpush1.bf16.msra.mxu0 0
        %6738 = vmatprep.subr.bf16.mxu0 0
        %6739 = vmatpush1.bf16.msra.mxu0 0
        %6740 = vmatprep.subr.bf16.mxu0 0
        %6741 = vmatpush1.bf16.msra.mxu0 0
        %6742 = vmatprep.subr.bf16.mxu0 0
        %6743 = vmatpush1.bf16.msra.mxu0 0
        %6744 = vmatprep.subr.bf16.mxu0 0
        %6745 = vmatpush1.bf16.msra.mxu0 0
        %6746 = vmatprep.subr.bf16.mxu0 0
        %6747 = vmatpush1.bf16.msra.mxu0 0
        %6748 = vmatprep.subr.bf16.mxu0 0
        %6749 = vmatpush1.bf16.msra.mxu0 0
        %6750 = vmatprep.mubr.bf16.mxu0 0
        %6751 = vmatmul.mubr.bf16.gmra.mrb[0].mxu0 %v6581
        %v6752 = vpop.f32.mrb[0].mxu0
        %v6753 = vadd.f32 0.0, %v6752
        %v6754 = vpop.f32.mrb[0].mxu0
        %v6755 = vpop.f32.mrb[0].mxu0
        %v6756 = vadd.f32 0.0, %v6755
        %v6757 = vpop.f32.mrb[0].mxu0
        %6758 = vmatprep.mubr.bf16.mxu0 0
        %6759 = vmatmul.mubr.bf16.gmra.mrb[0].mxu0 %v6582
        %v6760 = vpop.f32.mrb[0].mxu0
        %v6761 = vadd.f32 0.0, %v6760
        %v6762 = vpop.f32.mrb[0].mxu0
        %v6763 = vpop.f32.mrb[0].mxu0
        %v6764 = vadd.f32 0.0, %v6763
        %v6765 = vpop.f32.mrb[0].mxu0
        %6766 = vmatprep.mubr.bf16.mxu0 0
        %6767 = vmatmul.mubr.bf16.gmra.mrb[0].mxu0 %v6583
        %v6768 = vpop.f32.mrb[0].mxu0
        %v6769 = vadd.f32 0.0, %v6768
        %v6770 = vpop.f32.mrb[0].mxu0
        %v6771 = vpop.f32.mrb[0].mxu0
        %v6772 = vadd.f32 0.0, %v6771
        %v6773 = vpop.f32.mrb[0].mxu0
        %6774 = vmatprep.mubr.bf16.mxu0 0
        %6775 = vmatmul.mubr.bf16.gmra.mrb[0].mxu0 %v6584
        %v6776 = vpop.f32.mrb[0].mxu0
        %v6777 = vadd.f32 0.0, %v6776
        %v6778 = vpop.f32.mrb[0].mxu0
        %v6779 = vpop.f32.mrb[0].mxu0
        %v6780 = vadd.f32 0.0, %v6779
        %v6781 = vpop.f32.mrb[0].mxu0
        %6782 = vmatprep.mubr.bf16.mxu0 0
        %6783 = vmatmul.mubr.bf16.gmra.mrb[0].mxu0 %v6585
        %v6784 = vpop.f32.mrb[0].mxu0
        %v6785 = vadd.f32 0.0, %v6784
        %v6786 = vpop.f32.mrb[0].mxu0
        %v6787 = vpop.f32.mrb[0].mxu0
        %v6788 = vadd.f32 0.0, %v6787
        %v6789 = vpop.f32.mrb[0].mxu0
        %6790 = vmatprep.mubr.bf16.mxu0 0
        %6791 = vmatmul.mubr.bf16.gmra.mrb[0].mxu0 %v6586
        %v6792 = vpop.f32.mrb[0].mxu0
        %v6793 = vadd.f32 0.0, %v6792
        %v6794 = vpop.f32.mrb[0].mxu0
        %v6795 = vpop.f32.mrb[0].mxu0
        %v6796 = vadd.f32 0.0, %v6795
        %v6797 = vpop.f32.mrb[0].mxu0
        %6798 = vmatprep.mubr.bf16.mxu0 0
        %6799 = vmatmul.mubr.bf16.gmra.mrb[0].mxu0 %v6587
        %v6800 = vpop.f32.mrb[0].mxu0
        %v6801 = vadd.f32 0.0, %v6800
        %v6802 = vpop.f32.mrb[0].mxu0
        %v6803 = vpop.f32.mrb[0].mxu0
        %v6804 = vadd.f32 0.0, %v6803
        %v6805 = vpop.f32.mrb[0].mxu0
        %6806 = vmatprep.mubr.bf16.mxu0 0
        %6807 = vmatmul.mubr.bf16.gmra.mrb[0].mxu0 %v6588
        %v6808 = vpop.f32.mrb[0].mxu0
        %v6809 = vadd.f32 0.0, %v6808
        %v6810 = vpop.f32.mrb[0].mxu0
        %v6811 = vpop.f32.mrb[0].mxu0
        %v6812 = vadd.f32 0.0, %v6811
        %v6813 = vpop.f32.mrb[0].mxu0
        %6814 = vmatprep.mubr.bf16.mxu0 0
        %6815 = vmatmul.mubr.bf16.gmra.mrb[0].mxu0 %v6589
        %v6816 = vpop.f32.mrb[0].mxu0
        %v6817 = vadd.f32 0.0, %v6816
        %v6818 = vpop.f32.mrb[0].mxu0
        %v6819 = vpop.f32.mrb[0].mxu0
        %v6820 = vadd.f32 0.0, %v6819
        %v6821 = vpop.f32.mrb[0].mxu0
        %6822 = vmatprep.mubr.bf16.mxu0 0
        %6823 = vmatmul.mubr.bf16.gmra.mrb[0].mxu0 %v6590
        %v6824 = vpop.f32.mrb[0].mxu0
        %v6825 = vadd.f32 0.0, %v6824
        %v6826 = vpop.f32.mrb[0].mxu0
        %v6827 = vpop.f32.mrb[0].mxu0
        %v6828 = vadd.f32 0.0, %v6827
        %v6829 = vpop.f32.mrb[0].mxu0
        %6830 = vmatprep.mubr.bf16.mxu0 0
        %6831 = vmatmul.mubr.bf16.gmra.mrb[0].mxu0 %v6591
        %v6832 = vpop.f32.mrb[0].mxu0
        %v6833 = vadd.f32 0.0, %v6832
        %v6834 = vpop.f32.mrb[0].mxu0
        %v6835 = vpop.f32.mrb[0].mxu0
        %v6836 = vadd.f32 0.0, %v6835
        %v6837 = vpop.f32.mrb[0].mxu0
        %6838 = vmatprep.mubr.bf16.mxu0 0
        %6839 = vmatmul.mubr.bf16.gmra.mrb[0].mxu0 %v6592
        %v6840 = vpop.f32.mrb[0].mxu0
        %v6841 = vadd.f32 0.0, %v6840
        %v6842 = vpop.f32.mrb[0].mxu0
        %v6843 = vpop.f32.mrb[0].mxu0
        %v6844 = vadd.f32 0.0, %v6843
        %v6845 = vpop.f32.mrb[0].mxu0
        %6846 = vmatprep.mubr.bf16.mxu0 0
        %6847 = vmatmul.mubr.bf16.gmra.mrb[0].mxu0 %v6593
        %v6848 = vpop.f32.mrb[0].mxu0
        %v6849 = vadd.f32 0.0, %v6848
        %v6850 = vpop.f32.mrb[0].mxu0
        %v6851 = vpop.f32.mrb[0].mxu0
        %v6852 = vadd.f32 0.0, %v6851
        %v6853 = vpop.f32.mrb[0].mxu0
        %6854 = vmatprep.mubr.bf16.mxu0 0
        %6855 = vmatmul.mubr.bf16.gmra.mrb[0].mxu0 %v6594
        %v6856 = vpop.f32.mrb[0].mxu0
        %v6857 = vadd.f32 0.0, %v6856
        %v6858 = vpop.f32.mrb[0].mxu0
        %v6859 = vpop.f32.mrb[0].mxu0
        %v6860 = vadd.f32 0.0, %v6859
        %v6861 = vpop.f32.mrb[0].mxu0
        %6862 = vmatprep.mubr.bf16.mxu0 0
        %6863 = vmatmul.mubr.bf16.gmra.mrb[0].mxu0 %v6595
        %v6864 = vpop.f32.mrb[0].mxu0
        %v6865 = vadd.f32 0.0, %v6864
        %v6866 = vpop.f32.mrb[0].mxu0
        %v6867 = vpop.f32.mrb[0].mxu0
        %v6868 = vadd.f32 0.0, %v6867
        %v6869 = vpop.f32.mrb[0].mxu0
        %6870 = vmatprep.mubr.bf16.mxu0 0
        %6871 = vmatmul.mubr.bf16.gmra.mrb[0].mxu0 %v6596
        %v6872 = vpop.f32.mrb[0].mxu0
        %v6873 = vadd.f32 0.0, %v6872
        %v6874 = vpop.f32.mrb[0].mxu0
        %v6875 = vpop.f32.mrb[0].mxu0
        %v6876 = vadd.f32 0.0, %v6875
        %v6877 = vpop.f32.mrb[0].mxu0
        %6878 = vmatprep.mubr.bf16.mxu0 0
        %6879 = vmatmul.mubr.bf16.gmra.mrb[0].mxu0 %v6597
        %v6880 = vpop.f32.mrb[0].mxu0
        %v6881 = vadd.f32 0.0, %v6880
        %v6882 = vpop.f32.mrb[0].mxu0
        %v6883 = vpop.f32.mrb[0].mxu0
        %v6884 = vadd.f32 0.0, %v6883
        %v6885 = vpop.f32.mrb[0].mxu0
        %6886 = vmatprep.mubr.bf16.mxu0 0
        %6887 = vmatmul.mubr.bf16.gmra.mrb[0].mxu0 %v6598
        %v6888 = vpop.f32.mrb[0].mxu0
        %v6889 = vadd.f32 0.0, %v6888
        %v6890 = vpop.f32.mrb[0].mxu0
        %v6891 = vpop.f32.mrb[0].mxu0
        %v6892 = vadd.f32 0.0, %v6891
        %v6893 = vpop.f32.mrb[0].mxu0
        %6894 = vmatprep.mubr.bf16.mxu0 0
        %6895 = vmatmul.mubr.bf16.gmra.mrb[0].mxu0 %v6599
        %v6896 = vpop.f32.mrb[0].mxu0
        %v6897 = vadd.f32 0.0, %v6896
        %v6898 = vpop.f32.mrb[0].mxu0
        %v6899 = vpop.f32.mrb[0].mxu0
        %v6900 = vadd.f32 0.0, %v6899
        %v6901 = vpop.f32.mrb[0].mxu0
        %6902 = vmatprep.mubr.bf16.mxu0 0
        %6903 = vmatmul.mubr.bf16.gmra.mrb[0].mxu0 %v6600
        %v6904 = vpop.f32.mrb[0].mxu0
        %v6905 = vadd.f32 0.0, %v6904
        %v6906 = vpop.f32.mrb[0].mxu0
        %v6907 = vpop.f32.mrb[0].mxu0
        %v6908 = vadd.f32 0.0, %v6907
        %v6909 = vpop.f32.mrb[0].mxu0
        %6910 = vmatprep.mubr.bf16.mxu0 0
        %6911 = vmatmul.mubr.bf16.gmra.mrb[0].mxu0 %v6601
        %v6912 = vpop.f32.mrb[0].mxu0
        %v6913 = vadd.f32 0.0, %v6912
        %v6914 = vpop.f32.mrb[0].mxu0
        %v6915 = vpop.f32.mrb[0].mxu0
        %v6916 = vadd.f32 0.0, %v6915
        %v6917 = vpop.f32.mrb[0].mxu0
        %6918 = vmatprep.mubr.bf16.mxu0 0
        %6919 = vmatmul.mubr.bf16.gmra.mrb[0].mxu0 %v6602
        %v6920 = vpop.f32.mrb[0].mxu0
        %v6921 = vadd.f32 0.0, %v6920
        %v6922 = vpop.f32.mrb[0].mxu0
        %v6923 = vpop.f32.mrb[0].mxu0
        %v6924 = vadd.f32 0.0, %v6923
        %v6925 = vpop.f32.mrb[0].mxu0
        %6926 = vmatprep.mubr.bf16.mxu0 0
        %6927 = vmatmul.mubr.bf16.gmra.mrb[0].mxu0 %v6603
        %v6928 = vpop.f32.mrb[0].mxu0
        %v6929 = vadd.f32 0.0, %v6928
        %v6930 = vpop.f32.mrb[0].mxu0
        %v6931 = vpop.f32.mrb[0].mxu0
        %v6932 = vadd.f32 0.0, %v6931
        %v6933 = vpop.f32.mrb[0].mxu0
        %6934 = vmatprep.mubr.bf16.mxu0 0
        %6935 = vmatmul.mubr.bf16.gmra.mrb[0].mxu0 %v6604
        %v6936 = vpop.f32.mrb[0].mxu0
        %v6937 = vadd.f32 0.0, %v6936
        %v6938 = vpop.f32.mrb[0].mxu0
        %v6939 = vpop.f32.mrb[0].mxu0
        %v6940 = vadd.f32 0.0, %v6939
        %v6941 = vpop.f32.mrb[0].mxu0
        %6942 = vmatprep.mubr.bf16.mxu0 0
        %6943 = vmatmul.mubr.bf16.gmra.mrb[0].mxu0 %v6605
        %v6944 = vpop.f32.mrb[0].mxu0
        %v6945 = vadd.f32 0.0, %v6944
        %v6946 = vpop.f32.mrb[0].mxu0
        %v6947 = vpop.f32.mrb[0].mxu0
        %v6948 = vadd.f32 0.0, %v6947
        %v6949 = vpop.f32.mrb[0].mxu0
        %6950 = vmatprep.mubr.bf16.mxu0 0
        %6951 = vmatmul.mubr.bf16.gmra.mrb[0].mxu0 %v6606
        %v6952 = vpop.f32.mrb[0].mxu0
        %v6953 = vadd.f32 0.0, %v6952
        %v6954 = vpop.f32.mrb[0].mxu0
        %v6955 = vpop.f32.mrb[0].mxu0
        %v6956 = vadd.f32 0.0, %v6955
        %v6957 = vpop.f32.mrb[0].mxu0
        %6958 = vmatprep.mubr.bf16.mxu0 0
        %6959 = vmatmul.mubr.bf16.gmra.mrb[0].mxu0 %v6607
        %v6960 = vpop.f32.mrb[0].mxu0
        %v6961 = vadd.f32 0.0, %v6960
        %v6962 = vpop.f32.mrb[0].mxu0
        %v6963 = vpop.f32.mrb[0].mxu0
        %v6964 = vadd.f32 0.0, %v6963
        %v6965 = vpop.f32.mrb[0].mxu0
        %6966 = vmatprep.mubr.bf16.mxu0 0
        %6967 = vmatmul.mubr.bf16.gmra.mrb[0].mxu0 %v6608
        %v6968 = vpop.f32.mrb[0].mxu0
        %v6969 = vadd.f32 0.0, %v6968
        %v6970 = vpop.f32.mrb[0].mxu0
        %v6971 = vpop.f32.mrb[0].mxu0
        %v6972 = vadd.f32 0.0, %v6971
        %v6973 = vpop.f32.mrb[0].mxu0
        %6974 = vmatprep.mubr.bf16.mxu0 0
        %6975 = vmatmul.mubr.bf16.gmra.mrb[0].mxu0 %v6609
        %v6976 = vpop.f32.mrb[0].mxu0
        %v6977 = vadd.f32 0.0, %v6976
        %v6978 = vpop.f32.mrb[0].mxu0
        %v6979 = vpop.f32.mrb[0].mxu0
        %v6980 = vadd.f32 0.0, %v6979
        %v6981 = vpop.f32.mrb[0].mxu0
        %6982 = vmatprep.mubr.bf16.mxu0 0
        %6983 = vmatmul.mubr.bf16.gmra.mrb[0].mxu0 %v6610
        %v6984 = vpop.f32.mrb[0].mxu0
        %v6985 = vadd.f32 0.0, %v6984
        %v6986 = vpop.f32.mrb[0].mxu0
        %v6987 = vpop.f32.mrb[0].mxu0
        %v6988 = vadd.f32 0.0, %v6987
        %v6989 = vpop.f32.mrb[0].mxu0
        %6990 = vmatprep.mubr.bf16.mxu0 0
        %6991 = vmatmul.mubr.bf16.gmra.mrb[0].mxu0 %v6611
        %v6992 = vpop.f32.mrb[0].mxu0
        %v6993 = vadd.f32 0.0, %v6992
        %v6994 = vpop.f32.mrb[0].mxu0
        %v6995 = vpop.f32.mrb[0].mxu0
        %v6996 = vadd.f32 0.0, %v6995
        %v6997 = vpop.f32.mrb[0].mxu0
        %6998 = vmatprep.mubr.bf16.mxu0 0
        %6999 = vmatmul.mubr.bf16.gmra.mrb[0].mxu0 %v6612
        %v7000 = vpop.f32.mrb[0].mxu0
        %v7001 = vadd.f32 0.0, %v7000
        %v7002 = vpop.f32.mrb[0].mxu0
        %v7003 = vpop.f32.mrb[0].mxu0
        %v7004 = vadd.f32 0.0, %v7003
        %v7005 = vpop.f32.mrb[0].mxu0
        %7006 = vmatprep.mubr.bf16.mxu0 0
        %7007 = vmatmul.mubr.bf16.gmra.mrb[0].mxu0 %v6613
        %v7008 = vpop.f32.mrb[0].mxu0
        %v7009 = vadd.f32 0.0, %v7008
        %v7010 = vpop.f32.mrb[0].mxu0
        %v7011 = vpop.f32.mrb[0].mxu0
        %v7012 = vadd.f32 0.0, %v7011
        %v7013 = vpop.f32.mrb[0].mxu0
        %7014 = vmatprep.mubr.bf16.mxu0 0
        %7015 = vmatmul.mubr.bf16.gmra.mrb[0].mxu0 %v6614
        %v7016 = vpop.f32.mrb[0].mxu0
        %v7017 = vadd.f32 0.0, %v7016
        %v7018 = vpop.f32.mrb[0].mxu0
        %v7019 = vpop.f32.mrb[0].mxu0
        %v7020 = vadd.f32 0.0, %v7019
        %v7021 = vpop.f32.mrb[0].mxu0
        %7022 = vmatprep.mubr.bf16.mxu0 0
        %7023 = vmatmul.mubr.bf16.gmra.mrb[0].mxu0 %v6615
        %v7024 = vpop.f32.mrb[0].mxu0
        %v7025 = vadd.f32 0.0, %v7024
        %v7026 = vpop.f32.mrb[0].mxu0
        %v7027 = vpop.f32.mrb[0].mxu0
        %v7028 = vadd.f32 0.0, %v7027
        %v7029 = vpop.f32.mrb[0].mxu0
        %7030 = vmatprep.mubr.bf16.mxu0 0
        %7031 = vmatmul.mubr.bf16.gmra.mrb[0].mxu0 %v6616
        %v7032 = vpop.f32.mrb[0].mxu0
        %v7033 = vadd.f32 0.0, %v7032
        %v7034 = vpop.f32.mrb[0].mxu0
        %v7035 = vpop.f32.mrb[0].mxu0
        %v7036 = vadd.f32 0.0, %v7035
        %v7037 = vpop.f32.mrb[0].mxu0
        %7038 = vmatprep.mubr.bf16.mxu0 0
        %7039 = vmatmul.mubr.bf16.gmra.mrb[0].mxu0 %v6617
        %v7040 = vpop.f32.mrb[0].mxu0
        %v7041 = vadd.f32 0.0, %v7040
        %v7042 = vpop.f32.mrb[0].mxu0
        %v7043 = vpop.f32.mrb[0].mxu0
        %v7044 = vadd.f32 0.0, %v7043
        %v7045 = vpop.f32.mrb[0].mxu0
        %7046 = vmatprep.mubr.bf16.mxu0 0
        %7047 = vmatmul.mubr.bf16.gmra.mrb[0].mxu0 %v6618
        %v7048 = vpop.f32.mrb[0].mxu0
        %v7049 = vadd.f32 0.0, %v7048
        %v7050 = vpop.f32.mrb[0].mxu0
        %v7051 = vpop.f32.mrb[0].mxu0
        %v7052 = vadd.f32 0.0, %v7051
        %v7053 = vpop.f32.mrb[0].mxu0
        %7054 = vmatprep.mubr.bf16.mxu0 0
        %7055 = vmatmul.mubr.bf16.gmra.mrb[0].mxu0 %v6619
        %v7056 = vpop.f32.mrb[0].mxu0
        %v7057 = vadd.f32 0.0, %v7056
        %v7058 = vpop.f32.mrb[0].mxu0
        %v7059 = vpop.f32.mrb[0].mxu0
        %v7060 = vadd.f32 0.0, %v7059
        %v7061 = vpop.f32.mrb[0].mxu0
        %7062 = vmatprep.mubr.bf16.mxu0 0
        %7063 = vmatmul.mubr.bf16.gmra.mrb[0].mxu0 %v6620
        %v7064 = vpop.f32.mrb[0].mxu0
        %v7065 = vadd.f32 0.0, %v7064
        %v7066 = vpop.f32.mrb[0].mxu0
        %v7067 = vpop.f32.mrb[0].mxu0
        %v7068 = vadd.f32 0.0, %v7067
        %v7069 = vpop.f32.mrb[0].mxu0
        %7070 = vmatprep.mubr.bf16.mxu0 0
        %7071 = vmatmul.mubr.bf16.gmra.mrb[0].mxu0 %v6621
        %v7072 = vpop.f32.mrb[0].mxu0
        %v7073 = vadd.f32 0.0, %v7072
        %v7074 = vpop.f32.mrb[0].mxu0
        %v7075 = vpop.f32.mrb[0].mxu0
        %v7076 = vadd.f32 0.0, %v7075
        %v7077 = vpop.f32.mrb[0].mxu0
        %7078 = vmatprep.mubr.bf16.mxu0 0
        %7079 = vmatmul.mubr.bf16.gmra.mrb[0].mxu0 %v6622
        %v7080 = vpop.f32.mrb[0].mxu0
        %v7081 = vadd.f32 0.0, %v7080
        %v7082 = vpop.f32.mrb[0].mxu0
        %v7083 = vpop.f32.mrb[0].mxu0
        %v7084 = vadd.f32 0.0, %v7083
        %v7085 = vpop.f32.mrb[0].mxu0
        %7086 = vmatprep.mubr.bf16.mxu0 0
        %7087 = vmatmul.mubr.bf16.gmra.mrb[0].mxu0 %v6623
        %v7088 = vpop.f32.mrb[0].mxu0
        %v7089 = vadd.f32 0.0, %v7088
        %v7090 = vpop.f32.mrb[0].mxu0
        %v7091 = vpop.f32.mrb[0].mxu0
        %v7092 = vadd.f32 0.0, %v7091
        %v7093 = vpop.f32.mrb[0].mxu0
        %7094 = vmatprep.mubr.bf16.mxu0 0
        %7095 = vmatmul.mubr.bf16.gmra.mrb[0].mxu0 %v6624
        %v7096 = vpop.f32.mrb[0].mxu0
        %v7097 = vadd.f32 0.0, %v7096
        %v7098 = vpop.f32.mrb[0].mxu0
        %v7099 = vpop.f32.mrb[0].mxu0
        %v7100 = vadd.f32 0.0, %v7099
        %v7101 = vpop.f32.mrb[0].mxu0
        %7102 = vmatprep.mubr.bf16.mxu0 0
        %7103 = vmatmul.mubr.bf16.gmra.mrb[0].mxu0 %v6625
        %v7104 = vpop.f32.mrb[0].mxu0
        %v7105 = vadd.f32 0.0, %v7104
        %v7106 = vpop.f32.mrb[0].mxu0
        %v7107 = vpop.f32.mrb[0].mxu0
        %v7108 = vadd.f32 0.0, %v7107
        %v7109 = vpop.f32.mrb[0].mxu0
        %7110 = vmatprep.mubr.bf16.mxu0 0
        %7111 = vmatmul.mubr.bf16.gmra.mrb[0].mxu0 %v6626
        %v7112 = vpop.f32.mrb[0].mxu0
        %v7113 = vadd.f32 0.0, %v7112
        %v7114 = vpop.f32.mrb[0].mxu0
        %v7115 = vpop.f32.mrb[0].mxu0
        %v7116 = vadd.f32 0.0, %v7115
        %v7117 = vpop.f32.mrb[0].mxu0
        %7118 = vmatprep.mubr.bf16.mxu0 0
        %7119 = vmatmul.mubr.bf16.gmra.mrb[0].mxu0 %v6627
        %v7120 = vpop.f32.mrb[0].mxu0
        %v7121 = vadd.f32 0.0, %v7120
        %v7122 = vpop.f32.mrb[0].mxu0
        %v7123 = vpop.f32.mrb[0].mxu0
        %v7124 = vadd.f32 0.0, %v7123
        %v7125 = vpop.f32.mrb[0].mxu0
        %7126 = vmatprep.mubr.bf16.mxu0 0
        %7127 = vmatmul.mubr.bf16.gmra.mrb[0].mxu0 %v6628
        %v7128 = vpop.f32.mrb[0].mxu0
        %v7129 = vadd.f32 0.0, %v7128
        %v7130 = vpop.f32.mrb[0].mxu0
        %v7131 = vpop.f32.mrb[0].mxu0
        %v7132 = vadd.f32 0.0, %v7131
        %v7133 = vpop.f32.mrb[0].mxu0
        %7134 = vmatprep.mubr.bf16.mxu0 0
        %7135 = vmatmul.mubr.bf16.gmra.mrb[0].mxu0 %v6629
        %v7136 = vpop.f32.mrb[0].mxu0
        %v7137 = vadd.f32 0.0, %v7136
        %v7138 = vpop.f32.mrb[0].mxu0
        %v7139 = vpop.f32.mrb[0].mxu0
        %v7140 = vadd.f32 0.0, %v7139
        %v7141 = vpop.f32.mrb[0].mxu0
        %7142 = vmatprep.mubr.bf16.mxu0 0
        %7143 = vmatmul.mubr.bf16.gmra.mrb[0].mxu0 %v6630
        %v7144 = vpop.f32.mrb[0].mxu0
        %v7145 = vadd.f32 0.0, %v7144
        %v7146 = vpop.f32.mrb[0].mxu0
        %v7147 = vpop.f32.mrb[0].mxu0
        %v7148 = vadd.f32 0.0, %v7147
        %v7149 = vpop.f32.mrb[0].mxu0
        %7150 = vmatprep.mubr.bf16.mxu0 0
        %7151 = vmatmul.mubr.bf16.gmra.mrb[0].mxu0 %v6631
        %v7152 = vpop.f32.mrb[0].mxu0
        %v7153 = vadd.f32 0.0, %v7152
        %v7154 = vpop.f32.mrb[0].mxu0
        %v7155 = vpop.f32.mrb[0].mxu0
        %v7156 = vadd.f32 0.0, %v7155
        %v7157 = vpop.f32.mrb[0].mxu0
        %7158 = vmatprep.mubr.bf16.mxu0 0
        %7159 = vmatmul.mubr.bf16.gmra.mrb[0].mxu0 %v6632
        %v7160 = vpop.f32.mrb[0].mxu0
        %v7161 = vadd.f32 0.0, %v7160
        %v7162 = vpop.f32.mrb[0].mxu0
        %v7163 = vpop.f32.mrb[0].mxu0
        %v7164 = vadd.f32 0.0, %v7163
        %v7165 = vpop.f32.mrb[0].mxu0
        %7166 = vmatprep.mubr.bf16.mxu0 0
        %7167 = vmatmul.mubr.bf16.gmra.mrb[0].mxu0 %v6633
        %v7168 = vpop.f32.mrb[0].mxu0
        %v7169 = vadd.f32 0.0, %v7168
        %v7170 = vpop.f32.mrb[0].mxu0
        %v7171 = vpop.f32.mrb[0].mxu0
        %v7172 = vadd.f32 0.0, %v7171
        %v7173 = vpop.f32.mrb[0].mxu0
        %7174 = vmatprep.mubr.bf16.mxu0 0
        %7175 = vmatmul.mubr.bf16.gmra.mrb[0].mxu0 %v6634
        %v7176 = vpop.f32.mrb[0].mxu0
        %v7177 = vadd.f32 0.0, %v7176
        %v7178 = vpop.f32.mrb[0].mxu0
        %v7179 = vpop.f32.mrb[0].mxu0
        %v7180 = vadd.f32 0.0, %v7179
        %v7181 = vpop.f32.mrb[0].mxu0
        %7182 = vmatprep.mubr.bf16.mxu0 0
        %7183 = vmatmul.mubr.bf16.gmra.mrb[0].mxu0 %v6635
        %v7184 = vpop.f32.mrb[0].mxu0
        %v7185 = vadd.f32 0.0, %v7184
        %v7186 = vpop.f32.mrb[0].mxu0
        %v7187 = vpop.f32.mrb[0].mxu0
        %v7188 = vadd.f32 0.0, %v7187
        %v7189 = vpop.f32.mrb[0].mxu0
        %7190 = vmatprep.mubr.bf16.mxu0 0
        %7191 = vmatmul.mubr.bf16.gmra.mrb[0].mxu0 %v6636
        %v7192 = vpop.f32.mrb[0].mxu0
        %v7193 = vadd.f32 0.0, %v7192
        %v7194 = vpop.f32.mrb[0].mxu0
        %v7195 = vpop.f32.mrb[0].mxu0
        %v7196 = vadd.f32 0.0, %v7195
        %v7197 = vpop.f32.mrb[0].mxu0
        %7198 = vmatprep.mubr.bf16.mxu0 0
        %7199 = vmatmul.mubr.bf16.gmra.mrb[0].mxu0 %v6637
        %v7200 = vpop.f32.mrb[0].mxu0
        %v7201 = vadd.f32 0.0, %v7200
        %v7202 = vpop.f32.mrb[0].mxu0
        %v7203 = vpop.f32.mrb[0].mxu0
        %v7204 = vadd.f32 0.0, %v7203
        %v7205 = vpop.f32.mrb[0].mxu0
        %7206 = vmatprep.mubr.bf16.mxu0 0
        %7207 = vmatmul.mubr.bf16.gmra.mrb[0].mxu0 %v6638
        %v7208 = vpop.f32.mrb[0].mxu0
        %v7209 = vadd.f32 0.0, %v7208
        %v7210 = vpop.f32.mrb[0].mxu0
        %v7211 = vpop.f32.mrb[0].mxu0
        %v7212 = vadd.f32 0.0, %v7211
        %v7213 = vpop.f32.mrb[0].mxu0
        %7214 = vmatprep.mubr.bf16.mxu0 0
        %7215 = vmatmul.mubr.bf16.gmra.mrb[0].mxu0 %v6639
        %v7216 = vpop.f32.mrb[0].mxu0
        %v7217 = vadd.f32 0.0, %v7216
        %v7218 = vpop.f32.mrb[0].mxu0
        %v7219 = vpop.f32.mrb[0].mxu0
        %v7220 = vadd.f32 0.0, %v7219
        %v7221 = vpop.f32.mrb[0].mxu0
        %7222 = vmatprep.mubr.bf16.mxu0 0
        %7223 = vmatmul.mubr.bf16.gmra.mrb[0].mxu0 %v6640
        %v7224 = vpop.f32.mrb[0].mxu0
        %v7225 = vadd.f32 0.0, %v7224
        %v7226 = vpop.f32.mrb[0].mxu0
        %v7227 = vpop.f32.mrb[0].mxu0
        %v7228 = vadd.f32 0.0, %v7227
        %v7229 = vpop.f32.mrb[0].mxu0
        %7230 = vmatprep.mubr.bf16.mxu0 0
        %7231 = vmatmul.mubr.bf16.gmra.mrb[0].mxu0 %v6641
        %v7232 = vpop.f32.mrb[0].mxu0
        %v7233 = vadd.f32 0.0, %v7232
        %v7234 = vpop.f32.mrb[0].mxu0
        %v7235 = vpop.f32.mrb[0].mxu0
        %v7236 = vadd.f32 0.0, %v7235
        %v7237 = vpop.f32.mrb[0].mxu0
        %7238 = vmatprep.mubr.bf16.mxu0 0
        %7239 = vmatmul.mubr.bf16.gmra.mrb[0].mxu0 %v6642
        %v7240 = vpop.f32.mrb[0].mxu0
        %v7241 = vadd.f32 0.0, %v7240
        %v7242 = vpop.f32.mrb[0].mxu0
        %v7243 = vpop.f32.mrb[0].mxu0
        %v7244 = vadd.f32 0.0, %v7243
        %v7245 = vpop.f32.mrb[0].mxu0
        %7246 = vmatprep.mubr.bf16.mxu0 0
        %7247 = vmatmul.mubr.bf16.gmra.mrb[0].mxu0 %v6643
        %v7248 = vpop.f32.mrb[0].mxu0
        %v7249 = vadd.f32 0.0, %v7248
        %v7250 = vpop.f32.mrb[0].mxu0
        %v7251 = vpop.f32.mrb[0].mxu0
        %v7252 = vadd.f32 0.0, %v7251
        %v7253 = vpop.f32.mrb[0].mxu0
        %7254 = vmatprep.mubr.bf16.mxu0 0
        %7255 = vmatmul.mubr.bf16.gmra.mrb[0].mxu0 %v6644
        %v7256 = vpop.f32.mrb[0].mxu0
        %v7257 = vadd.f32 0.0, %v7256
        %v7258 = vpop.f32.mrb[0].mxu0
        %v7259 = vpop.f32.mrb[0].mxu0
        %v7260 = vadd.f32 0.0, %v7259
        %v7261 = vpop.f32.mrb[0].mxu0
        %7262 = vmatprep.mubr.bf16.mxu0 0
        %7263 = vmatmul.mubr.bf16.gmra.mrb[0].mxu0 %v6645
        %v7264 = vpop.f32.mrb[0].mxu0
        %v7265 = vadd.f32 0.0, %v7264
        %v7266 = vpop.f32.mrb[0].mxu0
        %v7267 = vpop.f32.mrb[0].mxu0
        %v7268 = vadd.f32 0.0, %v7267
        %v7269 = vpop.f32.mrb[0].mxu0
        %7270 = vmatprep.mubr.bf16.mxu0 0
        %7271 = vmatmul.mubr.bf16.gmra.mrb[0].mxu0 %v6646
        %v7272 = vpop.f32.mrb[0].mxu0
        %v7273 = vadd.f32 0.0, %v7272
        %v7274 = vpop.f32.mrb[0].mxu0
        %v7275 = vpop.f32.mrb[0].mxu0
        %v7276 = vadd.f32 0.0, %v7275
        %v7277 = vpop.f32.mrb[0].mxu0
        %7278 = vmatprep.mubr.bf16.mxu0 0
        %7279 = vmatmul.mubr.bf16.gmra.mrb[0].mxu0 %v6647
        %v7280 = vpop.f32.mrb[0].mxu0
        %v7281 = vadd.f32 0.0, %v7280
        %v7282 = vpop.f32.mrb[0].mxu0
        %v7283 = vpop.f32.mrb[0].mxu0
        %v7284 = vadd.f32 0.0, %v7283
        %v7285 = vpop.f32.mrb[0].mxu0
        %7286 = vmatprep.mubr.bf16.mxu0 0
        %7287 = vmatmul.mubr.bf16.gmra.mrb[0].mxu0 %v6648
        %v7288 = vpop.f32.mrb[0].mxu0
        %v7289 = vadd.f32 0.0, %v7288
        %v7290 = vpop.f32.mrb[0].mxu0
        %v7291 = vpop.f32.mrb[0].mxu0
        %v7292 = vadd.f32 0.0, %v7291
        %v7293 = vpop.f32.mrb[0].mxu0
        %7294 = vmatprep.mubr.bf16.mxu0 0
        %7295 = vmatmul.mubr.bf16.gmra.mrb[0].mxu0 %v6649
        %v7296 = vpop.f32.mrb[0].mxu0
        %v7297 = vadd.f32 0.0, %v7296
        %v7298 = vpop.f32.mrb[0].mxu0
        %v7299 = vpop.f32.mrb[0].mxu0
        %v7300 = vpop.f32.mrb[0].mxu0
        %7301 = vmatprep.mubr.bf16.mxu0 0
        %7302 = vmatmul.mubr.bf16.gmra.mrb[0].mxu0 %v6650
        %v7303 = vpop.f32.mrb[0].mxu0
        %v7304 = vpop.f32.mrb[0].mxu0
        %v7305 = vpop.f32.mrb[0].mxu0
        %v7306 = vpop.f32.mrb[0].mxu0
        %7307 = vmatprep.mubr.bf16.mxu0 0
        %7308 = vmatmul.mubr.bf16.gmra.mrb[0].mxu0 %v6651
        %v7309 = vpop.f32.mrb[0].mxu0
        %v7310 = vpop.f32.mrb[0].mxu0
        %v7311 = vpop.f32.mrb[0].mxu0
        %v7312 = vpop.f32.mrb[0].mxu0
        %7313 = vmatprep.mubr.bf16.mxu0 0
        %7314 = vmatmul.mubr.bf16.gmra.mrb[0].mxu0 %v6652
        %v7315 = vpop.f32.mrb[0].mxu0
        %v7316 = vpop.f32.mrb[0].mxu0
        %v7317 = vpop.f32.mrb[0].mxu0
        %v7318 = vpop.f32.mrb[0].mxu0
        %7319 = vmatprep.mubr.bf16.mxu0 0
        %7320 = vmatmul.mubr.bf16.gmra.mrb[0].mxu0 %v6653
        %v7321 = vpop.f32.mrb[0].mxu0
        %v7322 = vpop.f32.mrb[0].mxu0
        %v7323 = vpop.f32.mrb[0].mxu0
        %v7324 = vpop.f32.mrb[0].mxu0
        %7325 = vdwg.mxu0
        %s7326 = scalar_lea.vmem %s5, 64
        %v7327 = vld [vmem:[%s7326] sm:$0xf]
        %v7328 = vld [vmem:[%s7326 + $0x4] sm:$0xf]
        %v7329 = vld [vmem:[%s7326 + $0x8] sm:$0xf]
        %v7330 = vld [vmem:[%s7326 + $0xc] sm:$0xf]
        %v7331 = vld [vmem:[%s7326 + $0x10] sm:$0xf]
        %v7332 = vld [vmem:[%s7326 + $0x14] sm:$0xf]
        %v7333 = vld [vmem:[%s7326 + $0x18] sm:$0xf]
        %v7334 = vld [vmem:[%s7326 + $0x1c] sm:$0xf]
        %v7335 = vld [vmem:[%s7326 + $0x20] sm:$0xf]
        %v7336 = vld [vmem:[%s7326 + $0x24] sm:$0xf]
        %v7337 = vld [vmem:[%s7326 + $0x28] sm:$0xf]
        %v7338 = vld [vmem:[%s7326 + $0x2c] sm:$0xf]
        %v7339 = vld [vmem:[%s7326 + $0x30] sm:$0xf]
        %v7340 = vld [vmem:[%s7326 + $0x34] sm:$0xf]
        %v7341 = vld [vmem:[%s7326 + $0x38] sm:$0xf]
        %v7342 = vld [vmem:[%s7326 + $0x3c] sm:$0xf]
        %v7359 = vunpack.c.l.b16 %v7327
        %v7360 = vunpack.c.l.b16 %v7328
        %v7361 = vunpack.c.l.b16 %v7329
        %v7362 = vunpack.c.l.b16 %v7330
        %v7363 = vunpack.c.l.b16 %v7331
        %v7364 = vunpack.c.l.b16 %v7332
        %v7365 = vunpack.c.l.b16 %v7333
        %v7366 = vunpack.c.l.b16 %v7334
        %v7367 = vunpack.c.l.b16 %v7335
        %v7368 = vunpack.c.l.b16 %v7336
        %v7369 = vunpack.c.l.b16 %v7337
        %v7370 = vunpack.c.l.b16 %v7338
        %v7371 = vunpack.c.l.b16 %v7339
        %v7372 = vunpack.c.l.b16 %v7340
        %v7373 = vunpack.c.l.b16 %v7341
        %v7374 = vunpack.c.l.b16 %v7342
        %v7375 = vpack.c.b16 %v7360, %v7359
        %v7376 = vpack.c.b16 %v7362, %v7361
        %v7377 = vpack.c.b16 %v7364, %v7363
        %v7378 = vpack.c.b16 %v7366, %v7365
        %v7379 = vpack.c.b16 %v7368, %v7367
        %v7380 = vpack.c.b16 %v7370, %v7369
        %v7381 = vpack.c.b16 %v7372, %v7371
        %v7382 = vpack.c.b16 %v7374, %v7373
        %7391 = vmatprep.subr.bf16.mxu0 0
        %7392 = vmatpush1.bf16.msra.mxu0 %v7375
        %7393 = vmatprep.subr.bf16.mxu0 0
        %7394 = vmatpush1.bf16.msra.mxu0 %v7376
        %7395 = vmatprep.subr.bf16.mxu0 0
        %7396 = vmatpush1.bf16.msra.mxu0 %v7377
        %7397 = vmatprep.subr.bf16.mxu0 0
        %7398 = vmatpush1.bf16.msra.mxu0 %v7378
        %7399 = vmatprep.subr.bf16.mxu0 0
        %7400 = vmatpush1.bf16.msra.mxu0 %v7379
        %7401 = vmatprep.subr.bf16.mxu0 0
        %7402 = vmatpush1.bf16.msra.mxu0 %v7380
        %7403 = vmatprep.subr.bf16.mxu0 0
        %7404 = vmatpush1.bf16.msra.mxu0 %v7381
        %7405 = vmatprep.subr.bf16.mxu0 0
        %7406 = vmatpush1.bf16.msra.mxu0 %v7382
        %7407 = vmatprep.subr.bf16.mxu0 0
        %7408 = vmatpush1.bf16.msra.mxu0 0
        %7409 = vmatprep.subr.bf16.mxu0 0
        %7410 = vmatpush1.bf16.msra.mxu0 0
        %7411 = vmatprep.subr.bf16.mxu0 0
        %7412 = vmatpush1.bf16.msra.mxu0 0
        %7413 = vmatprep.subr.bf16.mxu0 0
        %7414 = vmatpush1.bf16.msra.mxu0 0
        %7415 = vmatprep.subr.bf16.mxu0 0
        %7416 = vmatpush1.bf16.msra.mxu0 0
        %7417 = vmatprep.subr.bf16.mxu0 0
        %7418 = vmatpush1.bf16.msra.mxu0 0
        %7419 = vmatprep.subr.bf16.mxu0 0
        %7420 = vmatpush1.bf16.msra.mxu0 0
        %7421 = vmatprep.subr.bf16.mxu0 0
        %7422 = vmatpush1.bf16.msra.mxu0 0
        %7423 = vmatprep.mubr.bf16.mxu0 0
        %7424 = vmatmul.mubr.bf16.gmra.mrb[0].mxu0 %v6581
        %v7425 = vpop.f32.mrb[0].mxu0
        %v7426 = vpop.f32.mrb[0].mxu0
        %v7427 = vpop.f32.mrb[0].mxu0
        %v7428 = vpop.f32.mrb[0].mxu0
        %7429 = vmatprep.mubr.bf16.mxu0 0
        %7430 = vmatmul.mubr.bf16.gmra.mrb[0].mxu0 %v6582
        %v7431 = vpop.f32.mrb[0].mxu0
        %v7432 = vpop.f32.mrb[0].mxu0
        %v7433 = vpop.f32.mrb[0].mxu0
        %v7434 = vpop.f32.mrb[0].mxu0
        %7435 = vmatprep.mubr.bf16.mxu0 0
        %7436 = vmatmul.mubr.bf16.gmra.mrb[0].mxu0 %v6583
        %v7437 = vpop.f32.mrb[0].mxu0
        %v7438 = vadd.f32 0.0, %v7437
        %v7439 = vpop.f32.mrb[0].mxu0
        %v7440 = vpop.f32.mrb[0].mxu0
        %v7441 = vadd.f32 0.0, %v7440
        %v7442 = vpop.f32.mrb[0].mxu0
        %7443 = vmatprep.mubr.bf16.mxu0 0
        %7444 = vmatmul.mubr.bf16.gmra.mrb[0].mxu0 %v6584
        %v7445 = vpop.f32.mrb[0].mxu0
        %v7446 = vadd.f32 0.0, %v7445
        %v7447 = vpop.f32.mrb[0].mxu0
        %v7448 = vpop.f32.mrb[0].mxu0
        %v7449 = vadd.f32 0.0, %v7448
        %v7450 = vpop.f32.mrb[0].mxu0
        %7451 = vmatprep.mubr.bf16.mxu0 0
        %7452 = vmatmul.mubr.bf16.gmra.mrb[0].mxu0 %v6585
        %v7453 = vpop.f32.mrb[0].mxu0
        %v7454 = vadd.f32 0.0, %v7453
        %v7455 = vpop.f32.mrb[0].mxu0
        %v7456 = vpop.f32.mrb[0].mxu0
        %v7457 = vadd.f32 0.0, %v7456
        %v7458 = vpop.f32.mrb[0].mxu0
        %7459 = vmatprep.mubr.bf16.mxu0 0
        %7460 = vmatmul.mubr.bf16.gmra.mrb[0].mxu0 %v6586
        %v7461 = vpop.f32.mrb[0].mxu0
        %v7462 = vadd.f32 0.0, %v7461
        %v7463 = vpop.f32.mrb[0].mxu0
        %v7464 = vpop.f32.mrb[0].mxu0
        %v7465 = vadd.f32 0.0, %v7464
        %v7466 = vpop.f32.mrb[0].mxu0
        %7467 = vmatprep.mubr.bf16.mxu0 0
        %7468 = vmatmul.mubr.bf16.gmra.mrb[0].mxu0 %v6587
        %v7469 = vpop.f32.mrb[0].mxu0
        %v7470 = vadd.f32 0.0, %v7469
        %v7471 = vpop.f32.mrb[0].mxu0
        %v7472 = vpop.f32.mrb[0].mxu0
        %v7473 = vadd.f32 0.0, %v7472
        %v7474 = vpop.f32.mrb[0].mxu0
        %7475 = vmatprep.mubr.bf16.mxu0 0
        %7476 = vmatmul.mubr.bf16.gmra.mrb[0].mxu0 %v6588
        %v7477 = vpop.f32.mrb[0].mxu0
        %v7478 = vadd.f32 0.0, %v7477
        %v7479 = vpop.f32.mrb[0].mxu0
        %v7480 = vpop.f32.mrb[0].mxu0
        %v7481 = vadd.f32 0.0, %v7480
        %v7482 = vpop.f32.mrb[0].mxu0
        %7483 = vmatprep.mubr.bf16.mxu0 0
        %7484 = vmatmul.mubr.bf16.gmra.mrb[0].mxu0 %v6589
        %v7485 = vpop.f32.mrb[0].mxu0
        %v7486 = vadd.f32 0.0, %v7485
        %v7487 = vpop.f32.mrb[0].mxu0
        %v7488 = vpop.f32.mrb[0].mxu0
        %v7489 = vadd.f32 0.0, %v7488
        %v7490 = vpop.f32.mrb[0].mxu0
        %7491 = vmatprep.mubr.bf16.mxu0 0
        %7492 = vmatmul.mubr.bf16.gmra.mrb[0].mxu0 %v6590
        %v7493 = vpop.f32.mrb[0].mxu0
        %v7494 = vadd.f32 0.0, %v7493
        %v7495 = vpop.f32.mrb[0].mxu0
        %v7496 = vpop.f32.mrb[0].mxu0
        %v7497 = vadd.f32 0.0, %v7496
        %v7498 = vpop.f32.mrb[0].mxu0
        %7499 = vmatprep.mubr.bf16.mxu0 0
        %7500 = vmatmul.mubr.bf16.gmra.mrb[0].mxu0 %v6591
        %v7501 = vpop.f32.mrb[0].mxu0
        %v7502 = vadd.f32 0.0, %v7501
        %v7503 = vpop.f32.mrb[0].mxu0
        %v7504 = vpop.f32.mrb[0].mxu0
        %v7505 = vadd.f32 0.0, %v7504
        %v7506 = vpop.f32.mrb[0].mxu0
        %7507 = vmatprep.mubr.bf16.mxu0 0
        %7508 = vmatmul.mubr.bf16.gmra.mrb[0].mxu0 %v6592
        %v7509 = vpop.f32.mrb[0].mxu0
        %v7510 = vadd.f32 0.0, %v7509
        %v7511 = vpop.f32.mrb[0].mxu0
        %v7512 = vpop.f32.mrb[0].mxu0
        %v7513 = vadd.f32 0.0, %v7512
        %v7514 = vpop.f32.mrb[0].mxu0
        %7515 = vmatprep.mubr.bf16.mxu0 0
        %7516 = vmatmul.mubr.bf16.gmra.mrb[0].mxu0 %v6593
        %v7517 = vpop.f32.mrb[0].mxu0
        %v7518 = vadd.f32 0.0, %v7517
        %v7519 = vpop.f32.mrb[0].mxu0
        %v7520 = vpop.f32.mrb[0].mxu0
        %v7521 = vadd.f32 0.0, %v7520
        %v7522 = vpop.f32.mrb[0].mxu0
        %7523 = vmatprep.mubr.bf16.mxu0 0
        %7524 = vmatmul.mubr.bf16.gmra.mrb[0].mxu0 %v6594
        %v7525 = vpop.f32.mrb[0].mxu0
        %v7526 = vadd.f32 0.0, %v7525
        %v7527 = vpop.f32.mrb[0].mxu0
        %v7528 = vpop.f32.mrb[0].mxu0
        %v7529 = vadd.f32 0.0, %v7528
        %v7530 = vpop.f32.mrb[0].mxu0
        %7531 = vmatprep.mubr.bf16.mxu0 0
        %7532 = vmatmul.mubr.bf16.gmra.mrb[0].mxu0 %v6595
        %v7533 = vpop.f32.mrb[0].mxu0
        %v7534 = vadd.f32 0.0, %v7533
        %v7535 = vpop.f32.mrb[0].mxu0
        %v7536 = vpop.f32.mrb[0].mxu0
        %v7537 = vadd.f32 0.0, %v7536
        %v7538 = vpop.f32.mrb[0].mxu0
        %7539 = vmatprep.mubr.bf16.mxu0 0
        %7540 = vmatmul.mubr.bf16.gmra.mrb[0].mxu0 %v6596
        %v7541 = vpop.f32.mrb[0].mxu0
        %v7542 = vadd.f32 0.0, %v7541
        %v7543 = vpop.f32.mrb[0].mxu0
        %v7544 = vpop.f32.mrb[0].mxu0
        %v7545 = vadd.f32 0.0, %v7544
        %v7546 = vpop.f32.mrb[0].mxu0
        %7547 = vmatprep.mubr.bf16.mxu0 0
        %7548 = vmatmul.mubr.bf16.gmra.mrb[0].mxu0 %v6597
        %v7549 = vpop.f32.mrb[0].mxu0
        %v7550 = vadd.f32 0.0, %v7549
        %v7551 = vpop.f32.mrb[0].mxu0
        %v7552 = vpop.f32.mrb[0].mxu0
        %v7553 = vadd.f32 0.0, %v7552
        %v7554 = vpop.f32.mrb[0].mxu0
        %7555 = vmatprep.mubr.bf16.mxu0 0
        %7556 = vmatmul.mubr.bf16.gmra.mrb[0].mxu0 %v6598
        %v7557 = vpop.f32.mrb[0].mxu0
        %v7558 = vadd.f32 0.0, %v7557
        %v7559 = vpop.f32.mrb[0].mxu0
        %v7560 = vpop.f32.mrb[0].mxu0
        %v7561 = vadd.f32 0.0, %v7560
        %v7562 = vpop.f32.mrb[0].mxu0
        %7563 = vmatprep.mubr.bf16.mxu0 0
        %7564 = vmatmul.mubr.bf16.gmra.mrb[0].mxu0 %v6599
        %v7565 = vpop.f32.mrb[0].mxu0
        %v7566 = vadd.f32 0.0, %v7565
        %v7567 = vpop.f32.mrb[0].mxu0
        %v7568 = vpop.f32.mrb[0].mxu0
        %v7569 = vadd.f32 0.0, %v7568
        %v7570 = vpop.f32.mrb[0].mxu0
        %7571 = vmatprep.mubr.bf16.mxu0 0
        %7572 = vmatmul.mubr.bf16.gmra.mrb[0].mxu0 %v6600
        %v7573 = vpop.f32.mrb[0].mxu0
        %v7574 = vadd.f32 0.0, %v7573
        %v7575 = vpop.f32.mrb[0].mxu0
        %v7576 = vpop.f32.mrb[0].mxu0
        %v7577 = vadd.f32 0.0, %v7576
        %v7578 = vpop.f32.mrb[0].mxu0
        %7579 = vmatprep.mubr.bf16.mxu0 0
        %7580 = vmatmul.mubr.bf16.gmra.mrb[0].mxu0 %v6601
        %v7581 = vpop.f32.mrb[0].mxu0
        %v7582 = vadd.f32 0.0, %v7581
        %v7583 = vpop.f32.mrb[0].mxu0
        %v7584 = vpop.f32.mrb[0].mxu0
        %v7585 = vadd.f32 0.0, %v7584
        %v7586 = vpop.f32.mrb[0].mxu0
        %7587 = vmatprep.mubr.bf16.mxu0 0
        %7588 = vmatmul.mubr.bf16.gmra.mrb[0].mxu0 %v6602
        %v7589 = vpop.f32.mrb[0].mxu0
        %v7590 = vadd.f32 0.0, %v7589
        %v7591 = vpop.f32.mrb[0].mxu0
        %v7592 = vpop.f32.mrb[0].mxu0
        %v7593 = vadd.f32 0.0, %v7592
        %v7594 = vpop.f32.mrb[0].mxu0
        %7595 = vmatprep.mubr.bf16.mxu0 0
        %7596 = vmatmul.mubr.bf16.gmra.mrb[0].mxu0 %v6603
        %v7597 = vpop.f32.mrb[0].mxu0
        %v7598 = vadd.f32 0.0, %v7597
        %v7599 = vpop.f32.mrb[0].mxu0
        %v7600 = vpop.f32.mrb[0].mxu0
        %v7601 = vadd.f32 0.0, %v7600
        %v7602 = vpop.f32.mrb[0].mxu0
        %7603 = vmatprep.mubr.bf16.mxu0 0
        %7604 = vmatmul.mubr.bf16.gmra.mrb[0].mxu0 %v6604
        %v7605 = vpop.f32.mrb[0].mxu0
        %v7606 = vadd.f32 0.0, %v7605
        %v7607 = vpop.f32.mrb[0].mxu0
        %v7608 = vpop.f32.mrb[0].mxu0
        %v7609 = vadd.f32 0.0, %v7608
        %v7610 = vpop.f32.mrb[0].mxu0
        %7611 = vmatprep.mubr.bf16.mxu0 0
        %7612 = vmatmul.mubr.bf16.gmra.mrb[0].mxu0 %v6605
        %v7613 = vpop.f32.mrb[0].mxu0
        %v7614 = vadd.f32 0.0, %v7613
        %v7615 = vpop.f32.mrb[0].mxu0
        %v7616 = vpop.f32.mrb[0].mxu0
        %v7617 = vadd.f32 0.0, %v7616
        %v7618 = vpop.f32.mrb[0].mxu0
        %7619 = vmatprep.mubr.bf16.mxu0 0
        %7620 = vmatmul.mubr.bf16.gmra.mrb[0].mxu0 %v6606
        %v7621 = vpop.f32.mrb[0].mxu0
        %v7622 = vadd.f32 0.0, %v7621
        %v7623 = vpop.f32.mrb[0].mxu0
        %v7624 = vpop.f32.mrb[0].mxu0
        %v7625 = vadd.f32 0.0, %v7624
        %v7626 = vpop.f32.mrb[0].mxu0
        %7627 = vmatprep.mubr.bf16.mxu0 0
        %7628 = vmatmul.mubr.bf16.gmra.mrb[0].mxu0 %v6607
        %v7629 = vpop.f32.mrb[0].mxu0
        %v7630 = vadd.f32 0.0, %v7629
        %v7631 = vpop.f32.mrb[0].mxu0
        %v7632 = vpop.f32.mrb[0].mxu0
        %v7633 = vadd.f32 0.0, %v7632
        %v7634 = vpop.f32.mrb[0].mxu0
        %7635 = vmatprep.mubr.bf16.mxu0 0
        %7636 = vmatmul.mubr.bf16.gmra.mrb[0].mxu0 %v6608
        %v7637 = vpop.f32.mrb[0].mxu0
        %v7638 = vadd.f32 0.0, %v7637
        %v7639 = vpop.f32.mrb[0].mxu0
        %v7640 = vpop.f32.mrb[0].mxu0
        %v7641 = vadd.f32 0.0, %v7640
        %v7642 = vpop.f32.mrb[0].mxu0
        %7643 = vmatprep.mubr.bf16.mxu0 0
        %7644 = vmatmul.mubr.bf16.gmra.mrb[0].mxu0 %v6609
        %v7645 = vpop.f32.mrb[0].mxu0
        %v7646 = vadd.f32 0.0, %v7645
        %v7647 = vpop.f32.mrb[0].mxu0
        %v7648 = vpop.f32.mrb[0].mxu0
        %v7649 = vadd.f32 0.0, %v7648
        %v7650 = vpop.f32.mrb[0].mxu0
        %7651 = vmatprep.mubr.bf16.mxu0 0
        %7652 = vmatmul.mubr.bf16.gmra.mrb[0].mxu0 %v6610
        %v7653 = vpop.f32.mrb[0].mxu0
        %v7654 = vadd.f32 0.0, %v7653
        %v7655 = vpop.f32.mrb[0].mxu0
        %v7656 = vpop.f32.mrb[0].mxu0
        %v7657 = vadd.f32 0.0, %v7656
        %v7658 = vpop.f32.mrb[0].mxu0
        %7659 = vmatprep.mubr.bf16.mxu0 0
        %7660 = vmatmul.mubr.bf16.gmra.mrb[0].mxu0 %v6611
        %v7661 = vpop.f32.mrb[0].mxu0
        %v7662 = vadd.f32 0.0, %v7661
        %v7663 = vpop.f32.mrb[0].mxu0
        %v7664 = vpop.f32.mrb[0].mxu0
        %v7665 = vadd.f32 0.0, %v7664
        %v7666 = vpop.f32.mrb[0].mxu0
        %7667 = vmatprep.mubr.bf16.mxu0 0
        %7668 = vmatmul.mubr.bf16.gmra.mrb[0].mxu0 %v6612
        %v7669 = vpop.f32.mrb[0].mxu0
        %v7670 = vadd.f32 0.0, %v7669
        %v7671 = vpop.f32.mrb[0].mxu0
        %v7672 = vpop.f32.mrb[0].mxu0
        %v7673 = vadd.f32 0.0, %v7672
        %v7674 = vpop.f32.mrb[0].mxu0
        %7675 = vmatprep.mubr.bf16.mxu0 0
        %7676 = vmatmul.mubr.bf16.gmra.mrb[0].mxu0 %v6613
        %v7677 = vpop.f32.mrb[0].mxu0
        %v7678 = vadd.f32 0.0, %v7677
        %v7679 = vpop.f32.mrb[0].mxu0
        %v7680 = vpop.f32.mrb[0].mxu0
        %v7681 = vadd.f32 0.0, %v7680
        %v7682 = vpop.f32.mrb[0].mxu0
        %7683 = vmatprep.mubr.bf16.mxu0 0
        %7684 = vmatmul.mubr.bf16.gmra.mrb[0].mxu0 %v6614
        %v7685 = vpop.f32.mrb[0].mxu0
        %v7686 = vadd.f32 0.0, %v7685
        %v7687 = vpop.f32.mrb[0].mxu0
        %v7688 = vpop.f32.mrb[0].mxu0
        %v7689 = vadd.f32 0.0, %v7688
        %v7690 = vpop.f32.mrb[0].mxu0
        %7691 = vmatprep.mubr.bf16.mxu0 0
        %7692 = vmatmul.mubr.bf16.gmra.mrb[0].mxu0 %v6615
        %v7693 = vpop.f32.mrb[0].mxu0
        %v7694 = vadd.f32 0.0, %v7693
        %v7695 = vpop.f32.mrb[0].mxu0
        %v7696 = vpop.f32.mrb[0].mxu0
        %v7697 = vadd.f32 0.0, %v7696
        %v7698 = vpop.f32.mrb[0].mxu0
        %7699 = vmatprep.mubr.bf16.mxu0 0
        %7700 = vmatmul.mubr.bf16.gmra.mrb[0].mxu0 %v6616
        %v7701 = vpop.f32.mrb[0].mxu0
        %v7702 = vadd.f32 0.0, %v7701
        %v7703 = vpop.f32.mrb[0].mxu0
        %v7704 = vpop.f32.mrb[0].mxu0
        %v7705 = vadd.f32 0.0, %v7704
        %v7706 = vpop.f32.mrb[0].mxu0
        %7707 = vmatprep.mubr.bf16.mxu0 0
        %7708 = vmatmul.mubr.bf16.gmra.mrb[0].mxu0 %v6617
        %v7709 = vpop.f32.mrb[0].mxu0
        %v7710 = vadd.f32 0.0, %v7709
        %v7711 = vpop.f32.mrb[0].mxu0
        %v7712 = vpop.f32.mrb[0].mxu0
        %v7713 = vadd.f32 0.0, %v7712
        %v7714 = vpop.f32.mrb[0].mxu0
        %7715 = vmatprep.mubr.bf16.mxu0 0
        %7716 = vmatmul.mubr.bf16.gmra.mrb[0].mxu0 %v6618
        %v7717 = vpop.f32.mrb[0].mxu0
        %v7718 = vadd.f32 0.0, %v7717
        %v7719 = vpop.f32.mrb[0].mxu0
        %v7720 = vpop.f32.mrb[0].mxu0
        %v7721 = vadd.f32 0.0, %v7720
        %v7722 = vpop.f32.mrb[0].mxu0
        %7723 = vmatprep.mubr.bf16.mxu0 0
        %7724 = vmatmul.mubr.bf16.gmra.mrb[0].mxu0 %v6619
        %v7725 = vpop.f32.mrb[0].mxu0
        %v7726 = vadd.f32 0.0, %v7725
        %v7727 = vpop.f32.mrb[0].mxu0
        %v7728 = vpop.f32.mrb[0].mxu0
        %v7729 = vadd.f32 0.0, %v7728
        %v7730 = vpop.f32.mrb[0].mxu0
        %7731 = vmatprep.mubr.bf16.mxu0 0
        %7732 = vmatmul.mubr.bf16.gmra.mrb[0].mxu0 %v6620
        %v7733 = vpop.f32.mrb[0].mxu0
        %v7734 = vadd.f32 0.0, %v7733
        %v7735 = vpop.f32.mrb[0].mxu0
        %v7736 = vpop.f32.mrb[0].mxu0
        %v7737 = vadd.f32 0.0, %v7736
        %v7738 = vpop.f32.mrb[0].mxu0
        %7739 = vmatprep.mubr.bf16.mxu0 0
        %7740 = vmatmul.mubr.bf16.gmra.mrb[0].mxu0 %v6621
        %v7741 = vpop.f32.mrb[0].mxu0
        %v7742 = vadd.f32 0.0, %v7741
        %v7743 = vpop.f32.mrb[0].mxu0
        %v7744 = vpop.f32.mrb[0].mxu0
        %v7745 = vadd.f32 0.0, %v7744
        %v7746 = vpop.f32.mrb[0].mxu0
        %7747 = vmatprep.mubr.bf16.mxu0 0
        %7748 = vmatmul.mubr.bf16.gmra.mrb[0].mxu0 %v6622
        %v7749 = vpop.f32.mrb[0].mxu0
        %v7750 = vadd.f32 0.0, %v7749
        %v7751 = vpop.f32.mrb[0].mxu0
        %v7752 = vpop.f32.mrb[0].mxu0
        %v7753 = vadd.f32 0.0, %v7752
        %v7754 = vpop.f32.mrb[0].mxu0
        %7755 = vmatprep.mubr.bf16.mxu0 0
        %7756 = vmatmul.mubr.bf16.gmra.mrb[0].mxu0 %v6623
        %v7757 = vpop.f32.mrb[0].mxu0
        %v7758 = vadd.f32 0.0, %v7757
        %v7759 = vpop.f32.mrb[0].mxu0
        %v7760 = vpop.f32.mrb[0].mxu0
        %v7761 = vadd.f32 0.0, %v7760
        %v7762 = vpop.f32.mrb[0].mxu0
        %7763 = vmatprep.mubr.bf16.mxu0 0
        %7764 = vmatmul.mubr.bf16.gmra.mrb[0].mxu0 %v6624
        %v7765 = vpop.f32.mrb[0].mxu0
        %v7766 = vadd.f32 0.0, %v7765
        %v7767 = vpop.f32.mrb[0].mxu0
        %v7768 = vpop.f32.mrb[0].mxu0
        %v7769 = vadd.f32 0.0, %v7768
        %v7770 = vpop.f32.mrb[0].mxu0
        %7771 = vmatprep.mubr.bf16.mxu0 0
        %7772 = vmatmul.mubr.bf16.gmra.mrb[0].mxu0 %v6625
        %v7773 = vpop.f32.mrb[0].mxu0
        %v7774 = vadd.f32 0.0, %v7773
        %v7775 = vpop.f32.mrb[0].mxu0
        %v7776 = vpop.f32.mrb[0].mxu0
        %v7777 = vadd.f32 0.0, %v7776
        %v7778 = vpop.f32.mrb[0].mxu0
        %7779 = vmatprep.mubr.bf16.mxu0 0
        %7780 = vmatmul.mubr.bf16.gmra.mrb[0].mxu0 %v6626
        %v7781 = vpop.f32.mrb[0].mxu0
        %v7782 = vadd.f32 0.0, %v7781
        %v7783 = vpop.f32.mrb[0].mxu0
        %v7784 = vpop.f32.mrb[0].mxu0
        %v7785 = vadd.f32 0.0, %v7784
        %v7786 = vpop.f32.mrb[0].mxu0
        %7787 = vmatprep.mubr.bf16.mxu0 0
        %7788 = vmatmul.mubr.bf16.gmra.mrb[0].mxu0 %v6627
        %v7789 = vpop.f32.mrb[0].mxu0
        %v7790 = vadd.f32 0.0, %v7789
        %v7791 = vpop.f32.mrb[0].mxu0
        %v7792 = vpop.f32.mrb[0].mxu0
        %v7793 = vadd.f32 0.0, %v7792
        %v7794 = vpop.f32.mrb[0].mxu0
        %7795 = vmatprep.mubr.bf16.mxu0 0
        %7796 = vmatmul.mubr.bf16.gmra.mrb[0].mxu0 %v6628
        %v7797 = vpop.f32.mrb[0].mxu0
        %v7798 = vadd.f32 0.0, %v7797
        %v7799 = vpop.f32.mrb[0].mxu0
        %v7800 = vpop.f32.mrb[0].mxu0
        %v7801 = vadd.f32 0.0, %v7800
        %v7802 = vpop.f32.mrb[0].mxu0
        %7803 = vmatprep.mubr.bf16.mxu0 0
        %7804 = vmatmul.mubr.bf16.gmra.mrb[0].mxu0 %v6629
        %v7805 = vpop.f32.mrb[0].mxu0
        %v7806 = vadd.f32 0.0, %v7805
        %v7807 = vpop.f32.mrb[0].mxu0
        %v7808 = vpop.f32.mrb[0].mxu0
        %v7809 = vadd.f32 0.0, %v7808
        %v7810 = vpop.f32.mrb[0].mxu0
        %7811 = vmatprep.mubr.bf16.mxu0 0
        %7812 = vmatmul.mubr.bf16.gmra.mrb[0].mxu0 %v6630
        %v7813 = vpop.f32.mrb[0].mxu0
        %v7814 = vadd.f32 0.0, %v7813
        %v7815 = vpop.f32.mrb[0].mxu0
        %v7816 = vpop.f32.mrb[0].mxu0
        %v7817 = vadd.f32 0.0, %v7816
        %v7818 = vpop.f32.mrb[0].mxu0
        %7819 = vmatprep.mubr.bf16.mxu0 0
        %7820 = vmatmul.mubr.bf16.gmra.mrb[0].mxu0 %v6631
        %v7821 = vpop.f32.mrb[0].mxu0
        %v7822 = vadd.f32 0.0, %v7821
        %v7823 = vpop.f32.mrb[0].mxu0
        %v7824 = vpop.f32.mrb[0].mxu0
        %v7825 = vadd.f32 0.0, %v7824
        %v7826 = vpop.f32.mrb[0].mxu0
        %7827 = vmatprep.mubr.bf16.mxu0 0
        %7828 = vmatmul.mubr.bf16.gmra.mrb[0].mxu0 %v6632
        %v7829 = vpop.f32.mrb[0].mxu0
        %v7830 = vadd.f32 0.0, %v7829
        %v7831 = vpop.f32.mrb[0].mxu0
        %v7832 = vpop.f32.mrb[0].mxu0
        %v7833 = vadd.f32 0.0, %v7832
        %v7834 = vpop.f32.mrb[0].mxu0
        %7835 = vmatprep.mubr.bf16.mxu0 0
        %7836 = vmatmul.mubr.bf16.gmra.mrb[0].mxu0 %v6633
        %v7837 = vpop.f32.mrb[0].mxu0
        %v7838 = vadd.f32 0.0, %v7837
        %v7839 = vpop.f32.mrb[0].mxu0
        %v7840 = vpop.f32.mrb[0].mxu0
        %v7841 = vadd.f32 0.0, %v7840
        %v7842 = vpop.f32.mrb[0].mxu0
        %7843 = vmatprep.mubr.bf16.mxu0 0
        %7844 = vmatmul.mubr.bf16.gmra.mrb[0].mxu0 %v6634
        %v7845 = vpop.f32.mrb[0].mxu0
        %v7846 = vadd.f32 0.0, %v7845
        %v7847 = vpop.f32.mrb[0].mxu0
        %v7848 = vpop.f32.mrb[0].mxu0
        %v7849 = vadd.f32 0.0, %v7848
        %v7850 = vpop.f32.mrb[0].mxu0
        %7851 = vmatprep.mubr.bf16.mxu0 0
        %7852 = vmatmul.mubr.bf16.gmra.mrb[0].mxu0 %v6635
        %v7853 = vpop.f32.mrb[0].mxu0
        %v7854 = vadd.f32 0.0, %v7853
        %v7855 = vpop.f32.mrb[0].mxu0
        %v7856 = vpop.f32.mrb[0].mxu0
        %v7857 = vadd.f32 0.0, %v7856
        %v7858 = vpop.f32.mrb[0].mxu0
        %7859 = vmatprep.mubr.bf16.mxu0 0
        %7860 = vmatmul.mubr.bf16.gmra.mrb[0].mxu0 %v6636
        %v7861 = vpop.f32.mrb[0].mxu0
        %v7862 = vadd.f32 0.0, %v7861
        %v7863 = vpop.f32.mrb[0].mxu0
        %v7864 = vpop.f32.mrb[0].mxu0
        %v7865 = vadd.f32 0.0, %v7864
        %v7866 = vpop.f32.mrb[0].mxu0
        %7867 = vmatprep.mubr.bf16.mxu0 0
        %7868 = vmatmul.mubr.bf16.gmra.mrb[0].mxu0 %v6637
        %v7869 = vpop.f32.mrb[0].mxu0
        %v7870 = vadd.f32 0.0, %v7869
        %v7871 = vpop.f32.mrb[0].mxu0
        %v7872 = vpop.f32.mrb[0].mxu0
        %v7873 = vadd.f32 0.0, %v7872
        %v7874 = vpop.f32.mrb[0].mxu0
        %7875 = vmatprep.mubr.bf16.mxu0 0
        %7876 = vmatmul.mubr.bf16.gmra.mrb[0].mxu0 %v6638
        %v7877 = vpop.f32.mrb[0].mxu0
        %v7878 = vadd.f32 0.0, %v7877
        %v7879 = vpop.f32.mrb[0].mxu0
        %v7880 = vpop.f32.mrb[0].mxu0
        %v7881 = vadd.f32 0.0, %v7880
        %v7882 = vpop.f32.mrb[0].mxu0
        %7883 = vmatprep.mubr.bf16.mxu0 0
        %7884 = vmatmul.mubr.bf16.gmra.mrb[0].mxu0 %v6639
        %v7885 = vpop.f32.mrb[0].mxu0
        %v7886 = vadd.f32 0.0, %v7885
        %v7887 = vpop.f32.mrb[0].mxu0
        %v7888 = vpop.f32.mrb[0].mxu0
        %v7889 = vadd.f32 0.0, %v7888
        %v7890 = vpop.f32.mrb[0].mxu0
        %7891 = vmatprep.mubr.bf16.mxu0 0
        %7892 = vmatmul.mubr.bf16.gmra.mrb[0].mxu0 %v6640
        %v7893 = vpop.f32.mrb[0].mxu0
        %v7894 = vadd.f32 0.0, %v7893
        %v7895 = vpop.f32.mrb[0].mxu0
        %v7896 = vpop.f32.mrb[0].mxu0
        %v7897 = vadd.f32 0.0, %v7896
        %v7898 = vpop.f32.mrb[0].mxu0
        %7899 = vmatprep.mubr.bf16.mxu0 0
        %7900 = vmatmul.mubr.bf16.gmra.mrb[0].mxu0 %v6641
        %v7901 = vpop.f32.mrb[0].mxu0
        %v7902 = vadd.f32 0.0, %v7901
        %v7903 = vpop.f32.mrb[0].mxu0
        %v7904 = vpop.f32.mrb[0].mxu0
        %v7905 = vadd.f32 0.0, %v7904
        %v7906 = vpop.f32.mrb[0].mxu0
        %7907 = vmatprep.mubr.bf16.mxu0 0
        %7908 = vmatmul.mubr.bf16.gmra.mrb[0].mxu0 %v6642
        %v7909 = vpop.f32.mrb[0].mxu0
        %v7910 = vadd.f32 0.0, %v7909
        %v7911 = vpop.f32.mrb[0].mxu0
        %v7912 = vpop.f32.mrb[0].mxu0
        %v7913 = vadd.f32 0.0, %v7912
        %v7914 = vpop.f32.mrb[0].mxu0
        %7915 = vmatprep.mubr.bf16.mxu0 0
        %7916 = vmatmul.mubr.bf16.gmra.mrb[0].mxu0 %v6643
        %v7917 = vpop.f32.mrb[0].mxu0
        %v7918 = vadd.f32 0.0, %v7917
        %v7919 = vpop.f32.mrb[0].mxu0
        %v7920 = vpop.f32.mrb[0].mxu0
        %v7921 = vadd.f32 0.0, %v7920
        %v7922 = vpop.f32.mrb[0].mxu0
        %7923 = vmatprep.mubr.bf16.mxu0 0
        %7924 = vmatmul.mubr.bf16.gmra.mrb[0].mxu0 %v6644
        %v7925 = vpop.f32.mrb[0].mxu0
        %v7926 = vadd.f32 0.0, %v7925
        %v7927 = vpop.f32.mrb[0].mxu0
        %v7928 = vpop.f32.mrb[0].mxu0
        %v7929 = vadd.f32 0.0, %v7928
        %v7930 = vpop.f32.mrb[0].mxu0
        %7931 = vmatprep.mubr.bf16.mxu0 0
        %7932 = vmatmul.mubr.bf16.gmra.mrb[0].mxu0 %v6645
        %v7933 = vpop.f32.mrb[0].mxu0
        %v7934 = vadd.f32 0.0, %v7933
        %v7935 = vpop.f32.mrb[0].mxu0
        %v7936 = vpop.f32.mrb[0].mxu0
        %v7937 = vadd.f32 0.0, %v7936
        %v7938 = vpop.f32.mrb[0].mxu0
        %7939 = vmatprep.mubr.bf16.mxu0 0
        %7940 = vmatmul.mubr.bf16.gmra.mrb[0].mxu0 %v6646
        %v7941 = vpop.f32.mrb[0].mxu0
        %v7942 = vadd.f32 0.0, %v7941
        %v7943 = vpop.f32.mrb[0].mxu0
        %v7944 = vpop.f32.mrb[0].mxu0
        %v7945 = vadd.f32 0.0, %v7944
        %v7946 = vpop.f32.mrb[0].mxu0
        %7947 = vmatprep.mubr.bf16.mxu0 0
        %7948 = vmatmul.mubr.bf16.gmra.mrb[0].mxu0 %v6647
        %v7949 = vpop.f32.mrb[0].mxu0
        %v7950 = vadd.f32 0.0, %v7949
        %v7951 = vpop.f32.mrb[0].mxu0
        %v7952 = vpop.f32.mrb[0].mxu0
        %v7953 = vadd.f32 0.0, %v7952
        %v7954 = vpop.f32.mrb[0].mxu0
        %7955 = vmatprep.mubr.bf16.mxu0 0
        %7956 = vmatmul.mubr.bf16.gmra.mrb[0].mxu0 %v6648
        %v7957 = vpop.f32.mrb[0].mxu0
        %v7958 = vadd.f32 0.0, %v7957
        %v7959 = vpop.f32.mrb[0].mxu0
        %v7960 = vpop.f32.mrb[0].mxu0
        %v7961 = vadd.f32 0.0, %v7960
        %v7962 = vpop.f32.mrb[0].mxu0
        %7963 = vmatprep.mubr.bf16.mxu0 0
        %7964 = vmatmul.mubr.bf16.gmra.mrb[0].mxu0 %v6649
        %v7965 = vpop.f32.mrb[0].mxu0
        %v7966 = vadd.f32 0.0, %v7965
        %v7967 = vpop.f32.mrb[0].mxu0
        %v7968 = vpop.f32.mrb[0].mxu0
        %v7969 = vadd.f32 0.0, %v7968
        %v7970 = vpop.f32.mrb[0].mxu0
        %7971 = vmatprep.mubr.bf16.mxu0 0
        %7972 = vmatmul.mubr.bf16.gmra.mrb[0].mxu0 %v6650
        %v7973 = vpop.f32.mrb[0].mxu0
        %v7974 = vadd.f32 0.0, %v7973
        %v7975 = vpop.f32.mrb[0].mxu0
        %v7976 = vpop.f32.mrb[0].mxu0
        %v7977 = vadd.f32 0.0, %v7976
        %v7978 = vpop.f32.mrb[0].mxu0
        %7979 = vmatprep.mubr.bf16.mxu0 0
        %7980 = vmatmul.mubr.bf16.gmra.mrb[0].mxu0 %v6651
        %v7981 = vpop.f32.mrb[0].mxu0
        %v7982 = vadd.f32 0.0, %v7981
        %v7983 = vpop.f32.mrb[0].mxu0
        %v7984 = vpop.f32.mrb[0].mxu0
        %v7985 = vpop.f32.mrb[0].mxu0
        %7986 = vmatprep.mubr.bf16.mxu0 0
        %7987 = vmatmul.mubr.bf16.gmra.mrb[0].mxu0 %v6652
        %v7988 = vpop.f32.mrb[0].mxu0
        %v7989 = vpop.f32.mrb[0].mxu0
        %v7990 = vpop.f32.mrb[0].mxu0
        %v7991 = vpop.f32.mrb[0].mxu0
        %7992 = vmatprep.mubr.bf16.mxu0 0
        %7993 = vmatmul.mubr.bf16.gmra.mrb[0].mxu0 %v6653
        %v7994 = vpop.f32.mrb[0].mxu0
        %v7995 = vpop.f32.mrb[0].mxu0
        %v7996 = vpop.f32.mrb[0].mxu0
        %v7997 = vpop.f32.mrb[0].mxu0
        %7998 = vdwg.mxu0
        %s7999 = scalar_lea.vmem %s5, 128
        %v8000 = vld [vmem:[%s7999] sm:$0xf]
        %v8001 = vld [vmem:[%s7999 + $0x4] sm:$0xf]
        %v8002 = vld [vmem:[%s7999 + $0x8] sm:$0xf]
        %v8003 = vld [vmem:[%s7999 + $0xc] sm:$0xf]
        %v8004 = vld [vmem:[%s7999 + $0x10] sm:$0xf]
        %v8005 = vld [vmem:[%s7999 + $0x14] sm:$0xf]
        %v8006 = vld [vmem:[%s7999 + $0x18] sm:$0xf]
        %v8007 = vld [vmem:[%s7999 + $0x1c] sm:$0xf]
        %v8008 = vld [vmem:[%s7999 + $0x20] sm:$0xf]
        %v8009 = vld [vmem:[%s7999 + $0x24] sm:$0xf]
        %v8010 = vld [vmem:[%s7999 + $0x28] sm:$0xf]
        %v8011 = vld [vmem:[%s7999 + $0x2c] sm:$0xf]
        %v8012 = vld [vmem:[%s7999 + $0x30] sm:$0xf]
        %v8013 = vld [vmem:[%s7999 + $0x34] sm:$0xf]
        %v8014 = vld [vmem:[%s7999 + $0x38] sm:$0xf]
        %v8015 = vld [vmem:[%s7999 + $0x3c] sm:$0xf]
        %v8032 = vunpack.c.l.b16 %v8000
        %v8033 = vunpack.c.l.b16 %v8001
        %v8034 = vunpack.c.l.b16 %v8002
        %v8035 = vunpack.c.l.b16 %v8003
        %v8036 = vunpack.c.l.b16 %v8004
        %v8037 = vunpack.c.l.b16 %v8005
        %v8038 = vunpack.c.l.b16 %v8006
        %v8039 = vunpack.c.l.b16 %v8007
        %v8040 = vunpack.c.l.b16 %v8008
        %v8041 = vunpack.c.l.b16 %v8009
        %v8042 = vunpack.c.l.b16 %v8010
        %v8043 = vunpack.c.l.b16 %v8011
        %v8044 = vunpack.c.l.b16 %v8012
        %v8045 = vunpack.c.l.b16 %v8013
        %v8046 = vunpack.c.l.b16 %v8014
        %v8047 = vunpack.c.l.b16 %v8015
        %v8048 = vpack.c.b16 %v8033, %v8032
        %v8049 = vpack.c.b16 %v8035, %v8034
        %v8050 = vpack.c.b16 %v8037, %v8036
        %v8051 = vpack.c.b16 %v8039, %v8038
        %v8052 = vpack.c.b16 %v8041, %v8040
        %v8053 = vpack.c.b16 %v8043, %v8042
        %v8054 = vpack.c.b16 %v8045, %v8044
        %v8055 = vpack.c.b16 %v8047, %v8046
        %8064 = vmatprep.subr.bf16.mxu0 0
        %8065 = vmatpush1.bf16.msra.mxu0 %v8048
        %8066 = vmatprep.subr.bf16.mxu0 0
        %8067 = vmatpush1.bf16.msra.mxu0 %v8049
        %8068 = vmatprep.subr.bf16.mxu0 0
        %8069 = vmatpush1.bf16.msra.mxu0 %v8050
        %8070 = vmatprep.subr.bf16.mxu0 0
        %8071 = vmatpush1.bf16.msra.mxu0 %v8051
        %8072 = vmatprep.subr.bf16.mxu0 0
        %8073 = vmatpush1.bf16.msra.mxu0 %v8052
        %8074 = vmatprep.subr.bf16.mxu0 0
        %8075 = vmatpush1.bf16.msra.mxu0 %v8053
        %8076 = vmatprep.subr.bf16.mxu0 0
        %8077 = vmatpush1.bf16.msra.mxu0 %v8054
        %8078 = vmatprep.subr.bf16.mxu0 0
        %8079 = vmatpush1.bf16.msra.mxu0 %v8055
        %8080 = vmatprep.subr.bf16.mxu0 0
        %8081 = vmatpush1.bf16.msra.mxu0 0
        %8082 = vmatprep.subr.bf16.mxu0 0
        %8083 = vmatpush1.bf16.msra.mxu0 0
        %8084 = vmatprep.subr.bf16.mxu0 0
        %8085 = vmatpush1.bf16.msra.mxu0 0
        %8086 = vmatprep.subr.bf16.mxu0 0
        %8087 = vmatpush1.bf16.msra.mxu0 0
        %8088 = vmatprep.subr.bf16.mxu0 0
        %8089 = vmatpush1.bf16.msra.mxu0 0
        %8090 = vmatprep.subr.bf16.mxu0 0
        %8091 = vmatpush1.bf16.msra.mxu0 0
        %8092 = vmatprep.subr.bf16.mxu0 0
        %8093 = vmatpush1.bf16.msra.mxu0 0
        %8094 = vmatprep.subr.bf16.mxu0 0
        %8095 = vmatpush1.bf16.msra.mxu0 0
        %8096 = vmatprep.mubr.bf16.mxu0 0
        %8097 = vmatmul.mubr.bf16.gmra.mrb[0].mxu0 %v6581
        %v8098 = vpop.f32.mrb[0].mxu0
        %v8099 = vpop.f32.mrb[0].mxu0
        %v8100 = vpop.f32.mrb[0].mxu0
        %v8101 = vpop.f32.mrb[0].mxu0
        %8102 = vmatprep.mubr.bf16.mxu0 0
        %8103 = vmatmul.mubr.bf16.gmra.mrb[0].mxu0 %v6582
        %v8104 = vpop.f32.mrb[0].mxu0
        %v8105 = vpop.f32.mrb[0].mxu0
        %v8106 = vpop.f32.mrb[0].mxu0
        %v8107 = vpop.f32.mrb[0].mxu0
        %8108 = vmatprep.mubr.bf16.mxu0 0
        %8109 = vmatmul.mubr.bf16.gmra.mrb[0].mxu0 %v6583
        %v8110 = vpop.f32.mrb[0].mxu0
        %v8111 = vpop.f32.mrb[0].mxu0
        %v8112 = vpop.f32.mrb[0].mxu0
        %v8113 = vpop.f32.mrb[0].mxu0
        %8114 = vmatprep.mubr.bf16.mxu0 0
        %8115 = vmatmul.mubr.bf16.gmra.mrb[0].mxu0 %v6584
        %v8116 = vpop.f32.mrb[0].mxu0
        %v8117 = vpop.f32.mrb[0].mxu0
        %v8118 = vpop.f32.mrb[0].mxu0
        %v8119 = vpop.f32.mrb[0].mxu0
        %8120 = vmatprep.mubr.bf16.mxu0 0
        %8121 = vmatmul.mubr.bf16.gmra.mrb[0].mxu0 %v6585
        %v8122 = vpop.f32.mrb[0].mxu0
        %v8123 = vadd.f32 0.0, %v8122
        %v8124 = vpop.f32.mrb[0].mxu0
        %v8125 = vpop.f32.mrb[0].mxu0
        %v8126 = vadd.f32 0.0, %v8125
        %v8127 = vpop.f32.mrb[0].mxu0
        %8128 = vmatprep.mubr.bf16.mxu0 0
        %8129 = vmatmul.mubr.bf16.gmra.mrb[0].mxu0 %v6586
        %v8130 = vpop.f32.mrb[0].mxu0
        %v8131 = vadd.f32 0.0, %v8130
        %v8132 = vpop.f32.mrb[0].mxu0
        %v8133 = vpop.f32.mrb[0].mxu0
        %v8134 = vadd.f32 0.0, %v8133
        %v8135 = vpop.f32.mrb[0].mxu0
        %8136 = vmatprep.mubr.bf16.mxu0 0
        %8137 = vmatmul.mubr.bf16.gmra.mrb[0].mxu0 %v6587
        %v8138 = vpop.f32.mrb[0].mxu0
        %v8139 = vadd.f32 0.0, %v8138
        %v8140 = vpop.f32.mrb[0].mxu0
        %v8141 = vpop.f32.mrb[0].mxu0
        %v8142 = vadd.f32 0.0, %v8141
        %v8143 = vpop.f32.mrb[0].mxu0
        %8144 = vmatprep.mubr.bf16.mxu0 0
        %8145 = vmatmul.mubr.bf16.gmra.mrb[0].mxu0 %v6588
        %v8146 = vpop.f32.mrb[0].mxu0
        %v8147 = vadd.f32 0.0, %v8146
        %v8148 = vpop.f32.mrb[0].mxu0
        %v8149 = vpop.f32.mrb[0].mxu0
        %v8150 = vadd.f32 0.0, %v8149
        %v8151 = vpop.f32.mrb[0].mxu0
        %8152 = vmatprep.mubr.bf16.mxu0 0
        %8153 = vmatmul.mubr.bf16.gmra.mrb[0].mxu0 %v6589
        %v8154 = vpop.f32.mrb[0].mxu0
        %v8155 = vadd.f32 0.0, %v8154
        %v8156 = vpop.f32.mrb[0].mxu0
        %v8157 = vpop.f32.mrb[0].mxu0
        %v8158 = vadd.f32 0.0, %v8157
        %v8159 = vpop.f32.mrb[0].mxu0
        %8160 = vmatprep.mubr.bf16.mxu0 0
        %8161 = vmatmul.mubr.bf16.gmra.mrb[0].mxu0 %v6590
        %v8162 = vpop.f32.mrb[0].mxu0
        %v8163 = vadd.f32 0.0, %v8162
        %v8164 = vpop.f32.mrb[0].mxu0
        %v8165 = vpop.f32.mrb[0].mxu0
        %v8166 = vadd.f32 0.0, %v8165
        %v8167 = vpop.f32.mrb[0].mxu0
        %8168 = vmatprep.mubr.bf16.mxu0 0
        %8169 = vmatmul.mubr.bf16.gmra.mrb[0].mxu0 %v6591
        %v8170 = vpop.f32.mrb[0].mxu0
        %v8171 = vadd.f32 0.0, %v8170
        %v8172 = vpop.f32.mrb[0].mxu0
        %v8173 = vpop.f32.mrb[0].mxu0
        %v8174 = vadd.f32 0.0, %v8173
        %v8175 = vpop.f32.mrb[0].mxu0
        %8176 = vmatprep.mubr.bf16.mxu0 0
        %8177 = vmatmul.mubr.bf16.gmra.mrb[0].mxu0 %v6592
        %v8178 = vpop.f32.mrb[0].mxu0
        %v8179 = vadd.f32 0.0, %v8178
        %v8180 = vpop.f32.mrb[0].mxu0
        %v8181 = vpop.f32.mrb[0].mxu0
        %v8182 = vadd.f32 0.0, %v8181
        %v8183 = vpop.f32.mrb[0].mxu0
        %8184 = vmatprep.mubr.bf16.mxu0 0
        %8185 = vmatmul.mubr.bf16.gmra.mrb[0].mxu0 %v6593
        %v8186 = vpop.f32.mrb[0].mxu0
        %v8187 = vadd.f32 0.0, %v8186
        %v8188 = vpop.f32.mrb[0].mxu0
        %v8189 = vpop.f32.mrb[0].mxu0
        %v8190 = vadd.f32 0.0, %v8189
        %v8191 = vpop.f32.mrb[0].mxu0
        %8192 = vmatprep.mubr.bf16.mxu0 0
        %8193 = vmatmul.mubr.bf16.gmra.mrb[0].mxu0 %v6594
        %v8194 = vpop.f32.mrb[0].mxu0
        %v8195 = vadd.f32 0.0, %v8194
        %v8196 = vpop.f32.mrb[0].mxu0
        %v8197 = vpop.f32.mrb[0].mxu0
        %v8198 = vadd.f32 0.0, %v8197
        %v8199 = vpop.f32.mrb[0].mxu0
        %8200 = vmatprep.mubr.bf16.mxu0 0
        %8201 = vmatmul.mubr.bf16.gmra.mrb[0].mxu0 %v6595
        %v8202 = vpop.f32.mrb[0].mxu0
        %v8203 = vadd.f32 0.0, %v8202
        %v8204 = vpop.f32.mrb[0].mxu0
        %v8205 = vpop.f32.mrb[0].mxu0
        %v8206 = vadd.f32 0.0, %v8205
        %v8207 = vpop.f32.mrb[0].mxu0
        %8208 = vmatprep.mubr.bf16.mxu0 0
        %8209 = vmatmul.mubr.bf16.gmra.mrb[0].mxu0 %v6596
        %v8210 = vpop.f32.mrb[0].mxu0
        %v8211 = vadd.f32 0.0, %v8210
        %v8212 = vpop.f32.mrb[0].mxu0
        %v8213 = vpop.f32.mrb[0].mxu0
        %v8214 = vadd.f32 0.0, %v8213
        %v8215 = vpop.f32.mrb[0].mxu0
        %8216 = vmatprep.mubr.bf16.mxu0 0
        %8217 = vmatmul.mubr.bf16.gmra.mrb[0].mxu0 %v6597
        %v8218 = vpop.f32.mrb[0].mxu0
        %v8219 = vadd.f32 0.0, %v8218
        %v8220 = vpop.f32.mrb[0].mxu0
        %v8221 = vpop.f32.mrb[0].mxu0
        %v8222 = vadd.f32 0.0, %v8221
        %v8223 = vpop.f32.mrb[0].mxu0
        %8224 = vmatprep.mubr.bf16.mxu0 0
        %8225 = vmatmul.mubr.bf16.gmra.mrb[0].mxu0 %v6598
        %v8226 = vpop.f32.mrb[0].mxu0
        %v8227 = vadd.f32 0.0, %v8226
        %v8228 = vpop.f32.mrb[0].mxu0
        %v8229 = vpop.f32.mrb[0].mxu0
        %v8230 = vadd.f32 0.0, %v8229
        %v8231 = vpop.f32.mrb[0].mxu0
        %8232 = vmatprep.mubr.bf16.mxu0 0
        %8233 = vmatmul.mubr.bf16.gmra.mrb[0].mxu0 %v6599
        %v8234 = vpop.f32.mrb[0].mxu0
        %v8235 = vadd.f32 0.0, %v8234
        %v8236 = vpop.f32.mrb[0].mxu0
        %v8237 = vpop.f32.mrb[0].mxu0
        %v8238 = vadd.f32 0.0, %v8237
        %v8239 = vpop.f32.mrb[0].mxu0
        %8240 = vmatprep.mubr.bf16.mxu0 0
        %8241 = vmatmul.mubr.bf16.gmra.mrb[0].mxu0 %v6600
        %v8242 = vpop.f32.mrb[0].mxu0
        %v8243 = vadd.f32 0.0, %v8242
        %v8244 = vpop.f32.mrb[0].mxu0
        %v8245 = vpop.f32.mrb[0].mxu0
        %v8246 = vadd.f32 0.0, %v8245
        %v8247 = vpop.f32.mrb[0].mxu0
        %8248 = vmatprep.mubr.bf16.mxu0 0
        %8249 = vmatmul.mubr.bf16.gmra.mrb[0].mxu0 %v6601
        %v8250 = vpop.f32.mrb[0].mxu0
        %v8251 = vadd.f32 0.0, %v8250
        %v8252 = vpop.f32.mrb[0].mxu0
        %v8253 = vpop.f32.mrb[0].mxu0
        %v8254 = vadd.f32 0.0, %v8253
        %v8255 = vpop.f32.mrb[0].mxu0
        %8256 = vmatprep.mubr.bf16.mxu0 0
        %8257 = vmatmul.mubr.bf16.gmra.mrb[0].mxu0 %v6602
        %v8258 = vpop.f32.mrb[0].mxu0
        %v8259 = vadd.f32 0.0, %v8258
        %v8260 = vpop.f32.mrb[0].mxu0
        %v8261 = vpop.f32.mrb[0].mxu0
        %v8262 = vadd.f32 0.0, %v8261
        %v8263 = vpop.f32.mrb[0].mxu0
        %8264 = vmatprep.mubr.bf16.mxu0 0
        %8265 = vmatmul.mubr.bf16.gmra.mrb[0].mxu0 %v6603
        %v8266 = vpop.f32.mrb[0].mxu0
        %v8267 = vadd.f32 0.0, %v8266
        %v8268 = vpop.f32.mrb[0].mxu0
        %v8269 = vpop.f32.mrb[0].mxu0
        %v8270 = vadd.f32 0.0, %v8269
        %v8271 = vpop.f32.mrb[0].mxu0
        %8272 = vmatprep.mubr.bf16.mxu0 0
        %8273 = vmatmul.mubr.bf16.gmra.mrb[0].mxu0 %v6604
        %v8274 = vpop.f32.mrb[0].mxu0
        %v8275 = vadd.f32 0.0, %v8274
        %v8276 = vpop.f32.mrb[0].mxu0
        %v8277 = vpop.f32.mrb[0].mxu0
        %v8278 = vadd.f32 0.0, %v8277
        %v8279 = vpop.f32.mrb[0].mxu0
        %8280 = vmatprep.mubr.bf16.mxu0 0
        %8281 = vmatmul.mubr.bf16.gmra.mrb[0].mxu0 %v6605
        %v8282 = vpop.f32.mrb[0].mxu0
        %v8283 = vadd.f32 0.0, %v8282
        %v8284 = vpop.f32.mrb[0].mxu0
        %v8285 = vpop.f32.mrb[0].mxu0
        %v8286 = vadd.f32 0.0, %v8285
        %v8287 = vpop.f32.mrb[0].mxu0
        %8288 = vmatprep.mubr.bf16.mxu0 0
        %8289 = vmatmul.mubr.bf16.gmra.mrb[0].mxu0 %v6606
        %v8290 = vpop.f32.mrb[0].mxu0
        %v8291 = vadd.f32 0.0, %v8290
        %v8292 = vpop.f32.mrb[0].mxu0
        %v8293 = vpop.f32.mrb[0].mxu0
        %v8294 = vadd.f32 0.0, %v8293
        %v8295 = vpop.f32.mrb[0].mxu0
        %8296 = vmatprep.mubr.bf16.mxu0 0
        %8297 = vmatmul.mubr.bf16.gmra.mrb[0].mxu0 %v6607
        %v8298 = vpop.f32.mrb[0].mxu0
        %v8299 = vadd.f32 0.0, %v8298
        %v8300 = vpop.f32.mrb[0].mxu0
        %v8301 = vpop.f32.mrb[0].mxu0
        %v8302 = vadd.f32 0.0, %v8301
        %v8303 = vpop.f32.mrb[0].mxu0
        %8304 = vmatprep.mubr.bf16.mxu0 0
        %8305 = vmatmul.mubr.bf16.gmra.mrb[0].mxu0 %v6608
        %v8306 = vpop.f32.mrb[0].mxu0
        %v8307 = vadd.f32 0.0, %v8306
        %v8308 = vpop.f32.mrb[0].mxu0
        %v8309 = vpop.f32.mrb[0].mxu0
        %v8310 = vadd.f32 0.0, %v8309
        %v8311 = vpop.f32.mrb[0].mxu0
        %8312 = vmatprep.mubr.bf16.mxu0 0
        %8313 = vmatmul.mubr.bf16.gmra.mrb[0].mxu0 %v6609
        %v8314 = vpop.f32.mrb[0].mxu0
        %v8315 = vadd.f32 0.0, %v8314
        %v8316 = vpop.f32.mrb[0].mxu0
        %v8317 = vpop.f32.mrb[0].mxu0
        %v8318 = vadd.f32 0.0, %v8317
        %v8319 = vpop.f32.mrb[0].mxu0
        %8320 = vmatprep.mubr.bf16.mxu0 0
        %8321 = vmatmul.mubr.bf16.gmra.mrb[0].mxu0 %v6610
        %v8322 = vpop.f32.mrb[0].mxu0
        %v8323 = vadd.f32 0.0, %v8322
        %v8324 = vpop.f32.mrb[0].mxu0
        %v8325 = vpop.f32.mrb[0].mxu0
        %v8326 = vadd.f32 0.0, %v8325
        %v8327 = vpop.f32.mrb[0].mxu0
        %8328 = vmatprep.mubr.bf16.mxu0 0
        %8329 = vmatmul.mubr.bf16.gmra.mrb[0].mxu0 %v6611
        %v8330 = vpop.f32.mrb[0].mxu0
        %v8331 = vadd.f32 0.0, %v8330
        %v8332 = vpop.f32.mrb[0].mxu0
        %v8333 = vpop.f32.mrb[0].mxu0
        %v8334 = vadd.f32 0.0, %v8333
        %v8335 = vpop.f32.mrb[0].mxu0
        %8336 = vmatprep.mubr.bf16.mxu0 0
        %8337 = vmatmul.mubr.bf16.gmra.mrb[0].mxu0 %v6612
        %v8338 = vpop.f32.mrb[0].mxu0
        %v8339 = vadd.f32 0.0, %v8338
        %v8340 = vpop.f32.mrb[0].mxu0
        %v8341 = vpop.f32.mrb[0].mxu0
        %v8342 = vadd.f32 0.0, %v8341
        %v8343 = vpop.f32.mrb[0].mxu0
        %8344 = vmatprep.mubr.bf16.mxu0 0
        %8345 = vmatmul.mubr.bf16.gmra.mrb[0].mxu0 %v6613
        %v8346 = vpop.f32.mrb[0].mxu0
        %v8347 = vadd.f32 0.0, %v8346
        %v8348 = vpop.f32.mrb[0].mxu0
        %v8349 = vpop.f32.mrb[0].mxu0
        %v8350 = vadd.f32 0.0, %v8349
        %v8351 = vpop.f32.mrb[0].mxu0
        %8352 = vmatprep.mubr.bf16.mxu0 0
        %8353 = vmatmul.mubr.bf16.gmra.mrb[0].mxu0 %v6614
        %v8354 = vpop.f32.mrb[0].mxu0
        %v8355 = vadd.f32 0.0, %v8354
        %v8356 = vpop.f32.mrb[0].mxu0
        %v8357 = vpop.f32.mrb[0].mxu0
        %v8358 = vadd.f32 0.0, %v8357
        %v8359 = vpop.f32.mrb[0].mxu0
        %8360 = vmatprep.mubr.bf16.mxu0 0
        %8361 = vmatmul.mubr.bf16.gmra.mrb[0].mxu0 %v6615
        %v8362 = vpop.f32.mrb[0].mxu0
        %v8363 = vadd.f32 0.0, %v8362
        %v8364 = vpop.f32.mrb[0].mxu0
        %v8365 = vpop.f32.mrb[0].mxu0
        %v8366 = vadd.f32 0.0, %v8365
        %v8367 = vpop.f32.mrb[0].mxu0
        %8368 = vmatprep.mubr.bf16.mxu0 0
        %8369 = vmatmul.mubr.bf16.gmra.mrb[0].mxu0 %v6616
        %v8370 = vpop.f32.mrb[0].mxu0
        %v8371 = vadd.f32 0.0, %v8370
        %v8372 = vpop.f32.mrb[0].mxu0
        %v8373 = vpop.f32.mrb[0].mxu0
        %v8374 = vadd.f32 0.0, %v8373
        %v8375 = vpop.f32.mrb[0].mxu0
        %8376 = vmatprep.mubr.bf16.mxu0 0
        %8377 = vmatmul.mubr.bf16.gmra.mrb[0].mxu0 %v6617
        %v8378 = vpop.f32.mrb[0].mxu0
        %v8379 = vadd.f32 0.0, %v8378
        %v8380 = vpop.f32.mrb[0].mxu0
        %v8381 = vpop.f32.mrb[0].mxu0
        %v8382 = vadd.f32 0.0, %v8381
        %v8383 = vpop.f32.mrb[0].mxu0
        %8384 = vmatprep.mubr.bf16.mxu0 0
        %8385 = vmatmul.mubr.bf16.gmra.mrb[0].mxu0 %v6618
        %v8386 = vpop.f32.mrb[0].mxu0
        %v8387 = vadd.f32 0.0, %v8386
        %v8388 = vpop.f32.mrb[0].mxu0
        %v8389 = vpop.f32.mrb[0].mxu0
        %v8390 = vadd.f32 0.0, %v8389
        %v8391 = vpop.f32.mrb[0].mxu0
        %8392 = vmatprep.mubr.bf16.mxu0 0
        %8393 = vmatmul.mubr.bf16.gmra.mrb[0].mxu0 %v6619
        %v8394 = vpop.f32.mrb[0].mxu0
        %v8395 = vadd.f32 0.0, %v8394
        %v8396 = vpop.f32.mrb[0].mxu0
        %v8397 = vpop.f32.mrb[0].mxu0
        %v8398 = vadd.f32 0.0, %v8397
        %v8399 = vpop.f32.mrb[0].mxu0
        %8400 = vmatprep.mubr.bf16.mxu0 0
        %8401 = vmatmul.mubr.bf16.gmra.mrb[0].mxu0 %v6620
        %v8402 = vpop.f32.mrb[0].mxu0
        %v8403 = vadd.f32 0.0, %v8402
        %v8404 = vpop.f32.mrb[0].mxu0
        %v8405 = vpop.f32.mrb[0].mxu0
        %v8406 = vadd.f32 0.0, %v8405
        %v8407 = vpop.f32.mrb[0].mxu0
        %8408 = vmatprep.mubr.bf16.mxu0 0
        %8409 = vmatmul.mubr.bf16.gmra.mrb[0].mxu0 %v6621
        %v8410 = vpop.f32.mrb[0].mxu0
        %v8411 = vadd.f32 0.0, %v8410
        %v8412 = vpop.f32.mrb[0].mxu0
        %v8413 = vpop.f32.mrb[0].mxu0
        %v8414 = vadd.f32 0.0, %v8413
        %v8415 = vpop.f32.mrb[0].mxu0
        %8416 = vmatprep.mubr.bf16.mxu0 0
        %8417 = vmatmul.mubr.bf16.gmra.mrb[0].mxu0 %v6622
        %v8418 = vpop.f32.mrb[0].mxu0
        %v8419 = vadd.f32 0.0, %v8418
        %v8420 = vpop.f32.mrb[0].mxu0
        %v8421 = vpop.f32.mrb[0].mxu0
        %v8422 = vadd.f32 0.0, %v8421
        %v8423 = vpop.f32.mrb[0].mxu0
        %8424 = vmatprep.mubr.bf16.mxu0 0
        %8425 = vmatmul.mubr.bf16.gmra.mrb[0].mxu0 %v6623
        %v8426 = vpop.f32.mrb[0].mxu0
        %v8427 = vadd.f32 0.0, %v8426
        %v8428 = vpop.f32.mrb[0].mxu0
        %v8429 = vpop.f32.mrb[0].mxu0
        %v8430 = vadd.f32 0.0, %v8429
        %v8431 = vpop.f32.mrb[0].mxu0
        %8432 = vmatprep.mubr.bf16.mxu0 0
        %8433 = vmatmul.mubr.bf16.gmra.mrb[0].mxu0 %v6624
        %v8434 = vpop.f32.mrb[0].mxu0
        %v8435 = vadd.f32 0.0, %v8434
        %v8436 = vpop.f32.mrb[0].mxu0
        %v8437 = vpop.f32.mrb[0].mxu0
        %v8438 = vadd.f32 0.0, %v8437
        %v8439 = vpop.f32.mrb[0].mxu0
        %8440 = vmatprep.mubr.bf16.mxu0 0
        %8441 = vmatmul.mubr.bf16.gmra.mrb[0].mxu0 %v6625
        %v8442 = vpop.f32.mrb[0].mxu0
        %v8443 = vadd.f32 0.0, %v8442
        %v8444 = vpop.f32.mrb[0].mxu0
        %v8445 = vpop.f32.mrb[0].mxu0
        %v8446 = vadd.f32 0.0, %v8445
        %v8447 = vpop.f32.mrb[0].mxu0
        %8448 = vmatprep.mubr.bf16.mxu0 0
        %8449 = vmatmul.mubr.bf16.gmra.mrb[0].mxu0 %v6626
        %v8450 = vpop.f32.mrb[0].mxu0
        %v8451 = vadd.f32 0.0, %v8450
        %v8452 = vpop.f32.mrb[0].mxu0
        %v8453 = vpop.f32.mrb[0].mxu0
        %v8454 = vadd.f32 0.0, %v8453
        %v8455 = vpop.f32.mrb[0].mxu0
        %8456 = vmatprep.mubr.bf16.mxu0 0
        %8457 = vmatmul.mubr.bf16.gmra.mrb[0].mxu0 %v6627
        %v8458 = vpop.f32.mrb[0].mxu0
        %v8459 = vadd.f32 0.0, %v8458
        %v8460 = vpop.f32.mrb[0].mxu0
        %v8461 = vpop.f32.mrb[0].mxu0
        %v8462 = vadd.f32 0.0, %v8461
        %v8463 = vpop.f32.mrb[0].mxu0
        %8464 = vmatprep.mubr.bf16.mxu0 0
        %8465 = vmatmul.mubr.bf16.gmra.mrb[0].mxu0 %v6628
        %v8466 = vpop.f32.mrb[0].mxu0
        %v8467 = vadd.f32 0.0, %v8466
        %v8468 = vpop.f32.mrb[0].mxu0
        %v8469 = vpop.f32.mrb[0].mxu0
        %v8470 = vadd.f32 0.0, %v8469
        %v8471 = vpop.f32.mrb[0].mxu0
        %8472 = vmatprep.mubr.bf16.mxu0 0
        %8473 = vmatmul.mubr.bf16.gmra.mrb[0].mxu0 %v6629
        %v8474 = vpop.f32.mrb[0].mxu0
        %v8475 = vadd.f32 0.0, %v8474
        %v8476 = vpop.f32.mrb[0].mxu0
        %v8477 = vpop.f32.mrb[0].mxu0
        %v8478 = vadd.f32 0.0, %v8477
        %v8479 = vpop.f32.mrb[0].mxu0
        %8480 = vmatprep.mubr.bf16.mxu0 0
        %8481 = vmatmul.mubr.bf16.gmra.mrb[0].mxu0 %v6630
        %v8482 = vpop.f32.mrb[0].mxu0
        %v8483 = vadd.f32 0.0, %v8482
        %v8484 = vpop.f32.mrb[0].mxu0
        %v8485 = vpop.f32.mrb[0].mxu0
        %v8486 = vadd.f32 0.0, %v8485
        %v8487 = vpop.f32.mrb[0].mxu0
        %8488 = vmatprep.mubr.bf16.mxu0 0
        %8489 = vmatmul.mubr.bf16.gmra.mrb[0].mxu0 %v6631
        %v8490 = vpop.f32.mrb[0].mxu0
        %v8491 = vadd.f32 0.0, %v8490
        %v8492 = vpop.f32.mrb[0].mxu0
        %v8493 = vpop.f32.mrb[0].mxu0
        %v8494 = vadd.f32 0.0, %v8493
        %v8495 = vpop.f32.mrb[0].mxu0
        %8496 = vmatprep.mubr.bf16.mxu0 0
        %8497 = vmatmul.mubr.bf16.gmra.mrb[0].mxu0 %v6632
        %v8498 = vpop.f32.mrb[0].mxu0
        %v8499 = vadd.f32 0.0, %v8498
        %v8500 = vpop.f32.mrb[0].mxu0
        %v8501 = vpop.f32.mrb[0].mxu0
        %v8502 = vadd.f32 0.0, %v8501
        %v8503 = vpop.f32.mrb[0].mxu0
        %8504 = vmatprep.mubr.bf16.mxu0 0
        %8505 = vmatmul.mubr.bf16.gmra.mrb[0].mxu0 %v6633
        %v8506 = vpop.f32.mrb[0].mxu0
        %v8507 = vadd.f32 0.0, %v8506
        %v8508 = vpop.f32.mrb[0].mxu0
        %v8509 = vpop.f32.mrb[0].mxu0
        %v8510 = vadd.f32 0.0, %v8509
        %v8511 = vpop.f32.mrb[0].mxu0
        %8512 = vmatprep.mubr.bf16.mxu0 0
        %8513 = vmatmul.mubr.bf16.gmra.mrb[0].mxu0 %v6634
        %v8514 = vpop.f32.mrb[0].mxu0
        %v8515 = vadd.f32 0.0, %v8514
        %v8516 = vpop.f32.mrb[0].mxu0
        %v8517 = vpop.f32.mrb[0].mxu0
        %v8518 = vadd.f32 0.0, %v8517
        %v8519 = vpop.f32.mrb[0].mxu0
        %8520 = vmatprep.mubr.bf16.mxu0 0
        %8521 = vmatmul.mubr.bf16.gmra.mrb[0].mxu0 %v6635
        %v8522 = vpop.f32.mrb[0].mxu0
        %v8523 = vadd.f32 0.0, %v8522
        %v8524 = vpop.f32.mrb[0].mxu0
        %v8525 = vpop.f32.mrb[0].mxu0
        %v8526 = vadd.f32 0.0, %v8525
        %v8527 = vpop.f32.mrb[0].mxu0
        %8528 = vmatprep.mubr.bf16.mxu0 0
        %8529 = vmatmul.mubr.bf16.gmra.mrb[0].mxu0 %v6636
        %v8530 = vpop.f32.mrb[0].mxu0
        %v8531 = vadd.f32 0.0, %v8530
        %v8532 = vpop.f32.mrb[0].mxu0
        %v8533 = vpop.f32.mrb[0].mxu0
        %v8534 = vadd.f32 0.0, %v8533
        %v8535 = vpop.f32.mrb[0].mxu0
        %8536 = vmatprep.mubr.bf16.mxu0 0
        %8537 = vmatmul.mubr.bf16.gmra.mrb[0].mxu0 %v6637
        %v8538 = vpop.f32.mrb[0].mxu0
        %v8539 = vadd.f32 0.0, %v8538
        %v8540 = vpop.f32.mrb[0].mxu0
        %v8541 = vpop.f32.mrb[0].mxu0
        %v8542 = vadd.f32 0.0, %v8541
        %v8543 = vpop.f32.mrb[0].mxu0
        %8544 = vmatprep.mubr.bf16.mxu0 0
        %8545 = vmatmul.mubr.bf16.gmra.mrb[0].mxu0 %v6638
        %v8546 = vpop.f32.mrb[0].mxu0
        %v8547 = vadd.f32 0.0, %v8546
        %v8548 = vpop.f32.mrb[0].mxu0
        %v8549 = vpop.f32.mrb[0].mxu0
        %v8550 = vadd.f32 0.0, %v8549
        %v8551 = vpop.f32.mrb[0].mxu0
        %8552 = vmatprep.mubr.bf16.mxu0 0
        %8553 = vmatmul.mubr.bf16.gmra.mrb[0].mxu0 %v6639
        %v8554 = vpop.f32.mrb[0].mxu0
        %v8555 = vadd.f32 0.0, %v8554
        %v8556 = vpop.f32.mrb[0].mxu0
        %v8557 = vpop.f32.mrb[0].mxu0
        %v8558 = vadd.f32 0.0, %v8557
        %v8559 = vpop.f32.mrb[0].mxu0
        %8560 = vmatprep.mubr.bf16.mxu0 0
        %8561 = vmatmul.mubr.bf16.gmra.mrb[0].mxu0 %v6640
        %v8562 = vpop.f32.mrb[0].mxu0
        %v8563 = vadd.f32 0.0, %v8562
        %v8564 = vpop.f32.mrb[0].mxu0
        %v8565 = vpop.f32.mrb[0].mxu0
        %v8566 = vadd.f32 0.0, %v8565
        %v8567 = vpop.f32.mrb[0].mxu0
        %8568 = vmatprep.mubr.bf16.mxu0 0
        %8569 = vmatmul.mubr.bf16.gmra.mrb[0].mxu0 %v6641
        %v8570 = vpop.f32.mrb[0].mxu0
        %v8571 = vadd.f32 0.0, %v8570
        %v8572 = vpop.f32.mrb[0].mxu0
        %v8573 = vpop.f32.mrb[0].mxu0
        %v8574 = vadd.f32 0.0, %v8573
        %v8575 = vpop.f32.mrb[0].mxu0
        %8576 = vmatprep.mubr.bf16.mxu0 0
        %8577 = vmatmul.mubr.bf16.gmra.mrb[0].mxu0 %v6642
        %v8578 = vpop.f32.mrb[0].mxu0
        %v8579 = vadd.f32 0.0, %v8578
        %v8580 = vpop.f32.mrb[0].mxu0
        %v8581 = vpop.f32.mrb[0].mxu0
        %v8582 = vadd.f32 0.0, %v8581
        %v8583 = vpop.f32.mrb[0].mxu0
        %8584 = vmatprep.mubr.bf16.mxu0 0
        %8585 = vmatmul.mubr.bf16.gmra.mrb[0].mxu0 %v6643
        %v8586 = vpop.f32.mrb[0].mxu0
        %v8587 = vadd.f32 0.0, %v8586
        %v8588 = vpop.f32.mrb[0].mxu0
        %v8589 = vpop.f32.mrb[0].mxu0
        %v8590 = vadd.f32 0.0, %v8589
        %v8591 = vpop.f32.mrb[0].mxu0
        %8592 = vmatprep.mubr.bf16.mxu0 0
        %8593 = vmatmul.mubr.bf16.gmra.mrb[0].mxu0 %v6644
        %v8594 = vpop.f32.mrb[0].mxu0
        %v8595 = vadd.f32 0.0, %v8594
        %v8596 = vpop.f32.mrb[0].mxu0
        %v8597 = vpop.f32.mrb[0].mxu0
        %v8598 = vadd.f32 0.0, %v8597
        %v8599 = vpop.f32.mrb[0].mxu0
        %8600 = vmatprep.mubr.bf16.mxu0 0
        %8601 = vmatmul.mubr.bf16.gmra.mrb[0].mxu0 %v6645
        %v8602 = vpop.f32.mrb[0].mxu0
        %v8603 = vadd.f32 0.0, %v8602
        %v8604 = vpop.f32.mrb[0].mxu0
        %v8605 = vpop.f32.mrb[0].mxu0
        %v8606 = vadd.f32 0.0, %v8605
        %v8607 = vpop.f32.mrb[0].mxu0
        %8608 = vmatprep.mubr.bf16.mxu0 0
        %8609 = vmatmul.mubr.bf16.gmra.mrb[0].mxu0 %v6646
        %v8610 = vpop.f32.mrb[0].mxu0
        %v8611 = vadd.f32 0.0, %v8610
        %v8612 = vpop.f32.mrb[0].mxu0
        %v8613 = vpop.f32.mrb[0].mxu0
        %v8614 = vadd.f32 0.0, %v8613
        %v8615 = vpop.f32.mrb[0].mxu0
        %8616 = vmatprep.mubr.bf16.mxu0 0
        %8617 = vmatmul.mubr.bf16.gmra.mrb[0].mxu0 %v6647
        %v8618 = vpop.f32.mrb[0].mxu0
        %v8619 = vadd.f32 0.0, %v8618
        %v8620 = vpop.f32.mrb[0].mxu0
        %v8621 = vpop.f32.mrb[0].mxu0
        %v8622 = vadd.f32 0.0, %v8621
        %v8623 = vpop.f32.mrb[0].mxu0
        %8624 = vmatprep.mubr.bf16.mxu0 0
        %8625 = vmatmul.mubr.bf16.gmra.mrb[0].mxu0 %v6648
        %v8626 = vpop.f32.mrb[0].mxu0
        %v8627 = vadd.f32 0.0, %v8626
        %v8628 = vpop.f32.mrb[0].mxu0
        %v8629 = vpop.f32.mrb[0].mxu0
        %v8630 = vadd.f32 0.0, %v8629
        %v8631 = vpop.f32.mrb[0].mxu0
        %8632 = vmatprep.mubr.bf16.mxu0 0
        %8633 = vmatmul.mubr.bf16.gmra.mrb[0].mxu0 %v6649
        %v8634 = vpop.f32.mrb[0].mxu0
        %v8635 = vadd.f32 0.0, %v8634
        %v8636 = vpop.f32.mrb[0].mxu0
        %v8637 = vpop.f32.mrb[0].mxu0
        %v8638 = vadd.f32 0.0, %v8637
        %v8639 = vpop.f32.mrb[0].mxu0
        %8640 = vmatprep.mubr.bf16.mxu0 0
        %8641 = vmatmul.mubr.bf16.gmra.mrb[0].mxu0 %v6650
        %v8642 = vpop.f32.mrb[0].mxu0
        %v8643 = vadd.f32 0.0, %v8642
        %v8644 = vpop.f32.mrb[0].mxu0
        %v8645 = vpop.f32.mrb[0].mxu0
        %v8646 = vadd.f32 0.0, %v8645
        %v8647 = vpop.f32.mrb[0].mxu0
        %8648 = vmatprep.mubr.bf16.mxu0 0
        %8649 = vmatmul.mubr.bf16.gmra.mrb[0].mxu0 %v6651
        %v8650 = vpop.f32.mrb[0].mxu0
        %v8651 = vadd.f32 0.0, %v8650
        %v8652 = vpop.f32.mrb[0].mxu0
        %v8653 = vpop.f32.mrb[0].mxu0
        %v8654 = vadd.f32 0.0, %v8653
        %v8655 = vpop.f32.mrb[0].mxu0
        %8656 = vmatprep.mubr.bf16.mxu0 0
        %8657 = vmatmul.mubr.bf16.gmra.mrb[0].mxu0 %v6652
        %v8658 = vpop.f32.mrb[0].mxu0
        %v8659 = vadd.f32 0.0, %v8658
        %v8660 = vpop.f32.mrb[0].mxu0
        %v8661 = vpop.f32.mrb[0].mxu0
        %v8662 = vadd.f32 0.0, %v8661
        %v8663 = vpop.f32.mrb[0].mxu0
        %8664 = vmatprep.mubr.bf16.mxu0 0
        %8665 = vmatmul.mubr.bf16.gmra.mrb[0].mxu0 %v6653
        %v8666 = vpop.f32.mrb[0].mxu0
        %v8667 = vadd.f32 0.0, %v8666
        %v8668 = vpop.f32.mrb[0].mxu0
        %v8669 = vpop.f32.mrb[0].mxu0
        %v8670 = vpop.f32.mrb[0].mxu0
        %8671 = vdwg.mxu0
        %v8809 = vrot.slane %v7438, 2
        %v8810 = vrot.slane %v7441, 2
        %v8811 = vsel %vm2454, %v8809, %v8810
        %v8812 = vrot.slane %v7446, 2
        %v8813 = vsel %vm2454, %v8810, %v8812
        %v8814 = vrot.slane %v7449, 2
        %v8815 = vsel %vm2454, %v8812, %v8814
        %v8816 = vrot.slane %v7454, 2
        %v8817 = vsel %vm2454, %v8814, %v8816
        %v8818 = vrot.slane %v7457, 2
        %v8819 = vsel %vm2454, %v8816, %v8818
        %v8820 = vrot.slane %v7462, 2
        %v8821 = vsel %vm2454, %v8818, %v8820
        %v8822 = vrot.slane %v7465, 2
        %v8823 = vsel %vm2454, %v8820, %v8822
        %v8824 = vrot.slane %v7470, 2
        %v8825 = vsel %vm2454, %v8822, %v8824
        %v8826 = vrot.slane %v7473, 2
        %v8827 = vsel %vm2454, %v8824, %v8826
        %v8828 = vrot.slane %v7478, 2
        %v8829 = vsel %vm2454, %v8826, %v8828
        %v8830 = vrot.slane %v7481, 2
        %v8831 = vsel %vm2454, %v8828, %v8830
        %v8832 = vrot.slane %v7486, 2
        %v8833 = vsel %vm2454, %v8830, %v8832
        %v8834 = vrot.slane %v7489, 2
        %v8835 = vsel %vm2454, %v8832, %v8834
        %v8836 = vrot.slane %v7494, 2
        %v8837 = vsel %vm2454, %v8834, %v8836
        %v8838 = vrot.slane %v7497, 2
        %v8839 = vsel %vm2454, %v8836, %v8838
        %v8840 = vrot.slane %v7502, 2
        %v8841 = vsel %vm2454, %v8838, %v8840
        %v8842 = vrot.slane %v7505, 2
        %v8843 = vsel %vm2454, %v8840, %v8842
        %v8844 = vrot.slane %v7510, 2
        %v8845 = vsel %vm2454, %v8842, %v8844
        %v8846 = vrot.slane %v7513, 2
        %v8847 = vsel %vm2454, %v8844, %v8846
        %v8848 = vrot.slane %v7518, 2
        %v8849 = vsel %vm2454, %v8846, %v8848
        %v8850 = vrot.slane %v7521, 2
        %v8851 = vsel %vm2454, %v8848, %v8850
        %v8852 = vrot.slane %v7526, 2
        %v8853 = vsel %vm2454, %v8850, %v8852
        %v8854 = vrot.slane %v7529, 2
        %v8855 = vsel %vm2454, %v8852, %v8854
        %v8856 = vrot.slane %v7534, 2
        %v8857 = vsel %vm2454, %v8854, %v8856
        %v8858 = vrot.slane %v7537, 2
        %v8859 = vsel %vm2454, %v8856, %v8858
        %v8860 = vrot.slane %v7542, 2
        %v8861 = vsel %vm2454, %v8858, %v8860
        %v8862 = vrot.slane %v7545, 2
        %v8863 = vsel %vm2454, %v8860, %v8862
        %v8864 = vrot.slane %v7550, 2
        %v8865 = vsel %vm2454, %v8862, %v8864
        %v8866 = vrot.slane %v7553, 2
        %v8867 = vsel %vm2454, %v8864, %v8866
        %v8868 = vrot.slane %v7558, 2
        %v8869 = vsel %vm2454, %v8866, %v8868
        %v8870 = vrot.slane %v7561, 2
        %v8871 = vsel %vm2454, %v8868, %v8870
        %v8872 = vrot.slane %v7566, 2
        %v8873 = vsel %vm2454, %v8870, %v8872
        %v8874 = vrot.slane %v7569, 2
        %v8875 = vsel %vm2454, %v8872, %v8874
        %v8876 = vrot.slane %v7574, 2
        %v8877 = vsel %vm2454, %v8874, %v8876
        %v8878 = vrot.slane %v7577, 2
        %v8879 = vsel %vm2454, %v8876, %v8878
        %v8880 = vrot.slane %v7582, 2
        %v8881 = vsel %vm2454, %v8878, %v8880
        %v8882 = vrot.slane %v7585, 2
        %v8883 = vsel %vm2454, %v8880, %v8882
        %v8884 = vrot.slane %v7590, 2
        %v8885 = vsel %vm2454, %v8882, %v8884
        %v8886 = vrot.slane %v7593, 2
        %v8887 = vsel %vm2454, %v8884, %v8886
        %v8888 = vrot.slane %v7598, 2
        %v8889 = vsel %vm2454, %v8886, %v8888
        %v8890 = vrot.slane %v7601, 2
        %v8891 = vsel %vm2454, %v8888, %v8890
        %v8892 = vrot.slane %v7606, 2
        %v8893 = vsel %vm2454, %v8890, %v8892
        %v8894 = vrot.slane %v7609, 2
        %v8895 = vsel %vm2454, %v8892, %v8894
        %v8896 = vrot.slane %v7614, 2
        %v8897 = vsel %vm2454, %v8894, %v8896
        %v8898 = vrot.slane %v7617, 2
        %v8899 = vsel %vm2454, %v8896, %v8898
        %v8900 = vrot.slane %v7622, 2
        %v8901 = vsel %vm2454, %v8898, %v8900
        %v8902 = vrot.slane %v7625, 2
        %v8903 = vsel %vm2454, %v8900, %v8902
        %v8904 = vrot.slane %v7630, 2
        %v8905 = vsel %vm2454, %v8902, %v8904
        %v8906 = vrot.slane %v7633, 2
        %v8907 = vsel %vm2454, %v8904, %v8906
        %v8908 = vrot.slane %v7638, 2
        %v8909 = vsel %vm2454, %v8906, %v8908
        %v8910 = vrot.slane %v7641, 2
        %v8911 = vsel %vm2454, %v8908, %v8910
        %v8912 = vrot.slane %v7646, 2
        %v8913 = vsel %vm2454, %v8910, %v8912
        %v8914 = vrot.slane %v7649, 2
        %v8915 = vsel %vm2454, %v8912, %v8914
        %v8916 = vrot.slane %v7654, 2
        %v8917 = vsel %vm2454, %v8914, %v8916
        %v8918 = vrot.slane %v7657, 2
        %v8919 = vsel %vm2454, %v8916, %v8918
        %v8920 = vrot.slane %v7662, 2
        %v8921 = vsel %vm2454, %v8918, %v8920
        %v8922 = vrot.slane %v7665, 2
        %v8923 = vsel %vm2454, %v8920, %v8922
        %v8924 = vrot.slane %v7670, 2
        %v8925 = vsel %vm2454, %v8922, %v8924
        %v8926 = vrot.slane %v7673, 2
        %v8927 = vsel %vm2454, %v8924, %v8926
        %v8928 = vrot.slane %v7678, 2
        %v8929 = vsel %vm2454, %v8926, %v8928
        %v8930 = vrot.slane %v7681, 2
        %v8931 = vsel %vm2454, %v8928, %v8930
        %v8932 = vrot.slane %v7686, 2
        %v8933 = vsel %vm2454, %v8930, %v8932
        %v8934 = vrot.slane %v7689, 2
        %v8935 = vsel %vm2454, %v8932, %v8934
        %v8936 = vrot.slane %v7694, 2
        %v8937 = vsel %vm2454, %v8934, %v8936
        %v8938 = vrot.slane %v7697, 2
        %v8939 = vsel %vm2454, %v8936, %v8938
        %v8940 = vrot.slane %v7702, 2
        %v8941 = vsel %vm2454, %v8938, %v8940
        %v8942 = vrot.slane %v7705, 2
        %v8943 = vsel %vm2454, %v8940, %v8942
        %v8944 = vrot.slane %v7710, 2
        %v8945 = vsel %vm2454, %v8942, %v8944
        %v8946 = vrot.slane %v7713, 2
        %v8947 = vsel %vm2454, %v8944, %v8946
        %v8948 = vrot.slane %v7718, 2
        %v8949 = vsel %vm2454, %v8946, %v8948
        %v8950 = vrot.slane %v7721, 2
        %v8951 = vsel %vm2454, %v8948, %v8950
        %v8952 = vrot.slane %v7726, 2
        %v8953 = vsel %vm2454, %v8950, %v8952
        %v8954 = vrot.slane %v7729, 2
        %v8955 = vsel %vm2454, %v8952, %v8954
        %v8956 = vrot.slane %v7734, 2
        %v8957 = vsel %vm2454, %v8954, %v8956
        %v8958 = vrot.slane %v7737, 2
        %v8959 = vsel %vm2454, %v8956, %v8958
        %v8960 = vrot.slane %v7742, 2
        %v8961 = vsel %vm2454, %v8958, %v8960
        %v8962 = vrot.slane %v7745, 2
        %v8963 = vsel %vm2454, %v8960, %v8962
        %v8964 = vrot.slane %v7750, 2
        %v8965 = vsel %vm2454, %v8962, %v8964
        %v8966 = vrot.slane %v7753, 2
        %v8967 = vsel %vm2454, %v8964, %v8966
        %v8968 = vrot.slane %v7758, 2
        %v8969 = vsel %vm2454, %v8966, %v8968
        %v8970 = vrot.slane %v7761, 2
        %v8971 = vsel %vm2454, %v8968, %v8970
        %v8972 = vrot.slane %v7766, 2
        %v8973 = vsel %vm2454, %v8970, %v8972
        %v8974 = vrot.slane %v7769, 2
        %v8975 = vsel %vm2454, %v8972, %v8974
        %v8976 = vrot.slane %v7774, 2
        %v8977 = vsel %vm2454, %v8974, %v8976
        %v8978 = vrot.slane %v7777, 2
        %v8979 = vsel %vm2454, %v8976, %v8978
        %v8980 = vrot.slane %v7782, 2
        %v8981 = vsel %vm2454, %v8978, %v8980
        %v8982 = vrot.slane %v7785, 2
        %v8983 = vsel %vm2454, %v8980, %v8982
        %v8984 = vrot.slane %v7790, 2
        %v8985 = vsel %vm2454, %v8982, %v8984
        %v8986 = vrot.slane %v7793, 2
        %v8987 = vsel %vm2454, %v8984, %v8986
        %v8988 = vrot.slane %v7798, 2
        %v8989 = vsel %vm2454, %v8986, %v8988
        %v8990 = vrot.slane %v7801, 2
        %v8991 = vsel %vm2454, %v8988, %v8990
        %v8992 = vrot.slane %v7806, 2
        %v8993 = vsel %vm2454, %v8990, %v8992
        %v8994 = vrot.slane %v7809, 2
        %v8995 = vsel %vm2454, %v8992, %v8994
        %v8996 = vrot.slane %v7814, 2
        %v8997 = vsel %vm2454, %v8994, %v8996
        %v8998 = vrot.slane %v7817, 2
        %v8999 = vsel %vm2454, %v8996, %v8998
        %v9000 = vrot.slane %v7822, 2
        %v9001 = vsel %vm2454, %v8998, %v9000
        %v9002 = vrot.slane %v7825, 2
        %v9003 = vsel %vm2454, %v9000, %v9002
        %v9004 = vrot.slane %v7830, 2
        %v9005 = vsel %vm2454, %v9002, %v9004
        %v9006 = vrot.slane %v7833, 2
        %v9007 = vsel %vm2454, %v9004, %v9006
        %v9008 = vrot.slane %v7838, 2
        %v9009 = vsel %vm2454, %v9006, %v9008
        %v9010 = vrot.slane %v7841, 2
        %v9011 = vsel %vm2454, %v9008, %v9010
        %v9012 = vrot.slane %v7846, 2
        %v9013 = vsel %vm2454, %v9010, %v9012
        %v9014 = vrot.slane %v7849, 2
        %v9015 = vsel %vm2454, %v9012, %v9014
        %v9016 = vrot.slane %v7854, 2
        %v9017 = vsel %vm2454, %v9014, %v9016
        %v9018 = vrot.slane %v7857, 2
        %v9019 = vsel %vm2454, %v9016, %v9018
        %v9020 = vrot.slane %v7862, 2
        %v9021 = vsel %vm2454, %v9018, %v9020
        %v9022 = vrot.slane %v7865, 2
        %v9023 = vsel %vm2454, %v9020, %v9022
        %v9024 = vrot.slane %v7870, 2
        %v9025 = vsel %vm2454, %v9022, %v9024
        %v9026 = vrot.slane %v7873, 2
        %v9027 = vsel %vm2454, %v9024, %v9026
        %v9028 = vrot.slane %v7878, 2
        %v9029 = vsel %vm2454, %v9026, %v9028
        %v9030 = vrot.slane %v7881, 2
        %v9031 = vsel %vm2454, %v9028, %v9030
        %v9032 = vrot.slane %v7886, 2
        %v9033 = vsel %vm2454, %v9030, %v9032
        %v9034 = vrot.slane %v7889, 2
        %v9035 = vsel %vm2454, %v9032, %v9034
        %v9036 = vrot.slane %v7894, 2
        %v9037 = vsel %vm2454, %v9034, %v9036
        %v9038 = vrot.slane %v7897, 2
        %v9039 = vsel %vm2454, %v9036, %v9038
        %v9040 = vrot.slane %v7902, 2
        %v9041 = vsel %vm2454, %v9038, %v9040
        %v9042 = vrot.slane %v7905, 2
        %v9043 = vsel %vm2454, %v9040, %v9042
        %v9044 = vrot.slane %v7910, 2
        %v9045 = vsel %vm2454, %v9042, %v9044
        %v9046 = vrot.slane %v7913, 2
        %v9047 = vsel %vm2454, %v9044, %v9046
        %v9048 = vrot.slane %v7918, 2
        %v9049 = vsel %vm2454, %v9046, %v9048
        %v9050 = vrot.slane %v7921, 2
        %v9051 = vsel %vm2454, %v9048, %v9050
        %v9052 = vrot.slane %v7926, 2
        %v9053 = vsel %vm2454, %v9050, %v9052
        %v9054 = vrot.slane %v7929, 2
        %v9055 = vsel %vm2454, %v9052, %v9054
        %v9056 = vrot.slane %v7934, 2
        %v9057 = vsel %vm2454, %v9054, %v9056
        %v9058 = vrot.slane %v7937, 2
        %v9059 = vsel %vm2454, %v9056, %v9058
        %v9060 = vrot.slane %v7942, 2
        %v9061 = vsel %vm2454, %v9058, %v9060
        %v9062 = vrot.slane %v7945, 2
        %v9063 = vsel %vm2454, %v9060, %v9062
        %v9064 = vrot.slane %v7950, 2
        %v9065 = vsel %vm2454, %v9062, %v9064
        %v9066 = vrot.slane %v7953, 2
        %v9067 = vsel %vm2454, %v9064, %v9066
        %v9068 = vrot.slane %v7958, 2
        %v9069 = vsel %vm2454, %v9066, %v9068
        %v9070 = vrot.slane %v7961, 2
        %v9071 = vsel %vm2454, %v9068, %v9070
        %v9072 = vrot.slane %v7966, 2
        %v9073 = vsel %vm2454, %v9070, %v9072
        %v9074 = vrot.slane %v7969, 2
        %v9075 = vsel %vm2454, %v9072, %v9074
        %v9076 = vrot.slane %v7974, 2
        %v9077 = vsel %vm2454, %v9074, %v9076
        %v9078 = vrot.slane %v7977, 2
        %v9079 = vsel %vm2454, %v9076, %v9078
        %v9080 = vrot.slane %v7982, 2
        %v9081 = vsel %vm2454, %v9078, %v9080
        %v9218 = vadd.f32 %v6753, %v8811
        %v9219 = vadd.f32 %v6756, %v8813
        %v9220 = vadd.f32 %v6761, %v8815
        %v9221 = vadd.f32 %v6764, %v8817
        %v9222 = vadd.f32 %v6769, %v8819
        %v9223 = vadd.f32 %v6772, %v8821
        %v9224 = vadd.f32 %v6777, %v8823
        %v9225 = vadd.f32 %v6780, %v8825
        %v9226 = vadd.f32 %v6785, %v8827
        %v9227 = vadd.f32 %v6788, %v8829
        %v9228 = vadd.f32 %v6793, %v8831
        %v9229 = vadd.f32 %v6796, %v8833
        %v9230 = vadd.f32 %v6801, %v8835
        %v9231 = vadd.f32 %v6804, %v8837
        %v9232 = vadd.f32 %v6809, %v8839
        %v9233 = vadd.f32 %v6812, %v8841
        %v9234 = vadd.f32 %v6817, %v8843
        %v9235 = vadd.f32 %v6820, %v8845
        %v9236 = vadd.f32 %v6825, %v8847
        %v9237 = vadd.f32 %v6828, %v8849
        %v9238 = vadd.f32 %v6833, %v8851
        %v9239 = vadd.f32 %v6836, %v8853
        %v9240 = vadd.f32 %v6841, %v8855
        %v9241 = vadd.f32 %v6844, %v8857
        %v9242 = vadd.f32 %v6849, %v8859
        %v9243 = vadd.f32 %v6852, %v8861
        %v9244 = vadd.f32 %v6857, %v8863
        %v9245 = vadd.f32 %v6860, %v8865
        %v9246 = vadd.f32 %v6865, %v8867
        %v9247 = vadd.f32 %v6868, %v8869
        %v9248 = vadd.f32 %v6873, %v8871
        %v9249 = vadd.f32 %v6876, %v8873
        %v9250 = vadd.f32 %v6881, %v8875
        %v9251 = vadd.f32 %v6884, %v8877
        %v9252 = vadd.f32 %v6889, %v8879
        %v9253 = vadd.f32 %v6892, %v8881
        %v9254 = vadd.f32 %v6897, %v8883
        %v9255 = vadd.f32 %v6900, %v8885
        %v9256 = vadd.f32 %v6905, %v8887
        %v9257 = vadd.f32 %v6908, %v8889
        %v9258 = vadd.f32 %v6913, %v8891
        %v9259 = vadd.f32 %v6916, %v8893
        %v9260 = vadd.f32 %v6921, %v8895
        %v9261 = vadd.f32 %v6924, %v8897
        %v9262 = vadd.f32 %v6929, %v8899
        %v9263 = vadd.f32 %v6932, %v8901
        %v9264 = vadd.f32 %v6937, %v8903
        %v9265 = vadd.f32 %v6940, %v8905
        %v9266 = vadd.f32 %v6945, %v8907
        %v9267 = vadd.f32 %v6948, %v8909
        %v9268 = vadd.f32 %v6953, %v8911
        %v9269 = vadd.f32 %v6956, %v8913
        %v9270 = vadd.f32 %v6961, %v8915
        %v9271 = vadd.f32 %v6964, %v8917
        %v9272 = vadd.f32 %v6969, %v8919
        %v9273 = vadd.f32 %v6972, %v8921
        %v9274 = vadd.f32 %v6977, %v8923
        %v9275 = vadd.f32 %v6980, %v8925
        %v9276 = vadd.f32 %v6985, %v8927
        %v9277 = vadd.f32 %v6988, %v8929
        %v9278 = vadd.f32 %v6993, %v8931
        %v9279 = vadd.f32 %v6996, %v8933
        %v9280 = vadd.f32 %v7001, %v8935
        %v9281 = vadd.f32 %v7004, %v8937
        %v9282 = vadd.f32 %v7009, %v8939
        %v9283 = vadd.f32 %v7012, %v8941
        %v9284 = vadd.f32 %v7017, %v8943
        %v9285 = vadd.f32 %v7020, %v8945
        %v9286 = vadd.f32 %v7025, %v8947
        %v9287 = vadd.f32 %v7028, %v8949
        %v9288 = vadd.f32 %v7033, %v8951
        %v9289 = vadd.f32 %v7036, %v8953
        %v9290 = vadd.f32 %v7041, %v8955
        %v9291 = vadd.f32 %v7044, %v8957
        %v9292 = vadd.f32 %v7049, %v8959
        %v9293 = vadd.f32 %v7052, %v8961
        %v9294 = vadd.f32 %v7057, %v8963
        %v9295 = vadd.f32 %v7060, %v8965
        %v9296 = vadd.f32 %v7065, %v8967
        %v9297 = vadd.f32 %v7068, %v8969
        %v9298 = vadd.f32 %v7073, %v8971
        %v9299 = vadd.f32 %v7076, %v8973
        %v9300 = vadd.f32 %v7081, %v8975
        %v9301 = vadd.f32 %v7084, %v8977
        %v9302 = vadd.f32 %v7089, %v8979
        %v9303 = vadd.f32 %v7092, %v8981
        %v9304 = vadd.f32 %v7097, %v8983
        %v9305 = vadd.f32 %v7100, %v8985
        %v9306 = vadd.f32 %v7105, %v8987
        %v9307 = vadd.f32 %v7108, %v8989
        %v9308 = vadd.f32 %v7113, %v8991
        %v9309 = vadd.f32 %v7116, %v8993
        %v9310 = vadd.f32 %v7121, %v8995
        %v9311 = vadd.f32 %v7124, %v8997
        %v9312 = vadd.f32 %v7129, %v8999
        %v9313 = vadd.f32 %v7132, %v9001
        %v9314 = vadd.f32 %v7137, %v9003
        %v9315 = vadd.f32 %v7140, %v9005
        %v9316 = vadd.f32 %v7145, %v9007
        %v9317 = vadd.f32 %v7148, %v9009
        %v9318 = vadd.f32 %v7153, %v9011
        %v9319 = vadd.f32 %v7156, %v9013
        %v9320 = vadd.f32 %v7161, %v9015
        %v9321 = vadd.f32 %v7164, %v9017
        %v9322 = vadd.f32 %v7169, %v9019
        %v9323 = vadd.f32 %v7172, %v9021
        %v9324 = vadd.f32 %v7177, %v9023
        %v9325 = vadd.f32 %v7180, %v9025
        %v9326 = vadd.f32 %v7185, %v9027
        %v9327 = vadd.f32 %v7188, %v9029
        %v9328 = vadd.f32 %v7193, %v9031
        %v9329 = vadd.f32 %v7196, %v9033
        %v9330 = vadd.f32 %v7201, %v9035
        %v9331 = vadd.f32 %v7204, %v9037
        %v9332 = vadd.f32 %v7209, %v9039
        %v9333 = vadd.f32 %v7212, %v9041
        %v9334 = vadd.f32 %v7217, %v9043
        %v9335 = vadd.f32 %v7220, %v9045
        %v9336 = vadd.f32 %v7225, %v9047
        %v9337 = vadd.f32 %v7228, %v9049
        %v9338 = vadd.f32 %v7233, %v9051
        %v9339 = vadd.f32 %v7236, %v9053
        %v9340 = vadd.f32 %v7241, %v9055
        %v9341 = vadd.f32 %v7244, %v9057
        %v9342 = vadd.f32 %v7249, %v9059
        %v9343 = vadd.f32 %v7252, %v9061
        %v9344 = vadd.f32 %v7257, %v9063
        %v9345 = vadd.f32 %v7260, %v9065
        %v9346 = vadd.f32 %v7265, %v9067
        %v9347 = vadd.f32 %v7268, %v9069
        %v9348 = vadd.f32 %v7273, %v9071
        %v9349 = vadd.f32 %v7276, %v9073
        %v9350 = vadd.f32 %v7281, %v9075
        %v9351 = vadd.f32 %v7284, %v9077
        %v9352 = vadd.f32 %v7289, %v9079
        %v9353 = vadd.f32 %v7292, %v9081
        %v9491 = vrot.slane %v8123, 4
        %v9492 = vrot.slane %v8126, 4
        %v9493 = vsel %vm3002, %v9491, %v9492
        %v9494 = vrot.slane %v8131, 4
        %v9495 = vsel %vm3002, %v9492, %v9494
        %v9496 = vrot.slane %v8134, 4
        %v9497 = vsel %vm3002, %v9494, %v9496
        %v9498 = vrot.slane %v8139, 4
        %v9499 = vsel %vm3002, %v9496, %v9498
        %v9500 = vrot.slane %v8142, 4
        %v9501 = vsel %vm3002, %v9498, %v9500
        %v9502 = vrot.slane %v8147, 4
        %v9503 = vsel %vm3002, %v9500, %v9502
        %v9504 = vrot.slane %v8150, 4
        %v9505 = vsel %vm3002, %v9502, %v9504
        %v9506 = vrot.slane %v8155, 4
        %v9507 = vsel %vm3002, %v9504, %v9506
        %v9508 = vrot.slane %v8158, 4
        %v9509 = vsel %vm3002, %v9506, %v9508
        %v9510 = vrot.slane %v8163, 4
        %v9511 = vsel %vm3002, %v9508, %v9510
        %v9512 = vrot.slane %v8166, 4
        %v9513 = vsel %vm3002, %v9510, %v9512
        %v9514 = vrot.slane %v8171, 4
        %v9515 = vsel %vm3002, %v9512, %v9514
        %v9516 = vrot.slane %v8174, 4
        %v9517 = vsel %vm3002, %v9514, %v9516
        %v9518 = vrot.slane %v8179, 4
        %v9519 = vsel %vm3002, %v9516, %v9518
        %v9520 = vrot.slane %v8182, 4
        %v9521 = vsel %vm3002, %v9518, %v9520
        %v9522 = vrot.slane %v8187, 4
        %v9523 = vsel %vm3002, %v9520, %v9522
        %v9524 = vrot.slane %v8190, 4
        %v9525 = vsel %vm3002, %v9522, %v9524
        %v9526 = vrot.slane %v8195, 4
        %v9527 = vsel %vm3002, %v9524, %v9526
        %v9528 = vrot.slane %v8198, 4
        %v9529 = vsel %vm3002, %v9526, %v9528
        %v9530 = vrot.slane %v8203, 4
        %v9531 = vsel %vm3002, %v9528, %v9530
        %v9532 = vrot.slane %v8206, 4
        %v9533 = vsel %vm3002, %v9530, %v9532
        %v9534 = vrot.slane %v8211, 4
        %v9535 = vsel %vm3002, %v9532, %v9534
        %v9536 = vrot.slane %v8214, 4
        %v9537 = vsel %vm3002, %v9534, %v9536
        %v9538 = vrot.slane %v8219, 4
        %v9539 = vsel %vm3002, %v9536, %v9538
        %v9540 = vrot.slane %v8222, 4
        %v9541 = vsel %vm3002, %v9538, %v9540
        %v9542 = vrot.slane %v8227, 4
        %v9543 = vsel %vm3002, %v9540, %v9542
        %v9544 = vrot.slane %v8230, 4
        %v9545 = vsel %vm3002, %v9542, %v9544
        %v9546 = vrot.slane %v8235, 4
        %v9547 = vsel %vm3002, %v9544, %v9546
        %v9548 = vrot.slane %v8238, 4
        %v9549 = vsel %vm3002, %v9546, %v9548
        %v9550 = vrot.slane %v8243, 4
        %v9551 = vsel %vm3002, %v9548, %v9550
        %v9552 = vrot.slane %v8246, 4
        %v9553 = vsel %vm3002, %v9550, %v9552
        %v9554 = vrot.slane %v8251, 4
        %v9555 = vsel %vm3002, %v9552, %v9554
        %v9556 = vrot.slane %v8254, 4
        %v9557 = vsel %vm3002, %v9554, %v9556
        %v9558 = vrot.slane %v8259, 4
        %v9559 = vsel %vm3002, %v9556, %v9558
        %v9560 = vrot.slane %v8262, 4
        %v9561 = vsel %vm3002, %v9558, %v9560
        %v9562 = vrot.slane %v8267, 4
        %v9563 = vsel %vm3002, %v9560, %v9562
        %v9564 = vrot.slane %v8270, 4
        %v9565 = vsel %vm3002, %v9562, %v9564
        %v9566 = vrot.slane %v8275, 4
        %v9567 = vsel %vm3002, %v9564, %v9566
        %v9568 = vrot.slane %v8278, 4
        %v9569 = vsel %vm3002, %v9566, %v9568
        %v9570 = vrot.slane %v8283, 4
        %v9571 = vsel %vm3002, %v9568, %v9570
        %v9572 = vrot.slane %v8286, 4
        %v9573 = vsel %vm3002, %v9570, %v9572
        %v9574 = vrot.slane %v8291, 4
        %v9575 = vsel %vm3002, %v9572, %v9574
        %v9576 = vrot.slane %v8294, 4
        %v9577 = vsel %vm3002, %v9574, %v9576
        %v9578 = vrot.slane %v8299, 4
        %v9579 = vsel %vm3002, %v9576, %v9578
        %v9580 = vrot.slane %v8302, 4
        %v9581 = vsel %vm3002, %v9578, %v9580
        %v9582 = vrot.slane %v8307, 4
        %v9583 = vsel %vm3002, %v9580, %v9582
        %v9584 = vrot.slane %v8310, 4
        %v9585 = vsel %vm3002, %v9582, %v9584
        %v9586 = vrot.slane %v8315, 4
        %v9587 = vsel %vm3002, %v9584, %v9586
        %v9588 = vrot.slane %v8318, 4
        %v9589 = vsel %vm3002, %v9586, %v9588
        %v9590 = vrot.slane %v8323, 4
        %v9591 = vsel %vm3002, %v9588, %v9590
        %v9592 = vrot.slane %v8326, 4
        %v9593 = vsel %vm3002, %v9590, %v9592
        %v9594 = vrot.slane %v8331, 4
        %v9595 = vsel %vm3002, %v9592, %v9594
        %v9596 = vrot.slane %v8334, 4
        %v9597 = vsel %vm3002, %v9594, %v9596
        %v9598 = vrot.slane %v8339, 4
        %v9599 = vsel %vm3002, %v9596, %v9598
        %v9600 = vrot.slane %v8342, 4
        %v9601 = vsel %vm3002, %v9598, %v9600
        %v9602 = vrot.slane %v8347, 4
        %v9603 = vsel %vm3002, %v9600, %v9602
        %v9604 = vrot.slane %v8350, 4
        %v9605 = vsel %vm3002, %v9602, %v9604
        %v9606 = vrot.slane %v8355, 4
        %v9607 = vsel %vm3002, %v9604, %v9606
        %v9608 = vrot.slane %v8358, 4
        %v9609 = vsel %vm3002, %v9606, %v9608
        %v9610 = vrot.slane %v8363, 4
        %v9611 = vsel %vm3002, %v9608, %v9610
        %v9612 = vrot.slane %v8366, 4
        %v9613 = vsel %vm3002, %v9610, %v9612
        %v9614 = vrot.slane %v8371, 4
        %v9615 = vsel %vm3002, %v9612, %v9614
        %v9616 = vrot.slane %v8374, 4
        %v9617 = vsel %vm3002, %v9614, %v9616
        %v9618 = vrot.slane %v8379, 4
        %v9619 = vsel %vm3002, %v9616, %v9618
        %v9620 = vrot.slane %v8382, 4
        %v9621 = vsel %vm3002, %v9618, %v9620
        %v9622 = vrot.slane %v8387, 4
        %v9623 = vsel %vm3002, %v9620, %v9622
        %v9624 = vrot.slane %v8390, 4
        %v9625 = vsel %vm3002, %v9622, %v9624
        %v9626 = vrot.slane %v8395, 4
        %v9627 = vsel %vm3002, %v9624, %v9626
        %v9628 = vrot.slane %v8398, 4
        %v9629 = vsel %vm3002, %v9626, %v9628
        %v9630 = vrot.slane %v8403, 4
        %v9631 = vsel %vm3002, %v9628, %v9630
        %v9632 = vrot.slane %v8406, 4
        %v9633 = vsel %vm3002, %v9630, %v9632
        %v9634 = vrot.slane %v8411, 4
        %v9635 = vsel %vm3002, %v9632, %v9634
        %v9636 = vrot.slane %v8414, 4
        %v9637 = vsel %vm3002, %v9634, %v9636
        %v9638 = vrot.slane %v8419, 4
        %v9639 = vsel %vm3002, %v9636, %v9638
        %v9640 = vrot.slane %v8422, 4
        %v9641 = vsel %vm3002, %v9638, %v9640
        %v9642 = vrot.slane %v8427, 4
        %v9643 = vsel %vm3002, %v9640, %v9642
        %v9644 = vrot.slane %v8430, 4
        %v9645 = vsel %vm3002, %v9642, %v9644
        %v9646 = vrot.slane %v8435, 4
        %v9647 = vsel %vm3002, %v9644, %v9646
        %v9648 = vrot.slane %v8438, 4
        %v9649 = vsel %vm3002, %v9646, %v9648
        %v9650 = vrot.slane %v8443, 4
        %v9651 = vsel %vm3002, %v9648, %v9650
        %v9652 = vrot.slane %v8446, 4
        %v9653 = vsel %vm3002, %v9650, %v9652
        %v9654 = vrot.slane %v8451, 4
        %v9655 = vsel %vm3002, %v9652, %v9654
        %v9656 = vrot.slane %v8454, 4
        %v9657 = vsel %vm3002, %v9654, %v9656
        %v9658 = vrot.slane %v8459, 4
        %v9659 = vsel %vm3002, %v9656, %v9658
        %v9660 = vrot.slane %v8462, 4
        %v9661 = vsel %vm3002, %v9658, %v9660
        %v9662 = vrot.slane %v8467, 4
        %v9663 = vsel %vm3002, %v9660, %v9662
        %v9664 = vrot.slane %v8470, 4
        %v9665 = vsel %vm3002, %v9662, %v9664
        %v9666 = vrot.slane %v8475, 4
        %v9667 = vsel %vm3002, %v9664, %v9666
        %v9668 = vrot.slane %v8478, 4
        %v9669 = vsel %vm3002, %v9666, %v9668
        %v9670 = vrot.slane %v8483, 4
        %v9671 = vsel %vm3002, %v9668, %v9670
        %v9672 = vrot.slane %v8486, 4
        %v9673 = vsel %vm3002, %v9670, %v9672
        %v9674 = vrot.slane %v8491, 4
        %v9675 = vsel %vm3002, %v9672, %v9674
        %v9676 = vrot.slane %v8494, 4
        %v9677 = vsel %vm3002, %v9674, %v9676
        %v9678 = vrot.slane %v8499, 4
        %v9679 = vsel %vm3002, %v9676, %v9678
        %v9680 = vrot.slane %v8502, 4
        %v9681 = vsel %vm3002, %v9678, %v9680
        %v9682 = vrot.slane %v8507, 4
        %v9683 = vsel %vm3002, %v9680, %v9682
        %v9684 = vrot.slane %v8510, 4
        %v9685 = vsel %vm3002, %v9682, %v9684
        %v9686 = vrot.slane %v8515, 4
        %v9687 = vsel %vm3002, %v9684, %v9686
        %v9688 = vrot.slane %v8518, 4
        %v9689 = vsel %vm3002, %v9686, %v9688
        %v9690 = vrot.slane %v8523, 4
        %v9691 = vsel %vm3002, %v9688, %v9690
        %v9692 = vrot.slane %v8526, 4
        %v9693 = vsel %vm3002, %v9690, %v9692
        %v9694 = vrot.slane %v8531, 4
        %v9695 = vsel %vm3002, %v9692, %v9694
        %v9696 = vrot.slane %v8534, 4
        %v9697 = vsel %vm3002, %v9694, %v9696
        %v9698 = vrot.slane %v8539, 4
        %v9699 = vsel %vm3002, %v9696, %v9698
        %v9700 = vrot.slane %v8542, 4
        %v9701 = vsel %vm3002, %v9698, %v9700
        %v9702 = vrot.slane %v8547, 4
        %v9703 = vsel %vm3002, %v9700, %v9702
        %v9704 = vrot.slane %v8550, 4
        %v9705 = vsel %vm3002, %v9702, %v9704
        %v9706 = vrot.slane %v8555, 4
        %v9707 = vsel %vm3002, %v9704, %v9706
        %v9708 = vrot.slane %v8558, 4
        %v9709 = vsel %vm3002, %v9706, %v9708
        %v9710 = vrot.slane %v8563, 4
        %v9711 = vsel %vm3002, %v9708, %v9710
        %v9712 = vrot.slane %v8566, 4
        %v9713 = vsel %vm3002, %v9710, %v9712
        %v9714 = vrot.slane %v8571, 4
        %v9715 = vsel %vm3002, %v9712, %v9714
        %v9716 = vrot.slane %v8574, 4
        %v9717 = vsel %vm3002, %v9714, %v9716
        %v9718 = vrot.slane %v8579, 4
        %v9719 = vsel %vm3002, %v9716, %v9718
        %v9720 = vrot.slane %v8582, 4
        %v9721 = vsel %vm3002, %v9718, %v9720
        %v9722 = vrot.slane %v8587, 4
        %v9723 = vsel %vm3002, %v9720, %v9722
        %v9724 = vrot.slane %v8590, 4
        %v9725 = vsel %vm3002, %v9722, %v9724
        %v9726 = vrot.slane %v8595, 4
        %v9727 = vsel %vm3002, %v9724, %v9726
        %v9728 = vrot.slane %v8598, 4
        %v9729 = vsel %vm3002, %v9726, %v9728
        %v9730 = vrot.slane %v8603, 4
        %v9731 = vsel %vm3002, %v9728, %v9730
        %v9732 = vrot.slane %v8606, 4
        %v9733 = vsel %vm3002, %v9730, %v9732
        %v9734 = vrot.slane %v8611, 4
        %v9735 = vsel %vm3002, %v9732, %v9734
        %v9736 = vrot.slane %v8614, 4
        %v9737 = vsel %vm3002, %v9734, %v9736
        %v9738 = vrot.slane %v8619, 4
        %v9739 = vsel %vm3002, %v9736, %v9738
        %v9740 = vrot.slane %v8622, 4
        %v9741 = vsel %vm3002, %v9738, %v9740
        %v9742 = vrot.slane %v8627, 4
        %v9743 = vsel %vm3002, %v9740, %v9742
        %v9744 = vrot.slane %v8630, 4
        %v9745 = vsel %vm3002, %v9742, %v9744
        %v9746 = vrot.slane %v8635, 4
        %v9747 = vsel %vm3002, %v9744, %v9746
        %v9748 = vrot.slane %v8638, 4
        %v9749 = vsel %vm3002, %v9746, %v9748
        %v9750 = vrot.slane %v8643, 4
        %v9751 = vsel %vm3002, %v9748, %v9750
        %v9752 = vrot.slane %v8646, 4
        %v9753 = vsel %vm3002, %v9750, %v9752
        %v9754 = vrot.slane %v8651, 4
        %v9755 = vsel %vm3002, %v9752, %v9754
        %v9756 = vrot.slane %v8654, 4
        %v9757 = vsel %vm3002, %v9754, %v9756
        %v9758 = vrot.slane %v8659, 4
        %v9759 = vsel %vm3002, %v9756, %v9758
        %v9760 = vrot.slane %v8662, 4
        %v9761 = vsel %vm3002, %v9758, %v9760
        %v9762 = vrot.slane %v8667, 4
        %v9763 = vsel %vm3002, %v9760, %v9762
        %v9900 = vadd.f32 %v9218, %v9493
        %v9901 = vadd.f32 %v9219, %v9495
        %v9902 = vadd.f32 %v9220, %v9497
        %v9903 = vadd.f32 %v9221, %v9499
        %v9904 = vadd.f32 %v9222, %v9501
        %v9905 = vadd.f32 %v9223, %v9503
        %v9906 = vadd.f32 %v9224, %v9505
        %v9907 = vadd.f32 %v9225, %v9507
        %v9908 = vadd.f32 %v9226, %v9509
        %v9909 = vadd.f32 %v9227, %v9511
        %v9910 = vadd.f32 %v9228, %v9513
        %v9911 = vadd.f32 %v9229, %v9515
        %v9912 = vadd.f32 %v9230, %v9517
        %v9913 = vadd.f32 %v9231, %v9519
        %v9914 = vadd.f32 %v9232, %v9521
        %v9915 = vadd.f32 %v9233, %v9523
        %v9916 = vadd.f32 %v9234, %v9525
        %v9917 = vadd.f32 %v9235, %v9527
        %v9918 = vadd.f32 %v9236, %v9529
        %v9919 = vadd.f32 %v9237, %v9531
        %v9920 = vadd.f32 %v9238, %v9533
        %v9921 = vadd.f32 %v9239, %v9535
        %v9922 = vadd.f32 %v9240, %v9537
        %v9923 = vadd.f32 %v9241, %v9539
        %v9924 = vadd.f32 %v9242, %v9541
        %v9925 = vadd.f32 %v9243, %v9543
        %v9926 = vadd.f32 %v9244, %v9545
        %v9927 = vadd.f32 %v9245, %v9547
        %v9928 = vadd.f32 %v9246, %v9549
        %v9929 = vadd.f32 %v9247, %v9551
        %v9930 = vadd.f32 %v9248, %v9553
        %v9931 = vadd.f32 %v9249, %v9555
        %v9932 = vadd.f32 %v9250, %v9557
        %v9933 = vadd.f32 %v9251, %v9559
        %v9934 = vadd.f32 %v9252, %v9561
        %v9935 = vadd.f32 %v9253, %v9563
        %v9936 = vadd.f32 %v9254, %v9565
        %v9937 = vadd.f32 %v9255, %v9567
        %v9938 = vadd.f32 %v9256, %v9569
        %v9939 = vadd.f32 %v9257, %v9571
        %v9940 = vadd.f32 %v9258, %v9573
        %v9941 = vadd.f32 %v9259, %v9575
        %v9942 = vadd.f32 %v9260, %v9577
        %v9943 = vadd.f32 %v9261, %v9579
        %v9944 = vadd.f32 %v9262, %v9581
        %v9945 = vadd.f32 %v9263, %v9583
        %v9946 = vadd.f32 %v9264, %v9585
        %v9947 = vadd.f32 %v9265, %v9587
        %v9948 = vadd.f32 %v9266, %v9589
        %v9949 = vadd.f32 %v9267, %v9591
        %v9950 = vadd.f32 %v9268, %v9593
        %v9951 = vadd.f32 %v9269, %v9595
        %v9952 = vadd.f32 %v9270, %v9597
        %v9953 = vadd.f32 %v9271, %v9599
        %v9954 = vadd.f32 %v9272, %v9601
        %v9955 = vadd.f32 %v9273, %v9603
        %v9956 = vadd.f32 %v9274, %v9605
        %v9957 = vadd.f32 %v9275, %v9607
        %v9958 = vadd.f32 %v9276, %v9609
        %v9959 = vadd.f32 %v9277, %v9611
        %v9960 = vadd.f32 %v9278, %v9613
        %v9961 = vadd.f32 %v9279, %v9615
        %v9962 = vadd.f32 %v9280, %v9617
        %v9963 = vadd.f32 %v9281, %v9619
        %v9964 = vadd.f32 %v9282, %v9621
        %v9965 = vadd.f32 %v9283, %v9623
        %v9966 = vadd.f32 %v9284, %v9625
        %v9967 = vadd.f32 %v9285, %v9627
        %v9968 = vadd.f32 %v9286, %v9629
        %v9969 = vadd.f32 %v9287, %v9631
        %v9970 = vadd.f32 %v9288, %v9633
        %v9971 = vadd.f32 %v9289, %v9635
        %v9972 = vadd.f32 %v9290, %v9637
        %v9973 = vadd.f32 %v9291, %v9639
        %v9974 = vadd.f32 %v9292, %v9641
        %v9975 = vadd.f32 %v9293, %v9643
        %v9976 = vadd.f32 %v9294, %v9645
        %v9977 = vadd.f32 %v9295, %v9647
        %v9978 = vadd.f32 %v9296, %v9649
        %v9979 = vadd.f32 %v9297, %v9651
        %v9980 = vadd.f32 %v9298, %v9653
        %v9981 = vadd.f32 %v9299, %v9655
        %v9982 = vadd.f32 %v9300, %v9657
        %v9983 = vadd.f32 %v9301, %v9659
        %v9984 = vadd.f32 %v9302, %v9661
        %v9985 = vadd.f32 %v9303, %v9663
        %v9986 = vadd.f32 %v9304, %v9665
        %v9987 = vadd.f32 %v9305, %v9667
        %v9988 = vadd.f32 %v9306, %v9669
        %v9989 = vadd.f32 %v9307, %v9671
        %v9990 = vadd.f32 %v9308, %v9673
        %v9991 = vadd.f32 %v9309, %v9675
        %v9992 = vadd.f32 %v9310, %v9677
        %v9993 = vadd.f32 %v9311, %v9679
        %v9994 = vadd.f32 %v9312, %v9681
        %v9995 = vadd.f32 %v9313, %v9683
        %v9996 = vadd.f32 %v9314, %v9685
        %v9997 = vadd.f32 %v9315, %v9687
        %v9998 = vadd.f32 %v9316, %v9689
        %v9999 = vadd.f32 %v9317, %v9691
        %v10000 = vadd.f32 %v9318, %v9693
        %v10001 = vadd.f32 %v9319, %v9695
        %v10002 = vadd.f32 %v9320, %v9697
        %v10003 = vadd.f32 %v9321, %v9699
        %v10004 = vadd.f32 %v9322, %v9701
        %v10005 = vadd.f32 %v9323, %v9703
        %v10006 = vadd.f32 %v9324, %v9705
        %v10007 = vadd.f32 %v9325, %v9707
        %v10008 = vadd.f32 %v9326, %v9709
        %v10009 = vadd.f32 %v9327, %v9711
        %v10010 = vadd.f32 %v9328, %v9713
        %v10011 = vadd.f32 %v9329, %v9715
        %v10012 = vadd.f32 %v9330, %v9717
        %v10013 = vadd.f32 %v9331, %v9719
        %v10014 = vadd.f32 %v9332, %v9721
        %v10015 = vadd.f32 %v9333, %v9723
        %v10016 = vadd.f32 %v9334, %v9725
        %v10017 = vadd.f32 %v9335, %v9727
        %v10018 = vadd.f32 %v9336, %v9729
        %v10019 = vadd.f32 %v9337, %v9731
        %v10020 = vadd.f32 %v9338, %v9733
        %v10021 = vadd.f32 %v9339, %v9735
        %v10022 = vadd.f32 %v9340, %v9737
        %v10023 = vadd.f32 %v9341, %v9739
        %v10024 = vadd.f32 %v9342, %v9741
        %v10025 = vadd.f32 %v9343, %v9743
        %v10026 = vadd.f32 %v9344, %v9745
        %v10027 = vadd.f32 %v9345, %v9747
        %v10028 = vadd.f32 %v9346, %v9749
        %v10029 = vadd.f32 %v9347, %v9751
        %v10030 = vadd.f32 %v9348, %v9753
        %v10031 = vadd.f32 %v9349, %v9755
        %v10032 = vadd.f32 %v9350, %v9757
        %v10033 = vadd.f32 %v9351, %v9759
        %v10034 = vadd.f32 %v9352, %v9761
        %v10035 = vadd.f32 %v9353, %v9763
        %v10037 = vadd.f32 %v7297, %v9080
        %v10039 = vadd.f32 %v10037, %v9762
        %10177 = vrot.lane.b32.xlu0 %v9900, 120
        %v10178 = vpop.permute.xlu0 %10177
        %10179 = vrot.lane.b32.xlu0 %v9901, 120
        %v10180 = vpop.permute.xlu0 %10179
        %10181 = vrot.lane.b32.xlu0 %v9902, 120
        %v10182 = vpop.permute.xlu0 %10181
        %10183 = vrot.lane.b32.xlu0 %v9903, 120
        %v10184 = vpop.permute.xlu0 %10183
        %10185 = vrot.lane.b32.xlu0 %v9904, 120
        %v10186 = vpop.permute.xlu0 %10185
        %10187 = vrot.lane.b32.xlu0 %v9905, 120
        %v10188 = vpop.permute.xlu0 %10187
        %10189 = vrot.lane.b32.xlu0 %v9906, 120
        %v10190 = vpop.permute.xlu0 %10189
        %10191 = vrot.lane.b32.xlu0 %v9907, 120
        %v10192 = vpop.permute.xlu0 %10191
        %10193 = vrot.lane.b32.xlu0 %v9908, 120
        %v10194 = vpop.permute.xlu0 %10193
        %10195 = vrot.lane.b32.xlu0 %v9909, 120
        %v10196 = vpop.permute.xlu0 %10195
        %10197 = vrot.lane.b32.xlu0 %v9910, 120
        %v10198 = vpop.permute.xlu0 %10197
        %10199 = vrot.lane.b32.xlu0 %v9911, 120
        %v10200 = vpop.permute.xlu0 %10199
        %10201 = vrot.lane.b32.xlu0 %v9912, 120
        %v10202 = vpop.permute.xlu0 %10201
        %10203 = vrot.lane.b32.xlu0 %v9913, 120
        %v10204 = vpop.permute.xlu0 %10203
        %10205 = vrot.lane.b32.xlu0 %v9914, 120
        %v10206 = vpop.permute.xlu0 %10205
        %10207 = vrot.lane.b32.xlu0 %v9915, 120
        %v10208 = vpop.permute.xlu0 %10207
        %10209 = vrot.lane.b32.xlu0 %v9916, 120
        %v10210 = vpop.permute.xlu0 %10209
        %10211 = vrot.lane.b32.xlu0 %v9917, 120
        %v10212 = vpop.permute.xlu0 %10211
        %10213 = vrot.lane.b32.xlu0 %v9918, 120
        %v10214 = vpop.permute.xlu0 %10213
        %10215 = vrot.lane.b32.xlu0 %v9919, 120
        %v10216 = vpop.permute.xlu0 %10215
        %10217 = vrot.lane.b32.xlu0 %v9920, 120
        %v10218 = vpop.permute.xlu0 %10217
        %10219 = vrot.lane.b32.xlu0 %v9921, 120
        %v10220 = vpop.permute.xlu0 %10219
        %10221 = vrot.lane.b32.xlu0 %v9922, 120
        %v10222 = vpop.permute.xlu0 %10221
        %10223 = vrot.lane.b32.xlu0 %v9923, 120
        %v10224 = vpop.permute.xlu0 %10223
        %10225 = vrot.lane.b32.xlu0 %v9924, 120
        %v10226 = vpop.permute.xlu0 %10225
        %10227 = vrot.lane.b32.xlu0 %v9925, 120
        %v10228 = vpop.permute.xlu0 %10227
        %10229 = vrot.lane.b32.xlu0 %v9926, 120
        %v10230 = vpop.permute.xlu0 %10229
        %10231 = vrot.lane.b32.xlu0 %v9927, 120
        %v10232 = vpop.permute.xlu0 %10231
        %10233 = vrot.lane.b32.xlu0 %v9928, 120
        %v10234 = vpop.permute.xlu0 %10233
        %10235 = vrot.lane.b32.xlu0 %v9929, 120
        %v10236 = vpop.permute.xlu0 %10235
        %10237 = vrot.lane.b32.xlu0 %v9930, 120
        %v10238 = vpop.permute.xlu0 %10237
        %10239 = vrot.lane.b32.xlu0 %v9931, 120
        %v10240 = vpop.permute.xlu0 %10239
        %10241 = vrot.lane.b32.xlu0 %v9932, 120
        %v10242 = vpop.permute.xlu0 %10241
        %10243 = vrot.lane.b32.xlu0 %v9933, 120
        %v10244 = vpop.permute.xlu0 %10243
        %10245 = vrot.lane.b32.xlu0 %v9934, 120
        %v10246 = vpop.permute.xlu0 %10245
        %10247 = vrot.lane.b32.xlu0 %v9935, 120
        %v10248 = vpop.permute.xlu0 %10247
        %10249 = vrot.lane.b32.xlu0 %v9936, 120
        %v10250 = vpop.permute.xlu0 %10249
        %10251 = vrot.lane.b32.xlu0 %v9937, 120
        %v10252 = vpop.permute.xlu0 %10251
        %10253 = vrot.lane.b32.xlu0 %v9938, 120
        %v10254 = vpop.permute.xlu0 %10253
        %10255 = vrot.lane.b32.xlu0 %v9939, 120
        %v10256 = vpop.permute.xlu0 %10255
        %10257 = vrot.lane.b32.xlu0 %v9940, 120
        %v10258 = vpop.permute.xlu0 %10257
        %10259 = vrot.lane.b32.xlu0 %v9941, 120
        %v10260 = vpop.permute.xlu0 %10259
        %10261 = vrot.lane.b32.xlu0 %v9942, 120
        %v10262 = vpop.permute.xlu0 %10261
        %10263 = vrot.lane.b32.xlu0 %v9943, 120
        %v10264 = vpop.permute.xlu0 %10263
        %10265 = vrot.lane.b32.xlu0 %v9944, 120
        %v10266 = vpop.permute.xlu0 %10265
        %10267 = vrot.lane.b32.xlu0 %v9945, 120
        %v10268 = vpop.permute.xlu0 %10267
        %10269 = vrot.lane.b32.xlu0 %v9946, 120
        %v10270 = vpop.permute.xlu0 %10269
        %10271 = vrot.lane.b32.xlu0 %v9947, 120
        %v10272 = vpop.permute.xlu0 %10271
        %10273 = vrot.lane.b32.xlu0 %v9948, 120
        %v10274 = vpop.permute.xlu0 %10273
        %10275 = vrot.lane.b32.xlu0 %v9949, 120
        %v10276 = vpop.permute.xlu0 %10275
        %10277 = vrot.lane.b32.xlu0 %v9950, 120
        %v10278 = vpop.permute.xlu0 %10277
        %10279 = vrot.lane.b32.xlu0 %v9951, 120
        %v10280 = vpop.permute.xlu0 %10279
        %10281 = vrot.lane.b32.xlu0 %v9952, 120
        %v10282 = vpop.permute.xlu0 %10281
        %10283 = vrot.lane.b32.xlu0 %v9953, 120
        %v10284 = vpop.permute.xlu0 %10283
        %10285 = vrot.lane.b32.xlu0 %v9954, 120
        %v10286 = vpop.permute.xlu0 %10285
        %10287 = vrot.lane.b32.xlu0 %v9955, 120
        %v10288 = vpop.permute.xlu0 %10287
        %10289 = vrot.lane.b32.xlu0 %v9956, 120
        %v10290 = vpop.permute.xlu0 %10289
        %10291 = vrot.lane.b32.xlu0 %v9957, 120
        %v10292 = vpop.permute.xlu0 %10291
        %10293 = vrot.lane.b32.xlu0 %v9958, 120
        %v10294 = vpop.permute.xlu0 %10293
        %10295 = vrot.lane.b32.xlu0 %v9959, 120
        %v10296 = vpop.permute.xlu0 %10295
        %10297 = vrot.lane.b32.xlu0 %v9960, 120
        %v10298 = vpop.permute.xlu0 %10297
        %10299 = vrot.lane.b32.xlu0 %v9961, 120
        %v10300 = vpop.permute.xlu0 %10299
        %10301 = vrot.lane.b32.xlu0 %v9962, 120
        %v10302 = vpop.permute.xlu0 %10301
        %10303 = vrot.lane.b32.xlu0 %v9963, 120
        %v10304 = vpop.permute.xlu0 %10303
        %10305 = vrot.lane.b32.xlu0 %v9964, 120
        %v10306 = vpop.permute.xlu0 %10305
        %10307 = vrot.lane.b32.xlu0 %v9965, 120
        %v10308 = vpop.permute.xlu0 %10307
        %10309 = vrot.lane.b32.xlu0 %v9966, 120
        %v10310 = vpop.permute.xlu0 %10309
        %10311 = vrot.lane.b32.xlu0 %v9967, 120
        %v10312 = vpop.permute.xlu0 %10311
        %10313 = vrot.lane.b32.xlu0 %v9968, 120
        %v10314 = vpop.permute.xlu0 %10313
        %10315 = vrot.lane.b32.xlu0 %v9969, 120
        %v10316 = vpop.permute.xlu0 %10315
        %10317 = vrot.lane.b32.xlu0 %v9970, 120
        %v10318 = vpop.permute.xlu0 %10317
        %10319 = vrot.lane.b32.xlu0 %v9971, 120
        %v10320 = vpop.permute.xlu0 %10319
        %10321 = vrot.lane.b32.xlu0 %v9972, 120
        %v10322 = vpop.permute.xlu0 %10321
        %10323 = vrot.lane.b32.xlu0 %v9973, 120
        %v10324 = vpop.permute.xlu0 %10323
        %10325 = vrot.lane.b32.xlu0 %v9974, 120
        %v10326 = vpop.permute.xlu0 %10325
        %10327 = vrot.lane.b32.xlu0 %v9975, 120
        %v10328 = vpop.permute.xlu0 %10327
        %10329 = vrot.lane.b32.xlu0 %v9976, 120
        %v10330 = vpop.permute.xlu0 %10329
        %10331 = vrot.lane.b32.xlu0 %v9977, 120
        %v10332 = vpop.permute.xlu0 %10331
        %10333 = vrot.lane.b32.xlu0 %v9978, 120
        %v10334 = vpop.permute.xlu0 %10333
        %10335 = vrot.lane.b32.xlu0 %v9979, 120
        %v10336 = vpop.permute.xlu0 %10335
        %10337 = vrot.lane.b32.xlu0 %v9980, 120
        %v10338 = vpop.permute.xlu0 %10337
        %10339 = vrot.lane.b32.xlu0 %v9981, 120
        %v10340 = vpop.permute.xlu0 %10339
        %10341 = vrot.lane.b32.xlu0 %v9982, 120
        %v10342 = vpop.permute.xlu0 %10341
        %10343 = vrot.lane.b32.xlu0 %v9983, 120
        %v10344 = vpop.permute.xlu0 %10343
        %10345 = vrot.lane.b32.xlu0 %v9984, 120
        %v10346 = vpop.permute.xlu0 %10345
        %10347 = vrot.lane.b32.xlu0 %v9985, 120
        %v10348 = vpop.permute.xlu0 %10347
        %10349 = vrot.lane.b32.xlu0 %v9986, 120
        %v10350 = vpop.permute.xlu0 %10349
        %10351 = vrot.lane.b32.xlu0 %v9987, 120
        %v10352 = vpop.permute.xlu0 %10351
        %10353 = vrot.lane.b32.xlu0 %v9988, 120
        %v10354 = vpop.permute.xlu0 %10353
        %10355 = vrot.lane.b32.xlu0 %v9989, 120
        %v10356 = vpop.permute.xlu0 %10355
        %10357 = vrot.lane.b32.xlu0 %v9990, 120
        %v10358 = vpop.permute.xlu0 %10357
        %10359 = vrot.lane.b32.xlu0 %v9991, 120
        %v10360 = vpop.permute.xlu0 %10359
        %10361 = vrot.lane.b32.xlu0 %v9992, 120
        %v10362 = vpop.permute.xlu0 %10361
        %10363 = vrot.lane.b32.xlu0 %v9993, 120
        %v10364 = vpop.permute.xlu0 %10363
        %10365 = vrot.lane.b32.xlu0 %v9994, 120
        %v10366 = vpop.permute.xlu0 %10365
        %10367 = vrot.lane.b32.xlu0 %v9995, 120
        %v10368 = vpop.permute.xlu0 %10367
        %10369 = vrot.lane.b32.xlu0 %v9996, 120
        %v10370 = vpop.permute.xlu0 %10369
        %10371 = vrot.lane.b32.xlu0 %v9997, 120
        %v10372 = vpop.permute.xlu0 %10371
        %10373 = vrot.lane.b32.xlu0 %v9998, 120
        %v10374 = vpop.permute.xlu0 %10373
        %10375 = vrot.lane.b32.xlu0 %v9999, 120
        %v10376 = vpop.permute.xlu0 %10375
        %10377 = vrot.lane.b32.xlu0 %v10000, 120
        %v10378 = vpop.permute.xlu0 %10377
        %10379 = vrot.lane.b32.xlu0 %v10001, 120
        %v10380 = vpop.permute.xlu0 %10379
        %10381 = vrot.lane.b32.xlu0 %v10002, 120
        %v10382 = vpop.permute.xlu0 %10381
        %10383 = vrot.lane.b32.xlu0 %v10003, 120
        %v10384 = vpop.permute.xlu0 %10383
        %10385 = vrot.lane.b32.xlu0 %v10004, 120
        %v10386 = vpop.permute.xlu0 %10385
        %10387 = vrot.lane.b32.xlu0 %v10005, 120
        %v10388 = vpop.permute.xlu0 %10387
        %10389 = vrot.lane.b32.xlu0 %v10006, 120
        %v10390 = vpop.permute.xlu0 %10389
        %10391 = vrot.lane.b32.xlu0 %v10007, 120
        %v10392 = vpop.permute.xlu0 %10391
        %10393 = vrot.lane.b32.xlu0 %v10008, 120
        %v10394 = vpop.permute.xlu0 %10393
        %10395 = vrot.lane.b32.xlu0 %v10009, 120
        %v10396 = vpop.permute.xlu0 %10395
        %10397 = vrot.lane.b32.xlu0 %v10010, 120
        %v10398 = vpop.permute.xlu0 %10397
        %10399 = vrot.lane.b32.xlu0 %v10011, 120
        %v10400 = vpop.permute.xlu0 %10399
        %10401 = vrot.lane.b32.xlu0 %v10012, 120
        %v10402 = vpop.permute.xlu0 %10401
        %10403 = vrot.lane.b32.xlu0 %v10013, 120
        %v10404 = vpop.permute.xlu0 %10403
        %10405 = vrot.lane.b32.xlu0 %v10014, 120
        %v10406 = vpop.permute.xlu0 %10405
        %10407 = vrot.lane.b32.xlu0 %v10015, 120
        %v10408 = vpop.permute.xlu0 %10407
        %10409 = vrot.lane.b32.xlu0 %v10016, 120
        %v10410 = vpop.permute.xlu0 %10409
        %10411 = vrot.lane.b32.xlu0 %v10017, 120
        %v10412 = vpop.permute.xlu0 %10411
        %10413 = vrot.lane.b32.xlu0 %v10018, 120
        %v10414 = vpop.permute.xlu0 %10413
        %10415 = vrot.lane.b32.xlu0 %v10019, 120
        %v10416 = vpop.permute.xlu0 %10415
        %10417 = vrot.lane.b32.xlu0 %v10020, 120
        %v10418 = vpop.permute.xlu0 %10417
        %10419 = vrot.lane.b32.xlu0 %v10021, 120
        %v10420 = vpop.permute.xlu0 %10419
        %10421 = vrot.lane.b32.xlu0 %v10022, 120
        %v10422 = vpop.permute.xlu0 %10421
        %10423 = vrot.lane.b32.xlu0 %v10023, 120
        %v10424 = vpop.permute.xlu0 %10423
        %10425 = vrot.lane.b32.xlu0 %v10024, 120
        %v10426 = vpop.permute.xlu0 %10425
        %10427 = vrot.lane.b32.xlu0 %v10025, 120
        %v10428 = vpop.permute.xlu0 %10427
        %10429 = vrot.lane.b32.xlu0 %v10026, 120
        %v10430 = vpop.permute.xlu0 %10429
        %10431 = vrot.lane.b32.xlu0 %v10027, 120
        %v10432 = vpop.permute.xlu0 %10431
        %10433 = vrot.lane.b32.xlu0 %v10028, 120
        %v10434 = vpop.permute.xlu0 %10433
        %10435 = vrot.lane.b32.xlu0 %v10029, 120
        %v10436 = vpop.permute.xlu0 %10435
        %10437 = vrot.lane.b32.xlu0 %v10030, 120
        %v10438 = vpop.permute.xlu0 %10437
        %10439 = vrot.lane.b32.xlu0 %v10031, 120
        %v10440 = vpop.permute.xlu0 %10439
        %10441 = vrot.lane.b32.xlu0 %v10032, 120
        %v10442 = vpop.permute.xlu0 %10441
        %10443 = vrot.lane.b32.xlu0 %v10033, 120
        %v10444 = vpop.permute.xlu0 %10443
        %10445 = vrot.lane.b32.xlu0 %v10034, 120
        %v10446 = vpop.permute.xlu0 %10445
        %10447 = vrot.lane.b32.xlu0 %v10035, 120
        %v10448 = vpop.permute.xlu0 %10447
        %10449 = vrot.lane.b32.xlu0 %v10039, 120
        %v10450 = vpop.permute.xlu0 %10449
        %v10725 = vrot.slane %v10178, 1
        %v10726 = vrot.slane %v10180, 1
        %v10727 = vsel %vm2271, %v10725, %v10726
        %v10728 = vrot.slane %v10182, 1
        %v10729 = vsel %vm2271, %v10726, %v10728
        %v10730 = vrot.slane %v10184, 1
        %v10731 = vsel %vm2271, %v10728, %v10730
        %v10732 = vrot.slane %v10186, 1
        %v10733 = vsel %vm2271, %v10730, %v10732
        %v10734 = vrot.slane %v10188, 1
        %v10735 = vsel %vm2271, %v10732, %v10734
        %v10736 = vrot.slane %v10190, 1
        %v10737 = vsel %vm2271, %v10734, %v10736
        %v10738 = vrot.slane %v10192, 1
        %v10739 = vsel %vm2271, %v10736, %v10738
        %v10740 = vrot.slane %v10194, 1
        %v10741 = vsel %vm2271, %v10738, %v10740
        %v10742 = vrot.slane %v10196, 1
        %v10743 = vsel %vm2271, %v10740, %v10742
        %v10744 = vrot.slane %v10198, 1
        %v10745 = vsel %vm2271, %v10742, %v10744
        %v10746 = vrot.slane %v10200, 1
        %v10747 = vsel %vm2271, %v10744, %v10746
        %v10748 = vrot.slane %v10202, 1
        %v10749 = vsel %vm2271, %v10746, %v10748
        %v10750 = vrot.slane %v10204, 1
        %v10751 = vsel %vm2271, %v10748, %v10750
        %v10752 = vrot.slane %v10206, 1
        %v10753 = vsel %vm2271, %v10750, %v10752
        %v10754 = vrot.slane %v10208, 1
        %v10755 = vsel %vm2271, %v10752, %v10754
        %v10756 = vrot.slane %v10210, 1
        %v10757 = vsel %vm2271, %v10754, %v10756
        %v10758 = vrot.slane %v10212, 1
        %v10759 = vsel %vm2271, %v10756, %v10758
        %v10760 = vrot.slane %v10214, 1
        %v10761 = vsel %vm2271, %v10758, %v10760
        %v10762 = vrot.slane %v10216, 1
        %v10763 = vsel %vm2271, %v10760, %v10762
        %v10764 = vrot.slane %v10218, 1
        %v10765 = vsel %vm2271, %v10762, %v10764
        %v10766 = vrot.slane %v10220, 1
        %v10767 = vsel %vm2271, %v10764, %v10766
        %v10768 = vrot.slane %v10222, 1
        %v10769 = vsel %vm2271, %v10766, %v10768
        %v10770 = vrot.slane %v10224, 1
        %v10771 = vsel %vm2271, %v10768, %v10770
        %v10772 = vrot.slane %v10226, 1
        %v10773 = vsel %vm2271, %v10770, %v10772
        %v10774 = vrot.slane %v10228, 1
        %v10775 = vsel %vm2271, %v10772, %v10774
        %v10776 = vrot.slane %v10230, 1
        %v10777 = vsel %vm2271, %v10774, %v10776
        %v10778 = vrot.slane %v10232, 1
        %v10779 = vsel %vm2271, %v10776, %v10778
        %v10780 = vrot.slane %v10234, 1
        %v10781 = vsel %vm2271, %v10778, %v10780
        %v10782 = vrot.slane %v10236, 1
        %v10783 = vsel %vm2271, %v10780, %v10782
        %v10784 = vrot.slane %v10238, 1
        %v10785 = vsel %vm2271, %v10782, %v10784
        %v10786 = vrot.slane %v10240, 1
        %v10787 = vsel %vm2271, %v10784, %v10786
        %v10788 = vrot.slane %v10242, 1
        %v10789 = vsel %vm2271, %v10786, %v10788
        %v10790 = vrot.slane %v10244, 1
        %v10791 = vsel %vm2271, %v10788, %v10790
        %v10792 = vrot.slane %v10246, 1
        %v10793 = vsel %vm2271, %v10790, %v10792
        %v10794 = vrot.slane %v10248, 1
        %v10795 = vsel %vm2271, %v10792, %v10794
        %v10796 = vrot.slane %v10250, 1
        %v10797 = vsel %vm2271, %v10794, %v10796
        %v10798 = vrot.slane %v10252, 1
        %v10799 = vsel %vm2271, %v10796, %v10798
        %v10800 = vrot.slane %v10254, 1
        %v10801 = vsel %vm2271, %v10798, %v10800
        %v10802 = vrot.slane %v10256, 1
        %v10803 = vsel %vm2271, %v10800, %v10802
        %v10804 = vrot.slane %v10258, 1
        %v10805 = vsel %vm2271, %v10802, %v10804
        %v10806 = vrot.slane %v10260, 1
        %v10807 = vsel %vm2271, %v10804, %v10806
        %v10808 = vrot.slane %v10262, 1
        %v10809 = vsel %vm2271, %v10806, %v10808
        %v10810 = vrot.slane %v10264, 1
        %v10811 = vsel %vm2271, %v10808, %v10810
        %v10812 = vrot.slane %v10266, 1
        %v10813 = vsel %vm2271, %v10810, %v10812
        %v10814 = vrot.slane %v10268, 1
        %v10815 = vsel %vm2271, %v10812, %v10814
        %v10816 = vrot.slane %v10270, 1
        %v10817 = vsel %vm2271, %v10814, %v10816
        %v10818 = vrot.slane %v10272, 1
        %v10819 = vsel %vm2271, %v10816, %v10818
        %v10820 = vrot.slane %v10274, 1
        %v10821 = vsel %vm2271, %v10818, %v10820
        %v10822 = vrot.slane %v10276, 1
        %v10823 = vsel %vm2271, %v10820, %v10822
        %v10824 = vrot.slane %v10278, 1
        %v10825 = vsel %vm2271, %v10822, %v10824
        %v10826 = vrot.slane %v10280, 1
        %v10827 = vsel %vm2271, %v10824, %v10826
        %v10828 = vrot.slane %v10282, 1
        %v10829 = vsel %vm2271, %v10826, %v10828
        %v10830 = vrot.slane %v10284, 1
        %v10831 = vsel %vm2271, %v10828, %v10830
        %v10832 = vrot.slane %v10286, 1
        %v10833 = vsel %vm2271, %v10830, %v10832
        %v10834 = vrot.slane %v10288, 1
        %v10835 = vsel %vm2271, %v10832, %v10834
        %v10836 = vrot.slane %v10290, 1
        %v10837 = vsel %vm2271, %v10834, %v10836
        %v10838 = vrot.slane %v10292, 1
        %v10839 = vsel %vm2271, %v10836, %v10838
        %v10840 = vrot.slane %v10294, 1
        %v10841 = vsel %vm2271, %v10838, %v10840
        %v10842 = vrot.slane %v10296, 1
        %v10843 = vsel %vm2271, %v10840, %v10842
        %v10844 = vrot.slane %v10298, 1
        %v10845 = vsel %vm2271, %v10842, %v10844
        %v10846 = vrot.slane %v10300, 1
        %v10847 = vsel %vm2271, %v10844, %v10846
        %v10848 = vrot.slane %v10302, 1
        %v10849 = vsel %vm2271, %v10846, %v10848
        %v10850 = vrot.slane %v10304, 1
        %v10851 = vsel %vm2271, %v10848, %v10850
        %v10852 = vrot.slane %v10306, 1
        %v10853 = vsel %vm2271, %v10850, %v10852
        %v10854 = vrot.slane %v10308, 1
        %v10855 = vsel %vm2271, %v10852, %v10854
        %v10856 = vrot.slane %v10310, 1
        %v10857 = vsel %vm2271, %v10854, %v10856
        %v10858 = vrot.slane %v10312, 1
        %v10859 = vsel %vm2271, %v10856, %v10858
        %v10860 = vrot.slane %v10314, 1
        %v10861 = vsel %vm2271, %v10858, %v10860
        %v10862 = vrot.slane %v10316, 1
        %v10863 = vsel %vm2271, %v10860, %v10862
        %v10864 = vrot.slane %v10318, 1
        %v10865 = vsel %vm2271, %v10862, %v10864
        %v10866 = vrot.slane %v10320, 1
        %v10867 = vsel %vm2271, %v10864, %v10866
        %v10868 = vrot.slane %v10322, 1
        %v10869 = vsel %vm2271, %v10866, %v10868
        %v10870 = vrot.slane %v10324, 1
        %v10871 = vsel %vm2271, %v10868, %v10870
        %v10872 = vrot.slane %v10326, 1
        %v10873 = vsel %vm2271, %v10870, %v10872
        %v10874 = vrot.slane %v10328, 1
        %v10875 = vsel %vm2271, %v10872, %v10874
        %v10876 = vrot.slane %v10330, 1
        %v10877 = vsel %vm2271, %v10874, %v10876
        %v10878 = vrot.slane %v10332, 1
        %v10879 = vsel %vm2271, %v10876, %v10878
        %v10880 = vrot.slane %v10334, 1
        %v10881 = vsel %vm2271, %v10878, %v10880
        %v10882 = vrot.slane %v10336, 1
        %v10883 = vsel %vm2271, %v10880, %v10882
        %v10884 = vrot.slane %v10338, 1
        %v10885 = vsel %vm2271, %v10882, %v10884
        %v10886 = vrot.slane %v10340, 1
        %v10887 = vsel %vm2271, %v10884, %v10886
        %v10888 = vrot.slane %v10342, 1
        %v10889 = vsel %vm2271, %v10886, %v10888
        %v10890 = vrot.slane %v10344, 1
        %v10891 = vsel %vm2271, %v10888, %v10890
        %v10892 = vrot.slane %v10346, 1
        %v10893 = vsel %vm2271, %v10890, %v10892
        %v10894 = vrot.slane %v10348, 1
        %v10895 = vsel %vm2271, %v10892, %v10894
        %v10896 = vrot.slane %v10350, 1
        %v10897 = vsel %vm2271, %v10894, %v10896
        %v10898 = vrot.slane %v10352, 1
        %v10899 = vsel %vm2271, %v10896, %v10898
        %v10900 = vrot.slane %v10354, 1
        %v10901 = vsel %vm2271, %v10898, %v10900
        %v10902 = vrot.slane %v10356, 1
        %v10903 = vsel %vm2271, %v10900, %v10902
        %v10904 = vrot.slane %v10358, 1
        %v10905 = vsel %vm2271, %v10902, %v10904
        %v10906 = vrot.slane %v10360, 1
        %v10907 = vsel %vm2271, %v10904, %v10906
        %v10908 = vrot.slane %v10362, 1
        %v10909 = vsel %vm2271, %v10906, %v10908
        %v10910 = vrot.slane %v10364, 1
        %v10911 = vsel %vm2271, %v10908, %v10910
        %v10912 = vrot.slane %v10366, 1
        %v10913 = vsel %vm2271, %v10910, %v10912
        %v10914 = vrot.slane %v10368, 1
        %v10915 = vsel %vm2271, %v10912, %v10914
        %v10916 = vrot.slane %v10370, 1
        %v10917 = vsel %vm2271, %v10914, %v10916
        %v10918 = vrot.slane %v10372, 1
        %v10919 = vsel %vm2271, %v10916, %v10918
        %v10920 = vrot.slane %v10374, 1
        %v10921 = vsel %vm2271, %v10918, %v10920
        %v10922 = vrot.slane %v10376, 1
        %v10923 = vsel %vm2271, %v10920, %v10922
        %v10924 = vrot.slane %v10378, 1
        %v10925 = vsel %vm2271, %v10922, %v10924
        %v10926 = vrot.slane %v10380, 1
        %v10927 = vsel %vm2271, %v10924, %v10926
        %v10928 = vrot.slane %v10382, 1
        %v10929 = vsel %vm2271, %v10926, %v10928
        %v10930 = vrot.slane %v10384, 1
        %v10931 = vsel %vm2271, %v10928, %v10930
        %v10932 = vrot.slane %v10386, 1
        %v10933 = vsel %vm2271, %v10930, %v10932
        %v10934 = vrot.slane %v10388, 1
        %v10935 = vsel %vm2271, %v10932, %v10934
        %v10936 = vrot.slane %v10390, 1
        %v10937 = vsel %vm2271, %v10934, %v10936
        %v10938 = vrot.slane %v10392, 1
        %v10939 = vsel %vm2271, %v10936, %v10938
        %v10940 = vrot.slane %v10394, 1
        %v10941 = vsel %vm2271, %v10938, %v10940
        %v10942 = vrot.slane %v10396, 1
        %v10943 = vsel %vm2271, %v10940, %v10942
        %v10944 = vrot.slane %v10398, 1
        %v10945 = vsel %vm2271, %v10942, %v10944
        %v10946 = vrot.slane %v10400, 1
        %v10947 = vsel %vm2271, %v10944, %v10946
        %v10948 = vrot.slane %v10402, 1
        %v10949 = vsel %vm2271, %v10946, %v10948
        %v10950 = vrot.slane %v10404, 1
        %v10951 = vsel %vm2271, %v10948, %v10950
        %v10952 = vrot.slane %v10406, 1
        %v10953 = vsel %vm2271, %v10950, %v10952
        %v10954 = vrot.slane %v10408, 1
        %v10955 = vsel %vm2271, %v10952, %v10954
        %v10956 = vrot.slane %v10410, 1
        %v10957 = vsel %vm2271, %v10954, %v10956
        %v10958 = vrot.slane %v10412, 1
        %v10959 = vsel %vm2271, %v10956, %v10958
        %v10960 = vrot.slane %v10414, 1
        %v10961 = vsel %vm2271, %v10958, %v10960
        %v10962 = vrot.slane %v10416, 1
        %v10963 = vsel %vm2271, %v10960, %v10962
        %v10964 = vrot.slane %v10418, 1
        %v10965 = vsel %vm2271, %v10962, %v10964
        %v10966 = vrot.slane %v10420, 1
        %v10967 = vsel %vm2271, %v10964, %v10966
        %v10968 = vrot.slane %v10422, 1
        %v10969 = vsel %vm2271, %v10966, %v10968
        %v10970 = vrot.slane %v10424, 1
        %v10971 = vsel %vm2271, %v10968, %v10970
        %v10972 = vrot.slane %v10426, 1
        %v10973 = vsel %vm2271, %v10970, %v10972
        %v10974 = vrot.slane %v10428, 1
        %v10975 = vsel %vm2271, %v10972, %v10974
        %v10976 = vrot.slane %v10430, 1
        %v10977 = vsel %vm2271, %v10974, %v10976
        %v10978 = vrot.slane %v10432, 1
        %v10979 = vsel %vm2271, %v10976, %v10978
        %v10980 = vrot.slane %v10434, 1
        %v10981 = vsel %vm2271, %v10978, %v10980
        %v10982 = vrot.slane %v10436, 1
        %v10983 = vsel %vm2271, %v10980, %v10982
        %v10984 = vrot.slane %v10438, 1
        %v10985 = vsel %vm2271, %v10982, %v10984
        %v10986 = vrot.slane %v10440, 1
        %v10987 = vsel %vm2271, %v10984, %v10986
        %v10988 = vrot.slane %v10442, 1
        %v10989 = vsel %vm2271, %v10986, %v10988
        %v10990 = vrot.slane %v10444, 1
        %v10991 = vsel %vm2271, %v10988, %v10990
        %v10992 = vrot.slane %v10446, 1
        %v10993 = vsel %vm2271, %v10990, %v10992
        %v10994 = vrot.slane %v10448, 1
        %v10995 = vsel %vm2271, %v10992, %v10994
        %v10996 = vrot.slane %v10450, 1
        %v10997 = vsel %vm2271, %v10994, %v10996
        %v11134 = vadd.f32 %v9900, %v10727
        %v11135 = vadd.f32 %v9901, %v10729
        %v11136 = vadd.f32 %v9902, %v10731
        %v11137 = vadd.f32 %v9903, %v10733
        %v11138 = vadd.f32 %v9904, %v10735
        %v11139 = vadd.f32 %v9905, %v10737
        %v11140 = vadd.f32 %v9906, %v10739
        %v11141 = vadd.f32 %v9907, %v10741
        %v11142 = vadd.f32 %v9908, %v10743
        %v11143 = vadd.f32 %v9909, %v10745
        %v11144 = vadd.f32 %v9910, %v10747
        %v11145 = vadd.f32 %v9911, %v10749
        %v11146 = vadd.f32 %v9912, %v10751
        %v11147 = vadd.f32 %v9913, %v10753
        %v11148 = vadd.f32 %v9914, %v10755
        %v11149 = vadd.f32 %v9915, %v10757
        %v11150 = vadd.f32 %v9916, %v10759
        %v11151 = vadd.f32 %v9917, %v10761
        %v11152 = vadd.f32 %v9918, %v10763
        %v11153 = vadd.f32 %v9919, %v10765
        %v11154 = vadd.f32 %v9920, %v10767
        %v11155 = vadd.f32 %v9921, %v10769
        %v11156 = vadd.f32 %v9922, %v10771
        %v11157 = vadd.f32 %v9923, %v10773
        %v11158 = vadd.f32 %v9924, %v10775
        %v11159 = vadd.f32 %v9925, %v10777
        %v11160 = vadd.f32 %v9926, %v10779
        %v11161 = vadd.f32 %v9927, %v10781
        %v11162 = vadd.f32 %v9928, %v10783
        %v11163 = vadd.f32 %v9929, %v10785
        %v11164 = vadd.f32 %v9930, %v10787
        %v11165 = vadd.f32 %v9931, %v10789
        %v11166 = vadd.f32 %v9932, %v10791
        %v11167 = vadd.f32 %v9933, %v10793
        %v11168 = vadd.f32 %v9934, %v10795
        %v11169 = vadd.f32 %v9935, %v10797
        %v11170 = vadd.f32 %v9936, %v10799
        %v11171 = vadd.f32 %v9937, %v10801
        %v11172 = vadd.f32 %v9938, %v10803
        %v11173 = vadd.f32 %v9939, %v10805
        %v11174 = vadd.f32 %v9940, %v10807
        %v11175 = vadd.f32 %v9941, %v10809
        %v11176 = vadd.f32 %v9942, %v10811
        %v11177 = vadd.f32 %v9943, %v10813
        %v11178 = vadd.f32 %v9944, %v10815
        %v11179 = vadd.f32 %v9945, %v10817
        %v11180 = vadd.f32 %v9946, %v10819
        %v11181 = vadd.f32 %v9947, %v10821
        %v11182 = vadd.f32 %v9948, %v10823
        %v11183 = vadd.f32 %v9949, %v10825
        %v11184 = vadd.f32 %v9950, %v10827
        %v11185 = vadd.f32 %v9951, %v10829
        %v11186 = vadd.f32 %v9952, %v10831
        %v11187 = vadd.f32 %v9953, %v10833
        %v11188 = vadd.f32 %v9954, %v10835
        %v11189 = vadd.f32 %v9955, %v10837
        %v11190 = vadd.f32 %v9956, %v10839
        %v11191 = vadd.f32 %v9957, %v10841
        %v11192 = vadd.f32 %v9958, %v10843
        %v11193 = vadd.f32 %v9959, %v10845
        %v11194 = vadd.f32 %v9960, %v10847
        %v11195 = vadd.f32 %v9961, %v10849
        %v11196 = vadd.f32 %v9962, %v10851
        %v11197 = vadd.f32 %v9963, %v10853
        %v11198 = vadd.f32 %v9964, %v10855
        %v11199 = vadd.f32 %v9965, %v10857
        %v11200 = vadd.f32 %v9966, %v10859
        %v11201 = vadd.f32 %v9967, %v10861
        %v11202 = vadd.f32 %v9968, %v10863
        %v11203 = vadd.f32 %v9969, %v10865
        %v11204 = vadd.f32 %v9970, %v10867
        %v11205 = vadd.f32 %v9971, %v10869
        %v11206 = vadd.f32 %v9972, %v10871
        %v11207 = vadd.f32 %v9973, %v10873
        %v11208 = vadd.f32 %v9974, %v10875
        %v11209 = vadd.f32 %v9975, %v10877
        %v11210 = vadd.f32 %v9976, %v10879
        %v11211 = vadd.f32 %v9977, %v10881
        %v11212 = vadd.f32 %v9978, %v10883
        %v11213 = vadd.f32 %v9979, %v10885
        %v11214 = vadd.f32 %v9980, %v10887
        %v11215 = vadd.f32 %v9981, %v10889
        %v11216 = vadd.f32 %v9982, %v10891
        %v11217 = vadd.f32 %v9983, %v10893
        %v11218 = vadd.f32 %v9984, %v10895
        %v11219 = vadd.f32 %v9985, %v10897
        %v11220 = vadd.f32 %v9986, %v10899
        %v11221 = vadd.f32 %v9987, %v10901
        %v11222 = vadd.f32 %v9988, %v10903
        %v11223 = vadd.f32 %v9989, %v10905
        %v11224 = vadd.f32 %v9990, %v10907
        %v11225 = vadd.f32 %v9991, %v10909
        %v11226 = vadd.f32 %v9992, %v10911
        %v11227 = vadd.f32 %v9993, %v10913
        %v11228 = vadd.f32 %v9994, %v10915
        %v11229 = vadd.f32 %v9995, %v10917
        %v11230 = vadd.f32 %v9996, %v10919
        %v11231 = vadd.f32 %v9997, %v10921
        %v11232 = vadd.f32 %v9998, %v10923
        %v11233 = vadd.f32 %v9999, %v10925
        %v11234 = vadd.f32 %v10000, %v10927
        %v11235 = vadd.f32 %v10001, %v10929
        %v11236 = vadd.f32 %v10002, %v10931
        %v11237 = vadd.f32 %v10003, %v10933
        %v11238 = vadd.f32 %v10004, %v10935
        %v11239 = vadd.f32 %v10005, %v10937
        %v11240 = vadd.f32 %v10006, %v10939
        %v11241 = vadd.f32 %v10007, %v10941
        %v11242 = vadd.f32 %v10008, %v10943
        %v11243 = vadd.f32 %v10009, %v10945
        %v11244 = vadd.f32 %v10010, %v10947
        %v11245 = vadd.f32 %v10011, %v10949
        %v11246 = vadd.f32 %v10012, %v10951
        %v11247 = vadd.f32 %v10013, %v10953
        %v11248 = vadd.f32 %v10014, %v10955
        %v11249 = vadd.f32 %v10015, %v10957
        %v11250 = vadd.f32 %v10016, %v10959
        %v11251 = vadd.f32 %v10017, %v10961
        %v11252 = vadd.f32 %v10018, %v10963
        %v11253 = vadd.f32 %v10019, %v10965
        %v11254 = vadd.f32 %v10020, %v10967
        %v11255 = vadd.f32 %v10021, %v10969
        %v11256 = vadd.f32 %v10022, %v10971
        %v11257 = vadd.f32 %v10023, %v10973
        %v11258 = vadd.f32 %v10024, %v10975
        %v11259 = vadd.f32 %v10025, %v10977
        %v11260 = vadd.f32 %v10026, %v10979
        %v11261 = vadd.f32 %v10027, %v10981
        %v11262 = vadd.f32 %v10028, %v10983
        %v11263 = vadd.f32 %v10029, %v10985
        %v11264 = vadd.f32 %v10030, %v10987
        %v11265 = vadd.f32 %v10031, %v10989
        %v11266 = vadd.f32 %v10032, %v10991
        %v11267 = vadd.f32 %v10033, %v10993
        %v11268 = vadd.f32 %v10034, %v10995
        %v11269 = vadd.f32 %v10035, %v10997
        %11270 = vrot.lane.b32.xlu0 %v9900, 112
        %v11271 = vpop.permute.xlu0 %11270
        %11272 = vrot.lane.b32.xlu0 %v9901, 112
        %v11273 = vpop.permute.xlu0 %11272
        %11274 = vrot.lane.b32.xlu0 %v9902, 112
        %v11275 = vpop.permute.xlu0 %11274
        %11276 = vrot.lane.b32.xlu0 %v9903, 112
        %v11277 = vpop.permute.xlu0 %11276
        %11278 = vrot.lane.b32.xlu0 %v9904, 112
        %v11279 = vpop.permute.xlu0 %11278
        %11280 = vrot.lane.b32.xlu0 %v9905, 112
        %v11281 = vpop.permute.xlu0 %11280
        %11282 = vrot.lane.b32.xlu0 %v9906, 112
        %v11283 = vpop.permute.xlu0 %11282
        %11284 = vrot.lane.b32.xlu0 %v9907, 112
        %v11285 = vpop.permute.xlu0 %11284
        %11286 = vrot.lane.b32.xlu0 %v9908, 112
        %v11287 = vpop.permute.xlu0 %11286
        %11288 = vrot.lane.b32.xlu0 %v9909, 112
        %v11289 = vpop.permute.xlu0 %11288
        %11290 = vrot.lane.b32.xlu0 %v9910, 112
        %v11291 = vpop.permute.xlu0 %11290
        %11292 = vrot.lane.b32.xlu0 %v9911, 112
        %v11293 = vpop.permute.xlu0 %11292
        %11294 = vrot.lane.b32.xlu0 %v9912, 112
        %v11295 = vpop.permute.xlu0 %11294
        %11296 = vrot.lane.b32.xlu0 %v9913, 112
        %v11297 = vpop.permute.xlu0 %11296
        %11298 = vrot.lane.b32.xlu0 %v9914, 112
        %v11299 = vpop.permute.xlu0 %11298
        %11300 = vrot.lane.b32.xlu0 %v9915, 112
        %v11301 = vpop.permute.xlu0 %11300
        %11302 = vrot.lane.b32.xlu0 %v9916, 112
        %v11303 = vpop.permute.xlu0 %11302
        %11304 = vrot.lane.b32.xlu0 %v9917, 112
        %v11305 = vpop.permute.xlu0 %11304
        %11306 = vrot.lane.b32.xlu0 %v9918, 112
        %v11307 = vpop.permute.xlu0 %11306
        %11308 = vrot.lane.b32.xlu0 %v9919, 112
        %v11309 = vpop.permute.xlu0 %11308
        %11310 = vrot.lane.b32.xlu0 %v9920, 112
        %v11311 = vpop.permute.xlu0 %11310
        %11312 = vrot.lane.b32.xlu0 %v9921, 112
        %v11313 = vpop.permute.xlu0 %11312
        %11314 = vrot.lane.b32.xlu0 %v9922, 112
        %v11315 = vpop.permute.xlu0 %11314
        %11316 = vrot.lane.b32.xlu0 %v9923, 112
        %v11317 = vpop.permute.xlu0 %11316
        %11318 = vrot.lane.b32.xlu0 %v9924, 112
        %v11319 = vpop.permute.xlu0 %11318
        %11320 = vrot.lane.b32.xlu0 %v9925, 112
        %v11321 = vpop.permute.xlu0 %11320
        %11322 = vrot.lane.b32.xlu0 %v9926, 112
        %v11323 = vpop.permute.xlu0 %11322
        %11324 = vrot.lane.b32.xlu0 %v9927, 112
        %v11325 = vpop.permute.xlu0 %11324
        %11326 = vrot.lane.b32.xlu0 %v9928, 112
        %v11327 = vpop.permute.xlu0 %11326
        %11328 = vrot.lane.b32.xlu0 %v9929, 112
        %v11329 = vpop.permute.xlu0 %11328
        %11330 = vrot.lane.b32.xlu0 %v9930, 112
        %v11331 = vpop.permute.xlu0 %11330
        %11332 = vrot.lane.b32.xlu0 %v9931, 112
        %v11333 = vpop.permute.xlu0 %11332
        %11334 = vrot.lane.b32.xlu0 %v9932, 112
        %v11335 = vpop.permute.xlu0 %11334
        %11336 = vrot.lane.b32.xlu0 %v9933, 112
        %v11337 = vpop.permute.xlu0 %11336
        %11338 = vrot.lane.b32.xlu0 %v9934, 112
        %v11339 = vpop.permute.xlu0 %11338
        %11340 = vrot.lane.b32.xlu0 %v9935, 112
        %v11341 = vpop.permute.xlu0 %11340
        %11342 = vrot.lane.b32.xlu0 %v9936, 112
        %v11343 = vpop.permute.xlu0 %11342
        %11344 = vrot.lane.b32.xlu0 %v9937, 112
        %v11345 = vpop.permute.xlu0 %11344
        %11346 = vrot.lane.b32.xlu0 %v9938, 112
        %v11347 = vpop.permute.xlu0 %11346
        %11348 = vrot.lane.b32.xlu0 %v9939, 112
        %v11349 = vpop.permute.xlu0 %11348
        %11350 = vrot.lane.b32.xlu0 %v9940, 112
        %v11351 = vpop.permute.xlu0 %11350
        %11352 = vrot.lane.b32.xlu0 %v9941, 112
        %v11353 = vpop.permute.xlu0 %11352
        %11354 = vrot.lane.b32.xlu0 %v9942, 112
        %v11355 = vpop.permute.xlu0 %11354
        %11356 = vrot.lane.b32.xlu0 %v9943, 112
        %v11357 = vpop.permute.xlu0 %11356
        %11358 = vrot.lane.b32.xlu0 %v9944, 112
        %v11359 = vpop.permute.xlu0 %11358
        %11360 = vrot.lane.b32.xlu0 %v9945, 112
        %v11361 = vpop.permute.xlu0 %11360
        %11362 = vrot.lane.b32.xlu0 %v9946, 112
        %v11363 = vpop.permute.xlu0 %11362
        %11364 = vrot.lane.b32.xlu0 %v9947, 112
        %v11365 = vpop.permute.xlu0 %11364
        %11366 = vrot.lane.b32.xlu0 %v9948, 112
        %v11367 = vpop.permute.xlu0 %11366
        %11368 = vrot.lane.b32.xlu0 %v9949, 112
        %v11369 = vpop.permute.xlu0 %11368
        %11370 = vrot.lane.b32.xlu0 %v9950, 112
        %v11371 = vpop.permute.xlu0 %11370
        %11372 = vrot.lane.b32.xlu0 %v9951, 112
        %v11373 = vpop.permute.xlu0 %11372
        %11374 = vrot.lane.b32.xlu0 %v9952, 112
        %v11375 = vpop.permute.xlu0 %11374
        %11376 = vrot.lane.b32.xlu0 %v9953, 112
        %v11377 = vpop.permute.xlu0 %11376
        %11378 = vrot.lane.b32.xlu0 %v9954, 112
        %v11379 = vpop.permute.xlu0 %11378
        %11380 = vrot.lane.b32.xlu0 %v9955, 112
        %v11381 = vpop.permute.xlu0 %11380
        %11382 = vrot.lane.b32.xlu0 %v9956, 112
        %v11383 = vpop.permute.xlu0 %11382
        %11384 = vrot.lane.b32.xlu0 %v9957, 112
        %v11385 = vpop.permute.xlu0 %11384
        %11386 = vrot.lane.b32.xlu0 %v9958, 112
        %v11387 = vpop.permute.xlu0 %11386
        %11388 = vrot.lane.b32.xlu0 %v9959, 112
        %v11389 = vpop.permute.xlu0 %11388
        %11390 = vrot.lane.b32.xlu0 %v9960, 112
        %v11391 = vpop.permute.xlu0 %11390
        %11392 = vrot.lane.b32.xlu0 %v9961, 112
        %v11393 = vpop.permute.xlu0 %11392
        %11394 = vrot.lane.b32.xlu0 %v9962, 112
        %v11395 = vpop.permute.xlu0 %11394
        %11396 = vrot.lane.b32.xlu0 %v9963, 112
        %v11397 = vpop.permute.xlu0 %11396
        %11398 = vrot.lane.b32.xlu0 %v9964, 112
        %v11399 = vpop.permute.xlu0 %11398
        %11400 = vrot.lane.b32.xlu0 %v9965, 112
        %v11401 = vpop.permute.xlu0 %11400
        %11402 = vrot.lane.b32.xlu0 %v9966, 112
        %v11403 = vpop.permute.xlu0 %11402
        %11404 = vrot.lane.b32.xlu0 %v9967, 112
        %v11405 = vpop.permute.xlu0 %11404
        %11406 = vrot.lane.b32.xlu0 %v9968, 112
        %v11407 = vpop.permute.xlu0 %11406
        %11408 = vrot.lane.b32.xlu0 %v9969, 112
        %v11409 = vpop.permute.xlu0 %11408
        %11410 = vrot.lane.b32.xlu0 %v9970, 112
        %v11411 = vpop.permute.xlu0 %11410
        %11412 = vrot.lane.b32.xlu0 %v9971, 112
        %v11413 = vpop.permute.xlu0 %11412
        %11414 = vrot.lane.b32.xlu0 %v9972, 112
        %v11415 = vpop.permute.xlu0 %11414
        %11416 = vrot.lane.b32.xlu0 %v9973, 112
        %v11417 = vpop.permute.xlu0 %11416
        %11418 = vrot.lane.b32.xlu0 %v9974, 112
        %v11419 = vpop.permute.xlu0 %11418
        %11420 = vrot.lane.b32.xlu0 %v9975, 112
        %v11421 = vpop.permute.xlu0 %11420
        %11422 = vrot.lane.b32.xlu0 %v9976, 112
        %v11423 = vpop.permute.xlu0 %11422
        %11424 = vrot.lane.b32.xlu0 %v9977, 112
        %v11425 = vpop.permute.xlu0 %11424
        %11426 = vrot.lane.b32.xlu0 %v9978, 112
        %v11427 = vpop.permute.xlu0 %11426
        %11428 = vrot.lane.b32.xlu0 %v9979, 112
        %v11429 = vpop.permute.xlu0 %11428
        %11430 = vrot.lane.b32.xlu0 %v9980, 112
        %v11431 = vpop.permute.xlu0 %11430
        %11432 = vrot.lane.b32.xlu0 %v9981, 112
        %v11433 = vpop.permute.xlu0 %11432
        %11434 = vrot.lane.b32.xlu0 %v9982, 112
        %v11435 = vpop.permute.xlu0 %11434
        %11436 = vrot.lane.b32.xlu0 %v9983, 112
        %v11437 = vpop.permute.xlu0 %11436
        %11438 = vrot.lane.b32.xlu0 %v9984, 112
        %v11439 = vpop.permute.xlu0 %11438
        %11440 = vrot.lane.b32.xlu0 %v9985, 112
        %v11441 = vpop.permute.xlu0 %11440
        %11442 = vrot.lane.b32.xlu0 %v9986, 112
        %v11443 = vpop.permute.xlu0 %11442
        %11444 = vrot.lane.b32.xlu0 %v9987, 112
        %v11445 = vpop.permute.xlu0 %11444
        %11446 = vrot.lane.b32.xlu0 %v9988, 112
        %v11447 = vpop.permute.xlu0 %11446
        %11448 = vrot.lane.b32.xlu0 %v9989, 112
        %v11449 = vpop.permute.xlu0 %11448
        %11450 = vrot.lane.b32.xlu0 %v9990, 112
        %v11451 = vpop.permute.xlu0 %11450
        %11452 = vrot.lane.b32.xlu0 %v9991, 112
        %v11453 = vpop.permute.xlu0 %11452
        %11454 = vrot.lane.b32.xlu0 %v9992, 112
        %v11455 = vpop.permute.xlu0 %11454
        %11456 = vrot.lane.b32.xlu0 %v9993, 112
        %v11457 = vpop.permute.xlu0 %11456
        %11458 = vrot.lane.b32.xlu0 %v9994, 112
        %v11459 = vpop.permute.xlu0 %11458
        %11460 = vrot.lane.b32.xlu0 %v9995, 112
        %v11461 = vpop.permute.xlu0 %11460
        %11462 = vrot.lane.b32.xlu0 %v9996, 112
        %v11463 = vpop.permute.xlu0 %11462
        %11464 = vrot.lane.b32.xlu0 %v9997, 112
        %v11465 = vpop.permute.xlu0 %11464
        %11466 = vrot.lane.b32.xlu0 %v9998, 112
        %v11467 = vpop.permute.xlu0 %11466
        %11468 = vrot.lane.b32.xlu0 %v9999, 112
        %v11469 = vpop.permute.xlu0 %11468
        %11470 = vrot.lane.b32.xlu0 %v10000, 112
        %v11471 = vpop.permute.xlu0 %11470
        %11472 = vrot.lane.b32.xlu0 %v10001, 112
        %v11473 = vpop.permute.xlu0 %11472
        %11474 = vrot.lane.b32.xlu0 %v10002, 112
        %v11475 = vpop.permute.xlu0 %11474
        %11476 = vrot.lane.b32.xlu0 %v10003, 112
        %v11477 = vpop.permute.xlu0 %11476
        %11478 = vrot.lane.b32.xlu0 %v10004, 112
        %v11479 = vpop.permute.xlu0 %11478
        %11480 = vrot.lane.b32.xlu0 %v10005, 112
        %v11481 = vpop.permute.xlu0 %11480
        %11482 = vrot.lane.b32.xlu0 %v10006, 112
        %v11483 = vpop.permute.xlu0 %11482
        %11484 = vrot.lane.b32.xlu0 %v10007, 112
        %v11485 = vpop.permute.xlu0 %11484
        %11486 = vrot.lane.b32.xlu0 %v10008, 112
        %v11487 = vpop.permute.xlu0 %11486
        %11488 = vrot.lane.b32.xlu0 %v10009, 112
        %v11489 = vpop.permute.xlu0 %11488
        %11490 = vrot.lane.b32.xlu0 %v10010, 112
        %v11491 = vpop.permute.xlu0 %11490
        %11492 = vrot.lane.b32.xlu0 %v10011, 112
        %v11493 = vpop.permute.xlu0 %11492
        %11494 = vrot.lane.b32.xlu0 %v10012, 112
        %v11495 = vpop.permute.xlu0 %11494
        %11496 = vrot.lane.b32.xlu0 %v10013, 112
        %v11497 = vpop.permute.xlu0 %11496
        %11498 = vrot.lane.b32.xlu0 %v10014, 112
        %v11499 = vpop.permute.xlu0 %11498
        %11500 = vrot.lane.b32.xlu0 %v10015, 112
        %v11501 = vpop.permute.xlu0 %11500
        %11502 = vrot.lane.b32.xlu0 %v10016, 112
        %v11503 = vpop.permute.xlu0 %11502
        %11504 = vrot.lane.b32.xlu0 %v10017, 112
        %v11505 = vpop.permute.xlu0 %11504
        %11506 = vrot.lane.b32.xlu0 %v10018, 112
        %v11507 = vpop.permute.xlu0 %11506
        %11508 = vrot.lane.b32.xlu0 %v10019, 112
        %v11509 = vpop.permute.xlu0 %11508
        %11510 = vrot.lane.b32.xlu0 %v10020, 112
        %v11511 = vpop.permute.xlu0 %11510
        %11512 = vrot.lane.b32.xlu0 %v10021, 112
        %v11513 = vpop.permute.xlu0 %11512
        %11514 = vrot.lane.b32.xlu0 %v10022, 112
        %v11515 = vpop.permute.xlu0 %11514
        %11516 = vrot.lane.b32.xlu0 %v10023, 112
        %v11517 = vpop.permute.xlu0 %11516
        %11518 = vrot.lane.b32.xlu0 %v10024, 112
        %v11519 = vpop.permute.xlu0 %11518
        %11520 = vrot.lane.b32.xlu0 %v10025, 112
        %v11521 = vpop.permute.xlu0 %11520
        %11522 = vrot.lane.b32.xlu0 %v10026, 112
        %v11523 = vpop.permute.xlu0 %11522
        %11524 = vrot.lane.b32.xlu0 %v10027, 112
        %v11525 = vpop.permute.xlu0 %11524
        %11526 = vrot.lane.b32.xlu0 %v10028, 112
        %v11527 = vpop.permute.xlu0 %11526
        %11528 = vrot.lane.b32.xlu0 %v10029, 112
        %v11529 = vpop.permute.xlu0 %11528
        %11530 = vrot.lane.b32.xlu0 %v10030, 112
        %v11531 = vpop.permute.xlu0 %11530
        %11532 = vrot.lane.b32.xlu0 %v10031, 112
        %v11533 = vpop.permute.xlu0 %11532
        %11534 = vrot.lane.b32.xlu0 %v10032, 112
        %v11535 = vpop.permute.xlu0 %11534
        %11536 = vrot.lane.b32.xlu0 %v10033, 112
        %v11537 = vpop.permute.xlu0 %11536
        %11538 = vrot.lane.b32.xlu0 %v10034, 112
        %v11539 = vpop.permute.xlu0 %11538
        %11540 = vrot.lane.b32.xlu0 %v10035, 112
        %v11541 = vpop.permute.xlu0 %11540
        %11542 = vrot.lane.b32.xlu0 %v10039, 112
        %v11543 = vpop.permute.xlu0 %11542
        %v11818 = vrot.slane %v11271, 2
        %v11819 = vrot.slane %v11273, 2
        %v11820 = vsel %vm2454, %v11818, %v11819
        %v11821 = vrot.slane %v11275, 2
        %v11822 = vsel %vm2454, %v11819, %v11821
        %v11823 = vrot.slane %v11277, 2
        %v11824 = vsel %vm2454, %v11821, %v11823
        %v11825 = vrot.slane %v11279, 2
        %v11826 = vsel %vm2454, %v11823, %v11825
        %v11827 = vrot.slane %v11281, 2
        %v11828 = vsel %vm2454, %v11825, %v11827
        %v11829 = vrot.slane %v11283, 2
        %v11830 = vsel %vm2454, %v11827, %v11829
        %v11831 = vrot.slane %v11285, 2
        %v11832 = vsel %vm2454, %v11829, %v11831
        %v11833 = vrot.slane %v11287, 2
        %v11834 = vsel %vm2454, %v11831, %v11833
        %v11835 = vrot.slane %v11289, 2
        %v11836 = vsel %vm2454, %v11833, %v11835
        %v11837 = vrot.slane %v11291, 2
        %v11838 = vsel %vm2454, %v11835, %v11837
        %v11839 = vrot.slane %v11293, 2
        %v11840 = vsel %vm2454, %v11837, %v11839
        %v11841 = vrot.slane %v11295, 2
        %v11842 = vsel %vm2454, %v11839, %v11841
        %v11843 = vrot.slane %v11297, 2
        %v11844 = vsel %vm2454, %v11841, %v11843
        %v11845 = vrot.slane %v11299, 2
        %v11846 = vsel %vm2454, %v11843, %v11845
        %v11847 = vrot.slane %v11301, 2
        %v11848 = vsel %vm2454, %v11845, %v11847
        %v11849 = vrot.slane %v11303, 2
        %v11850 = vsel %vm2454, %v11847, %v11849
        %v11851 = vrot.slane %v11305, 2
        %v11852 = vsel %vm2454, %v11849, %v11851
        %v11853 = vrot.slane %v11307, 2
        %v11854 = vsel %vm2454, %v11851, %v11853
        %v11855 = vrot.slane %v11309, 2
        %v11856 = vsel %vm2454, %v11853, %v11855
        %v11857 = vrot.slane %v11311, 2
        %v11858 = vsel %vm2454, %v11855, %v11857
        %v11859 = vrot.slane %v11313, 2
        %v11860 = vsel %vm2454, %v11857, %v11859
        %v11861 = vrot.slane %v11315, 2
        %v11862 = vsel %vm2454, %v11859, %v11861
        %v11863 = vrot.slane %v11317, 2
        %v11864 = vsel %vm2454, %v11861, %v11863
        %v11865 = vrot.slane %v11319, 2
        %v11866 = vsel %vm2454, %v11863, %v11865
        %v11867 = vrot.slane %v11321, 2
        %v11868 = vsel %vm2454, %v11865, %v11867
        %v11869 = vrot.slane %v11323, 2
        %v11870 = vsel %vm2454, %v11867, %v11869
        %v11871 = vrot.slane %v11325, 2
        %v11872 = vsel %vm2454, %v11869, %v11871
        %v11873 = vrot.slane %v11327, 2
        %v11874 = vsel %vm2454, %v11871, %v11873
        %v11875 = vrot.slane %v11329, 2
        %v11876 = vsel %vm2454, %v11873, %v11875
        %v11877 = vrot.slane %v11331, 2
        %v11878 = vsel %vm2454, %v11875, %v11877
        %v11879 = vrot.slane %v11333, 2
        %v11880 = vsel %vm2454, %v11877, %v11879
        %v11881 = vrot.slane %v11335, 2
        %v11882 = vsel %vm2454, %v11879, %v11881
        %v11883 = vrot.slane %v11337, 2
        %v11884 = vsel %vm2454, %v11881, %v11883
        %v11885 = vrot.slane %v11339, 2
        %v11886 = vsel %vm2454, %v11883, %v11885
        %v11887 = vrot.slane %v11341, 2
        %v11888 = vsel %vm2454, %v11885, %v11887
        %v11889 = vrot.slane %v11343, 2
        %v11890 = vsel %vm2454, %v11887, %v11889
        %v11891 = vrot.slane %v11345, 2
        %v11892 = vsel %vm2454, %v11889, %v11891
        %v11893 = vrot.slane %v11347, 2
        %v11894 = vsel %vm2454, %v11891, %v11893
        %v11895 = vrot.slane %v11349, 2
        %v11896 = vsel %vm2454, %v11893, %v11895
        %v11897 = vrot.slane %v11351, 2
        %v11898 = vsel %vm2454, %v11895, %v11897
        %v11899 = vrot.slane %v11353, 2
        %v11900 = vsel %vm2454, %v11897, %v11899
        %v11901 = vrot.slane %v11355, 2
        %v11902 = vsel %vm2454, %v11899, %v11901
        %v11903 = vrot.slane %v11357, 2
        %v11904 = vsel %vm2454, %v11901, %v11903
        %v11905 = vrot.slane %v11359, 2
        %v11906 = vsel %vm2454, %v11903, %v11905
        %v11907 = vrot.slane %v11361, 2
        %v11908 = vsel %vm2454, %v11905, %v11907
        %v11909 = vrot.slane %v11363, 2
        %v11910 = vsel %vm2454, %v11907, %v11909
        %v11911 = vrot.slane %v11365, 2
        %v11912 = vsel %vm2454, %v11909, %v11911
        %v11913 = vrot.slane %v11367, 2
        %v11914 = vsel %vm2454, %v11911, %v11913
        %v11915 = vrot.slane %v11369, 2
        %v11916 = vsel %vm2454, %v11913, %v11915
        %v11917 = vrot.slane %v11371, 2
        %v11918 = vsel %vm2454, %v11915, %v11917
        %v11919 = vrot.slane %v11373, 2
        %v11920 = vsel %vm2454, %v11917, %v11919
        %v11921 = vrot.slane %v11375, 2
        %v11922 = vsel %vm2454, %v11919, %v11921
        %v11923 = vrot.slane %v11377, 2
        %v11924 = vsel %vm2454, %v11921, %v11923
        %v11925 = vrot.slane %v11379, 2
        %v11926 = vsel %vm2454, %v11923, %v11925
        %v11927 = vrot.slane %v11381, 2
        %v11928 = vsel %vm2454, %v11925, %v11927
        %v11929 = vrot.slane %v11383, 2
        %v11930 = vsel %vm2454, %v11927, %v11929
        %v11931 = vrot.slane %v11385, 2
        %v11932 = vsel %vm2454, %v11929, %v11931
        %v11933 = vrot.slane %v11387, 2
        %v11934 = vsel %vm2454, %v11931, %v11933
        %v11935 = vrot.slane %v11389, 2
        %v11936 = vsel %vm2454, %v11933, %v11935
        %v11937 = vrot.slane %v11391, 2
        %v11938 = vsel %vm2454, %v11935, %v11937
        %v11939 = vrot.slane %v11393, 2
        %v11940 = vsel %vm2454, %v11937, %v11939
        %v11941 = vrot.slane %v11395, 2
        %v11942 = vsel %vm2454, %v11939, %v11941
        %v11943 = vrot.slane %v11397, 2
        %v11944 = vsel %vm2454, %v11941, %v11943
        %v11945 = vrot.slane %v11399, 2
        %v11946 = vsel %vm2454, %v11943, %v11945
        %v11947 = vrot.slane %v11401, 2
        %v11948 = vsel %vm2454, %v11945, %v11947
        %v11949 = vrot.slane %v11403, 2
        %v11950 = vsel %vm2454, %v11947, %v11949
        %v11951 = vrot.slane %v11405, 2
        %v11952 = vsel %vm2454, %v11949, %v11951
        %v11953 = vrot.slane %v11407, 2
        %v11954 = vsel %vm2454, %v11951, %v11953
        %v11955 = vrot.slane %v11409, 2
        %v11956 = vsel %vm2454, %v11953, %v11955
        %v11957 = vrot.slane %v11411, 2
        %v11958 = vsel %vm2454, %v11955, %v11957
        %v11959 = vrot.slane %v11413, 2
        %v11960 = vsel %vm2454, %v11957, %v11959
        %v11961 = vrot.slane %v11415, 2
        %v11962 = vsel %vm2454, %v11959, %v11961
        %v11963 = vrot.slane %v11417, 2
        %v11964 = vsel %vm2454, %v11961, %v11963
        %v11965 = vrot.slane %v11419, 2
        %v11966 = vsel %vm2454, %v11963, %v11965
        %v11967 = vrot.slane %v11421, 2
        %v11968 = vsel %vm2454, %v11965, %v11967
        %v11969 = vrot.slane %v11423, 2
        %v11970 = vsel %vm2454, %v11967, %v11969
        %v11971 = vrot.slane %v11425, 2
        %v11972 = vsel %vm2454, %v11969, %v11971
        %v11973 = vrot.slane %v11427, 2
        %v11974 = vsel %vm2454, %v11971, %v11973
        %v11975 = vrot.slane %v11429, 2
        %v11976 = vsel %vm2454, %v11973, %v11975
        %v11977 = vrot.slane %v11431, 2
        %v11978 = vsel %vm2454, %v11975, %v11977
        %v11979 = vrot.slane %v11433, 2
        %v11980 = vsel %vm2454, %v11977, %v11979
        %v11981 = vrot.slane %v11435, 2
        %v11982 = vsel %vm2454, %v11979, %v11981
        %v11983 = vrot.slane %v11437, 2
        %v11984 = vsel %vm2454, %v11981, %v11983
        %v11985 = vrot.slane %v11439, 2
        %v11986 = vsel %vm2454, %v11983, %v11985
        %v11987 = vrot.slane %v11441, 2
        %v11988 = vsel %vm2454, %v11985, %v11987
        %v11989 = vrot.slane %v11443, 2
        %v11990 = vsel %vm2454, %v11987, %v11989
        %v11991 = vrot.slane %v11445, 2
        %v11992 = vsel %vm2454, %v11989, %v11991
        %v11993 = vrot.slane %v11447, 2
        %v11994 = vsel %vm2454, %v11991, %v11993
        %v11995 = vrot.slane %v11449, 2
        %v11996 = vsel %vm2454, %v11993, %v11995
        %v11997 = vrot.slane %v11451, 2
        %v11998 = vsel %vm2454, %v11995, %v11997
        %v11999 = vrot.slane %v11453, 2
        %v12000 = vsel %vm2454, %v11997, %v11999
        %v12001 = vrot.slane %v11455, 2
        %v12002 = vsel %vm2454, %v11999, %v12001
        %v12003 = vrot.slane %v11457, 2
        %v12004 = vsel %vm2454, %v12001, %v12003
        %v12005 = vrot.slane %v11459, 2
        %v12006 = vsel %vm2454, %v12003, %v12005
        %v12007 = vrot.slane %v11461, 2
        %v12008 = vsel %vm2454, %v12005, %v12007
        %v12009 = vrot.slane %v11463, 2
        %v12010 = vsel %vm2454, %v12007, %v12009
        %v12011 = vrot.slane %v11465, 2
        %v12012 = vsel %vm2454, %v12009, %v12011
        %v12013 = vrot.slane %v11467, 2
        %v12014 = vsel %vm2454, %v12011, %v12013
        %v12015 = vrot.slane %v11469, 2
        %v12016 = vsel %vm2454, %v12013, %v12015
        %v12017 = vrot.slane %v11471, 2
        %v12018 = vsel %vm2454, %v12015, %v12017
        %v12019 = vrot.slane %v11473, 2
        %v12020 = vsel %vm2454, %v12017, %v12019
        %v12021 = vrot.slane %v11475, 2
        %v12022 = vsel %vm2454, %v12019, %v12021
        %v12023 = vrot.slane %v11477, 2
        %v12024 = vsel %vm2454, %v12021, %v12023
        %v12025 = vrot.slane %v11479, 2
        %v12026 = vsel %vm2454, %v12023, %v12025
        %v12027 = vrot.slane %v11481, 2
        %v12028 = vsel %vm2454, %v12025, %v12027
        %v12029 = vrot.slane %v11483, 2
        %v12030 = vsel %vm2454, %v12027, %v12029
        %v12031 = vrot.slane %v11485, 2
        %v12032 = vsel %vm2454, %v12029, %v12031
        %v12033 = vrot.slane %v11487, 2
        %v12034 = vsel %vm2454, %v12031, %v12033
        %v12035 = vrot.slane %v11489, 2
        %v12036 = vsel %vm2454, %v12033, %v12035
        %v12037 = vrot.slane %v11491, 2
        %v12038 = vsel %vm2454, %v12035, %v12037
        %v12039 = vrot.slane %v11493, 2
        %v12040 = vsel %vm2454, %v12037, %v12039
        %v12041 = vrot.slane %v11495, 2
        %v12042 = vsel %vm2454, %v12039, %v12041
        %v12043 = vrot.slane %v11497, 2
        %v12044 = vsel %vm2454, %v12041, %v12043
        %v12045 = vrot.slane %v11499, 2
        %v12046 = vsel %vm2454, %v12043, %v12045
        %v12047 = vrot.slane %v11501, 2
        %v12048 = vsel %vm2454, %v12045, %v12047
        %v12049 = vrot.slane %v11503, 2
        %v12050 = vsel %vm2454, %v12047, %v12049
        %v12051 = vrot.slane %v11505, 2
        %v12052 = vsel %vm2454, %v12049, %v12051
        %v12053 = vrot.slane %v11507, 2
        %v12054 = vsel %vm2454, %v12051, %v12053
        %v12055 = vrot.slane %v11509, 2
        %v12056 = vsel %vm2454, %v12053, %v12055
        %v12057 = vrot.slane %v11511, 2
        %v12058 = vsel %vm2454, %v12055, %v12057
        %v12059 = vrot.slane %v11513, 2
        %v12060 = vsel %vm2454, %v12057, %v12059
        %v12061 = vrot.slane %v11515, 2
        %v12062 = vsel %vm2454, %v12059, %v12061
        %v12063 = vrot.slane %v11517, 2
        %v12064 = vsel %vm2454, %v12061, %v12063
        %v12065 = vrot.slane %v11519, 2
        %v12066 = vsel %vm2454, %v12063, %v12065
        %v12067 = vrot.slane %v11521, 2
        %v12068 = vsel %vm2454, %v12065, %v12067
        %v12069 = vrot.slane %v11523, 2
        %v12070 = vsel %vm2454, %v12067, %v12069
        %v12071 = vrot.slane %v11525, 2
        %v12072 = vsel %vm2454, %v12069, %v12071
        %v12073 = vrot.slane %v11527, 2
        %v12074 = vsel %vm2454, %v12071, %v12073
        %v12075 = vrot.slane %v11529, 2
        %v12076 = vsel %vm2454, %v12073, %v12075
        %v12077 = vrot.slane %v11531, 2
        %v12078 = vsel %vm2454, %v12075, %v12077
        %v12079 = vrot.slane %v11533, 2
        %v12080 = vsel %vm2454, %v12077, %v12079
        %v12081 = vrot.slane %v11535, 2
        %v12082 = vsel %vm2454, %v12079, %v12081
        %v12083 = vrot.slane %v11537, 2
        %v12084 = vsel %vm2454, %v12081, %v12083
        %v12085 = vrot.slane %v11539, 2
        %v12086 = vsel %vm2454, %v12083, %v12085
        %v12087 = vrot.slane %v11541, 2
        %v12088 = vsel %vm2454, %v12085, %v12087
        %v12089 = vrot.slane %v11543, 2
        %v12090 = vsel %vm2454, %v12087, %v12089
        %v12227 = vadd.f32 %v11134, %v11820
        %v12228 = vadd.f32 %v11135, %v11822
        %v12229 = vadd.f32 %v11136, %v11824
        %v12230 = vadd.f32 %v11137, %v11826
        %v12231 = vadd.f32 %v11138, %v11828
        %v12232 = vadd.f32 %v11139, %v11830
        %v12233 = vadd.f32 %v11140, %v11832
        %v12234 = vadd.f32 %v11141, %v11834
        %v12235 = vadd.f32 %v11142, %v11836
        %v12236 = vadd.f32 %v11143, %v11838
        %v12237 = vadd.f32 %v11144, %v11840
        %v12238 = vadd.f32 %v11145, %v11842
        %v12239 = vadd.f32 %v11146, %v11844
        %v12240 = vadd.f32 %v11147, %v11846
        %v12241 = vadd.f32 %v11148, %v11848
        %v12242 = vadd.f32 %v11149, %v11850
        %v12243 = vadd.f32 %v11150, %v11852
        %v12244 = vadd.f32 %v11151, %v11854
        %v12245 = vadd.f32 %v11152, %v11856
        %v12246 = vadd.f32 %v11153, %v11858
        %v12247 = vadd.f32 %v11154, %v11860
        %v12248 = vadd.f32 %v11155, %v11862
        %v12249 = vadd.f32 %v11156, %v11864
        %v12250 = vadd.f32 %v11157, %v11866
        %v12251 = vadd.f32 %v11158, %v11868
        %v12252 = vadd.f32 %v11159, %v11870
        %v12253 = vadd.f32 %v11160, %v11872
        %v12254 = vadd.f32 %v11161, %v11874
        %v12255 = vadd.f32 %v11162, %v11876
        %v12256 = vadd.f32 %v11163, %v11878
        %v12257 = vadd.f32 %v11164, %v11880
        %v12258 = vadd.f32 %v11165, %v11882
        %v12259 = vadd.f32 %v11166, %v11884
        %v12260 = vadd.f32 %v11167, %v11886
        %v12261 = vadd.f32 %v11168, %v11888
        %v12262 = vadd.f32 %v11169, %v11890
        %v12263 = vadd.f32 %v11170, %v11892
        %v12264 = vadd.f32 %v11171, %v11894
        %v12265 = vadd.f32 %v11172, %v11896
        %v12266 = vadd.f32 %v11173, %v11898
        %v12267 = vadd.f32 %v11174, %v11900
        %v12268 = vadd.f32 %v11175, %v11902
        %v12269 = vadd.f32 %v11176, %v11904
        %v12270 = vadd.f32 %v11177, %v11906
        %v12271 = vadd.f32 %v11178, %v11908
        %v12272 = vadd.f32 %v11179, %v11910
        %v12273 = vadd.f32 %v11180, %v11912
        %v12274 = vadd.f32 %v11181, %v11914
        %v12275 = vadd.f32 %v11182, %v11916
        %v12276 = vadd.f32 %v11183, %v11918
        %v12277 = vadd.f32 %v11184, %v11920
        %v12278 = vadd.f32 %v11185, %v11922
        %v12279 = vadd.f32 %v11186, %v11924
        %v12280 = vadd.f32 %v11187, %v11926
        %v12281 = vadd.f32 %v11188, %v11928
        %v12282 = vadd.f32 %v11189, %v11930
        %v12283 = vadd.f32 %v11190, %v11932
        %v12284 = vadd.f32 %v11191, %v11934
        %v12285 = vadd.f32 %v11192, %v11936
        %v12286 = vadd.f32 %v11193, %v11938
        %v12287 = vadd.f32 %v11194, %v11940
        %v12288 = vadd.f32 %v11195, %v11942
        %v12289 = vadd.f32 %v11196, %v11944
        %v12290 = vadd.f32 %v11197, %v11946
        %v12291 = vadd.f32 %v11198, %v11948
        %v12292 = vadd.f32 %v11199, %v11950
        %v12293 = vadd.f32 %v11200, %v11952
        %v12294 = vadd.f32 %v11201, %v11954
        %v12295 = vadd.f32 %v11202, %v11956
        %v12296 = vadd.f32 %v11203, %v11958
        %v12297 = vadd.f32 %v11204, %v11960
        %v12298 = vadd.f32 %v11205, %v11962
        %v12299 = vadd.f32 %v11206, %v11964
        %v12300 = vadd.f32 %v11207, %v11966
        %v12301 = vadd.f32 %v11208, %v11968
        %v12302 = vadd.f32 %v11209, %v11970
        %v12303 = vadd.f32 %v11210, %v11972
        %v12304 = vadd.f32 %v11211, %v11974
        %v12305 = vadd.f32 %v11212, %v11976
        %v12306 = vadd.f32 %v11213, %v11978
        %v12307 = vadd.f32 %v11214, %v11980
        %v12308 = vadd.f32 %v11215, %v11982
        %v12309 = vadd.f32 %v11216, %v11984
        %v12310 = vadd.f32 %v11217, %v11986
        %v12311 = vadd.f32 %v11218, %v11988
        %v12312 = vadd.f32 %v11219, %v11990
        %v12313 = vadd.f32 %v11220, %v11992
        %v12314 = vadd.f32 %v11221, %v11994
        %v12315 = vadd.f32 %v11222, %v11996
        %v12316 = vadd.f32 %v11223, %v11998
        %v12317 = vadd.f32 %v11224, %v12000
        %v12318 = vadd.f32 %v11225, %v12002
        %v12319 = vadd.f32 %v11226, %v12004
        %v12320 = vadd.f32 %v11227, %v12006
        %v12321 = vadd.f32 %v11228, %v12008
        %v12322 = vadd.f32 %v11229, %v12010
        %v12323 = vadd.f32 %v11230, %v12012
        %v12324 = vadd.f32 %v11231, %v12014
        %v12325 = vadd.f32 %v11232, %v12016
        %v12326 = vadd.f32 %v11233, %v12018
        %v12327 = vadd.f32 %v11234, %v12020
        %v12328 = vadd.f32 %v11235, %v12022
        %v12329 = vadd.f32 %v11236, %v12024
        %v12330 = vadd.f32 %v11237, %v12026
        %v12331 = vadd.f32 %v11238, %v12028
        %v12332 = vadd.f32 %v11239, %v12030
        %v12333 = vadd.f32 %v11240, %v12032
        %v12334 = vadd.f32 %v11241, %v12034
        %v12335 = vadd.f32 %v11242, %v12036
        %v12336 = vadd.f32 %v11243, %v12038
        %v12337 = vadd.f32 %v11244, %v12040
        %v12338 = vadd.f32 %v11245, %v12042
        %v12339 = vadd.f32 %v11246, %v12044
        %v12340 = vadd.f32 %v11247, %v12046
        %v12341 = vadd.f32 %v11248, %v12048
        %v12342 = vadd.f32 %v11249, %v12050
        %v12343 = vadd.f32 %v11250, %v12052
        %v12344 = vadd.f32 %v11251, %v12054
        %v12345 = vadd.f32 %v11252, %v12056
        %v12346 = vadd.f32 %v11253, %v12058
        %v12347 = vadd.f32 %v11254, %v12060
        %v12348 = vadd.f32 %v11255, %v12062
        %v12349 = vadd.f32 %v11256, %v12064
        %v12350 = vadd.f32 %v11257, %v12066
        %v12351 = vadd.f32 %v11258, %v12068
        %v12352 = vadd.f32 %v11259, %v12070
        %v12353 = vadd.f32 %v11260, %v12072
        %v12354 = vadd.f32 %v11261, %v12074
        %v12355 = vadd.f32 %v11262, %v12076
        %v12356 = vadd.f32 %v11263, %v12078
        %v12357 = vadd.f32 %v11264, %v12080
        %v12358 = vadd.f32 %v11265, %v12082
        %v12359 = vadd.f32 %v11266, %v12084
        %v12360 = vadd.f32 %v11267, %v12086
        %v12361 = vadd.f32 %v11268, %v12088
        %v12362 = vadd.f32 %v11269, %v12090
        %v12363 = vld [vmem:[%s6] sm:$0x1]
        %v12365 = vlaneseq
        %v12366 = vshrl.u32 %v12365, 7
        %v12367 = vsub.s32 0, %v12366
        %v12368 = vrot.slane %v12363, %v12367
        %v12370 = vadd.f32 %v12227, %v12368
        %v12371 = vadd.f32 %v12228, %v12368
        %v12372 = vadd.f32 %v12229, %v12368
        %v12373 = vadd.f32 %v12230, %v12368
        %v12374 = vadd.f32 %v12231, %v12368
        %v12375 = vadd.f32 %v12232, %v12368
        %v12376 = vadd.f32 %v12233, %v12368
        %v12377 = vadd.f32 %v12234, %v12368
        %v12378 = vadd.f32 %v12235, %v12368
        %v12379 = vadd.f32 %v12236, %v12368
        %v12380 = vadd.f32 %v12237, %v12368
        %v12381 = vadd.f32 %v12238, %v12368
        %v12382 = vadd.f32 %v12239, %v12368
        %v12383 = vadd.f32 %v12240, %v12368
        %v12384 = vadd.f32 %v12241, %v12368
        %v12385 = vadd.f32 %v12242, %v12368
        %v12386 = vadd.f32 %v12243, %v12368
        %v12387 = vadd.f32 %v12244, %v12368
        %v12388 = vadd.f32 %v12245, %v12368
        %v12389 = vadd.f32 %v12246, %v12368
        %v12390 = vadd.f32 %v12247, %v12368
        %v12391 = vadd.f32 %v12248, %v12368
        %v12392 = vadd.f32 %v12249, %v12368
        %v12393 = vadd.f32 %v12250, %v12368
        %v12394 = vadd.f32 %v12251, %v12368
        %v12395 = vadd.f32 %v12252, %v12368
        %v12396 = vadd.f32 %v12253, %v12368
        %v12397 = vadd.f32 %v12254, %v12368
        %v12398 = vadd.f32 %v12255, %v12368
        %v12399 = vadd.f32 %v12256, %v12368
        %v12400 = vadd.f32 %v12257, %v12368
        %v12401 = vadd.f32 %v12258, %v12368
        %v12402 = vadd.f32 %v12259, %v12368
        %v12403 = vadd.f32 %v12260, %v12368
        %v12404 = vadd.f32 %v12261, %v12368
        %v12405 = vadd.f32 %v12262, %v12368
        %v12406 = vadd.f32 %v12263, %v12368
        %v12407 = vadd.f32 %v12264, %v12368
        %v12408 = vadd.f32 %v12265, %v12368
        %v12409 = vadd.f32 %v12266, %v12368
        %v12410 = vadd.f32 %v12267, %v12368
        %v12411 = vadd.f32 %v12268, %v12368
        %v12412 = vadd.f32 %v12269, %v12368
        %v12413 = vadd.f32 %v12270, %v12368
        %v12414 = vadd.f32 %v12271, %v12368
        %v12415 = vadd.f32 %v12272, %v12368
        %v12416 = vadd.f32 %v12273, %v12368
        %v12417 = vadd.f32 %v12274, %v12368
        %v12418 = vadd.f32 %v12275, %v12368
        %v12419 = vadd.f32 %v12276, %v12368
        %v12420 = vadd.f32 %v12277, %v12368
        %v12421 = vadd.f32 %v12278, %v12368
        %v12422 = vadd.f32 %v12279, %v12368
        %v12423 = vadd.f32 %v12280, %v12368
        %v12424 = vadd.f32 %v12281, %v12368
        %v12425 = vadd.f32 %v12282, %v12368
        %v12426 = vadd.f32 %v12283, %v12368
        %v12427 = vadd.f32 %v12284, %v12368
        %v12428 = vadd.f32 %v12285, %v12368
        %v12429 = vadd.f32 %v12286, %v12368
        %v12430 = vadd.f32 %v12287, %v12368
        %v12431 = vadd.f32 %v12288, %v12368
        %v12432 = vadd.f32 %v12289, %v12368
        %v12433 = vadd.f32 %v12290, %v12368
        %v12434 = vadd.f32 %v12291, %v12368
        %v12435 = vadd.f32 %v12292, %v12368
        %v12436 = vadd.f32 %v12293, %v12368
        %v12437 = vadd.f32 %v12294, %v12368
        %v12438 = vadd.f32 %v12295, %v12368
        %v12439 = vadd.f32 %v12296, %v12368
        %v12440 = vadd.f32 %v12297, %v12368
        %v12441 = vadd.f32 %v12298, %v12368
        %v12442 = vadd.f32 %v12299, %v12368
        %v12443 = vadd.f32 %v12300, %v12368
        %v12444 = vadd.f32 %v12301, %v12368
        %v12445 = vadd.f32 %v12302, %v12368
        %v12446 = vadd.f32 %v12303, %v12368
        %v12447 = vadd.f32 %v12304, %v12368
        %v12448 = vadd.f32 %v12305, %v12368
        %v12449 = vadd.f32 %v12306, %v12368
        %v12450 = vadd.f32 %v12307, %v12368
        %v12451 = vadd.f32 %v12308, %v12368
        %v12452 = vadd.f32 %v12309, %v12368
        %v12453 = vadd.f32 %v12310, %v12368
        %v12454 = vadd.f32 %v12311, %v12368
        %v12455 = vadd.f32 %v12312, %v12368
        %v12456 = vadd.f32 %v12313, %v12368
        %v12457 = vadd.f32 %v12314, %v12368
        %v12458 = vadd.f32 %v12315, %v12368
        %v12459 = vadd.f32 %v12316, %v12368
        %v12460 = vadd.f32 %v12317, %v12368
        %v12461 = vadd.f32 %v12318, %v12368
        %v12462 = vadd.f32 %v12319, %v12368
        %v12463 = vadd.f32 %v12320, %v12368
        %v12464 = vadd.f32 %v12321, %v12368
        %v12465 = vadd.f32 %v12322, %v12368
        %v12466 = vadd.f32 %v12323, %v12368
        %v12467 = vadd.f32 %v12324, %v12368
        %v12468 = vadd.f32 %v12325, %v12368
        %v12469 = vadd.f32 %v12326, %v12368
        %v12470 = vadd.f32 %v12327, %v12368
        %v12471 = vadd.f32 %v12328, %v12368
        %v12472 = vadd.f32 %v12329, %v12368
        %v12473 = vadd.f32 %v12330, %v12368
        %v12474 = vadd.f32 %v12331, %v12368
        %v12475 = vadd.f32 %v12332, %v12368
        %v12476 = vadd.f32 %v12333, %v12368
        %v12477 = vadd.f32 %v12334, %v12368
        %v12478 = vadd.f32 %v12335, %v12368
        %v12479 = vadd.f32 %v12336, %v12368
        %v12480 = vadd.f32 %v12337, %v12368
        %v12481 = vadd.f32 %v12338, %v12368
        %v12482 = vadd.f32 %v12339, %v12368
        %v12483 = vadd.f32 %v12340, %v12368
        %v12484 = vadd.f32 %v12341, %v12368
        %v12485 = vadd.f32 %v12342, %v12368
        %v12486 = vadd.f32 %v12343, %v12368
        %v12487 = vadd.f32 %v12344, %v12368
        %v12488 = vadd.f32 %v12345, %v12368
        %v12489 = vadd.f32 %v12346, %v12368
        %v12490 = vadd.f32 %v12347, %v12368
        %v12491 = vadd.f32 %v12348, %v12368
        %v12492 = vadd.f32 %v12349, %v12368
        %v12493 = vadd.f32 %v12350, %v12368
        %v12494 = vadd.f32 %v12351, %v12368
        %v12495 = vadd.f32 %v12352, %v12368
        %v12496 = vadd.f32 %v12353, %v12368
        %v12497 = vadd.f32 %v12354, %v12368
        %v12498 = vadd.f32 %v12355, %v12368
        %v12499 = vadd.f32 %v12356, %v12368
        %v12500 = vadd.f32 %v12357, %v12368
        %v12501 = vadd.f32 %v12358, %v12368
        %v12502 = vadd.f32 %v12359, %v12368
        %v12503 = vadd.f32 %v12360, %v12368
        %v12504 = vadd.f32 %v12361, %v12368
        %v12505 = vadd.f32 %v12362, %v12368
        %12506 = vst [vmem:[%s271] sm:$0xff] %v12370
        %12507 = vst [vmem:[%s271 + $0x8] sm:$0xff] %v12371
        %12508 = vst [vmem:[%s271 + $0x10] sm:$0xff] %v12372
        %12509 = vst [vmem:[%s271 + $0x18] sm:$0xff] %v12373
        %12510 = vst [vmem:[%s271 + $0x20] sm:$0xff] %v12374
        %12511 = vst [vmem:[%s271 + $0x28] sm:$0xff] %v12375
        %12512 = vst [vmem:[%s271 + $0x30] sm:$0xff] %v12376
        %12513 = vst [vmem:[%s271 + $0x38] sm:$0xff] %v12377
        %12514 = vst [vmem:[%s271 + $0x40] sm:$0xff] %v12378
        %12515 = vst [vmem:[%s271 + $0x48] sm:$0xff] %v12379
        %12516 = vst [vmem:[%s271 + $0x50] sm:$0xff] %v12380
        %12517 = vst [vmem:[%s271 + $0x58] sm:$0xff] %v12381
        %12518 = vst [vmem:[%s271 + $0x60] sm:$0xff] %v12382
        %12519 = vst [vmem:[%s271 + $0x68] sm:$0xff] %v12383
        %12520 = vst [vmem:[%s271 + $0x70] sm:$0xff] %v12384
        %12521 = vst [vmem:[%s271 + $0x78] sm:$0xff] %v12385
        %12522 = vst [vmem:[%s271 + $0x80] sm:$0xff] %v12386
        %12523 = vst [vmem:[%s271 + $0x88] sm:$0xff] %v12387
        %12524 = vst [vmem:[%s271 + $0x90] sm:$0xff] %v12388
        %12525 = vst [vmem:[%s271 + $0x98] sm:$0xff] %v12389
        %12526 = vst [vmem:[%s271 + $0xa0] sm:$0xff] %v12390
        %12527 = vst [vmem:[%s271 + $0xa8] sm:$0xff] %v12391
        %12528 = vst [vmem:[%s271 + $0xb0] sm:$0xff] %v12392
        %12529 = vst [vmem:[%s271 + $0xb8] sm:$0xff] %v12393
        %12530 = vst [vmem:[%s271 + $0xc0] sm:$0xff] %v12394
        %12531 = vst [vmem:[%s271 + $0xc8] sm:$0xff] %v12395
        %12532 = vst [vmem:[%s271 + $0xd0] sm:$0xff] %v12396
        %12533 = vst [vmem:[%s271 + $0xd8] sm:$0xff] %v12397
        %12534 = vst [vmem:[%s271 + $0xe0] sm:$0xff] %v12398
        %12535 = vst [vmem:[%s271 + $0xe8] sm:$0xff] %v12399
        %12536 = vst [vmem:[%s271 + $0xf0] sm:$0xff] %v12400
        %12537 = vst [vmem:[%s271 + $0xf8] sm:$0xff] %v12401
        %12538 = vst [vmem:[%s271 + $0x100] sm:$0xff] %v12402
        %12539 = vst [vmem:[%s271 + $0x108] sm:$0xff] %v12403
        %12540 = vst [vmem:[%s271 + $0x110] sm:$0xff] %v12404
        %12541 = vst [vmem:[%s271 + $0x118] sm:$0xff] %v12405
        %12542 = vst [vmem:[%s271 + $0x120] sm:$0xff] %v12406
        %12543 = vst [vmem:[%s271 + $0x128] sm:$0xff] %v12407
        %12544 = vst [vmem:[%s271 + $0x130] sm:$0xff] %v12408
        %12545 = vst [vmem:[%s271 + $0x138] sm:$0xff] %v12409
        %12546 = vst [vmem:[%s271 + $0x140] sm:$0xff] %v12410
        %12547 = vst [vmem:[%s271 + $0x148] sm:$0xff] %v12411
        %12548 = vst [vmem:[%s271 + $0x150] sm:$0xff] %v12412
        %12549 = vst [vmem:[%s271 + $0x158] sm:$0xff] %v12413
        %12550 = vst [vmem:[%s271 + $0x160] sm:$0xff] %v12414
        %12551 = vst [vmem:[%s271 + $0x168] sm:$0xff] %v12415
        %12552 = vst [vmem:[%s271 + $0x170] sm:$0xff] %v12416
        %12553 = vst [vmem:[%s271 + $0x178] sm:$0xff] %v12417
        %12554 = vst [vmem:[%s271 + $0x180] sm:$0xff] %v12418
        %12555 = vst [vmem:[%s271 + $0x188] sm:$0xff] %v12419
        %12556 = vst [vmem:[%s271 + $0x190] sm:$0xff] %v12420
        %12557 = vst [vmem:[%s271 + $0x198] sm:$0xff] %v12421
        %12558 = vst [vmem:[%s271 + $0x1a0] sm:$0xff] %v12422
        %12559 = vst [vmem:[%s271 + $0x1a8] sm:$0xff] %v12423
        %12560 = vst [vmem:[%s271 + $0x1b0] sm:$0xff] %v12424
        %12561 = vst [vmem:[%s271 + $0x1b8] sm:$0xff] %v12425
        %12562 = vst [vmem:[%s271 + $0x1c0] sm:$0xff] %v12426
        %12563 = vst [vmem:[%s271 + $0x1c8] sm:$0xff] %v12427
        %12564 = vst [vmem:[%s271 + $0x1d0] sm:$0xff] %v12428
        %12565 = vst [vmem:[%s271 + $0x1d8] sm:$0xff] %v12429
        %12566 = vst [vmem:[%s271 + $0x1e0] sm:$0xff] %v12430
        %12567 = vst [vmem:[%s271 + $0x1e8] sm:$0xff] %v12431
        %12568 = vst [vmem:[%s271 + $0x1f0] sm:$0xff] %v12432
        %12569 = vst [vmem:[%s271 + $0x1f8] sm:$0xff] %v12433
        %12570 = vst [vmem:[%s271 + $0x200] sm:$0xff] %v12434
        %12571 = vst [vmem:[%s271 + $0x208] sm:$0xff] %v12435
        %12572 = vst [vmem:[%s271 + $0x210] sm:$0xff] %v12436
        %12573 = vst [vmem:[%s271 + $0x218] sm:$0xff] %v12437
        %12574 = vst [vmem:[%s271 + $0x220] sm:$0xff] %v12438
        %12575 = vst [vmem:[%s271 + $0x228] sm:$0xff] %v12439
        %12576 = vst [vmem:[%s271 + $0x230] sm:$0xff] %v12440
        %12577 = vst [vmem:[%s271 + $0x238] sm:$0xff] %v12441
        %12578 = vst [vmem:[%s271 + $0x240] sm:$0xff] %v12442
        %12579 = vst [vmem:[%s271 + $0x248] sm:$0xff] %v12443
        %12580 = vst [vmem:[%s271 + $0x250] sm:$0xff] %v12444
        %12581 = vst [vmem:[%s271 + $0x258] sm:$0xff] %v12445
        %12582 = vst [vmem:[%s271 + $0x260] sm:$0xff] %v12446
        %12583 = vst [vmem:[%s271 + $0x268] sm:$0xff] %v12447
        %12584 = vst [vmem:[%s271 + $0x270] sm:$0xff] %v12448
        %12585 = vst [vmem:[%s271 + $0x278] sm:$0xff] %v12449
        %12586 = vst [vmem:[%s271 + $0x280] sm:$0xff] %v12450
        %12587 = vst [vmem:[%s271 + $0x288] sm:$0xff] %v12451
        %12588 = vst [vmem:[%s271 + $0x290] sm:$0xff] %v12452
        %12589 = vst [vmem:[%s271 + $0x298] sm:$0xff] %v12453
        %12590 = vst [vmem:[%s271 + $0x2a0] sm:$0xff] %v12454
        %12591 = vst [vmem:[%s271 + $0x2a8] sm:$0xff] %v12455
        %12592 = vst [vmem:[%s271 + $0x2b0] sm:$0xff] %v12456
        %12593 = vst [vmem:[%s271 + $0x2b8] sm:$0xff] %v12457
        %12594 = vst [vmem:[%s271 + $0x2c0] sm:$0xff] %v12458
        %12595 = vst [vmem:[%s271 + $0x2c8] sm:$0xff] %v12459
        %12596 = vst [vmem:[%s271 + $0x2d0] sm:$0xff] %v12460
        %12597 = vst [vmem:[%s271 + $0x2d8] sm:$0xff] %v12461
        %12598 = vst [vmem:[%s271 + $0x2e0] sm:$0xff] %v12462
        %12599 = vst [vmem:[%s271 + $0x2e8] sm:$0xff] %v12463
        %12600 = vst [vmem:[%s271 + $0x2f0] sm:$0xff] %v12464
        %12601 = vst [vmem:[%s271 + $0x2f8] sm:$0xff] %v12465
        %12602 = vst [vmem:[%s271 + $0x300] sm:$0xff] %v12466
        %12603 = vst [vmem:[%s271 + $0x308] sm:$0xff] %v12467
        %12604 = vst [vmem:[%s271 + $0x310] sm:$0xff] %v12468
        %12605 = vst [vmem:[%s271 + $0x318] sm:$0xff] %v12469
        %12606 = vst [vmem:[%s271 + $0x320] sm:$0xff] %v12470
        %12607 = vst [vmem:[%s271 + $0x328] sm:$0xff] %v12471
        %12608 = vst [vmem:[%s271 + $0x330] sm:$0xff] %v12472
        %12609 = vst [vmem:[%s271 + $0x338] sm:$0xff] %v12473
        %12610 = vst [vmem:[%s271 + $0x340] sm:$0xff] %v12474
        %12611 = vst [vmem:[%s271 + $0x348] sm:$0xff] %v12475
        %12612 = vst [vmem:[%s271 + $0x350] sm:$0xff] %v12476
        %12613 = vst [vmem:[%s271 + $0x358] sm:$0xff] %v12477
        %12614 = vst [vmem:[%s271 + $0x360] sm:$0xff] %v12478
        %12615 = vst [vmem:[%s271 + $0x368] sm:$0xff] %v12479
        %12616 = vst [vmem:[%s271 + $0x370] sm:$0xff] %v12480
        %12617 = vst [vmem:[%s271 + $0x378] sm:$0xff] %v12481
        %12618 = vst [vmem:[%s271 + $0x380] sm:$0xff] %v12482
        %12619 = vst [vmem:[%s271 + $0x388] sm:$0xff] %v12483
        %12620 = vst [vmem:[%s271 + $0x390] sm:$0xff] %v12484
        %12621 = vst [vmem:[%s271 + $0x398] sm:$0xff] %v12485
        %12622 = vst [vmem:[%s271 + $0x3a0] sm:$0xff] %v12486
        %12623 = vst [vmem:[%s271 + $0x3a8] sm:$0xff] %v12487
        %12624 = vst [vmem:[%s271 + $0x3b0] sm:$0xff] %v12488
        %12625 = vst [vmem:[%s271 + $0x3b8] sm:$0xff] %v12489
        %12626 = vst [vmem:[%s271 + $0x3c0] sm:$0xff] %v12490
        %12627 = vst [vmem:[%s271 + $0x3c8] sm:$0xff] %v12491
        %12628 = vst [vmem:[%s271 + $0x3d0] sm:$0xff] %v12492
        %12629 = vst [vmem:[%s271 + $0x3d8] sm:$0xff] %v12493
        %12630 = vst [vmem:[%s271 + $0x3e0] sm:$0xff] %v12494
        %12631 = vst [vmem:[%s271 + $0x3e8] sm:$0xff] %v12495
        %12632 = vst [vmem:[%s271 + $0x3f0] sm:$0xff] %v12496
        %12633 = vst [vmem:[%s271 + $0x3f8] sm:$0xff] %v12497
        %12634 = vst [vmem:[%s271 + $0x400] sm:$0xff] %v12498
        %12635 = vst [vmem:[%s271 + $0x408] sm:$0xff] %v12499
        %12636 = vst [vmem:[%s271 + $0x410] sm:$0xff] %v12500
        %12637 = vst [vmem:[%s271 + $0x418] sm:$0xff] %v12501
        %12638 = vst [vmem:[%s271 + $0x420] sm:$0xff] %v12502
        %12639 = vst [vmem:[%s271 + $0x428] sm:$0xff] %v12503
        %12640 = vst [vmem:[%s271 + $0x430] sm:$0xff] %v12504
        %12641 = vst [vmem:[%s271 + $0x438] sm:$0xff] %v12505
        %s12642 = sand.u32 %s181, 1
        %s12643 = scalar_lea.sflag [#allocation3], %s12642
        %s12644 = sand.u32 %s181, 1
        %s12645 = smul.addr %s12644, 1088
        %s12646 = scalar_lea.vmem [#allocation2], %s12645
        // Predicated region
        $region49: #{tpu_custom_call.1} parent=47 // pred_check
          %p12647 = pneg %p191
        $region50: #{tpu_custom_call.1} parent=47 // pred_check_branch
          %12649 = sbr.rel (%p12647) target = $region52
        $region51: #{tpu_custom_call.1} parent=47 // pred_region
          %s12651 = ssub.s32 17408, 17408
          %12652 = vsyncadd %s12643, %s12651
          %s12653 = smul.addr %s21, 136
          %s12654 = smul.addr %s12653, 128
          %s12655 = scalar_lea.hbm %s7, %s12654
          %s12656 = sshll.u32 %s12646, 4
          %s12657 = int_to_ptr.vmem [resolvable:$true] %s12656
          %12662 = dma.vmem_to_hbm [thread:$0]  %s12657, 17408, %s12655, %s12643, 128, 128, 8
        $region52: #{tpu_custom_call.1} parent=47 // pred_fallthru
          _
      $region48: #{tpu_custom_call.1} parent=5 // pred_fallthru
        _
      %p12663 = scmp.le.s32.totalorder 2, %s16
      // Predicated region
      $region53: #{tpu_custom_call.1} parent=5 // pred_check
        %p12664 = pneg %p12663
      $region54: #{tpu_custom_call.1} parent=5 // pred_check_branch
        %12666 = sbr.rel (%p12664) target = $region56
      $region55: #{tpu_custom_call.1} parent=5 // pred_region
        %s12667 = ssub.s32 %s16, 2
        // Predicated region
        $region57: #{tpu_custom_call.1} parent=55 // pred_check
          %p12668 = pneg %p197
        $region58: #{tpu_custom_call.1} parent=55 // pred_check_branch
          %12670 = sbr.rel (%p12668) target = $region60
        $region59: #{tpu_custom_call.1} parent=55 // pred_region
          %s12671 = sand.u32 %s182, 1
          %s12672 = scalar_lea.sflag [#allocation3], %s12671
          %s12673 = sand.u32 %s182, 1
          %s12674 = smul.addr %s12673, 1088
          %s12675 = scalar_lea.vmem [#allocation2], %s12674
          %12676 = dma.done %s12672, 17408
        $region60: #{tpu_custom_call.1} parent=55 // pred_fallthru
          _
      $region56: #{tpu_custom_call.1} parent=5 // pred_fallthru
        _
    $region6: #{tpu_custom_call.1} parent=1 // loop_footer
      %s20 = sadd.s32 1, %s16
    $region7: #{tpu_custom_call.1} parent=1 // loop_footer_branch
      %15 = sbr.rel target = $region3
    $region8: #{tpu_custom_call.1} parent=1 // loop_exit
      _
    %12677 = vsyncpa [#allocation3], 1
    %s12678 = scalar_lea.sflag [#allocation3], 1
    %12679 = vsyncpa %s12678, 1

</llo_original>
